<compile_context>
chip_gen: v7x
topology: tpu7x:2x2x1
jax: 0.10.0
libtpu: 0.0.40
codegen_flags: <defaults>
</compile_context>

<pallas_src>
import functools

import numpy as np
import jax
import jax.numpy as jnp
from jax.experimental import pallas as pl
from jax.experimental.pallas import tpu as pltpu

# ----------------------- model constants (from the PyTorch module) ----------
IMG_HIST_LEN = 4          # imgs_buf_len
IMG_H = IMG_W = 50        # chosen so the conv stack collapses to 1x1 -> flat_features = 128
LAYER_SIZE = 256
N_COS = 64
ACTION_SIZE = 12
ACTION_PAD = 128          # lane-dense padded output width (sliced to 12 in the wrapper)
INPUT_SHAPE = 137         # 3 + 128 + 6
CNN_FEATURES = 128
CONV12_COUT = 64          # real conv1/conv2 output channels
CONV12_PAD = 128          # lane-dense padded conv1/conv2 output channels
NUM_TAU = 32


# ----------------------- Pallas kernel: tiled matmul + bias + relu ----------
def _mm_bias_relu_kernel(x_ref, w_ref, b_ref, o_ref):
    y = jnp.dot(x_ref[...], w_ref[...], preferred_element_type=jnp.float32)
    o_ref[...] = jnp.maximum(y + b_ref[...], 0.0).astype(o_ref.dtype)


def matmul_bias_relu(x, w, b, *, tile_m=512):
    """x:(M,K) bf16, w:(K,N) bf16 (N lane-dense), b:(1,N) f32 -> relu(x@w+b):(M,N) bf16."""
    m, k = x.shape
    n = w.shape[1]
    tm = min(tile_m, pl.cdiv(m, 128) * 128)     # don't over-pad tiny M; stays multiple of 8
    mp = pl.cdiv(m, tm) * tm
    if mp != m:
        x = jnp.pad(x, ((0, mp - m), (0, 0)))
    out = pl.pallas_call(
        _mm_bias_relu_kernel,
        out_shape=jax.ShapeDtypeStruct((mp, n), jnp.bfloat16),
        grid=(mp // tm,),
        in_specs=[pl.BlockSpec((tm, k), lambda i: (i, 0)),
                  pl.BlockSpec((k, n), lambda i: (0, 0)),
                  pl.BlockSpec((1, n), lambda i: (0, 0))],
        out_specs=pl.BlockSpec((tm, n), lambda i: (i, 0)),
        compiler_params=pltpu.CompilerParams(
            dimension_semantics=("parallel",)),
    )(x, w, b)
    return out[:m]


# ----------------------- Pallas kernel: fused conv3+conv4+IQN head ----------
def _iqn_head_kernel(p3_ref, hb_ref, cos_ref,
                     w3_ref, b3_ref, w4_ref, b4_ref, whc_ref,
                     wc_ref, bc_ref, w1_ref, b1_ref, w2_ref, b2_ref,
                     o_ref, *, tile_b, n_tau):
    f32, bf16 = jnp.float32, jnp.bfloat16

    # conv3: relu((TB*16, 1024) @ (1024, 128) + b)
    a3 = jnp.dot(p3_ref[...], w3_ref[...], preferred_element_type=f32) + b3_ref[...]
    a3 = jnp.maximum(a3, 0.0).astype(bf16).reshape(tile_b, 16, CNN_FEATURES)

    # conv4: its 4x4 kernel covers the whole 4x4 conv3 map -> 16 accumulated
    # (TB,128)@(128,128) MXU dots over pre-split weight blocks (no lane concat).
    a4 = jnp.zeros((tile_b, CNN_FEATURES), f32)
    for p in range(16):
        a4 = a4 + jnp.dot(a3[:, p, :], w4_ref[p], preferred_element_type=f32)
    a4 = jnp.maximum(a4 + b4_ref[...], 0.0)                               # (TB, 128)

    # head: speed/gear/rpm + act1/act2 + head bias are pre-folded into hb_ref.
    h = jnp.dot(a4.astype(bf16), whc_ref[...], preferred_element_type=f32) + hb_ref[...]
    h = jnp.maximum(h, 0.0)                                               # (TB, 256)

    # cos embedding
    ce = jnp.dot(cos_ref[...], wc_ref[...], preferred_element_type=f32) + bc_ref[...]
    ce = jnp.maximum(ce, 0.0)                                             # (TB*NT, 256)

    # tau broadcast multiply: (TB, NT, 256) * (TB, 1, 256), then ff1/ff2.
    z = (ce.reshape(tile_b, n_tau, LAYER_SIZE) * h[:, None, :]
         ).reshape(tile_b * n_tau, LAYER_SIZE)
    z1 = jnp.dot(z.astype(bf16), w1_ref[...], preferred_element_type=f32) + b1_ref[...]
    z1 = jnp.maximum(z1, 0.0)

    # ff2 padded to 128 columns -> lane-dense store; wrapper slices back to 12 actions.
    o_ref[...] = (jnp.dot(z1.astype(bf16), w2_ref[...], preferred_element_type=f32)
                  + b2_ref[...]).astype(o_ref.dtype)


def _pad_rows(a, rows):
    pad = rows - a.shape[0]
    if pad == 0:
        return a
    return jnp.pad(a, ((0, pad),) + ((0, 0),) * (a.ndim - 1))


def iqn_head(p3, hb, cos, pp, batch, n_tau, *, tile_b=16):
    tb = min(tile_b, max(8, pl.cdiv(batch, 8) * 8))     # batch tile, multiple of 8
    bp = pl.cdiv(batch, tb) * tb
    p3 = _pad_rows(p3, bp * 16)
    hb = _pad_rows(hb, bp)
    cos = _pad_rows(cos, bp * n_tau)
    const = lambda i: (0, 0)
    out = pl.pallas_call(
        functools.partial(_iqn_head_kernel, tile_b=tb, n_tau=n_tau),
        out_shape=jax.ShapeDtypeStruct((bp * n_tau, ACTION_PAD), jnp.float32),
        grid=(bp // tb,),
        in_specs=[
            pl.BlockSpec((tb * 16, 1024), lambda i: (i, 0)),                   # conv3 patches
            pl.BlockSpec((tb, LAYER_SIZE), lambda i: (i, 0)),                  # folded head bias
            pl.BlockSpec((tb * n_tau, N_COS), lambda i: (i, 0)),               # cos features
            pl.BlockSpec((1024, CNN_FEATURES), const),                         # conv3_w
            pl.BlockSpec((1, CNN_FEATURES), const),                            # conv3_b
            pl.BlockSpec((16, CNN_FEATURES, CNN_FEATURES), lambda i: (0, 0, 0)),  # conv4_w blocks
            pl.BlockSpec((1, CNN_FEATURES), const),                            # conv4_b
            pl.BlockSpec((CNN_FEATURES, LAYER_SIZE), const),                   # head_w_cnn
            pl.BlockSpec((N_COS, LAYER_SIZE), const),                          # cos_w
            pl.BlockSpec((1, LAYER_SIZE), const),                              # cos_b
            pl.BlockSpec((LAYER_SIZE, LAYER_SIZE), const),                     # ff1_w
            pl.BlockSpec((1, LAYER_SIZE), const),                              # ff1_b
            pl.BlockSpec((LAYER_SIZE, ACTION_PAD), const),                     # ff2_w (padded)
            pl.BlockSpec((1, ACTION_PAD), const),                              # ff2_b
        ],
        out_specs=pl.BlockSpec((tb * n_tau, ACTION_PAD), lambda i: (i, 0)),
        compiler_params=pltpu.CompilerParams(
            dimension_semantics=("parallel",)),
    )(p3, hb, cos,
      pp["conv3_w"], pp["conv3_b"], pp["conv4_w"], pp["conv4_b"], pp["head_w_cnn"],
      pp["cos_w"], pp["cos_b"], pp["ff1_w"], pp["ff1_b"], pp["ff2_w"], pp["ff2_b"])
    return out[: batch * n_tau]


# ----------------------- im2col glue (jitted XLA, NHWC) -----------------------
def _im2col(x, k, s):
    """NHWC x -> (B*ho*wo, k*k*C) patch matrix; columns ordered (kh, kw, cin)."""
    b, h, w, c = x.shape
    ho = (h - k) // s + 1
    wo = (w - k) // s + 1
    cols = [x[:, i:i + s * (ho - 1) + 1:s, j:j + s * (wo - 1) + 1:s, :]
            for i in range(k) for j in range(k)]
    patches = jnp.concatenate(cols, axis=-1)            # (B, ho, wo, k*k*C)
    return patches.reshape(b * ho * wo, k * k * c)


# ----------------------- parameter init + one-time layout prep ---------------
def _linear_params(key, in_f, out_f):
    k1, k2 = jax.random.split(key)
    bound = 1.0 / np.sqrt(in_f)
    w = jax.random.uniform(k1, (in_f, out_f), jnp.float32, -bound, bound)
    b = jax.random.uniform(k2, (out_f,), jnp.float32, -bound, bound)
    return w, b


def _conv_params(key, cin, cout, k):
    k1, k2 = jax.random.split(key)
    bound = 1.0 / np.sqrt(cin * k * k)
    w = jax.random.uniform(k1, (cout, cin, k, k), jnp.float32, -bound, bound)
    b = jax.random.uniform(k2, (cout,), jnp.float32, -bound, bound)
    return w, b


def init_params(key):
    ks = jax.random.split(key, 8)
    return {
        "conv1": _conv_params(ks[0], IMG_HIST_LEN, 64, 8),
        "conv2": _conv_params(ks[1], 64, 64, 4),
        "conv3": _conv_params(ks[2], 64, 128, 4),
        "conv4": _conv_params(ks[3], 128, 128, 4),
        "head":  _linear_params(ks[4], INPUT_SHAPE, LAYER_SIZE),
        "cos":   _linear_params(ks[5], N_COS, LAYER_SIZE),
        "ff1":   _linear_params(ks[6], LAYER_SIZE, LAYER_SIZE),
        "ff2":   _linear_params(ks[7], LAYER_SIZE, ACTION_SIZE),
    }


def prepare_params(params):
    """One-time layout prep: every re-layout / pad / bf16 cast happens here, not per step."""
    def conv_mat(w):   # (cout,cin,kh,kw) -> (kh*kw*cin, cout); columns ordered (kh,kw,cin)
        cout, cin, kh, kw = w.shape
        return w.transpose(2, 3, 1, 0).reshape(kh * kw * cin, cout)

    pp = {}

    # conv1: rows reordered to match the space-to-depth im2col column order
    # (kh2, kw2, dh, dw, cin) with kh = 2*kh2+dh, kw = 2*kw2+dw; cout padded 64 -> 128.
    w1, b1 = params["conv1"]                                   # (64, 4, 8, 8)
    w1r = (w1.transpose(2, 3, 1, 0)                            # (kh, kw, cin, cout)
             .reshape(4, 2, 4, 2, IMG_HIST_LEN, CONV12_COUT)   # (kh2, dh, kw2, dw, cin, cout)
             .transpose(0, 2, 1, 3, 4, 5)                      # (kh2, kw2, dh, dw, cin, cout)
             .reshape(4 * 4 * 2 * 2 * IMG_HIST_LEN, CONV12_COUT))
    pp["conv1_w"] = jnp.pad(w1r, ((0, 0), (0, CONV12_PAD - CONV12_COUT))).astype(jnp.bfloat16)
    pp["conv1_b"] = jnp.pad(b1, (0, CONV12_PAD - CONV12_COUT)).reshape(1, CONV12_PAD)

    # conv2: standard im2col layout, cout padded 64 -> 128 (lane-dense stores).
    w2, b2 = params["conv2"]
    pp["conv2_w"] = jnp.pad(conv_mat(w2),
                            ((0, 0), (0, CONV12_PAD - CONV12_COUT))).astype(jnp.bfloat16)
    pp["conv2_b"] = jnp.pad(b2, (0, CONV12_PAD - CONV12_COUT)).reshape(1, CONV12_PAD)

    w3, b3 = params["conv3"]
    pp["conv3_w"] = conv_mat(w3).astype(jnp.bfloat16)          # (1024, 128)
    pp["conv3_b"] = b3.reshape(1, CNN_FEATURES)

    # conv4: pre-split into 16 (cin, cout) blocks indexed by kernel position p = kh*4+kw.
    w4, b4 = params["conv4"]                                   # (128, 128, 4, 4)
    pp["conv4_w"] = (w4.transpose(2, 3, 1, 0)                  # (kh, kw, cin, cout)
                       .reshape(16, CNN_FEATURES, CNN_FEATURES)
                       .astype(jnp.bfloat16))
    pp["conv4_b"] = b4.reshape(1, CNN_FEATURES)

    # head weight rows = [speed,gear,rpm | cnn(128) | act1(3),act2(3)];
    # pre/act parts stay f32 and are folded into the head bias in the XLA wrapper.
    wh, bh = params["head"]
    pp["head_w_pre"] = wh[0:3]
    pp["head_w_cnn"] = wh[3:3 + CNN_FEATURES].astype(jnp.bfloat16)
    pp["head_w_act"] = wh[3 + CNN_FEATURES:]
    pp["head_b"] = bh.reshape(1, LAYER_SIZE)

    wc, bc = params["cos"]
    pp["cos_w"] = wc.astype(jnp.bfloat16)
    pp["cos_b"] = bc.reshape(1, LAYER_SIZE)

    wf1, bf1 = params["ff1"]
    pp["ff1_w"] = wf1.astype(jnp.bfloat16)
    pp["ff1_b"] = bf1.reshape(1, LAYER_SIZE)

    wf2, bf2 = params["ff2"]
    pp["ff2_w"] = jnp.pad(wf2, ((0, 0), (0, ACTION_PAD - ACTION_SIZE))).astype(jnp.bfloat16)
    pp["ff2_b"] = jnp.pad(bf2, (0, ACTION_PAD - ACTION_SIZE)).reshape(1, ACTION_PAD)
    return pp


# ----------------------- IQN forward (jitted) --------------------------------
@functools.partial(jax.jit, static_argnames=("num_tau",))
def iqn_forward(pp, inputs, tau_key, num_tau=NUM_TAU):
    speed, gear, rpm, images, act1, act2 = inputs
    batch = images.shape[0]

    # ---- VanillaCNN trunk (NHWC; conv = im2col + Pallas matmul+bias+relu) ----
    x = images.transpose(0, 2, 3, 1)                                       # (B,50,50,4)
    # space-to-depth: stride-2 8x8 windows -> unit-stride 4x4 windows over 16 dense lanes
    x = (x.reshape(batch, IMG_H // 2, 2, IMG_W // 2, 2, IMG_HIST_LEN)
           .transpose(0, 1, 3, 2, 4, 5)
           .reshape(batch, IMG_H // 2, IMG_W // 2, 4 * IMG_HIST_LEN)
           .astype(jnp.bfloat16))
    ho1 = (IMG_H - 8) // 2 + 1                                             # 22
    a1 = matmul_bias_relu(_im2col(x, 4, 1), pp["conv1_w"], pp["conv1_b"])
    a1 = a1[:, :CONV12_COUT].reshape(batch, ho1, ho1, CONV12_COUT)
    ho2 = (ho1 - 4) // 2 + 1                                               # 10
    a2 = matmul_bias_relu(_im2col(a1, 4, 2), pp["conv2_w"], pp["conv2_b"])
    a2 = a2[:, :CONV12_COUT].reshape(batch, ho2, ho2, CONV12_COUT)
    p3 = _im2col(a2, 4, 2)                                                 # (B*16, 1024) bf16

    # ---- calc_cos (RNG + cos kept as tiny XLA glue) ----
    taus = jax.random.uniform(tau_key, (batch, num_tau, 1), jnp.float32)
    pis = (jnp.pi * jnp.arange(N_COS, dtype=jnp.float32)).reshape(1, 1, N_COS)
    cos = jnp.cos(taus * pis).reshape(batch * num_tau, N_COS).astype(jnp.bfloat16)

    # ---- degenerate K=3 / K=6 head matmuls hoisted out of the kernel ----
    hb = (jnp.concatenate([speed, gear, rpm], axis=-1) @ pp["head_w_pre"]
          + jnp.concatenate([act1, act2], axis=-1) @ pp["head_w_act"]
          + pp["head_b"])                                                  # (B, 256) f32

    # ---- fused conv3+conv4+head+cos_embedding+ff1+ff2 Pallas kernel ----
    out = iqn_head(p3, hb, cos, pp, batch, num_tau)                        # (B*NT, 128)
    quantiles = out[:, :ACTION_SIZE].reshape(batch, num_tau, ACTION_SIZE)
    return quantiles, taus


# ----------------------- pure-JAX f32 reference (for validation) -------------
def iqn_reference(params, inputs, taus):
    speed, gear, rpm, images, act1, act2 = inputs

    def conv(x, wb, stride):
        w, b = wb
        y = jax.lax.conv_general_dilated(
            x, w, window_strides=(stride, stride), padding="VALID",
            dimension_numbers=("NCHW", "OIHW", "NCHW"))
        return jax.nn.relu(y + b[None, :, None, None])

    x = conv(images, params["conv1"], 2)
    x = conv(x, params["conv2"], 2)
    x = conv(x, params["conv3"], 2)
    x = conv(x, params["conv4"], 2)
    cnn = x.reshape(x.shape[0], -1)                                        # (B, 128)

    xcat = jnp.concatenate([speed, gear, rpm, cnn, act1, act2], axis=-1)
    wh, bh = params["head"]
    h = jax.nn.relu(xcat @ wh + bh)
    batch, n_tau = xcat.shape[0], taus.shape[1]
    pis = (jnp.pi * jnp.arange(N_COS, dtype=jnp.float32)).reshape(1, 1, N_COS)
    cos = jnp.cos(taus * pis).reshape(batch * n_tau, N_COS)
    wc, bc = params["cos"]
    cx = jax.nn.relu(cos @ wc + bc).reshape(batch, n_tau, LAYER_SIZE)
    z = (h[:, None, :] * cx).reshape(batch * n_tau, LAYER_SIZE)
    w1, b1 = params["ff1"]
    z = jax.nn.relu(z @ w1 + b1)
    w2, b2 = params["ff2"]
    return (z @ w2 + b2).reshape(batch, n_tau, ACTION_SIZE)


# ----------------------- main -------------------------------------------------
if __name__ == "__main__":
    key = jax.random.PRNGKey(0)
    pkey, dkey, tkey = jax.random.split(key, 3)
    raw_params = init_params(pkey)
    params = prepare_params(raw_params)

    B = 2
    dkeys = jax.random.split(dkey, 6)
    speed = jax.random.uniform(dkeys[0], (B, 1), jnp.float32)
    gear = jax.random.uniform(dkeys[1], (B, 1), jnp.float32)
    rpm = jax.random.uniform(dkeys[2], (B, 1), jnp.float32)
    images = jax.random.uniform(dkeys[3], (B, IMG_HIST_LEN, IMG_H, IMG_W), jnp.float32)
    act1 = jax.random.uniform(dkeys[4], (B, 3), jnp.float32)
    act2 = jax.random.uniform(dkeys[5], (B, 3), jnp.float32)
    inputs = (speed, gear, rpm, images, act1, act2)

    quantiles, taus = iqn_forward(params, inputs, tkey, num_tau=NUM_TAU)
    quantiles = jax.block_until_ready(quantiles)
    taus = jax.block_until_ready(taus)

    assert quantiles.shape == (B, NUM_TAU, ACTION_SIZE), quantiles.shape
    assert taus.shape == (B, NUM_TAU, 1), taus.shape
    assert bool(jnp.all(jnp.isfinite(quantiles)))

    # numerical check against the pure-JAX f32 reference (bf16-MXU tolerance)
    ref = jax.jit(iqn_reference)(raw_params, inputs, taus)
    np.testing.assert_allclose(np.asarray(quantiles), np.asarray(ref),
                               rtol=0.1, atol=1e-2)

    print("KERNEL_OK")
</pallas_src>

<mosaic_0001>
module attributes {stable_mosaic.version = 11 : i64} {
  func.func @_mm_bias_relu_kernel(%arg0: i32, %arg1: memref<512x256xbf16, #tpu.memory_space<vmem>>, %arg2: memref<256x128xbf16, #tpu.memory_space<vmem>>, %arg3: memref<1x128xf32, #tpu.memory_space<vmem>>, %arg4: memref<512x128xbf16, #tpu.memory_space<vmem>>) attributes {dimension_semantics = [#tpu.dimension_semantics<parallel>], iteration_bounds = array<i64: 2>, scalar_prefetch = 0 : i64, scratch_operands = 0 : i64, tpu.core_type = #tpu.core_type<tc>, window_params = [{transform_indices = @transform_0, window_bounds = array<i64: 512, 256>}, {pipeline_mode = #tpu.pipeline_mode<synchronous>, transform_indices = @transform_1, window_bounds = array<i64: 256, 128>}, {pipeline_mode = #tpu.pipeline_mode<synchronous>, transform_indices = @transform_2, window_bounds = array<i64: 1, 128>}, {transform_indices = @transform_3, window_bounds = array<i64: 512, 128>}]} {
    %c0 = arith.constant 0 : index
    %c0_0 = arith.constant 0 : index
    %0 = vector.load %arg1[%c0, %c0_0] : memref<512x256xbf16, #tpu.memory_space<vmem>>, vector<512x256xbf16>
    %c0_1 = arith.constant 0 : index
    %c0_2 = arith.constant 0 : index
    %1 = vector.load %arg2[%c0_1, %c0_2] : memref<256x128xbf16, #tpu.memory_space<vmem>>, vector<256x128xbf16>
    %cst = arith.constant dense<0.000000e+00> : vector<512x128xf32>
    %2 = tpu.matmul %0, %1, %cst {dimension_numbers = #tpu.dot_dimension_numbers<[1], [0], [0], [1], [0, 0, 1, 1], [], []>} : vector<512x256xbf16>, vector<256x128xbf16>, vector<512x128xf32> -> vector<512x128xf32>
    %c0_3 = arith.constant 0 : index
    %c0_4 = arith.constant 0 : index
    %3 = vector.load %arg3[%c0_3, %c0_4] : memref<1x128xf32, #tpu.memory_space<vmem>>, vector<1x128xf32>
    %4 = vector.broadcast %3 : vector<1x128xf32> to vector<512x128xf32>
    %5 = arith.addf %2, %4 : vector<512x128xf32>
    %cst_5 = arith.constant 0.000000e+00 : f32
    %6 = vector.broadcast %cst_5 : f32 to vector<512x128xf32>
    %7 = arith.maximumf %5, %6 : vector<512x128xf32>
    %8 = arith.truncf %7 : vector<512x128xf32> to vector<512x128xbf16>
    %c0_6 = arith.constant 0 : index
    %c0_7 = arith.constant 0 : index
    %9 = vector.load %arg4[%c0_6, %c0_7] : memref<512x128xbf16, #tpu.memory_space<vmem>>, vector<512x128xbf16>
    tpu.vector_store %arg4[%c0_6, %c0_7], %8 {strides = array<i32>} : memref<512x128xbf16, #tpu.memory_space<vmem>>, vector<512x128xbf16>,
    return
  }
  func.func @transform_0(%arg0: i32) -> (i32, i32) {
    %c0_i32 = arith.constant 0 : i32
    %c0_i32_0 = arith.constant 0 : i32
    return %arg0, %c0_i32 : i32, i32
  }
  func.func @transform_1(%arg0: i32) -> (i32, i32) {
    %c0_i32 = arith.constant 0 : i32
    %c0_i32_0 = arith.constant 0 : i32
    %c0_i32_1 = arith.constant 0 : i32
    return %c0_i32, %c0_i32_0 : i32, i32
  }
  func.func @transform_2(%arg0: i32) -> (i32, i32) {
    %c0_i32 = arith.constant 0 : i32
    %c0_i32_0 = arith.constant 0 : i32
    %c0_i32_1 = arith.constant 0 : i32
    return %c0_i32, %c0_i32_0 : i32, i32
  }
  func.func @transform_3(%arg0: i32) -> (i32, i32) {
    %c0_i32 = arith.constant 0 : i32
    %c0_i32_0 = arith.constant 0 : i32
    return %arg0, %c0_i32 : i32, i32
  }
}

module attributes {stable_mosaic.version = 11 : i64} {
  func.func @_mm_bias_relu_kernel(%arg0: i32, %arg1: memref<256x1024xbf16, #tpu.memory_space<vmem>>, %arg2: memref<1024x128xbf16, #tpu.memory_space<vmem>>, %arg3: memref<1x128xf32, #tpu.memory_space<vmem>>, %arg4: memref<256x128xbf16, #tpu.memory_space<vmem>>) attributes {dimension_semantics = [#tpu.dimension_semantics<parallel>], iteration_bounds = array<i64: 1>, scalar_prefetch = 0 : i64, scratch_operands = 0 : i64, tpu.core_type = #tpu.core_type<tc>, window_params = [{transform_indices = @transform_0, window_bounds = array<i64: 256, 1024>}, {pipeline_mode = #tpu.pipeline_mode<synchronous>, transform_indices = @transform_1, window_bounds = array<i64: 1024, 128>}, {pipeline_mode = #tpu.pipeline_mode<synchronous>, transform_indices = @transform_2, window_bounds = array<i64: 1, 128>}, {transform_indices = @transform_3, window_bounds = array<i64: 256, 128>}]} {
    %c0 = arith.constant 0 : index
    %c0_0 = arith.constant 0 : index
    %0 = vector.load %arg1[%c0, %c0_0] : memref<256x1024xbf16, #tpu.memory_space<vmem>>, vector<256x1024xbf16>
    %c0_1 = arith.constant 0 : index
    %c0_2 = arith.constant 0 : index
    %1 = vector.load %arg2[%c0_1, %c0_2] : memref<1024x128xbf16, #tpu.memory_space<vmem>>, vector<1024x128xbf16>
    %cst = arith.constant dense<0.000000e+00> : vector<256x128xf32>
    %2 = tpu.matmul %0, %1, %cst {dimension_numbers = #tpu.dot_dimension_numbers<[1], [0], [0], [1], [0, 0, 1, 1], [], []>} : vector<256x1024xbf16>, vector<1024x128xbf16>, vector<256x128xf32> -> vector<256x128xf32>
    %c0_3 = arith.constant 0 : index
    %c0_4 = arith.constant 0 : index
    %3 = vector.load %arg3[%c0_3, %c0_4] : memref<1x128xf32, #tpu.memory_space<vmem>>, vector<1x128xf32>
    %4 = vector.broadcast %3 : vector<1x128xf32> to vector<256x128xf32>
    %5 = arith.addf %2, %4 : vector<256x128xf32>
    %cst_5 = arith.constant 0.000000e+00 : f32
    %6 = vector.broadcast %cst_5 : f32 to vector<256x128xf32>
    %7 = arith.maximumf %5, %6 : vector<256x128xf32>
    %8 = arith.truncf %7 : vector<256x128xf32> to vector<256x128xbf16>
    %c0_6 = arith.constant 0 : index
    %c0_7 = arith.constant 0 : index
    %9 = vector.load %arg4[%c0_6, %c0_7] : memref<256x128xbf16, #tpu.memory_space<vmem>>, vector<256x128xbf16>
    tpu.vector_store %arg4[%c0_6, %c0_7], %8 {strides = array<i32>} : memref<256x128xbf16, #tpu.memory_space<vmem>>, vector<256x128xbf16>,
    return
  }
  func.func @transform_0(%arg0: i32) -> (i32, i32) {
    %c0_i32 = arith.constant 0 : i32
    %c0_i32_0 = arith.constant 0 : i32
    return %arg0, %c0_i32 : i32, i32
  }
  func.func @transform_1(%arg0: i32) -> (i32, i32) {
    %c0_i32 = arith.constant 0 : i32
    %c0_i32_0 = arith.constant 0 : i32
    %c0_i32_1 = arith.constant 0 : i32
    return %c0_i32, %c0_i32_0 : i32, i32
  }
  func.func @transform_2(%arg0: i32) -> (i32, i32) {
    %c0_i32 = arith.constant 0 : i32
    %c0_i32_0 = arith.constant 0 : i32
    %c0_i32_1 = arith.constant 0 : i32
    return %c0_i32, %c0_i32_0 : i32, i32
  }
  func.func @transform_3(%arg0: i32) -> (i32, i32) {
    %c0_i32 = arith.constant 0 : i32
    %c0_i32_0 = arith.constant 0 : i32
    return %arg0, %c0_i32 : i32, i32
  }
}

module attributes {stable_mosaic.version = 11 : i64} {
  func.func @_iqn_head_kernel(%arg0: i32, %arg1: memref<128x1024xbf16, #tpu.memory_space<vmem>>, %arg2: memref<8x256xf32, #tpu.memory_space<vmem>>, %arg3: memref<256x64xbf16, #tpu.memory_space<vmem>>, %arg4: memref<1024x128xbf16, #tpu.memory_space<vmem>>, %arg5: memref<1x128xf32, #tpu.memory_space<vmem>>, %arg6: memref<16x128x128xbf16, #tpu.memory_space<vmem>>, %arg7: memref<1x128xf32, #tpu.memory_space<vmem>>, %arg8: memref<128x256xbf16, #tpu.memory_space<vmem>>, %arg9: memref<64x256xbf16, #tpu.memory_space<vmem>>, %arg10: memref<1x256xf32, #tpu.memory_space<vmem>>, %arg11: memref<256x256xbf16, #tpu.memory_space<vmem>>, %arg12: memref<1x256xf32, #tpu.memory_space<vmem>>, %arg13: memref<256x128xbf16, #tpu.memory_space<vmem>>, %arg14: memref<1x128xf32, #tpu.memory_space<vmem>>, %arg15: memref<256x128xf32, #tpu.memory_space<vmem>>) attributes {dimension_semantics = [#tpu.dimension_semantics<parallel>], iteration_bounds = array<i64: 1>, scalar_prefetch = 0 : i64, scratch_operands = 0 : i64, tpu.core_type = #tpu.core_type<tc>, window_params = [{transform_indices = @transform_0, window_bounds = array<i64: 128, 1024>}, {transform_indices = @transform_1, window_bounds = array<i64: 8, 256>}, {transform_indices = @transform_2, window_bounds = array<i64: 256, 64>}, {pipeline_mode = #tpu.pipeline_mode<synchronous>, transform_indices = @transform_3, window_bounds = array<i64: 1024, 128>}, {pipeline_mode = #tpu.pipeline_mode<synchronous>, transform_indices = @transform_4, window_bounds = array<i64: 1, 128>}, {pipeline_mode = #tpu.pipeline_mode<synchronous>, transform_indices = @transform_5, window_bounds = array<i64: 16, 128, 128>}, {pipeline_mode = #tpu.pipeline_mode<synchronous>, transform_indices = @transform_6, window_bounds = array<i64: 1, 128>}, {pipeline_mode = #tpu.pipeline_mode<synchronous>, transform_indices = @transform_7, window_bounds = array<i64: 128, 256>}, {pipeline_mode = #tpu.pipeline_mode<synchronous>, transform_indices = @transform_8, window_bounds = array<i64: 64, 256>}, {pipeline_mode = #tpu.pipeline_mode<synchronous>, transform_indices = @transform_9, window_bounds = array<i64: 1, 256>}, {pipeline_mode = #tpu.pipeline_mode<synchronous>, transform_indices = @transform_10, window_bounds = array<i64: 256, 256>}, {pipeline_mode = #tpu.pipeline_mode<synchronous>, transform_indices = @transform_11, window_bounds = array<i64: 1, 256>}, {pipeline_mode = #tpu.pipeline_mode<synchronous>, transform_indices = @transform_12, window_bounds = array<i64: 256, 128>}, {pipeline_mode = #tpu.pipeline_mode<synchronous>, transform_indices = @transform_13, window_bounds = array<i64: 1, 128>}, {transform_indices = @transform_14, window_bounds = array<i64: 256, 128>}]} {
    %c0 = arith.constant 0 : index
    %c0_0 = arith.constant 0 : index
    %0 = vector.load %arg1[%c0, %c0_0] : memref<128x1024xbf16, #tpu.memory_space<vmem>>, vector<128x1024xbf16>
    %c0_1 = arith.constant 0 : index
    %c0_2 = arith.constant 0 : index
    %1 = vector.load %arg4[%c0_1, %c0_2] : memref<1024x128xbf16, #tpu.memory_space<vmem>>, vector<1024x128xbf16>
    %cst = arith.constant dense<0.000000e+00> : vector<128x128xf32>
    %2 = tpu.matmul %0, %1, %cst {dimension_numbers = #tpu.dot_dimension_numbers<[1], [0], [0], [1], [0, 0, 1, 1], [], []>} : vector<128x1024xbf16>, vector<1024x128xbf16>, vector<128x128xf32> -> vector<128x128xf32>
    %c0_3 = arith.constant 0 : index
    %c0_4 = arith.constant 0 : index
    %3 = vector.load %arg5[%c0_3, %c0_4] : memref<1x128xf32, #tpu.memory_space<vmem>>, vector<1x128xf32>
    %4 = vector.broadcast %3 : vector<1x128xf32> to vector<128x128xf32>
    %5 = arith.addf %2, %4 : vector<128x128xf32>
    %cst_5 = arith.constant 0.000000e+00 : f32
    %6 = vector.broadcast %cst_5 : f32 to vector<128x128xf32>
    %7 = arith.maximumf %5, %6 : vector<128x128xf32>
    %8 = arith.truncf %7 : vector<128x128xf32> to vector<128x128xbf16>
    %9 = vector.shape_cast %8 : vector<128x128xbf16> to vector<8x16x128xbf16>
    %cst_6 = arith.constant 0.000000e+00 : f32
    %10 = vector.broadcast %cst_6 : f32 to vector<8x128xf32>
    %11 = vector.extract_strided_slice %9 {offsets = [0, 0, 0], sizes = [8, 1, 128], strides = [1, 1, 1]} : vector<8x16x128xbf16> to vector<8x1x128xbf16>
    %12 = vector.shape_cast %11 : vector<8x1x128xbf16> to vector<8x128xbf16>
    %c0_7 = arith.constant 0 : index
    %c0_8 = arith.constant 0 : index
    %c0_9 = arith.constant 0 : index
    %13 = vector.load %arg6[%c0_7, %c0_8, %c0_9] : memref<16x128x128xbf16, #tpu.memory_space<vmem>>, vector<1x128x128xbf16>
    %14 = vector.shape_cast %13 : vector<1x128x128xbf16> to vector<128x128xbf16>
    %cst_10 = arith.constant dense<0.000000e+00> : vector<8x128xf32>
    %15 = tpu.matmul %12, %14, %cst_10 {dimension_numbers = #tpu.dot_dimension_numbers<[1], [0], [0], [1], [0, 0, 1, 1], [], []>} : vector<8x128xbf16>, vector<128x128xbf16>, vector<8x128xf32> -> vector<8x128xf32>
    %16 = arith.addf %10, %15 : vector<8x128xf32>
    %17 = vector.extract_strided_slice %9 {offsets = [0, 1, 0], sizes = [8, 1, 128], strides = [1, 1, 1]} : vector<8x16x128xbf16> to vector<8x1x128xbf16>
    %18 = vector.shape_cast %17 : vector<8x1x128xbf16> to vector<8x128xbf16>
    %c1 = arith.constant 1 : index
    %c0_11 = arith.constant 0 : index
    %c0_12 = arith.constant 0 : index
    %19 = vector.load %arg6[%c1, %c0_11, %c0_12] : memref<16x128x128xbf16, #tpu.memory_space<vmem>>, vector<1x128x128xbf16>
    %20 = vector.shape_cast %19 : vector<1x128x128xbf16> to vector<128x128xbf16>
    %cst_13 = arith.constant dense<0.000000e+00> : vector<8x128xf32>
    %21 = tpu.matmul %18, %20, %cst_13 {dimension_numbers = #tpu.dot_dimension_numbers<[1], [0], [0], [1], [0, 0, 1, 1], [], []>} : vector<8x128xbf16>, vector<128x128xbf16>, vector<8x128xf32> -> vector<8x128xf32>
    %22 = arith.addf %16, %21 : vector<8x128xf32>
    %23 = vector.extract_strided_slice %9 {offsets = [0, 2, 0], sizes = [8, 1, 128], strides = [1, 1, 1]} : vector<8x16x128xbf16> to vector<8x1x128xbf16>
    %24 = vector.shape_cast %23 : vector<8x1x128xbf16> to vector<8x128xbf16>
    %c2 = arith.constant 2 : index
    %c0_14 = arith.constant 0 : index
    %c0_15 = arith.constant 0 : index
    %25 = vector.load %arg6[%c2, %c0_14, %c0_15] : memref<16x128x128xbf16, #tpu.memory_space<vmem>>, vector<1x128x128xbf16>
    %26 = vector.shape_cast %25 : vector<1x128x128xbf16> to vector<128x128xbf16>
    %cst_16 = arith.constant dense<0.000000e+00> : vector<8x128xf32>
    %27 = tpu.matmul %24, %26, %cst_16 {dimension_numbers = #tpu.dot_dimension_numbers<[1], [0], [0], [1], [0, 0, 1, 1], [], []>} : vector<8x128xbf16>, vector<128x128xbf16>, vector<8x128xf32> -> vector<8x128xf32>
    %28 = arith.addf %22, %27 : vector<8x128xf32>
    %29 = vector.extract_strided_slice %9 {offsets = [0, 3, 0], sizes = [8, 1, 128], strides = [1, 1, 1]} : vector<8x16x128xbf16> to vector<8x1x128xbf16>
    %30 = vector.shape_cast %29 : vector<8x1x128xbf16> to vector<8x128xbf16>
    %c3 = arith.constant 3 : index
    %c0_17 = arith.constant 0 : index
    %c0_18 = arith.constant 0 : index
    %31 = vector.load %arg6[%c3, %c0_17, %c0_18] : memref<16x128x128xbf16, #tpu.memory_space<vmem>>, vector<1x128x128xbf16>
    %32 = vector.shape_cast %31 : vector<1x128x128xbf16> to vector<128x128xbf16>
    %cst_19 = arith.constant dense<0.000000e+00> : vector<8x128xf32>
    %33 = tpu.matmul %30, %32, %cst_19 {dimension_numbers = #tpu.dot_dimension_numbers<[1], [0], [0], [1], [0, 0, 1, 1], [], []>} : vector<8x128xbf16>, vector<128x128xbf16>, vector<8x128xf32> -> vector<8x128xf32>
    %34 = arith.addf %28, %33 : vector<8x128xf32>
    %35 = vector.extract_strided_slice %9 {offsets = [0, 4, 0], sizes = [8, 1, 128], strides = [1, 1, 1]} : vector<8x16x128xbf16> to vector<8x1x128xbf16>
    %36 = vector.shape_cast %35 : vector<8x1x128xbf16> to vector<8x128xbf16>
    %c4 = arith.constant 4 : index
    %c0_20 = arith.constant 0 : index
    %c0_21 = arith.constant 0 : index
    %37 = vector.load %arg6[%c4, %c0_20, %c0_21] : memref<16x128x128xbf16, #tpu.memory_space<vmem>>, vector<1x128x128xbf16>
    %38 = vector.shape_cast %37 : vector<1x128x128xbf16> to vector<128x128xbf16>
    %cst_22 = arith.constant dense<0.000000e+00> : vector<8x128xf32>
    %39 = tpu.matmul %36, %38, %cst_22 {dimension_numbers = #tpu.dot_dimension_numbers<[1], [0], [0], [1], [0, 0, 1, 1], [], []>} : vector<8x128xbf16>, vector<128x128xbf16>, vector<8x128xf32> -> vector<8x128xf32>
    %40 = arith.addf %34, %39 : vector<8x128xf32>
    %41 = vector.extract_strided_slice %9 {offsets = [0, 5, 0], sizes = [8, 1, 128], strides = [1, 1, 1]} : vector<8x16x128xbf16> to vector<8x1x128xbf16>
    %42 = vector.shape_cast %41 : vector<8x1x128xbf16> to vector<8x128xbf16>
    %c5 = arith.constant 5 : index
    %c0_23 = arith.constant 0 : index
    %c0_24 = arith.constant 0 : index
    %43 = vector.load %arg6[%c5, %c0_23, %c0_24] : memref<16x128x128xbf16, #tpu.memory_space<vmem>>, vector<1x128x128xbf16>
    %44 = vector.shape_cast %43 : vector<1x128x128xbf16> to vector<128x128xbf16>
    %cst_25 = arith.constant dense<0.000000e+00> : vector<8x128xf32>
    %45 = tpu.matmul %42, %44, %cst_25 {dimension_numbers = #tpu.dot_dimension_numbers<[1], [0], [0], [1], [0, 0, 1, 1], [], []>} : vector<8x128xbf16>, vector<128x128xbf16>, vector<8x128xf32> -> vector<8x128xf32>
    %46 = arith.addf %40, %45 : vector<8x128xf32>
    %47 = vector.extract_strided_slice %9 {offsets = [0, 6, 0], sizes = [8, 1, 128], strides = [1, 1, 1]} : vector<8x16x128xbf16> to vector<8x1x128xbf16>
    %48 = vector.shape_cast %47 : vector<8x1x128xbf16> to vector<8x128xbf16>
    %c6 = arith.constant 6 : index
    %c0_26 = arith.constant 0 : index
    %c0_27 = arith.constant 0 : index
    %49 = vector.load %arg6[%c6, %c0_26, %c0_27] : memref<16x128x128xbf16, #tpu.memory_space<vmem>>, vector<1x128x128xbf16>
    %50 = vector.shape_cast %49 : vector<1x128x128xbf16> to vector<128x128xbf16>
    %cst_28 = arith.constant dense<0.000000e+00> : vector<8x128xf32>
    %51 = tpu.matmul %48, %50, %cst_28 {dimension_numbers = #tpu.dot_dimension_numbers<[1], [0], [0], [1], [0, 0, 1, 1], [], []>} : vector<8x128xbf16>, vector<128x128xbf16>, vector<8x128xf32> -> vector<8x128xf32>
    %52 = arith.addf %46, %51 : vector<8x128xf32>
    %53 = vector.extract_strided_slice %9 {offsets = [0, 7, 0], sizes = [8, 1, 128], strides = [1, 1, 1]} : vector<8x16x128xbf16> to vector<8x1x128xbf16>
    %54 = vector.shape_cast %53 : vector<8x1x128xbf16> to vector<8x128xbf16>
    %c7 = arith.constant 7 : index
    %c0_29 = arith.constant 0 : index
    %c0_30 = arith.constant 0 : index
    %55 = vector.load %arg6[%c7, %c0_29, %c0_30] : memref<16x128x128xbf16, #tpu.memory_space<vmem>>, vector<1x128x128xbf16>
    %56 = vector.shape_cast %55 : vector<1x128x128xbf16> to vector<128x128xbf16>
    %cst_31 = arith.constant dense<0.000000e+00> : vector<8x128xf32>
    %57 = tpu.matmul %54, %56, %cst_31 {dimension_numbers = #tpu.dot_dimension_numbers<[1], [0], [0], [1], [0, 0, 1, 1], [], []>} : vector<8x128xbf16>, vector<128x128xbf16>, vector<8x128xf32> -> vector<8x128xf32>
    %58 = arith.addf %52, %57 : vector<8x128xf32>
    %59 = vector.extract_strided_slice %9 {offsets = [0, 8, 0], sizes = [8, 1, 128], strides = [1, 1, 1]} : vector<8x16x128xbf16> to vector<8x1x128xbf16>
    %60 = vector.shape_cast %59 : vector<8x1x128xbf16> to vector<8x128xbf16>
    %c8 = arith.constant 8 : index
    %c0_32 = arith.constant 0 : index
    %c0_33 = arith.constant 0 : index
    %61 = vector.load %arg6[%c8, %c0_32, %c0_33] : memref<16x128x128xbf16, #tpu.memory_space<vmem>>, vector<1x128x128xbf16>
    %62 = vector.shape_cast %61 : vector<1x128x128xbf16> to vector<128x128xbf16>
    %cst_34 = arith.constant dense<0.000000e+00> : vector<8x128xf32>
    %63 = tpu.matmul %60, %62, %cst_34 {dimension_numbers = #tpu.dot_dimension_numbers<[1], [0], [0], [1], [0, 0, 1, 1], [], []>} : vector<8x128xbf16>, vector<128x128xbf16>, vector<8x128xf32> -> vector<8x128xf32>
    %64 = arith.addf %58, %63 : vector<8x128xf32>
    %65 = vector.extract_strided_slice %9 {offsets = [0, 9, 0], sizes = [8, 1, 128], strides = [1, 1, 1]} : vector<8x16x128xbf16> to vector<8x1x128xbf16>
    %66 = vector.shape_cast %65 : vector<8x1x128xbf16> to vector<8x128xbf16>
    %c9 = arith.constant 9 : index
    %c0_35 = arith.constant 0 : index
    %c0_36 = arith.constant 0 : index
    %67 = vector.load %arg6[%c9, %c0_35, %c0_36] : memref<16x128x128xbf16, #tpu.memory_space<vmem>>, vector<1x128x128xbf16>
    %68 = vector.shape_cast %67 : vector<1x128x128xbf16> to vector<128x128xbf16>
    %cst_37 = arith.constant dense<0.000000e+00> : vector<8x128xf32>
    %69 = tpu.matmul %66, %68, %cst_37 {dimension_numbers = #tpu.dot_dimension_numbers<[1], [0], [0], [1], [0, 0, 1, 1], [], []>} : vector<8x128xbf16>, vector<128x128xbf16>, vector<8x128xf32> -> vector<8x128xf32>
    %70 = arith.addf %64, %69 : vector<8x128xf32>
    %71 = vector.extract_strided_slice %9 {offsets = [0, 10, 0], sizes = [8, 1, 128], strides = [1, 1, 1]} : vector<8x16x128xbf16> to vector<8x1x128xbf16>
    %72 = vector.shape_cast %71 : vector<8x1x128xbf16> to vector<8x128xbf16>
    %c10 = arith.constant 10 : index
    %c0_38 = arith.constant 0 : index
    %c0_39 = arith.constant 0 : index
    %73 = vector.load %arg6[%c10, %c0_38, %c0_39] : memref<16x128x128xbf16, #tpu.memory_space<vmem>>, vector<1x128x128xbf16>
    %74 = vector.shape_cast %73 : vector<1x128x128xbf16> to vector<128x128xbf16>
    %cst_40 = arith.constant dense<0.000000e+00> : vector<8x128xf32>
    %75 = tpu.matmul %72, %74, %cst_40 {dimension_numbers = #tpu.dot_dimension_numbers<[1], [0], [0], [1], [0, 0, 1, 1], [], []>} : vector<8x128xbf16>, vector<128x128xbf16>, vector<8x128xf32> -> vector<8x128xf32>
    %76 = arith.addf %70, %75 : vector<8x128xf32>
    %77 = vector.extract_strided_slice %9 {offsets = [0, 11, 0], sizes = [8, 1, 128], strides = [1, 1, 1]} : vector<8x16x128xbf16> to vector<8x1x128xbf16>
    %78 = vector.shape_cast %77 : vector<8x1x128xbf16> to vector<8x128xbf16>
    %c11 = arith.constant 11 : index
    %c0_41 = arith.constant 0 : index
    %c0_42 = arith.constant 0 : index
    %79 = vector.load %arg6[%c11, %c0_41, %c0_42] : memref<16x128x128xbf16, #tpu.memory_space<vmem>>, vector<1x128x128xbf16>
    %80 = vector.shape_cast %79 : vector<1x128x128xbf16> to vector<128x128xbf16>
    %cst_43 = arith.constant dense<0.000000e+00> : vector<8x128xf32>
    %81 = tpu.matmul %78, %80, %cst_43 {dimension_numbers = #tpu.dot_dimension_numbers<[1], [0], [0], [1], [0, 0, 1, 1], [], []>} : vector<8x128xbf16>, vector<128x128xbf16>, vector<8x128xf32> -> vector<8x128xf32>
    %82 = arith.addf %76, %81 : vector<8x128xf32>
    %83 = vector.extract_strided_slice %9 {offsets = [0, 12, 0], sizes = [8, 1, 128], strides = [1, 1, 1]} : vector<8x16x128xbf16> to vector<8x1x128xbf16>
    %84 = vector.shape_cast %83 : vector<8x1x128xbf16> to vector<8x128xbf16>
    %c12 = arith.constant 12 : index
    %c0_44 = arith.constant 0 : index
    %c0_45 = arith.constant 0 : index
    %85 = vector.load %arg6[%c12, %c0_44, %c0_45] : memref<16x128x128xbf16, #tpu.memory_space<vmem>>, vector<1x128x128xbf16>
    %86 = vector.shape_cast %85 : vector<1x128x128xbf16> to vector<128x128xbf16>
    %cst_46 = arith.constant dense<0.000000e+00> : vector<8x128xf32>
    %87 = tpu.matmul %84, %86, %cst_46 {dimension_numbers = #tpu.dot_dimension_numbers<[1], [0], [0], [1], [0, 0, 1, 1], [], []>} : vector<8x128xbf16>, vector<128x128xbf16>, vector<8x128xf32> -> vector<8x128xf32>
    %88 = arith.addf %82, %87 : vector<8x128xf32>
    %89 = vector.extract_strided_slice %9 {offsets = [0, 13, 0], sizes = [8, 1, 128], strides = [1, 1, 1]} : vector<8x16x128xbf16> to vector<8x1x128xbf16>
    %90 = vector.shape_cast %89 : vector<8x1x128xbf16> to vector<8x128xbf16>
    %c13 = arith.constant 13 : index
    %c0_47 = arith.constant 0 : index
    %c0_48 = arith.constant 0 : index
    %91 = vector.load %arg6[%c13, %c0_47, %c0_48] : memref<16x128x128xbf16, #tpu.memory_space<vmem>>, vector<1x128x128xbf16>
    %92 = vector.shape_cast %91 : vector<1x128x128xbf16> to vector<128x128xbf16>
    %cst_49 = arith.constant dense<0.000000e+00> : vector<8x128xf32>
    %93 = tpu.matmul %90, %92, %cst_49 {dimension_numbers = #tpu.dot_dimension_numbers<[1], [0], [0], [1], [0, 0, 1, 1], [], []>} : vector<8x128xbf16>, vector<128x128xbf16>, vector<8x128xf32> -> vector<8x128xf32>
    %94 = arith.addf %88, %93 : vector<8x128xf32>
    %95 = vector.extract_strided_slice %9 {offsets = [0, 14, 0], sizes = [8, 1, 128], strides = [1, 1, 1]} : vector<8x16x128xbf16> to vector<8x1x128xbf16>
    %96 = vector.shape_cast %95 : vector<8x1x128xbf16> to vector<8x128xbf16>
    %c14 = arith.constant 14 : index
    %c0_50 = arith.constant 0 : index
    %c0_51 = arith.constant 0 : index
    %97 = vector.load %arg6[%c14, %c0_50, %c0_51] : memref<16x128x128xbf16, #tpu.memory_space<vmem>>, vector<1x128x128xbf16>
    %98 = vector.shape_cast %97 : vector<1x128x128xbf16> to vector<128x128xbf16>
    %cst_52 = arith.constant dense<0.000000e+00> : vector<8x128xf32>
    %99 = tpu.matmul %96, %98, %cst_52 {dimension_numbers = #tpu.dot_dimension_numbers<[1], [0], [0], [1], [0, 0, 1, 1], [], []>} : vector<8x128xbf16>, vector<128x128xbf16>, vector<8x128xf32> -> vector<8x128xf32>
    %100 = arith.addf %94, %99 : vector<8x128xf32>
    %101 = vector.extract_strided_slice %9 {offsets = [0, 15, 0], sizes = [8, 1, 128], strides = [1, 1, 1]} : vector<8x16x128xbf16> to vector<8x1x128xbf16>
    %102 = vector.shape_cast %101 : vector<8x1x128xbf16> to vector<8x128xbf16>
    %c15 = arith.constant 15 : index
    %c0_53 = arith.constant 0 : index
    %c0_54 = arith.constant 0 : index
    %103 = vector.load %arg6[%c15, %c0_53, %c0_54] : memref<16x128x128xbf16, #tpu.memory_space<vmem>>, vector<1x128x128xbf16>
    %104 = vector.shape_cast %103 : vector<1x128x128xbf16> to vector<128x128xbf16>
    %cst_55 = arith.constant dense<0.000000e+00> : vector<8x128xf32>
    %105 = tpu.matmul %102, %104, %cst_55 {dimension_numbers = #tpu.dot_dimension_numbers<[1], [0], [0], [1], [0, 0, 1, 1], [], []>} : vector<8x128xbf16>, vector<128x128xbf16>, vector<8x128xf32> -> vector<8x128xf32>
    %106 = arith.addf %100, %105 : vector<8x128xf32>
    %c0_56 = arith.constant 0 : index
    %c0_57 = arith.constant 0 : index
    %107 = vector.load %arg7[%c0_56, %c0_57] : memref<1x128xf32, #tpu.memory_space<vmem>>, vector<1x128xf32>
    %108 = vector.broadcast %107 : vector<1x128xf32> to vector<8x128xf32>
    %109 = arith.addf %106, %108 : vector<8x128xf32>
    %cst_58 = arith.constant 0.000000e+00 : f32
    %110 = vector.broadcast %cst_58 : f32 to vector<8x128xf32>
    %111 = arith.maximumf %109, %110 : vector<8x128xf32>
    %112 = arith.truncf %111 : vector<8x128xf32> to vector<8x128xbf16>
    %c0_59 = arith.constant 0 : index
    %c0_60 = arith.constant 0 : index
    %113 = vector.load %arg8[%c0_59, %c0_60] : memref<128x256xbf16, #tpu.memory_space<vmem>>, vector<128x256xbf16>
    %cst_61 = arith.constant dense<0.000000e+00> : vector<8x256xf32>
    %114 = tpu.matmul %112, %113, %cst_61 {dimension_numbers = #tpu.dot_dimension_numbers<[1], [0], [0], [1], [0, 0, 1, 1], [], []>} : vector<8x128xbf16>, vector<128x256xbf16>, vector<8x256xf32> -> vector<8x256xf32>
    %c0_62 = arith.constant 0 : index
    %c0_63 = arith.constant 0 : index
    %115 = vector.load %arg2[%c0_62, %c0_63] : memref<8x256xf32, #tpu.memory_space<vmem>>, vector<8x256xf32>
    %116 = arith.addf %114, %115 : vector<8x256xf32>
    %cst_64 = arith.constant 0.000000e+00 : f32
    %117 = vector.broadcast %cst_64 : f32 to vector<8x256xf32>
    %118 = arith.maximumf %116, %117 : vector<8x256xf32>
    %c0_65 = arith.constant 0 : index
    %c0_66 = arith.constant 0 : index
    %119 = vector.load %arg3[%c0_65, %c0_66] : memref<256x64xbf16, #tpu.memory_space<vmem>>, vector<256x64xbf16>
    %c0_67 = arith.constant 0 : index
    %c0_68 = arith.constant 0 : index
    %120 = vector.load %arg9[%c0_67, %c0_68] : memref<64x256xbf16, #tpu.memory_space<vmem>>, vector<64x256xbf16>
    %cst_69 = arith.constant dense<0.000000e+00> : vector<256x256xf32>
    %121 = tpu.matmul %119, %120, %cst_69 {dimension_numbers = #tpu.dot_dimension_numbers<[1], [0], [0], [1], [0, 0, 1, 1], [], []>} : vector<256x64xbf16>, vector<64x256xbf16>, vector<256x256xf32> -> vector<256x256xf32>
    %c0_70 = arith.constant 0 : index
    %c0_71 = arith.constant 0 : index
    %122 = vector.load %arg10[%c0_70, %c0_71] : memref<1x256xf32, #tpu.memory_space<vmem>>, vector<1x256xf32>
    %123 = vector.broadcast %122 : vector<1x256xf32> to vector<256x256xf32>
    %124 = arith.addf %121, %123 : vector<256x256xf32>
    %cst_72 = arith.constant 0.000000e+00 : f32
    %125 = vector.broadcast %cst_72 : f32 to vector<256x256xf32>
    %126 = arith.maximumf %124, %125 : vector<256x256xf32>
    %127 = vector.shape_cast %126 : vector<256x256xf32> to vector<8x32x256xf32>
    %128 = vector.shape_cast %118 : vector<8x256xf32> to vector<8x1x256xf32>
    %129 = vector.broadcast %128 : vector<8x1x256xf32> to vector<8x32x256xf32>
    %130 = arith.mulf %127, %129 : vector<8x32x256xf32>
    %131 = vector.shape_cast %130 : vector<8x32x256xf32> to vector<256x256xf32>
    %132 = arith.truncf %131 : vector<256x256xf32> to vector<256x256xbf16>
    %c0_73 = arith.constant 0 : index
    %c0_74 = arith.constant 0 : index
    %133 = vector.load %arg11[%c0_73, %c0_74] : memref<256x256xbf16, #tpu.memory_space<vmem>>, vector<256x256xbf16>
    %cst_75 = arith.constant dense<0.000000e+00> : vector<256x256xf32>
    %134 = tpu.matmul %132, %133, %cst_75 {dimension_numbers = #tpu.dot_dimension_numbers<[1], [0], [0], [1], [0, 0, 1, 1], [], []>} : vector<256x256xbf16>, vector<256x256xbf16>, vector<256x256xf32> -> vector<256x256xf32>
    %c0_76 = arith.constant 0 : index
    %c0_77 = arith.constant 0 : index
    %135 = vector.load %arg12[%c0_76, %c0_77] : memref<1x256xf32, #tpu.memory_space<vmem>>, vector<1x256xf32>
    %136 = vector.broadcast %135 : vector<1x256xf32> to vector<256x256xf32>
    %137 = arith.addf %134, %136 : vector<256x256xf32>
    %cst_78 = arith.constant 0.000000e+00 : f32
    %138 = vector.broadcast %cst_78 : f32 to vector<256x256xf32>
    %139 = arith.maximumf %137, %138 : vector<256x256xf32>
    %140 = arith.truncf %139 : vector<256x256xf32> to vector<256x256xbf16>
    %c0_79 = arith.constant 0 : index
    %c0_80 = arith.constant 0 : index
    %141 = vector.load %arg13[%c0_79, %c0_80] : memref<256x128xbf16, #tpu.memory_space<vmem>>, vector<256x128xbf16>
    %cst_81 = arith.constant dense<0.000000e+00> : vector<256x128xf32>
    %142 = tpu.matmul %140, %141, %cst_81 {dimension_numbers = #tpu.dot_dimension_numbers<[1], [0], [0], [1], [0, 0, 1, 1], [], []>} : vector<256x256xbf16>, vector<256x128xbf16>, vector<256x128xf32> -> vector<256x128xf32>
    %c0_82 = arith.constant 0 : index
    %c0_83 = arith.constant 0 : index
    %143 = vector.load %arg14[%c0_82, %c0_83] : memref<1x128xf32, #tpu.memory_space<vmem>>, vector<1x128xf32>
    %144 = vector.broadcast %143 : vector<1x128xf32> to vector<256x128xf32>
    %145 = arith.addf %142, %144 : vector<256x128xf32>
    %c0_84 = arith.constant 0 : index
    %c0_85 = arith.constant 0 : index
    %146 = vector.load %arg15[%c0_84, %c0_85] : memref<256x128xf32, #tpu.memory_space<vmem>>, vector<256x128xf32>
    tpu.vector_store %arg15[%c0_84, %c0_85], %145 {strides = array<i32>} : memref<256x128xf32, #tpu.memory_space<vmem>>, vector<256x128xf32>,
    return
  }
  func.func @transform_0(%arg0: i32) -> (i32, i32) {
    %c0_i32 = arith.constant 0 : i32
    %c0_i32_0 = arith.constant 0 : i32
    return %arg0, %c0_i32 : i32, i32
  }
  func.func @transform_1(%arg0: i32) -> (i32, i32) {
    %c0_i32 = arith.constant 0 : i32
    %c0_i32_0 = arith.constant 0 : i32
    return %arg0, %c0_i32 : i32, i32
  }
  func.func @transform_2(%arg0: i32) -> (i32, i32) {
    %c0_i32 = arith.constant 0 : i32
    %c0_i32_0 = arith.constant 0 : i32
    return %arg0, %c0_i32 : i32, i32
  }
  func.func @transform_3(%arg0: i32) -> (i32, i32) {
    %c0_i32 = arith.constant 0 : i32
    %c0_i32_0 = arith.constant 0 : i32
    %c0_i32_1 = arith.constant 0 : i32
    return %c0_i32, %c0_i32_0 : i32, i32
  }
  func.func @transform_4(%arg0: i32) -> (i32, i32) {
    %c0_i32 = arith.constant 0 : i32
    %c0_i32_0 = arith.constant 0 : i32
    %c0_i32_1 = arith.constant 0 : i32
    return %c0_i32, %c0_i32_0 : i32, i32
  }
  func.func @transform_5(%arg0: i32) -> (i32, i32, i32) {
    %c0_i32 = arith.constant 0 : i32
    %c0_i32_0 = arith.constant 0 : i32
    %c0_i32_1 = arith.constant 0 : i32
    %c0_i32_2 = arith.constant 0 : i32
    return %c0_i32, %c0_i32_0, %c0_i32_1 : i32, i32, i32
  }
  func.func @transform_6(%arg0: i32) -> (i32, i32) {
    %c0_i32 = arith.constant 0 : i32
    %c0_i32_0 = arith.constant 0 : i32
    %c0_i32_1 = arith.constant 0 : i32
    return %c0_i32, %c0_i32_0 : i32, i32
  }
  func.func @transform_7(%arg0: i32) -> (i32, i32) {
    %c0_i32 = arith.constant 0 : i32
    %c0_i32_0 = arith.constant 0 : i32
    %c0_i32_1 = arith.constant 0 : i32
    return %c0_i32, %c0_i32_0 : i32, i32
  }
  func.func @transform_8(%arg0: i32) -> (i32, i32) {
    %c0_i32 = arith.constant 0 : i32
    %c0_i32_0 = arith.constant 0 : i32
    %c0_i32_1 = arith.constant 0 : i32
    return %c0_i32, %c0_i32_0 : i32, i32
  }
  func.func @transform_9(%arg0: i32) -> (i32, i32) {
    %c0_i32 = arith.constant 0 : i32
    %c0_i32_0 = arith.constant 0 : i32
    %c0_i32_1 = arith.constant 0 : i32
    return %c0_i32, %c0_i32_0 : i32, i32
  }
  func.func @transform_10(%arg0: i32) -> (i32, i32) {
    %c0_i32 = arith.constant 0 : i32
    %c0_i32_0 = arith.constant 0 : i32
    %c0_i32_1 = arith.constant 0 : i32
    return %c0_i32, %c0_i32_0 : i32, i32
  }
  func.func @transform_11(%arg0: i32) -> (i32, i32) {
    %c0_i32 = arith.constant 0 : i32
    %c0_i32_0 = arith.constant 0 : i32
    %c0_i32_1 = arith.constant 0 : i32
    return %c0_i32, %c0_i32_0 : i32, i32
  }
  func.func @transform_12(%arg0: i32) -> (i32, i32) {
    %c0_i32 = arith.constant 0 : i32
    %c0_i32_0 = arith.constant 0 : i32
    %c0_i32_1 = arith.constant 0 : i32
    return %c0_i32, %c0_i32_0 : i32, i32
  }
  func.func @transform_13(%arg0: i32) -> (i32, i32) {
    %c0_i32 = arith.constant 0 : i32
    %c0_i32_0 = arith.constant 0 : i32
    %c0_i32_1 = arith.constant 0 : i32
    return %c0_i32, %c0_i32_0 : i32, i32
  }
  func.func @transform_14(%arg0: i32) -> (i32, i32) {
    %c0_i32 = arith.constant 0 : i32
    %c0_i32_0 = arith.constant 0 : i32
    return %arg0, %c0_i32 : i32, i32
  }
}

</mosaic_0001>

<llo_original>
// kernel: iqn_forward.3
$region0: #{iqn_forward.3}
  #allocation0 [shape = 'u32[]', space=smem, size = 0x4, offset = 0x4, fixed_abs, tag = 'smem constant byte address 0x4 - core index']
  #allocation1 [shape = 'u32[144,128]{1,0:T(1,128)}', space=vmem, size = 0x12000, scoped, tag = 'internal scratch']
  %s0 = inlined_call_operand.vmem [shape: bf16[1024,256], index: 0, kind: input, shape index: {}]
  %s1 = inlined_call_operand.vmem [shape: bf16[256,128], index: 1, kind: input, shape index: {}]
  %s2 = inlined_call_operand.vmem [shape: f32[1,128], index: 2, kind: input, shape index: {}]
  %s3 = inlined_call_operand.vmem [shape: bf16[1024,128], index: 3, kind: output, shape index: {}]
  %s4 = sld [smem:[#allocation0]]
  $region45: #{iqn_forward.3} parent=0
    _
  %s6 = ssub.s32 1, %s4
  %s7 = scalar_select 0, %s6, %s4
  loop: start=0, step=1, limit=4
  $region2: #{iqn_forward.3} parent=0 // loop_pre_header
    _
  $region3: #{iqn_forward.3} parent=0 // loop_header
    %s9 = sphi 0, %s13
    %p10 = scmp.ge.s32.totalorder %s9, 4
    %s19 = sphi 0, %s21
    %s22 = sphi 0, %s19
    %s23 = sphi 0, %s22
    %s39 = sphi 0, %s23
    %s43 = sphi 0, %s43
    %s45 = sphi 0, %s43
    %s46 = sphi 0, %s45
    %s60 = sphi 0, %s46
    %s64 = sphi 0, %s64
    %s66 = sphi 0, %s64
    %s67 = sphi 0, %s66
    %s81 = sphi 0, %s67
    %s87 = sphi 0, %s89
    %s90 = sphi 0, %s87
    %s91 = sphi 0, %s90
    %s107 = sphi 0, %s91
  $region4: #{iqn_forward.3} parent=0 // loop_header_branch
    %12 = sbr.rel (%p10) target = $region8
  $region5: #{iqn_forward.3} parent=0 // loop_body
    %s14 = ssub.s32 %s9, 1
    %s15 = ssub.s32 %s9, 2
    %s16 = sadd.s32 %s9, 1
    %s17 = ssub.s32 %s9, %s16
    %p18 = scmp.eq.s32.totalorder %s17, 0
    %s20 = sadd.s32 %s19, 1
    %s21 = scalar_select %p18, %s19, %s20
    %p24 = pneg %p18
    %p25 = scmp.eq.s32.totalorder %s9, 1
    %p26 = por %p24, %p25
    %p27 = scmp.ne.s32.totalorder %s19, %s22
    %p28 = scmp.eq.s32.totalorder %s9, 0
    %p29 = por %p27, %p28
    %p30 = scmp.ne.s32.totalorder %s19, %s22
    %p31 = scmp.eq.s32.totalorder %s14, 1
    %p32 = por %p30, %p31
    %p33 = scmp.ne.s32.totalorder %s22, %s23
    %p34 = scmp.eq.s32.totalorder %s14, 0
    %p35 = por %p33, %p34
    %p36 = scmp.ne.s32.totalorder %s22, %s23
    %p37 = scmp.eq.s32.totalorder %s15, 1
    %p38 = por %p36, %p37
    %p40 = scmp.ne.s32.totalorder %s23, %s39
    %p41 = scmp.eq.s32.totalorder %s15, 0
    %p42 = por %p40, %p41
    %s44 = sadd.s32 %s43, 1
    %p47 = scmp.eq.s32.totalorder %s9, 1
    %p48 = scmp.ne.s32.totalorder %s43, %s45
    %p49 = scmp.eq.s32.totalorder %s9, 0
    %p50 = por %p48, %p49
    %p51 = scmp.ne.s32.totalorder %s43, %s45
    %p52 = scmp.eq.s32.totalorder %s14, 1
    %p53 = por %p51, %p52
    %p54 = scmp.ne.s32.totalorder %s45, %s46
    %p55 = scmp.eq.s32.totalorder %s14, 0
    %p56 = por %p54, %p55
    %p57 = scmp.ne.s32.totalorder %s45, %s46
    %p58 = scmp.eq.s32.totalorder %s15, 1
    %p59 = por %p57, %p58
    %p61 = scmp.ne.s32.totalorder %s46, %s60
    %p62 = scmp.eq.s32.totalorder %s15, 0
    %p63 = por %p61, %p62
    %s65 = sadd.s32 %s64, 1
    %p68 = scmp.eq.s32.totalorder %s9, 1
    %p69 = scmp.ne.s32.totalorder %s64, %s66
    %p70 = scmp.eq.s32.totalorder %s9, 0
    %p71 = por %p69, %p70
    %p72 = scmp.ne.s32.totalorder %s64, %s66
    %p73 = scmp.eq.s32.totalorder %s14, 1
    %p74 = por %p72, %p73
    %p75 = scmp.ne.s32.totalorder %s66, %s67
    %p76 = scmp.eq.s32.totalorder %s14, 0
    %p77 = por %p75, %p76
    %p78 = scmp.ne.s32.totalorder %s66, %s67
    %p79 = scmp.eq.s32.totalorder %s15, 1
    %p80 = por %p78, %p79
    %p82 = scmp.ne.s32.totalorder %s67, %s81
    %p83 = scmp.eq.s32.totalorder %s15, 0
    %p84 = por %p82, %p83
    %s85 = ssub.s32 %s9, %s16
    %p86 = scmp.eq.s32.totalorder %s85, 0
    %s88 = sadd.s32 %s87, 1
    %s89 = scalar_select %p86, %s87, %s88
    %p92 = pneg %p86
    %p93 = scmp.eq.s32.totalorder %s9, 1
    %p94 = por %p92, %p93
    %p95 = scmp.ne.s32.totalorder %s87, %s90
    %p96 = scmp.eq.s32.totalorder %s9, 0
    %p97 = por %p95, %p96
    %p98 = scmp.ne.s32.totalorder %s87, %s90
    %p99 = scmp.eq.s32.totalorder %s14, 1
    %p100 = por %p98, %p99
    %p101 = scmp.ne.s32.totalorder %s90, %s91
    %p102 = scmp.eq.s32.totalorder %s14, 0
    %p103 = por %p101, %p102
    %p104 = scmp.ne.s32.totalorder %s90, %s91
    %p105 = scmp.eq.s32.totalorder %s15, 1
    %p106 = por %p104, %p105
    %p108 = scmp.ne.s32.totalorder %s91, %s107
    %p109 = scmp.eq.s32.totalorder %s15, 0
    %p110 = por %p108, %p109
    %p111 = scmp.le.s32.totalorder 1, %s9
    %p112 = scmp.lt.s32.totalorder %s9, 3
    %p113 = pnand %p111, %p112
    %p114 = pneg %p113
    // Predicated region
    $region9: #{iqn_forward.3} parent=5 // pred_check
      _
    $region10: #{iqn_forward.3} parent=5 // pred_check_branch
      %116 = sbr.rel (%p113) target = $region12
    $region11: #{iqn_forward.3} parent=5 // pred_region
      %s117 = ssub.s32 %s9, 1
      // Predicated region
      $region13: #{iqn_forward.3} parent=11 // pred_check
        %p118 = pneg %p56
      $region14: #{iqn_forward.3} parent=11 // pred_check_branch
        %120 = sbr.rel (%p118) target = $region16
      $region15: #{iqn_forward.3} parent=11 // pred_region
        _
      $region16: #{iqn_forward.3} parent=11 // pred_fallthru
        _
      // Predicated region
      $region17: #{iqn_forward.3} parent=11 // pred_check
        %p121 = pneg %p77
      $region18: #{iqn_forward.3} parent=11 // pred_check_branch
        %123 = sbr.rel (%p121) target = $region20
      $region19: #{iqn_forward.3} parent=11 // pred_region
        _
      $region20: #{iqn_forward.3} parent=11 // pred_fallthru
        _
    $region12: #{iqn_forward.3} parent=5 // pred_fallthru
      _
    %p124 = scmp.lt.s32.totalorder %s9, 2
    // Predicated region
    $region21: #{iqn_forward.3} parent=5 // pred_check
      %p125 = pneg %p124
    $region22: #{iqn_forward.3} parent=5 // pred_check_branch
      %127 = sbr.rel (%p125) target = $region24
    $region23: #{iqn_forward.3} parent=5 // pred_region
      // Predicated region
      $region25: #{iqn_forward.3} parent=23 // pred_check
        %p128 = pneg %p29
      $region26: #{iqn_forward.3} parent=23 // pred_check_branch
        %130 = sbr.rel (%p128) target = $region28
      $region27: #{iqn_forward.3} parent=23 // pred_region
        %s131 = smul.u32 64, %s9
        %p132 = scmp.lt.s32.totalorder %s131, 127
        %s133 = scalar_select %p132, %s131, 127
        %s134 = smul.addr %s133, 2
        %s135 = smul.addr %s134, 4
        %s136 = scalar_lea.vmem %s0, %s135
        %s137 = smul.u32 64, %s9
      $region28: #{iqn_forward.3} parent=23 // pred_fallthru
        _
    $region24: #{iqn_forward.3} parent=5 // pred_fallthru
      _
    %p138 = scmp.le.s32.totalorder 1, %s9
    %p139 = scmp.lt.s32.totalorder %s9, 3
    %p140 = pnand %p138, %p139
    %p141 = pneg %p140
    // Predicated region
    $region29: #{iqn_forward.3} parent=5 // pred_check
      _
    $region30: #{iqn_forward.3} parent=5 // pred_check_branch
      %143 = sbr.rel (%p140) target = $region32
    $region31: #{iqn_forward.3} parent=5 // pred_region
      %s144 = ssub.s32 %s9, 1
      %s145 = smul.u32 64, %s14
      %p146 = scmp.lt.s32.totalorder %s145, 127
      %s147 = scalar_select %p146, %s145, 127
      %s148 = smul.addr %s147, 2
      %s149 = smul.addr %s148, 4
      %s150 = scalar_lea.vmem %s0, %s149
      %p151 = pneg %p35
      %p152 = pneg %p32
      %p153 = pneg %p56
      %p154 = pneg %p53
      %p155 = pneg %p77
      %p156 = pneg %p74
      %p157 = pneg %p103
      %p158 = pneg %p100
      %s159 = smul.u32 64, %s14
      %p160 = scmp.lt.s32.totalorder %s159, 127
      %s161 = scalar_select %p160, %s159, 127
      %s162 = smul.addr %s161, 4
      %s163 = scalar_lea.vmem %s3, %s162
      %s164 = smul.u32 64, %s14
      %p165 = scmp.lt.s32.totalorder %s164, 127
      %s166 = scalar_select %p165, %s164, 127
      %s167 = smul.addr %s166, 2
      %s168 = smul.addr %s167, 4
      %s169 = scalar_lea.vmem %s0, %s168
      %s170 = smul.u32 64, %s14
      %s171 = smul.u32 64, %s14
      %p172 = scmp.lt.s32.totalorder %s171, 127
      %s173 = scalar_select %p172, %s171, 127
      %s174 = smul.addr %s173, 4
      %s175 = scalar_lea.vmem %s3, %s174
      %s176 = smul.u32 64, %s14
      %v178 = vld [vmem:[%s169] sm:$0xff]
      %v179 = vld [vmem:[%s169 + $0x8] sm:$0xff]
      %v180 = vld [vmem:[%s169 + $0x10] sm:$0xff]
      %v181 = vld [vmem:[%s169 + $0x18] sm:$0xff]
      %v182 = vld [vmem:[%s169 + $0x20] sm:$0xff]
      %v183 = vld [vmem:[%s169 + $0x28] sm:$0xff]
      %v184 = vld [vmem:[%s169 + $0x30] sm:$0xff]
      %v185 = vld [vmem:[%s169 + $0x38] sm:$0xff]
      %v186 = vld [vmem:[%s169 + $0x40] sm:$0xff]
      %v187 = vld [vmem:[%s169 + $0x48] sm:$0xff]
      %v188 = vld [vmem:[%s169 + $0x50] sm:$0xff]
      %v189 = vld [vmem:[%s169 + $0x58] sm:$0xff]
      %v190 = vld [vmem:[%s169 + $0x60] sm:$0xff]
      %v191 = vld [vmem:[%s169 + $0x68] sm:$0xff]
      %v192 = vld [vmem:[%s169 + $0x70] sm:$0xff]
      %v193 = vld [vmem:[%s169 + $0x78] sm:$0xff]
      %v194 = vld [vmem:[%s169 + $0x80] sm:$0xff]
      %v195 = vld [vmem:[%s169 + $0x88] sm:$0xff]
      %v196 = vld [vmem:[%s169 + $0x90] sm:$0xff]
      %v197 = vld [vmem:[%s169 + $0x98] sm:$0xff]
      %v198 = vld [vmem:[%s169 + $0xa0] sm:$0xff]
      %v199 = vld [vmem:[%s169 + $0xa8] sm:$0xff]
      %v200 = vld [vmem:[%s169 + $0xb0] sm:$0xff]
      %v201 = vld [vmem:[%s169 + $0xb8] sm:$0xff]
      %v202 = vld [vmem:[%s169 + $0xc0] sm:$0xff]
      %v203 = vld [vmem:[%s169 + $0xc8] sm:$0xff]
      %v204 = vld [vmem:[%s169 + $0xd0] sm:$0xff]
      %v205 = vld [vmem:[%s169 + $0xd8] sm:$0xff]
      %v206 = vld [vmem:[%s169 + $0xe0] sm:$0xff]
      %v207 = vld [vmem:[%s169 + $0xe8] sm:$0xff]
      %v208 = vld [vmem:[%s169 + $0xf0] sm:$0xff]
      %v209 = vld [vmem:[%s169 + $0xf8] sm:$0xff]
      %v210 = vld [vmem:[%s169 + $0x100] sm:$0xff]
      %v211 = vld [vmem:[%s169 + $0x108] sm:$0xff]
      %v212 = vld [vmem:[%s169 + $0x110] sm:$0xff]
      %v213 = vld [vmem:[%s169 + $0x118] sm:$0xff]
      %v214 = vld [vmem:[%s169 + $0x120] sm:$0xff]
      %v215 = vld [vmem:[%s169 + $0x128] sm:$0xff]
      %v216 = vld [vmem:[%s169 + $0x130] sm:$0xff]
      %v217 = vld [vmem:[%s169 + $0x138] sm:$0xff]
      %v218 = vld [vmem:[%s169 + $0x140] sm:$0xff]
      %v219 = vld [vmem:[%s169 + $0x148] sm:$0xff]
      %v220 = vld [vmem:[%s169 + $0x150] sm:$0xff]
      %v221 = vld [vmem:[%s169 + $0x158] sm:$0xff]
      %v222 = vld [vmem:[%s169 + $0x160] sm:$0xff]
      %v223 = vld [vmem:[%s169 + $0x168] sm:$0xff]
      %v224 = vld [vmem:[%s169 + $0x170] sm:$0xff]
      %v225 = vld [vmem:[%s169 + $0x178] sm:$0xff]
      %v226 = vld [vmem:[%s169 + $0x180] sm:$0xff]
      %v227 = vld [vmem:[%s169 + $0x188] sm:$0xff]
      %v228 = vld [vmem:[%s169 + $0x190] sm:$0xff]
      %v229 = vld [vmem:[%s169 + $0x198] sm:$0xff]
      %v230 = vld [vmem:[%s169 + $0x1a0] sm:$0xff]
      %v231 = vld [vmem:[%s169 + $0x1a8] sm:$0xff]
      %v232 = vld [vmem:[%s169 + $0x1b0] sm:$0xff]
      %v233 = vld [vmem:[%s169 + $0x1b8] sm:$0xff]
      %v234 = vld [vmem:[%s169 + $0x1c0] sm:$0xff]
      %v235 = vld [vmem:[%s169 + $0x1c8] sm:$0xff]
      %v236 = vld [vmem:[%s169 + $0x1d0] sm:$0xff]
      %v237 = vld [vmem:[%s169 + $0x1d8] sm:$0xff]
      %v238 = vld [vmem:[%s169 + $0x1e0] sm:$0xff]
      %v239 = vld [vmem:[%s169 + $0x1e8] sm:$0xff]
      %v240 = vld [vmem:[%s169 + $0x1f0] sm:$0xff]
      %v241 = vld [vmem:[%s169 + $0x1f8] sm:$0xff]
      %v242 = vld [vmem:[%s1] sm:$0xf]
      %v243 = vld [vmem:[%s1 + $0x4] sm:$0xf]
      %v244 = vld [vmem:[%s1 + $0x8] sm:$0xf]
      %v245 = vld [vmem:[%s1 + $0xc] sm:$0xf]
      %v246 = vld [vmem:[%s1 + $0x10] sm:$0xf]
      %v247 = vld [vmem:[%s1 + $0x14] sm:$0xf]
      %v248 = vld [vmem:[%s1 + $0x18] sm:$0xf]
      %v249 = vld [vmem:[%s1 + $0x1c] sm:$0xf]
      %v250 = vld [vmem:[%s1 + $0x20] sm:$0xf]
      %v251 = vld [vmem:[%s1 + $0x24] sm:$0xf]
      %v252 = vld [vmem:[%s1 + $0x28] sm:$0xf]
      %v253 = vld [vmem:[%s1 + $0x2c] sm:$0xf]
      %v254 = vld [vmem:[%s1 + $0x30] sm:$0xf]
      %v255 = vld [vmem:[%s1 + $0x34] sm:$0xf]
      %v256 = vld [vmem:[%s1 + $0x38] sm:$0xf]
      %v257 = vld [vmem:[%s1 + $0x3c] sm:$0xf]
      %v258 = vld [vmem:[%s1 + $0x40] sm:$0xf]
      %v259 = vld [vmem:[%s1 + $0x44] sm:$0xf]
      %v260 = vld [vmem:[%s1 + $0x48] sm:$0xf]
      %v261 = vld [vmem:[%s1 + $0x4c] sm:$0xf]
      %v262 = vld [vmem:[%s1 + $0x50] sm:$0xf]
      %v263 = vld [vmem:[%s1 + $0x54] sm:$0xf]
      %v264 = vld [vmem:[%s1 + $0x58] sm:$0xf]
      %v265 = vld [vmem:[%s1 + $0x5c] sm:$0xf]
      %v266 = vld [vmem:[%s1 + $0x60] sm:$0xf]
      %v267 = vld [vmem:[%s1 + $0x64] sm:$0xf]
      %v268 = vld [vmem:[%s1 + $0x68] sm:$0xf]
      %v269 = vld [vmem:[%s1 + $0x6c] sm:$0xf]
      %v270 = vld [vmem:[%s1 + $0x70] sm:$0xf]
      %v271 = vld [vmem:[%s1 + $0x74] sm:$0xf]
      %v272 = vld [vmem:[%s1 + $0x78] sm:$0xf]
      %v273 = vld [vmem:[%s1 + $0x7c] sm:$0xf]
      %v274 = vld [vmem:[%s2] sm:$0x1]
      %v276 = vlaneseq
      %v277 = vshrl.u32 %v276, 7
      %v278 = vsub.s32 0, %v277
      %v279 = vrot.slane %v274, %v278
      %v345 = vunpack.c.l.b16 %v178
      %v346 = vunpack.c.h.b16 %v178
      %v347 = vunpack.c.l.b16 %v179
      %v348 = vunpack.c.h.b16 %v179
      %v349 = vunpack.c.l.b16 %v180
      %v350 = vunpack.c.h.b16 %v180
      %v351 = vunpack.c.l.b16 %v181
      %v352 = vunpack.c.h.b16 %v181
      %v353 = vunpack.c.l.b16 %v182
      %v354 = vunpack.c.h.b16 %v182
      %v355 = vunpack.c.l.b16 %v183
      %v356 = vunpack.c.h.b16 %v183
      %v357 = vunpack.c.l.b16 %v184
      %v358 = vunpack.c.h.b16 %v184
      %v359 = vunpack.c.l.b16 %v185
      %v360 = vunpack.c.h.b16 %v185
      %v361 = vunpack.c.l.b16 %v186
      %v362 = vunpack.c.h.b16 %v186
      %v363 = vunpack.c.l.b16 %v187
      %v364 = vunpack.c.h.b16 %v187
      %v365 = vunpack.c.l.b16 %v188
      %v366 = vunpack.c.h.b16 %v188
      %v367 = vunpack.c.l.b16 %v189
      %v368 = vunpack.c.h.b16 %v189
      %v369 = vunpack.c.l.b16 %v190
      %v370 = vunpack.c.h.b16 %v190
      %v371 = vunpack.c.l.b16 %v191
      %v372 = vunpack.c.h.b16 %v191
      %v373 = vunpack.c.l.b16 %v192
      %v374 = vunpack.c.h.b16 %v192
      %v375 = vunpack.c.l.b16 %v193
      %v376 = vunpack.c.h.b16 %v193
      %v377 = vunpack.c.l.b16 %v194
      %v378 = vunpack.c.h.b16 %v194
      %v379 = vunpack.c.l.b16 %v195
      %v380 = vunpack.c.h.b16 %v195
      %v381 = vunpack.c.l.b16 %v196
      %v382 = vunpack.c.h.b16 %v196
      %v383 = vunpack.c.l.b16 %v197
      %v384 = vunpack.c.h.b16 %v197
      %v385 = vunpack.c.l.b16 %v198
      %v386 = vunpack.c.h.b16 %v198
      %v387 = vunpack.c.l.b16 %v199
      %v388 = vunpack.c.h.b16 %v199
      %v389 = vunpack.c.l.b16 %v200
      %v390 = vunpack.c.h.b16 %v200
      %v391 = vunpack.c.l.b16 %v201
      %v392 = vunpack.c.h.b16 %v201
      %v393 = vunpack.c.l.b16 %v202
      %v394 = vunpack.c.h.b16 %v202
      %v395 = vunpack.c.l.b16 %v203
      %v396 = vunpack.c.h.b16 %v203
      %v397 = vunpack.c.l.b16 %v204
      %v398 = vunpack.c.h.b16 %v204
      %v399 = vunpack.c.l.b16 %v205
      %v400 = vunpack.c.h.b16 %v205
      %v401 = vunpack.c.l.b16 %v206
      %v402 = vunpack.c.h.b16 %v206
      %v403 = vunpack.c.l.b16 %v207
      %v404 = vunpack.c.h.b16 %v207
      %v405 = vunpack.c.l.b16 %v208
      %v406 = vunpack.c.h.b16 %v208
      %v407 = vunpack.c.l.b16 %v209
      %v408 = vunpack.c.h.b16 %v209
      %v409 = vunpack.c.l.b16 %v210
      %v410 = vunpack.c.h.b16 %v210
      %v411 = vunpack.c.l.b16 %v211
      %v412 = vunpack.c.h.b16 %v211
      %v413 = vunpack.c.l.b16 %v212
      %v414 = vunpack.c.h.b16 %v212
      %v415 = vunpack.c.l.b16 %v213
      %v416 = vunpack.c.h.b16 %v213
      %v417 = vunpack.c.l.b16 %v214
      %v418 = vunpack.c.h.b16 %v214
      %v419 = vunpack.c.l.b16 %v215
      %v420 = vunpack.c.h.b16 %v215
      %v421 = vunpack.c.l.b16 %v216
      %v422 = vunpack.c.h.b16 %v216
      %v423 = vunpack.c.l.b16 %v217
      %v424 = vunpack.c.h.b16 %v217
      %v425 = vunpack.c.l.b16 %v218
      %v426 = vunpack.c.h.b16 %v218
      %v427 = vunpack.c.l.b16 %v219
      %v428 = vunpack.c.h.b16 %v219
      %v429 = vunpack.c.l.b16 %v220
      %v430 = vunpack.c.h.b16 %v220
      %v431 = vunpack.c.l.b16 %v221
      %v432 = vunpack.c.h.b16 %v221
      %v433 = vunpack.c.l.b16 %v222
      %v434 = vunpack.c.h.b16 %v222
      %v435 = vunpack.c.l.b16 %v223
      %v436 = vunpack.c.h.b16 %v223
      %v437 = vunpack.c.l.b16 %v224
      %v438 = vunpack.c.h.b16 %v224
      %v439 = vunpack.c.l.b16 %v225
      %v440 = vunpack.c.h.b16 %v225
      %v441 = vunpack.c.l.b16 %v226
      %v442 = vunpack.c.h.b16 %v226
      %v443 = vunpack.c.l.b16 %v227
      %v444 = vunpack.c.h.b16 %v227
      %v445 = vunpack.c.l.b16 %v228
      %v446 = vunpack.c.h.b16 %v228
      %v447 = vunpack.c.l.b16 %v229
      %v448 = vunpack.c.h.b16 %v229
      %v449 = vunpack.c.l.b16 %v230
      %v450 = vunpack.c.h.b16 %v230
      %v451 = vunpack.c.l.b16 %v231
      %v452 = vunpack.c.h.b16 %v231
      %v453 = vunpack.c.l.b16 %v232
      %v454 = vunpack.c.h.b16 %v232
      %v455 = vunpack.c.l.b16 %v233
      %v456 = vunpack.c.h.b16 %v233
      %v457 = vunpack.c.l.b16 %v234
      %v458 = vunpack.c.h.b16 %v234
      %v459 = vunpack.c.l.b16 %v235
      %v460 = vunpack.c.h.b16 %v235
      %v461 = vunpack.c.l.b16 %v236
      %v462 = vunpack.c.h.b16 %v236
      %v463 = vunpack.c.l.b16 %v237
      %v464 = vunpack.c.h.b16 %v237
      %v465 = vunpack.c.l.b16 %v238
      %v466 = vunpack.c.h.b16 %v238
      %v467 = vunpack.c.l.b16 %v239
      %v468 = vunpack.c.h.b16 %v239
      %v469 = vunpack.c.l.b16 %v240
      %v470 = vunpack.c.h.b16 %v240
      %v471 = vunpack.c.l.b16 %v241
      %v472 = vunpack.c.h.b16 %v241
      %v473 = vpack.c.b16 %v347, %v345
      %v474 = vpack.c.b16 %v348, %v346
      %v475 = vpack.c.b16 %v351, %v349
      %v476 = vpack.c.b16 %v352, %v350
      %v477 = vpack.c.b16 %v355, %v353
      %v478 = vpack.c.b16 %v356, %v354
      %v479 = vpack.c.b16 %v359, %v357
      %v480 = vpack.c.b16 %v360, %v358
      %v481 = vpack.c.b16 %v363, %v361
      %v482 = vpack.c.b16 %v364, %v362
      %v483 = vpack.c.b16 %v367, %v365
      %v484 = vpack.c.b16 %v368, %v366
      %v485 = vpack.c.b16 %v371, %v369
      %v486 = vpack.c.b16 %v372, %v370
      %v487 = vpack.c.b16 %v375, %v373
      %v488 = vpack.c.b16 %v376, %v374
      %v489 = vpack.c.b16 %v379, %v377
      %v490 = vpack.c.b16 %v380, %v378
      %v491 = vpack.c.b16 %v383, %v381
      %v492 = vpack.c.b16 %v384, %v382
      %v493 = vpack.c.b16 %v387, %v385
      %v494 = vpack.c.b16 %v388, %v386
      %v495 = vpack.c.b16 %v391, %v389
      %v496 = vpack.c.b16 %v392, %v390
      %v497 = vpack.c.b16 %v395, %v393
      %v498 = vpack.c.b16 %v396, %v394
      %v499 = vpack.c.b16 %v399, %v397
      %v500 = vpack.c.b16 %v400, %v398
      %v501 = vpack.c.b16 %v403, %v401
      %v502 = vpack.c.b16 %v404, %v402
      %v503 = vpack.c.b16 %v407, %v405
      %v504 = vpack.c.b16 %v408, %v406
      %v505 = vpack.c.b16 %v411, %v409
      %v506 = vpack.c.b16 %v412, %v410
      %v507 = vpack.c.b16 %v415, %v413
      %v508 = vpack.c.b16 %v416, %v414
      %v509 = vpack.c.b16 %v419, %v417
      %v510 = vpack.c.b16 %v420, %v418
      %v511 = vpack.c.b16 %v423, %v421
      %v512 = vpack.c.b16 %v424, %v422
      %v513 = vpack.c.b16 %v427, %v425
      %v514 = vpack.c.b16 %v428, %v426
      %v515 = vpack.c.b16 %v431, %v429
      %v516 = vpack.c.b16 %v432, %v430
      %v517 = vpack.c.b16 %v435, %v433
      %v518 = vpack.c.b16 %v436, %v434
      %v519 = vpack.c.b16 %v439, %v437
      %v520 = vpack.c.b16 %v440, %v438
      %v521 = vpack.c.b16 %v443, %v441
      %v522 = vpack.c.b16 %v444, %v442
      %v523 = vpack.c.b16 %v447, %v445
      %v524 = vpack.c.b16 %v448, %v446
      %v525 = vpack.c.b16 %v451, %v449
      %v526 = vpack.c.b16 %v452, %v450
      %v527 = vpack.c.b16 %v455, %v453
      %v528 = vpack.c.b16 %v456, %v454
      %v529 = vpack.c.b16 %v459, %v457
      %v530 = vpack.c.b16 %v460, %v458
      %v531 = vpack.c.b16 %v463, %v461
      %v532 = vpack.c.b16 %v464, %v462
      %v533 = vpack.c.b16 %v467, %v465
      %v534 = vpack.c.b16 %v468, %v466
      %v535 = vpack.c.b16 %v471, %v469
      %v536 = vpack.c.b16 %v472, %v470
      %v633 = vunpack.c.l.b16 %v242
      %v634 = vunpack.c.l.b16 %v243
      %v635 = vunpack.c.l.b16 %v244
      %v636 = vunpack.c.l.b16 %v245
      %v637 = vunpack.c.l.b16 %v246
      %v638 = vunpack.c.l.b16 %v247
      %v639 = vunpack.c.l.b16 %v248
      %v640 = vunpack.c.l.b16 %v249
      %v641 = vunpack.c.l.b16 %v250
      %v642 = vunpack.c.l.b16 %v251
      %v643 = vunpack.c.l.b16 %v252
      %v644 = vunpack.c.l.b16 %v253
      %v645 = vunpack.c.l.b16 %v254
      %v646 = vunpack.c.l.b16 %v255
      %v647 = vunpack.c.l.b16 %v256
      %v648 = vunpack.c.l.b16 %v257
      %v649 = vunpack.c.l.b16 %v258
      %v650 = vunpack.c.l.b16 %v259
      %v651 = vunpack.c.l.b16 %v260
      %v652 = vunpack.c.l.b16 %v261
      %v653 = vunpack.c.l.b16 %v262
      %v654 = vunpack.c.l.b16 %v263
      %v655 = vunpack.c.l.b16 %v264
      %v656 = vunpack.c.l.b16 %v265
      %v657 = vunpack.c.l.b16 %v266
      %v658 = vunpack.c.l.b16 %v267
      %v659 = vunpack.c.l.b16 %v268
      %v660 = vunpack.c.l.b16 %v269
      %v661 = vunpack.c.l.b16 %v270
      %v662 = vunpack.c.l.b16 %v271
      %v663 = vunpack.c.l.b16 %v272
      %v664 = vunpack.c.l.b16 %v273
      %v665 = vpack.c.b16 %v634, %v633
      %v666 = vpack.c.b16 %v636, %v635
      %v667 = vpack.c.b16 %v638, %v637
      %v668 = vpack.c.b16 %v640, %v639
      %v669 = vpack.c.b16 %v642, %v641
      %v670 = vpack.c.b16 %v644, %v643
      %v671 = vpack.c.b16 %v646, %v645
      %v672 = vpack.c.b16 %v648, %v647
      %v673 = vpack.c.b16 %v650, %v649
      %v674 = vpack.c.b16 %v652, %v651
      %v675 = vpack.c.b16 %v654, %v653
      %v676 = vpack.c.b16 %v656, %v655
      %v677 = vpack.c.b16 %v658, %v657
      %v678 = vpack.c.b16 %v660, %v659
      %v679 = vpack.c.b16 %v662, %v661
      %v680 = vpack.c.b16 %v664, %v663
      %697 = vmatprep.subr.bf16.mxu0 0
      %698 = vmatpush1.bf16.msra.mxu0 %v665
      %699 = vmatprep.subr.bf16.mxu0 0
      %700 = vmatpush1.bf16.msra.mxu0 %v666
      %701 = vmatprep.subr.bf16.mxu0 0
      %702 = vmatpush1.bf16.msra.mxu0 %v667
      %703 = vmatprep.subr.bf16.mxu0 0
      %704 = vmatpush1.bf16.msra.mxu0 %v668
      %705 = vmatprep.subr.bf16.mxu0 0
      %706 = vmatpush1.bf16.msra.mxu0 %v669
      %707 = vmatprep.subr.bf16.mxu0 0
      %708 = vmatpush1.bf16.msra.mxu0 %v670
      %709 = vmatprep.subr.bf16.mxu0 0
      %710 = vmatpush1.bf16.msra.mxu0 %v671
      %711 = vmatprep.subr.bf16.mxu0 0
      %712 = vmatpush1.bf16.msra.mxu0 %v672
      %713 = vmatprep.subr.bf16.mxu0 0
      %714 = vmatpush1.bf16.msra.mxu0 %v673
      %715 = vmatprep.subr.bf16.mxu0 0
      %716 = vmatpush1.bf16.msra.mxu0 %v674
      %717 = vmatprep.subr.bf16.mxu0 0
      %718 = vmatpush1.bf16.msra.mxu0 %v675
      %719 = vmatprep.subr.bf16.mxu0 0
      %720 = vmatpush1.bf16.msra.mxu0 %v676
      %721 = vmatprep.subr.bf16.mxu0 0
      %722 = vmatpush1.bf16.msra.mxu0 %v677
      %723 = vmatprep.subr.bf16.mxu0 0
      %724 = vmatpush1.bf16.msra.mxu0 %v678
      %725 = vmatprep.subr.bf16.mxu0 0
      %726 = vmatpush1.bf16.msra.mxu0 %v679
      %727 = vmatprep.subr.bf16.mxu0 0
      %728 = vmatpush1.bf16.msra.mxu0 %v680
      %729 = vmatprep.mubr.bf16.mxu0 %v474
      %730 = vmatmul.mubr.bf16.gmra.mrb[0].mxu0 %v473
      %v731 = vpop.f32.mrb[0].mxu0
      %v732 = vadd.f32 %v279, %v731
      %v733 = vpop.f32.mrb[0].mxu0
      %v734 = vpop.f32.mrb[0].mxu0
      %v735 = vadd.f32 %v279, %v734
      %v736 = vpop.f32.mrb[0].mxu0
      %737 = vmatprep.mubr.bf16.mxu0 %v476
      %738 = vmatmul.mubr.bf16.gmra.mrb[0].mxu0 %v475
      %v739 = vpop.f32.mrb[0].mxu0
      %v740 = vadd.f32 %v279, %v739
      %v741 = vpop.f32.mrb[0].mxu0
      %v742 = vpop.f32.mrb[0].mxu0
      %v743 = vadd.f32 %v279, %v742
      %v744 = vpop.f32.mrb[0].mxu0
      %745 = vmatprep.mubr.bf16.mxu0 %v478
      %746 = vmatmul.mubr.bf16.gmra.mrb[0].mxu0 %v477
      %v747 = vpop.f32.mrb[0].mxu0
      %v748 = vadd.f32 %v279, %v747
      %v749 = vpop.f32.mrb[0].mxu0
      %v750 = vpop.f32.mrb[0].mxu0
      %v751 = vadd.f32 %v279, %v750
      %v752 = vpop.f32.mrb[0].mxu0
      %753 = vmatprep.mubr.bf16.mxu0 %v480
      %754 = vmatmul.mubr.bf16.gmra.mrb[0].mxu0 %v479
      %v755 = vpop.f32.mrb[0].mxu0
      %v756 = vadd.f32 %v279, %v755
      %v757 = vpop.f32.mrb[0].mxu0
      %v758 = vpop.f32.mrb[0].mxu0
      %v759 = vadd.f32 %v279, %v758
      %v760 = vpop.f32.mrb[0].mxu0
      %761 = vmatprep.mubr.bf16.mxu0 %v482
      %762 = vmatmul.mubr.bf16.gmra.mrb[0].mxu0 %v481
      %v763 = vpop.f32.mrb[0].mxu0
      %v764 = vadd.f32 %v279, %v763
      %v765 = vpop.f32.mrb[0].mxu0
      %v766 = vpop.f32.mrb[0].mxu0
      %v767 = vadd.f32 %v279, %v766
      %v768 = vpop.f32.mrb[0].mxu0
      %769 = vmatprep.mubr.bf16.mxu0 %v484
      %770 = vmatmul.mubr.bf16.gmra.mrb[0].mxu0 %v483
      %v771 = vpop.f32.mrb[0].mxu0
      %v772 = vadd.f32 %v279, %v771
      %v773 = vpop.f32.mrb[0].mxu0
      %v774 = vpop.f32.mrb[0].mxu0
      %v775 = vadd.f32 %v279, %v774
      %v776 = vpop.f32.mrb[0].mxu0
      %777 = vmatprep.mubr.bf16.mxu0 %v486
      %778 = vmatmul.mubr.bf16.gmra.mrb[0].mxu0 %v485
      %v779 = vpop.f32.mrb[0].mxu0
      %v780 = vadd.f32 %v279, %v779
      %v781 = vpop.f32.mrb[0].mxu0
      %v782 = vpop.f32.mrb[0].mxu0
      %v783 = vadd.f32 %v279, %v782
      %v784 = vpop.f32.mrb[0].mxu0
      %785 = vmatprep.mubr.bf16.mxu0 %v488
      %786 = vmatmul.mubr.bf16.gmra.mrb[0].mxu0 %v487
      %v787 = vpop.f32.mrb[0].mxu0
      %v788 = vadd.f32 %v279, %v787
      %v789 = vpop.f32.mrb[0].mxu0
      %v790 = vpop.f32.mrb[0].mxu0
      %v791 = vadd.f32 %v279, %v790
      %v792 = vpop.f32.mrb[0].mxu0
      %793 = vmatprep.mubr.bf16.mxu0 %v490
      %794 = vmatmul.mubr.bf16.gmra.mrb[0].mxu0 %v489
      %v795 = vpop.f32.mrb[0].mxu0
      %v796 = vadd.f32 %v279, %v795
      %v797 = vpop.f32.mrb[0].mxu0
      %v798 = vpop.f32.mrb[0].mxu0
      %v799 = vadd.f32 %v279, %v798
      %v800 = vpop.f32.mrb[0].mxu0
      %801 = vmatprep.mubr.bf16.mxu0 %v492
      %802 = vmatmul.mubr.bf16.gmra.mrb[0].mxu0 %v491
      %v803 = vpop.f32.mrb[0].mxu0
      %v804 = vadd.f32 %v279, %v803
      %v805 = vpop.f32.mrb[0].mxu0
      %v806 = vpop.f32.mrb[0].mxu0
      %v807 = vadd.f32 %v279, %v806
      %v808 = vpop.f32.mrb[0].mxu0
      %809 = vmatprep.mubr.bf16.mxu0 %v494
      %810 = vmatmul.mubr.bf16.gmra.mrb[0].mxu0 %v493
      %v811 = vpop.f32.mrb[0].mxu0
      %v812 = vadd.f32 %v279, %v811
      %v813 = vpop.f32.mrb[0].mxu0
      %v814 = vpop.f32.mrb[0].mxu0
      %v815 = vadd.f32 %v279, %v814
      %v816 = vpop.f32.mrb[0].mxu0
      %817 = vmatprep.mubr.bf16.mxu0 %v496
      %818 = vmatmul.mubr.bf16.gmra.mrb[0].mxu0 %v495
      %v819 = vpop.f32.mrb[0].mxu0
      %v820 = vadd.f32 %v279, %v819
      %v821 = vpop.f32.mrb[0].mxu0
      %v822 = vpop.f32.mrb[0].mxu0
      %v823 = vadd.f32 %v279, %v822
      %v824 = vpop.f32.mrb[0].mxu0
      %825 = vmatprep.mubr.bf16.mxu0 %v498
      %826 = vmatmul.mubr.bf16.gmra.mrb[0].mxu0 %v497
      %v827 = vpop.f32.mrb[0].mxu0
      %v828 = vadd.f32 %v279, %v827
      %v829 = vpop.f32.mrb[0].mxu0
      %v830 = vpop.f32.mrb[0].mxu0
      %v831 = vadd.f32 %v279, %v830
      %v832 = vpop.f32.mrb[0].mxu0
      %833 = vmatprep.mubr.bf16.mxu0 %v500
      %834 = vmatmul.mubr.bf16.gmra.mrb[0].mxu0 %v499
      %v835 = vpop.f32.mrb[0].mxu0
      %v836 = vadd.f32 %v279, %v835
      %v837 = vpop.f32.mrb[0].mxu0
      %v838 = vpop.f32.mrb[0].mxu0
      %v839 = vadd.f32 %v279, %v838
      %v840 = vpop.f32.mrb[0].mxu0
      %841 = vmatprep.mubr.bf16.mxu0 %v502
      %842 = vmatmul.mubr.bf16.gmra.mrb[0].mxu0 %v501
      %v843 = vpop.f32.mrb[0].mxu0
      %v844 = vadd.f32 %v279, %v843
      %v845 = vpop.f32.mrb[0].mxu0
      %v846 = vpop.f32.mrb[0].mxu0
      %v847 = vadd.f32 %v279, %v846
      %v848 = vpop.f32.mrb[0].mxu0
      %849 = vmatprep.mubr.bf16.mxu0 %v504
      %850 = vmatmul.mubr.bf16.gmra.mrb[0].mxu0 %v503
      %v851 = vpop.f32.mrb[0].mxu0
      %v852 = vadd.f32 %v279, %v851
      %v853 = vpop.f32.mrb[0].mxu0
      %v854 = vpop.f32.mrb[0].mxu0
      %v855 = vadd.f32 %v279, %v854
      %v856 = vpop.f32.mrb[0].mxu0
      %857 = vmatprep.mubr.bf16.mxu0 %v506
      %858 = vmatmul.mubr.bf16.gmra.mrb[0].mxu0 %v505
      %v859 = vpop.f32.mrb[0].mxu0
      %v860 = vadd.f32 %v279, %v859
      %v861 = vpop.f32.mrb[0].mxu0
      %v862 = vpop.f32.mrb[0].mxu0
      %v863 = vadd.f32 %v279, %v862
      %v864 = vpop.f32.mrb[0].mxu0
      %865 = vmatprep.mubr.bf16.mxu0 %v508
      %866 = vmatmul.mubr.bf16.gmra.mrb[0].mxu0 %v507
      %v867 = vpop.f32.mrb[0].mxu0
      %v868 = vadd.f32 %v279, %v867
      %v869 = vpop.f32.mrb[0].mxu0
      %v870 = vpop.f32.mrb[0].mxu0
      %v871 = vadd.f32 %v279, %v870
      %v872 = vpop.f32.mrb[0].mxu0
      %873 = vmatprep.mubr.bf16.mxu0 %v510
      %874 = vmatmul.mubr.bf16.gmra.mrb[0].mxu0 %v509
      %v875 = vpop.f32.mrb[0].mxu0
      %v876 = vadd.f32 %v279, %v875
      %v877 = vpop.f32.mrb[0].mxu0
      %v878 = vpop.f32.mrb[0].mxu0
      %v879 = vadd.f32 %v279, %v878
      %v880 = vpop.f32.mrb[0].mxu0
      %881 = vmatprep.mubr.bf16.mxu0 %v512
      %882 = vmatmul.mubr.bf16.gmra.mrb[0].mxu0 %v511
      %v883 = vpop.f32.mrb[0].mxu0
      %v884 = vadd.f32 %v279, %v883
      %v885 = vpop.f32.mrb[0].mxu0
      %v886 = vpop.f32.mrb[0].mxu0
      %v887 = vadd.f32 %v279, %v886
      %v888 = vpop.f32.mrb[0].mxu0
      %889 = vmatprep.mubr.bf16.mxu0 %v514
      %890 = vmatmul.mubr.bf16.gmra.mrb[0].mxu0 %v513
      %v891 = vpop.f32.mrb[0].mxu0
      %v892 = vadd.f32 %v279, %v891
      %v893 = vpop.f32.mrb[0].mxu0
      %v894 = vpop.f32.mrb[0].mxu0
      %v895 = vadd.f32 %v279, %v894
      %v896 = vpop.f32.mrb[0].mxu0
      %897 = vmatprep.mubr.bf16.mxu0 %v516
      %898 = vmatmul.mubr.bf16.gmra.mrb[0].mxu0 %v515
      %v899 = vpop.f32.mrb[0].mxu0
      %v900 = vadd.f32 %v279, %v899
      %v901 = vpop.f32.mrb[0].mxu0
      %v902 = vpop.f32.mrb[0].mxu0
      %v903 = vadd.f32 %v279, %v902
      %v904 = vpop.f32.mrb[0].mxu0
      %905 = vmatprep.mubr.bf16.mxu0 %v518
      %906 = vmatmul.mubr.bf16.gmra.mrb[0].mxu0 %v517
      %v907 = vpop.f32.mrb[0].mxu0
      %v908 = vadd.f32 %v279, %v907
      %v909 = vpop.f32.mrb[0].mxu0
      %v910 = vpop.f32.mrb[0].mxu0
      %v911 = vadd.f32 %v279, %v910
      %v912 = vpop.f32.mrb[0].mxu0
      %913 = vmatprep.mubr.bf16.mxu0 %v520
      %914 = vmatmul.mubr.bf16.gmra.mrb[0].mxu0 %v519
      %v915 = vpop.f32.mrb[0].mxu0
      %v916 = vadd.f32 %v279, %v915
      %v917 = vpop.f32.mrb[0].mxu0
      %v918 = vpop.f32.mrb[0].mxu0
      %v919 = vadd.f32 %v279, %v918
      %v920 = vpop.f32.mrb[0].mxu0
      %921 = vmatprep.mubr.bf16.mxu0 %v522
      %922 = vmatmul.mubr.bf16.gmra.mrb[0].mxu0 %v521
      %v923 = vpop.f32.mrb[0].mxu0
      %v924 = vadd.f32 %v279, %v923
      %v925 = vpop.f32.mrb[0].mxu0
      %v926 = vpop.f32.mrb[0].mxu0
      %v927 = vadd.f32 %v279, %v926
      %v928 = vpop.f32.mrb[0].mxu0
      %929 = vmatprep.mubr.bf16.mxu0 %v524
      %930 = vmatmul.mubr.bf16.gmra.mrb[0].mxu0 %v523
      %v931 = vpop.f32.mrb[0].mxu0
      %v932 = vadd.f32 %v279, %v931
      %v933 = vpop.f32.mrb[0].mxu0
      %v934 = vpop.f32.mrb[0].mxu0
      %v935 = vadd.f32 %v279, %v934
      %v936 = vpop.f32.mrb[0].mxu0
      %937 = vmatprep.mubr.bf16.mxu0 %v526
      %938 = vmatmul.mubr.bf16.gmra.mrb[0].mxu0 %v525
      %v939 = vpop.f32.mrb[0].mxu0
      %v940 = vadd.f32 %v279, %v939
      %v941 = vpop.f32.mrb[0].mxu0
      %v942 = vpop.f32.mrb[0].mxu0
      %v943 = vadd.f32 %v279, %v942
      %v944 = vpop.f32.mrb[0].mxu0
      %945 = vmatprep.mubr.bf16.mxu0 %v528
      %946 = vmatmul.mubr.bf16.gmra.mrb[0].mxu0 %v527
      %v947 = vpop.f32.mrb[0].mxu0
      %v948 = vadd.f32 %v279, %v947
      %v949 = vpop.f32.mrb[0].mxu0
      %v950 = vpop.f32.mrb[0].mxu0
      %v951 = vadd.f32 %v279, %v950
      %v952 = vpop.f32.mrb[0].mxu0
      %953 = vmatprep.mubr.bf16.mxu0 %v530
      %954 = vmatmul.mubr.bf16.gmra.mrb[0].mxu0 %v529
      %v955 = vpop.f32.mrb[0].mxu0
      %v956 = vadd.f32 %v279, %v955
      %v957 = vpop.f32.mrb[0].mxu0
      %v958 = vpop.f32.mrb[0].mxu0
      %v959 = vadd.f32 %v279, %v958
      %v960 = vpop.f32.mrb[0].mxu0
      %961 = vmatprep.mubr.bf16.mxu0 %v532
      %962 = vmatmul.mubr.bf16.gmra.mrb[0].mxu0 %v531
      %v963 = vpop.f32.mrb[0].mxu0
      %v964 = vadd.f32 %v279, %v963
      %v965 = vpop.f32.mrb[0].mxu0
      %v966 = vpop.f32.mrb[0].mxu0
      %v967 = vadd.f32 %v279, %v966
      %v968 = vpop.f32.mrb[0].mxu0
      %969 = vmatprep.mubr.bf16.mxu0 %v534
      %970 = vmatmul.mubr.bf16.gmra.mrb[0].mxu0 %v533
      %v971 = vpop.f32.mrb[0].mxu0
      %v972 = vadd.f32 %v279, %v971
      %v973 = vpop.f32.mrb[0].mxu0
      %v974 = vpop.f32.mrb[0].mxu0
      %v975 = vadd.f32 %v279, %v974
      %v976 = vpop.f32.mrb[0].mxu0
      %977 = vmatprep.mubr.bf16.mxu0 %v536
      %978 = vmatmul.mubr.bf16.gmra.mrb[0].mxu0 %v535
      %v979 = vpop.f32.mrb[0].mxu0
      %v980 = vadd.f32 %v279, %v979
      %v981 = vpop.f32.mrb[0].mxu0
      %v982 = vpop.f32.mrb[0].mxu0
      %v983 = vadd.f32 %v279, %v982
      %v984 = vpop.f32.mrb[0].mxu0
      %985 = vdwg.mxu0
      %v986 = vmax.f32 %v732, 0.0
      %v987 = vmax.f32 %v735, 0.0
      %v988 = vmax.f32 %v740, 0.0
      %v989 = vmax.f32 %v743, 0.0
      %v990 = vmax.f32 %v748, 0.0
      %v991 = vmax.f32 %v751, 0.0
      %v992 = vmax.f32 %v756, 0.0
      %v993 = vmax.f32 %v759, 0.0
      %v994 = vmax.f32 %v764, 0.0
      %v995 = vmax.f32 %v767, 0.0
      %v996 = vmax.f32 %v772, 0.0
      %v997 = vmax.f32 %v775, 0.0
      %v998 = vmax.f32 %v780, 0.0
      %v999 = vmax.f32 %v783, 0.0
      %v1000 = vmax.f32 %v788, 0.0
      %v1001 = vmax.f32 %v791, 0.0
      %v1002 = vmax.f32 %v796, 0.0
      %v1003 = vmax.f32 %v799, 0.0
      %v1004 = vmax.f32 %v804, 0.0
      %v1005 = vmax.f32 %v807, 0.0
      %v1006 = vmax.f32 %v812, 0.0
      %v1007 = vmax.f32 %v815, 0.0
      %v1008 = vmax.f32 %v820, 0.0
      %v1009 = vmax.f32 %v823, 0.0
      %v1010 = vmax.f32 %v828, 0.0
      %v1011 = vmax.f32 %v831, 0.0
      %v1012 = vmax.f32 %v836, 0.0
      %v1013 = vmax.f32 %v839, 0.0
      %v1014 = vmax.f32 %v844, 0.0
      %v1015 = vmax.f32 %v847, 0.0
      %v1016 = vmax.f32 %v852, 0.0
      %v1017 = vmax.f32 %v855, 0.0
      %v1018 = vmax.f32 %v860, 0.0
      %v1019 = vmax.f32 %v863, 0.0
      %v1020 = vmax.f32 %v868, 0.0
      %v1021 = vmax.f32 %v871, 0.0
      %v1022 = vmax.f32 %v876, 0.0
      %v1023 = vmax.f32 %v879, 0.0
      %v1024 = vmax.f32 %v884, 0.0
      %v1025 = vmax.f32 %v887, 0.0
      %v1026 = vmax.f32 %v892, 0.0
      %v1027 = vmax.f32 %v895, 0.0
      %v1028 = vmax.f32 %v900, 0.0
      %v1029 = vmax.f32 %v903, 0.0
      %v1030 = vmax.f32 %v908, 0.0
      %v1031 = vmax.f32 %v911, 0.0
      %v1032 = vmax.f32 %v916, 0.0
      %v1033 = vmax.f32 %v919, 0.0
      %v1034 = vmax.f32 %v924, 0.0
      %v1035 = vmax.f32 %v927, 0.0
      %v1036 = vmax.f32 %v932, 0.0
      %v1037 = vmax.f32 %v935, 0.0
      %v1038 = vmax.f32 %v940, 0.0
      %v1039 = vmax.f32 %v943, 0.0
      %v1040 = vmax.f32 %v948, 0.0
      %v1041 = vmax.f32 %v951, 0.0
      %v1042 = vmax.f32 %v956, 0.0
      %v1043 = vmax.f32 %v959, 0.0
      %v1044 = vmax.f32 %v964, 0.0
      %v1045 = vmax.f32 %v967, 0.0
      %v1046 = vmax.f32 %v972, 0.0
      %v1047 = vmax.f32 %v975, 0.0
      %v1048 = vmax.f32 %v980, 0.0
      %v1049 = vmax.f32 %v983, 0.0
      %v1050 = vpack.c.bf16 %v987, %v986
      %v1051 = vpack.c.bf16 %v989, %v988
      %v1052 = vpack.c.bf16 %v991, %v990
      %v1053 = vpack.c.bf16 %v993, %v992
      %v1054 = vpack.c.bf16 %v995, %v994
      %v1055 = vpack.c.bf16 %v997, %v996
      %v1056 = vpack.c.bf16 %v999, %v998
      %v1057 = vpack.c.bf16 %v1001, %v1000
      %v1058 = vpack.c.bf16 %v1003, %v1002
      %v1059 = vpack.c.bf16 %v1005, %v1004
      %v1060 = vpack.c.bf16 %v1007, %v1006
      %v1061 = vpack.c.bf16 %v1009, %v1008
      %v1062 = vpack.c.bf16 %v1011, %v1010
      %v1063 = vpack.c.bf16 %v1013, %v1012
      %v1064 = vpack.c.bf16 %v1015, %v1014
      %v1065 = vpack.c.bf16 %v1017, %v1016
      %v1066 = vpack.c.bf16 %v1019, %v1018
      %v1067 = vpack.c.bf16 %v1021, %v1020
      %v1068 = vpack.c.bf16 %v1023, %v1022
      %v1069 = vpack.c.bf16 %v1025, %v1024
      %v1070 = vpack.c.bf16 %v1027, %v1026
      %v1071 = vpack.c.bf16 %v1029, %v1028
      %v1072 = vpack.c.bf16 %v1031, %v1030
      %v1073 = vpack.c.bf16 %v1033, %v1032
      %v1074 = vpack.c.bf16 %v1035, %v1034
      %v1075 = vpack.c.bf16 %v1037, %v1036
      %v1076 = vpack.c.bf16 %v1039, %v1038
      %v1077 = vpack.c.bf16 %v1041, %v1040
      %v1078 = vpack.c.bf16 %v1043, %v1042
      %v1079 = vpack.c.bf16 %v1045, %v1044
      %v1080 = vpack.c.bf16 %v1047, %v1046
      %v1081 = vpack.c.bf16 %v1049, %v1048
      %v1114 = vunpack.c.l.b16 %v1050
      %v1115 = vunpack.c.h.b16 %v1050
      %v1116 = vunpack.c.l.b16 %v1051
      %v1117 = vunpack.c.h.b16 %v1051
      %v1118 = vunpack.c.l.b16 %v1052
      %v1119 = vunpack.c.h.b16 %v1052
      %v1120 = vunpack.c.l.b16 %v1053
      %v1121 = vunpack.c.h.b16 %v1053
      %v1122 = vunpack.c.l.b16 %v1054
      %v1123 = vunpack.c.h.b16 %v1054
      %v1124 = vunpack.c.l.b16 %v1055
      %v1125 = vunpack.c.h.b16 %v1055
      %v1126 = vunpack.c.l.b16 %v1056
      %v1127 = vunpack.c.h.b16 %v1056
      %v1128 = vunpack.c.l.b16 %v1057
      %v1129 = vunpack.c.h.b16 %v1057
      %v1130 = vunpack.c.l.b16 %v1058
      %v1131 = vunpack.c.h.b16 %v1058
      %v1132 = vunpack.c.l.b16 %v1059
      %v1133 = vunpack.c.h.b16 %v1059
      %v1134 = vunpack.c.l.b16 %v1060
      %v1135 = vunpack.c.h.b16 %v1060
      %v1136 = vunpack.c.l.b16 %v1061
      %v1137 = vunpack.c.h.b16 %v1061
      %v1138 = vunpack.c.l.b16 %v1062
      %v1139 = vunpack.c.h.b16 %v1062
      %v1140 = vunpack.c.l.b16 %v1063
      %v1141 = vunpack.c.h.b16 %v1063
      %v1142 = vunpack.c.l.b16 %v1064
      %v1143 = vunpack.c.h.b16 %v1064
      %v1144 = vunpack.c.l.b16 %v1065
      %v1145 = vunpack.c.h.b16 %v1065
      %v1146 = vunpack.c.l.b16 %v1066
      %v1147 = vunpack.c.h.b16 %v1066
      %v1148 = vunpack.c.l.b16 %v1067
      %v1149 = vunpack.c.h.b16 %v1067
      %v1150 = vunpack.c.l.b16 %v1068
      %v1151 = vunpack.c.h.b16 %v1068
      %v1152 = vunpack.c.l.b16 %v1069
      %v1153 = vunpack.c.h.b16 %v1069
      %v1154 = vunpack.c.l.b16 %v1070
      %v1155 = vunpack.c.h.b16 %v1070
      %v1156 = vunpack.c.l.b16 %v1071
      %v1157 = vunpack.c.h.b16 %v1071
      %v1158 = vunpack.c.l.b16 %v1072
      %v1159 = vunpack.c.h.b16 %v1072
      %v1160 = vunpack.c.l.b16 %v1073
      %v1161 = vunpack.c.h.b16 %v1073
      %v1162 = vunpack.c.l.b16 %v1074
      %v1163 = vunpack.c.h.b16 %v1074
      %v1164 = vunpack.c.l.b16 %v1075
      %v1165 = vunpack.c.h.b16 %v1075
      %v1166 = vunpack.c.l.b16 %v1076
      %v1167 = vunpack.c.h.b16 %v1076
      %v1168 = vunpack.c.l.b16 %v1077
      %v1169 = vunpack.c.h.b16 %v1077
      %v1170 = vunpack.c.l.b16 %v1078
      %v1171 = vunpack.c.h.b16 %v1078
      %v1172 = vunpack.c.l.b16 %v1079
      %v1173 = vunpack.c.h.b16 %v1079
      %v1174 = vunpack.c.l.b16 %v1080
      %v1175 = vunpack.c.h.b16 %v1080
      %v1176 = vunpack.c.l.b16 %v1081
      %v1177 = vunpack.c.h.b16 %v1081
      %v1178 = vpack.c.b16 %v1114, %v1114
      %v1179 = vpack.c.b16 %v1115, %v1115
      %v1180 = vpack.c.b16 %v1116, %v1116
      %v1181 = vpack.c.b16 %v1117, %v1117
      %v1182 = vpack.c.b16 %v1118, %v1118
      %v1183 = vpack.c.b16 %v1119, %v1119
      %v1184 = vpack.c.b16 %v1120, %v1120
      %v1185 = vpack.c.b16 %v1121, %v1121
      %v1186 = vpack.c.b16 %v1122, %v1122
      %v1187 = vpack.c.b16 %v1123, %v1123
      %v1188 = vpack.c.b16 %v1124, %v1124
      %v1189 = vpack.c.b16 %v1125, %v1125
      %v1190 = vpack.c.b16 %v1126, %v1126
      %v1191 = vpack.c.b16 %v1127, %v1127
      %v1192 = vpack.c.b16 %v1128, %v1128
      %v1193 = vpack.c.b16 %v1129, %v1129
      %v1194 = vpack.c.b16 %v1130, %v1130
      %v1195 = vpack.c.b16 %v1131, %v1131
      %v1196 = vpack.c.b16 %v1132, %v1132
      %v1197 = vpack.c.b16 %v1133, %v1133
      %v1198 = vpack.c.b16 %v1134, %v1134
      %v1199 = vpack.c.b16 %v1135, %v1135
      %v1200 = vpack.c.b16 %v1136, %v1136
      %v1201 = vpack.c.b16 %v1137, %v1137
      %v1202 = vpack.c.b16 %v1138, %v1138
      %v1203 = vpack.c.b16 %v1139, %v1139
      %v1204 = vpack.c.b16 %v1140, %v1140
      %v1205 = vpack.c.b16 %v1141, %v1141
      %v1206 = vpack.c.b16 %v1142, %v1142
      %v1207 = vpack.c.b16 %v1143, %v1143
      %v1208 = vpack.c.b16 %v1144, %v1144
      %v1209 = vpack.c.b16 %v1145, %v1145
      %v1210 = vpack.c.b16 %v1146, %v1146
      %v1211 = vpack.c.b16 %v1147, %v1147
      %v1212 = vpack.c.b16 %v1148, %v1148
      %v1213 = vpack.c.b16 %v1149, %v1149
      %v1214 = vpack.c.b16 %v1150, %v1150
      %v1215 = vpack.c.b16 %v1151, %v1151
      %v1216 = vpack.c.b16 %v1152, %v1152
      %v1217 = vpack.c.b16 %v1153, %v1153
      %v1218 = vpack.c.b16 %v1154, %v1154
      %v1219 = vpack.c.b16 %v1155, %v1155
      %v1220 = vpack.c.b16 %v1156, %v1156
      %v1221 = vpack.c.b16 %v1157, %v1157
      %v1222 = vpack.c.b16 %v1158, %v1158
      %v1223 = vpack.c.b16 %v1159, %v1159
      %v1224 = vpack.c.b16 %v1160, %v1160
      %v1225 = vpack.c.b16 %v1161, %v1161
      %v1226 = vpack.c.b16 %v1162, %v1162
      %v1227 = vpack.c.b16 %v1163, %v1163
      %v1228 = vpack.c.b16 %v1164, %v1164
      %v1229 = vpack.c.b16 %v1165, %v1165
      %v1230 = vpack.c.b16 %v1166, %v1166
      %v1231 = vpack.c.b16 %v1167, %v1167
      %v1232 = vpack.c.b16 %v1168, %v1168
      %v1233 = vpack.c.b16 %v1169, %v1169
      %v1234 = vpack.c.b16 %v1170, %v1170
      %v1235 = vpack.c.b16 %v1171, %v1171
      %v1236 = vpack.c.b16 %v1172, %v1172
      %v1237 = vpack.c.b16 %v1173, %v1173
      %v1238 = vpack.c.b16 %v1174, %v1174
      %v1239 = vpack.c.b16 %v1175, %v1175
      %v1240 = vpack.c.b16 %v1176, %v1176
      %v1241 = vpack.c.b16 %v1177, %v1177
      %1306 = vst [vmem:[%s175] sm:$0xf] %v1178
      %1307 = vst [vmem:[%s175 + $0x4] sm:$0xf] %v1179
      %1308 = vst [vmem:[%s175 + $0x8] sm:$0xf] %v1180
      %1309 = vst [vmem:[%s175 + $0xc] sm:$0xf] %v1181
      %1310 = vst [vmem:[%s175 + $0x10] sm:$0xf] %v1182
      %1311 = vst [vmem:[%s175 + $0x14] sm:$0xf] %v1183
      %1312 = vst [vmem:[%s175 + $0x18] sm:$0xf] %v1184
      %1313 = vst [vmem:[%s175 + $0x1c] sm:$0xf] %v1185
      %1314 = vst [vmem:[%s175 + $0x20] sm:$0xf] %v1186
      %1315 = vst [vmem:[%s175 + $0x24] sm:$0xf] %v1187
      %1316 = vst [vmem:[%s175 + $0x28] sm:$0xf] %v1188
      %1317 = vst [vmem:[%s175 + $0x2c] sm:$0xf] %v1189
      %1318 = vst [vmem:[%s175 + $0x30] sm:$0xf] %v1190
      %1319 = vst [vmem:[%s175 + $0x34] sm:$0xf] %v1191
      %1320 = vst [vmem:[%s175 + $0x38] sm:$0xf] %v1192
      %1321 = vst [vmem:[%s175 + $0x3c] sm:$0xf] %v1193
      %1322 = vst [vmem:[%s175 + $0x40] sm:$0xf] %v1194
      %1323 = vst [vmem:[%s175 + $0x44] sm:$0xf] %v1195
      %1324 = vst [vmem:[%s175 + $0x48] sm:$0xf] %v1196
      %1325 = vst [vmem:[%s175 + $0x4c] sm:$0xf] %v1197
      %1326 = vst [vmem:[%s175 + $0x50] sm:$0xf] %v1198
      %1327 = vst [vmem:[%s175 + $0x54] sm:$0xf] %v1199
      %1328 = vst [vmem:[%s175 + $0x58] sm:$0xf] %v1200
      %1329 = vst [vmem:[%s175 + $0x5c] sm:$0xf] %v1201
      %1330 = vst [vmem:[%s175 + $0x60] sm:$0xf] %v1202
      %1331 = vst [vmem:[%s175 + $0x64] sm:$0xf] %v1203
      %1332 = vst [vmem:[%s175 + $0x68] sm:$0xf] %v1204
      %1333 = vst [vmem:[%s175 + $0x6c] sm:$0xf] %v1205
      %1334 = vst [vmem:[%s175 + $0x70] sm:$0xf] %v1206
      %1335 = vst [vmem:[%s175 + $0x74] sm:$0xf] %v1207
      %1336 = vst [vmem:[%s175 + $0x78] sm:$0xf] %v1208
      %1337 = vst [vmem:[%s175 + $0x7c] sm:$0xf] %v1209
      %1338 = vst [vmem:[%s175 + $0x80] sm:$0xf] %v1210
      %1339 = vst [vmem:[%s175 + $0x84] sm:$0xf] %v1211
      %1340 = vst [vmem:[%s175 + $0x88] sm:$0xf] %v1212
      %1341 = vst [vmem:[%s175 + $0x8c] sm:$0xf] %v1213
      %1342 = vst [vmem:[%s175 + $0x90] sm:$0xf] %v1214
      %1343 = vst [vmem:[%s175 + $0x94] sm:$0xf] %v1215
      %1344 = vst [vmem:[%s175 + $0x98] sm:$0xf] %v1216
      %1345 = vst [vmem:[%s175 + $0x9c] sm:$0xf] %v1217
      %1346 = vst [vmem:[%s175 + $0xa0] sm:$0xf] %v1218
      %1347 = vst [vmem:[%s175 + $0xa4] sm:$0xf] %v1219
      %1348 = vst [vmem:[%s175 + $0xa8] sm:$0xf] %v1220
      %1349 = vst [vmem:[%s175 + $0xac] sm:$0xf] %v1221
      %1350 = vst [vmem:[%s175 + $0xb0] sm:$0xf] %v1222
      %1351 = vst [vmem:[%s175 + $0xb4] sm:$0xf] %v1223
      %1352 = vst [vmem:[%s175 + $0xb8] sm:$0xf] %v1224
      %1353 = vst [vmem:[%s175 + $0xbc] sm:$0xf] %v1225
      %1354 = vst [vmem:[%s175 + $0xc0] sm:$0xf] %v1226
      %1355 = vst [vmem:[%s175 + $0xc4] sm:$0xf] %v1227
      %1356 = vst [vmem:[%s175 + $0xc8] sm:$0xf] %v1228
      %1357 = vst [vmem:[%s175 + $0xcc] sm:$0xf] %v1229
      %1358 = vst [vmem:[%s175 + $0xd0] sm:$0xf] %v1230
      %1359 = vst [vmem:[%s175 + $0xd4] sm:$0xf] %v1231
      %1360 = vst [vmem:[%s175 + $0xd8] sm:$0xf] %v1232
      %1361 = vst [vmem:[%s175 + $0xdc] sm:$0xf] %v1233
      %1362 = vst [vmem:[%s175 + $0xe0] sm:$0xf] %v1234
      %1363 = vst [vmem:[%s175 + $0xe4] sm:$0xf] %v1235
      %1364 = vst [vmem:[%s175 + $0xe8] sm:$0xf] %v1236
      %1365 = vst [vmem:[%s175 + $0xec] sm:$0xf] %v1237
      %1366 = vst [vmem:[%s175 + $0xf0] sm:$0xf] %v1238
      %1367 = vst [vmem:[%s175 + $0xf4] sm:$0xf] %v1239
      %1368 = vst [vmem:[%s175 + $0xf8] sm:$0xf] %v1240
      %1369 = vst [vmem:[%s175 + $0xfc] sm:$0xf] %v1241
      %s1370 = smul.u32 64, %s14
      %p1371 = scmp.lt.s32.totalorder %s1370, 127
      %s1372 = scalar_select %p1371, %s1370, 127
      %s1373 = smul.addr %s1372, 4
      %s1374 = scalar_lea.vmem %s3, %s1373
      // Predicated region
      $region33: #{iqn_forward.3} parent=31 // pred_check
        %p1375 = pneg %p100
      $region34: #{iqn_forward.3} parent=31 // pred_check_branch
        %1377 = sbr.rel (%p1375) target = $region36
      $region35: #{iqn_forward.3} parent=31 // pred_region
        %s1378 = smul.u32 64, %s14
      $region36: #{iqn_forward.3} parent=31 // pred_fallthru
        _
    $region32: #{iqn_forward.3} parent=5 // pred_fallthru
      _
    %p1379 = scmp.le.s32.totalorder 2, %s9
    // Predicated region
    $region37: #{iqn_forward.3} parent=5 // pred_check
      %p1380 = pneg %p1379
    $region38: #{iqn_forward.3} parent=5 // pred_check_branch
      %1382 = sbr.rel (%p1380) target = $region40
    $region39: #{iqn_forward.3} parent=5 // pred_region
      %s1383 = ssub.s32 %s9, 2
      // Predicated region
      $region41: #{iqn_forward.3} parent=39 // pred_check
        %p1384 = pneg %p106
      $region42: #{iqn_forward.3} parent=39 // pred_check_branch
        %1386 = sbr.rel (%p1384) target = $region44
      $region43: #{iqn_forward.3} parent=39 // pred_region
        %s1387 = smul.u32 64, %s15
        %p1388 = scmp.lt.s32.totalorder %s1387, 127
        %s1389 = scalar_select %p1388, %s1387, 127
        %s1390 = smul.addr %s1389, 4
        %s1391 = scalar_lea.vmem %s3, %s1390
      $region44: #{iqn_forward.3} parent=39 // pred_fallthru
        _
    $region40: #{iqn_forward.3} parent=5 // pred_fallthru
      _
  $region6: #{iqn_forward.3} parent=0 // loop_footer
    %s13 = sadd.s32 1, %s9
  $region7: #{iqn_forward.3} parent=0 // loop_footer_branch
    %8 = sbr.rel target = $region3
  $region8: #{iqn_forward.3} parent=0 // loop_exit
    _

// kernel: iqn_forward.4
$region0: #{iqn_forward.4}
  #allocation0 [shape = 'u32[]', space=smem, size = 0x4, offset = 0x4, fixed_abs, tag = 'smem constant byte address 0x4 - core index']
  #allocation1 [shape = 'u32[144,128]{1,0:T(1,128)}', space=vmem, size = 0x12000, scoped, tag = 'internal scratch']
  %s0 = inlined_call_operand.vmem [shape: bf16[256,1024], index: 0, kind: input, shape index: {}]
  %s1 = inlined_call_operand.vmem [shape: bf16[1024,128], index: 1, kind: input, shape index: {}]
  %s2 = inlined_call_operand.vmem [shape: f32[1,128], index: 2, kind: input, shape index: {}]
  %s3 = inlined_call_operand.vmem [shape: bf16[256,128], index: 3, kind: output, shape index: {}]
  %s4 = sld [smem:[#allocation0]]
  $region22: #{iqn_forward.4} parent=0
    _
  %s6 = ssub.s32 1, %s4
  %s7 = scalar_select 0, %s6, %s4
  // Predicated region
  $region2: #{iqn_forward.4} parent=0 // pred_check
    _
  $region3: #{iqn_forward.4} parent=0 // pred_check_branch
    %9 = sbr.rel (0) target = $region5
  $region4: #{iqn_forward.4} parent=0 // pred_region
    _
  $region5: #{iqn_forward.4} parent=0 // pred_fallthru
    _
  // Predicated region
  $region6: #{iqn_forward.4} parent=0 // pred_check
    _
  $region7: #{iqn_forward.4} parent=0 // pred_check_branch
    %11 = sbr.rel (0) target = $region9
  $region8: #{iqn_forward.4} parent=0 // pred_region
    _
  $region9: #{iqn_forward.4} parent=0 // pred_fallthru
    _
  // Predicated region
  $region10: #{iqn_forward.4} parent=0 // pred_check
    _
  $region11: #{iqn_forward.4} parent=0 // pred_check_branch
    %13 = sbr.rel (0) target = $region13
  $region12: #{iqn_forward.4} parent=0 // pred_region
    _
  $region13: #{iqn_forward.4} parent=0 // pred_fallthru
    _
  %v15 = vld [vmem:[%s0] sm:$0xff]
  %v16 = vld [vmem:[%s0 + $0x8] sm:$0xff]
  %v17 = vld [vmem:[%s0 + $0x10] sm:$0xff]
  %v18 = vld [vmem:[%s0 + $0x18] sm:$0xff]
  %v19 = vld [vmem:[%s0 + $0x20] sm:$0xff]
  %v20 = vld [vmem:[%s0 + $0x28] sm:$0xff]
  %v21 = vld [vmem:[%s0 + $0x30] sm:$0xff]
  %v22 = vld [vmem:[%s0 + $0x38] sm:$0xff]
  %v23 = vld [vmem:[%s0 + $0x40] sm:$0xff]
  %v24 = vld [vmem:[%s0 + $0x48] sm:$0xff]
  %v25 = vld [vmem:[%s0 + $0x50] sm:$0xff]
  %v26 = vld [vmem:[%s0 + $0x58] sm:$0xff]
  %v27 = vld [vmem:[%s0 + $0x60] sm:$0xff]
  %v28 = vld [vmem:[%s0 + $0x68] sm:$0xff]
  %v29 = vld [vmem:[%s0 + $0x70] sm:$0xff]
  %v30 = vld [vmem:[%s0 + $0x78] sm:$0xff]
  %v31 = vld [vmem:[%s0 + $0x80] sm:$0xff]
  %v32 = vld [vmem:[%s0 + $0x88] sm:$0xff]
  %v33 = vld [vmem:[%s0 + $0x90] sm:$0xff]
  %v34 = vld [vmem:[%s0 + $0x98] sm:$0xff]
  %v35 = vld [vmem:[%s0 + $0xa0] sm:$0xff]
  %v36 = vld [vmem:[%s0 + $0xa8] sm:$0xff]
  %v37 = vld [vmem:[%s0 + $0xb0] sm:$0xff]
  %v38 = vld [vmem:[%s0 + $0xb8] sm:$0xff]
  %v39 = vld [vmem:[%s0 + $0xc0] sm:$0xff]
  %v40 = vld [vmem:[%s0 + $0xc8] sm:$0xff]
  %v41 = vld [vmem:[%s0 + $0xd0] sm:$0xff]
  %v42 = vld [vmem:[%s0 + $0xd8] sm:$0xff]
  %v43 = vld [vmem:[%s0 + $0xe0] sm:$0xff]
  %v44 = vld [vmem:[%s0 + $0xe8] sm:$0xff]
  %v45 = vld [vmem:[%s0 + $0xf0] sm:$0xff]
  %v46 = vld [vmem:[%s0 + $0xf8] sm:$0xff]
  %v47 = vld [vmem:[%s0 + $0x100] sm:$0xff]
  %v48 = vld [vmem:[%s0 + $0x108] sm:$0xff]
  %v49 = vld [vmem:[%s0 + $0x110] sm:$0xff]
  %v50 = vld [vmem:[%s0 + $0x118] sm:$0xff]
  %v51 = vld [vmem:[%s0 + $0x120] sm:$0xff]
  %v52 = vld [vmem:[%s0 + $0x128] sm:$0xff]
  %v53 = vld [vmem:[%s0 + $0x130] sm:$0xff]
  %v54 = vld [vmem:[%s0 + $0x138] sm:$0xff]
  %v55 = vld [vmem:[%s0 + $0x140] sm:$0xff]
  %v56 = vld [vmem:[%s0 + $0x148] sm:$0xff]
  %v57 = vld [vmem:[%s0 + $0x150] sm:$0xff]
  %v58 = vld [vmem:[%s0 + $0x158] sm:$0xff]
  %v59 = vld [vmem:[%s0 + $0x160] sm:$0xff]
  %v60 = vld [vmem:[%s0 + $0x168] sm:$0xff]
  %v61 = vld [vmem:[%s0 + $0x170] sm:$0xff]
  %v62 = vld [vmem:[%s0 + $0x178] sm:$0xff]
  %v63 = vld [vmem:[%s0 + $0x180] sm:$0xff]
  %v64 = vld [vmem:[%s0 + $0x188] sm:$0xff]
  %v65 = vld [vmem:[%s0 + $0x190] sm:$0xff]
  %v66 = vld [vmem:[%s0 + $0x198] sm:$0xff]
  %v67 = vld [vmem:[%s0 + $0x1a0] sm:$0xff]
  %v68 = vld [vmem:[%s0 + $0x1a8] sm:$0xff]
  %v69 = vld [vmem:[%s0 + $0x1b0] sm:$0xff]
  %v70 = vld [vmem:[%s0 + $0x1b8] sm:$0xff]
  %v71 = vld [vmem:[%s0 + $0x1c0] sm:$0xff]
  %v72 = vld [vmem:[%s0 + $0x1c8] sm:$0xff]
  %v73 = vld [vmem:[%s0 + $0x1d0] sm:$0xff]
  %v74 = vld [vmem:[%s0 + $0x1d8] sm:$0xff]
  %v75 = vld [vmem:[%s0 + $0x1e0] sm:$0xff]
  %v76 = vld [vmem:[%s0 + $0x1e8] sm:$0xff]
  %v77 = vld [vmem:[%s0 + $0x1f0] sm:$0xff]
  %v78 = vld [vmem:[%s0 + $0x1f8] sm:$0xff]
  %v79 = vld [vmem:[%s0 + $0x200] sm:$0xff]
  %v80 = vld [vmem:[%s0 + $0x208] sm:$0xff]
  %v81 = vld [vmem:[%s0 + $0x210] sm:$0xff]
  %v82 = vld [vmem:[%s0 + $0x218] sm:$0xff]
  %v83 = vld [vmem:[%s0 + $0x220] sm:$0xff]
  %v84 = vld [vmem:[%s0 + $0x228] sm:$0xff]
  %v85 = vld [vmem:[%s0 + $0x230] sm:$0xff]
  %v86 = vld [vmem:[%s0 + $0x238] sm:$0xff]
  %v87 = vld [vmem:[%s0 + $0x240] sm:$0xff]
  %v88 = vld [vmem:[%s0 + $0x248] sm:$0xff]
  %v89 = vld [vmem:[%s0 + $0x250] sm:$0xff]
  %v90 = vld [vmem:[%s0 + $0x258] sm:$0xff]
  %v91 = vld [vmem:[%s0 + $0x260] sm:$0xff]
  %v92 = vld [vmem:[%s0 + $0x268] sm:$0xff]
  %v93 = vld [vmem:[%s0 + $0x270] sm:$0xff]
  %v94 = vld [vmem:[%s0 + $0x278] sm:$0xff]
  %v95 = vld [vmem:[%s0 + $0x280] sm:$0xff]
  %v96 = vld [vmem:[%s0 + $0x288] sm:$0xff]
  %v97 = vld [vmem:[%s0 + $0x290] sm:$0xff]
  %v98 = vld [vmem:[%s0 + $0x298] sm:$0xff]
  %v99 = vld [vmem:[%s0 + $0x2a0] sm:$0xff]
  %v100 = vld [vmem:[%s0 + $0x2a8] sm:$0xff]
  %v101 = vld [vmem:[%s0 + $0x2b0] sm:$0xff]
  %v102 = vld [vmem:[%s0 + $0x2b8] sm:$0xff]
  %v103 = vld [vmem:[%s0 + $0x2c0] sm:$0xff]
  %v104 = vld [vmem:[%s0 + $0x2c8] sm:$0xff]
  %v105 = vld [vmem:[%s0 + $0x2d0] sm:$0xff]
  %v106 = vld [vmem:[%s0 + $0x2d8] sm:$0xff]
  %v107 = vld [vmem:[%s0 + $0x2e0] sm:$0xff]
  %v108 = vld [vmem:[%s0 + $0x2e8] sm:$0xff]
  %v109 = vld [vmem:[%s0 + $0x2f0] sm:$0xff]
  %v110 = vld [vmem:[%s0 + $0x2f8] sm:$0xff]
  %v111 = vld [vmem:[%s0 + $0x300] sm:$0xff]
  %v112 = vld [vmem:[%s0 + $0x308] sm:$0xff]
  %v113 = vld [vmem:[%s0 + $0x310] sm:$0xff]
  %v114 = vld [vmem:[%s0 + $0x318] sm:$0xff]
  %v115 = vld [vmem:[%s0 + $0x320] sm:$0xff]
  %v116 = vld [vmem:[%s0 + $0x328] sm:$0xff]
  %v117 = vld [vmem:[%s0 + $0x330] sm:$0xff]
  %v118 = vld [vmem:[%s0 + $0x338] sm:$0xff]
  %v119 = vld [vmem:[%s0 + $0x340] sm:$0xff]
  %v120 = vld [vmem:[%s0 + $0x348] sm:$0xff]
  %v121 = vld [vmem:[%s0 + $0x350] sm:$0xff]
  %v122 = vld [vmem:[%s0 + $0x358] sm:$0xff]
  %v123 = vld [vmem:[%s0 + $0x360] sm:$0xff]
  %v124 = vld [vmem:[%s0 + $0x368] sm:$0xff]
  %v125 = vld [vmem:[%s0 + $0x370] sm:$0xff]
  %v126 = vld [vmem:[%s0 + $0x378] sm:$0xff]
  %v127 = vld [vmem:[%s0 + $0x380] sm:$0xff]
  %v128 = vld [vmem:[%s0 + $0x388] sm:$0xff]
  %v129 = vld [vmem:[%s0 + $0x390] sm:$0xff]
  %v130 = vld [vmem:[%s0 + $0x398] sm:$0xff]
  %v131 = vld [vmem:[%s0 + $0x3a0] sm:$0xff]
  %v132 = vld [vmem:[%s0 + $0x3a8] sm:$0xff]
  %v133 = vld [vmem:[%s0 + $0x3b0] sm:$0xff]
  %v134 = vld [vmem:[%s0 + $0x3b8] sm:$0xff]
  %v135 = vld [vmem:[%s0 + $0x3c0] sm:$0xff]
  %v136 = vld [vmem:[%s0 + $0x3c8] sm:$0xff]
  %v137 = vld [vmem:[%s0 + $0x3d0] sm:$0xff]
  %v138 = vld [vmem:[%s0 + $0x3d8] sm:$0xff]
  %v139 = vld [vmem:[%s0 + $0x3e0] sm:$0xff]
  %v140 = vld [vmem:[%s0 + $0x3e8] sm:$0xff]
  %v141 = vld [vmem:[%s0 + $0x3f0] sm:$0xff]
  %v142 = vld [vmem:[%s0 + $0x3f8] sm:$0xff]
  %v143 = vld [vmem:[%s1] sm:$0xf]
  %v144 = vld [vmem:[%s1 + $0x4] sm:$0xf]
  %v145 = vld [vmem:[%s1 + $0x8] sm:$0xf]
  %v146 = vld [vmem:[%s1 + $0xc] sm:$0xf]
  %v147 = vld [vmem:[%s1 + $0x10] sm:$0xf]
  %v148 = vld [vmem:[%s1 + $0x14] sm:$0xf]
  %v149 = vld [vmem:[%s1 + $0x18] sm:$0xf]
  %v150 = vld [vmem:[%s1 + $0x1c] sm:$0xf]
  %v151 = vld [vmem:[%s1 + $0x20] sm:$0xf]
  %v152 = vld [vmem:[%s1 + $0x24] sm:$0xf]
  %v153 = vld [vmem:[%s1 + $0x28] sm:$0xf]
  %v154 = vld [vmem:[%s1 + $0x2c] sm:$0xf]
  %v155 = vld [vmem:[%s1 + $0x30] sm:$0xf]
  %v156 = vld [vmem:[%s1 + $0x34] sm:$0xf]
  %v157 = vld [vmem:[%s1 + $0x38] sm:$0xf]
  %v158 = vld [vmem:[%s1 + $0x3c] sm:$0xf]
  %v159 = vld [vmem:[%s1 + $0x40] sm:$0xf]
  %v160 = vld [vmem:[%s1 + $0x44] sm:$0xf]
  %v161 = vld [vmem:[%s1 + $0x48] sm:$0xf]
  %v162 = vld [vmem:[%s1 + $0x4c] sm:$0xf]
  %v163 = vld [vmem:[%s1 + $0x50] sm:$0xf]
  %v164 = vld [vmem:[%s1 + $0x54] sm:$0xf]
  %v165 = vld [vmem:[%s1 + $0x58] sm:$0xf]
  %v166 = vld [vmem:[%s1 + $0x5c] sm:$0xf]
  %v167 = vld [vmem:[%s1 + $0x60] sm:$0xf]
  %v168 = vld [vmem:[%s1 + $0x64] sm:$0xf]
  %v169 = vld [vmem:[%s1 + $0x68] sm:$0xf]
  %v170 = vld [vmem:[%s1 + $0x6c] sm:$0xf]
  %v171 = vld [vmem:[%s1 + $0x70] sm:$0xf]
  %v172 = vld [vmem:[%s1 + $0x74] sm:$0xf]
  %v173 = vld [vmem:[%s1 + $0x78] sm:$0xf]
  %v174 = vld [vmem:[%s1 + $0x7c] sm:$0xf]
  %v175 = vld [vmem:[%s1 + $0x80] sm:$0xf]
  %v176 = vld [vmem:[%s1 + $0x84] sm:$0xf]
  %v177 = vld [vmem:[%s1 + $0x88] sm:$0xf]
  %v178 = vld [vmem:[%s1 + $0x8c] sm:$0xf]
  %v179 = vld [vmem:[%s1 + $0x90] sm:$0xf]
  %v180 = vld [vmem:[%s1 + $0x94] sm:$0xf]
  %v181 = vld [vmem:[%s1 + $0x98] sm:$0xf]
  %v182 = vld [vmem:[%s1 + $0x9c] sm:$0xf]
  %v183 = vld [vmem:[%s1 + $0xa0] sm:$0xf]
  %v184 = vld [vmem:[%s1 + $0xa4] sm:$0xf]
  %v185 = vld [vmem:[%s1 + $0xa8] sm:$0xf]
  %v186 = vld [vmem:[%s1 + $0xac] sm:$0xf]
  %v187 = vld [vmem:[%s1 + $0xb0] sm:$0xf]
  %v188 = vld [vmem:[%s1 + $0xb4] sm:$0xf]
  %v189 = vld [vmem:[%s1 + $0xb8] sm:$0xf]
  %v190 = vld [vmem:[%s1 + $0xbc] sm:$0xf]
  %v191 = vld [vmem:[%s1 + $0xc0] sm:$0xf]
  %v192 = vld [vmem:[%s1 + $0xc4] sm:$0xf]
  %v193 = vld [vmem:[%s1 + $0xc8] sm:$0xf]
  %v194 = vld [vmem:[%s1 + $0xcc] sm:$0xf]
  %v195 = vld [vmem:[%s1 + $0xd0] sm:$0xf]
  %v196 = vld [vmem:[%s1 + $0xd4] sm:$0xf]
  %v197 = vld [vmem:[%s1 + $0xd8] sm:$0xf]
  %v198 = vld [vmem:[%s1 + $0xdc] sm:$0xf]
  %v199 = vld [vmem:[%s1 + $0xe0] sm:$0xf]
  %v200 = vld [vmem:[%s1 + $0xe4] sm:$0xf]
  %v201 = vld [vmem:[%s1 + $0xe8] sm:$0xf]
  %v202 = vld [vmem:[%s1 + $0xec] sm:$0xf]
  %v203 = vld [vmem:[%s1 + $0xf0] sm:$0xf]
  %v204 = vld [vmem:[%s1 + $0xf4] sm:$0xf]
  %v205 = vld [vmem:[%s1 + $0xf8] sm:$0xf]
  %v206 = vld [vmem:[%s1 + $0xfc] sm:$0xf]
  %v207 = vld [vmem:[%s1 + $0x100] sm:$0xf]
  %v208 = vld [vmem:[%s1 + $0x104] sm:$0xf]
  %v209 = vld [vmem:[%s1 + $0x108] sm:$0xf]
  %v210 = vld [vmem:[%s1 + $0x10c] sm:$0xf]
  %v211 = vld [vmem:[%s1 + $0x110] sm:$0xf]
  %v212 = vld [vmem:[%s1 + $0x114] sm:$0xf]
  %v213 = vld [vmem:[%s1 + $0x118] sm:$0xf]
  %v214 = vld [vmem:[%s1 + $0x11c] sm:$0xf]
  %v215 = vld [vmem:[%s1 + $0x120] sm:$0xf]
  %v216 = vld [vmem:[%s1 + $0x124] sm:$0xf]
  %v217 = vld [vmem:[%s1 + $0x128] sm:$0xf]
  %v218 = vld [vmem:[%s1 + $0x12c] sm:$0xf]
  %v219 = vld [vmem:[%s1 + $0x130] sm:$0xf]
  %v220 = vld [vmem:[%s1 + $0x134] sm:$0xf]
  %v221 = vld [vmem:[%s1 + $0x138] sm:$0xf]
  %v222 = vld [vmem:[%s1 + $0x13c] sm:$0xf]
  %v223 = vld [vmem:[%s1 + $0x140] sm:$0xf]
  %v224 = vld [vmem:[%s1 + $0x144] sm:$0xf]
  %v225 = vld [vmem:[%s1 + $0x148] sm:$0xf]
  %v226 = vld [vmem:[%s1 + $0x14c] sm:$0xf]
  %v227 = vld [vmem:[%s1 + $0x150] sm:$0xf]
  %v228 = vld [vmem:[%s1 + $0x154] sm:$0xf]
  %v229 = vld [vmem:[%s1 + $0x158] sm:$0xf]
  %v230 = vld [vmem:[%s1 + $0x15c] sm:$0xf]
  %v231 = vld [vmem:[%s1 + $0x160] sm:$0xf]
  %v232 = vld [vmem:[%s1 + $0x164] sm:$0xf]
  %v233 = vld [vmem:[%s1 + $0x168] sm:$0xf]
  %v234 = vld [vmem:[%s1 + $0x16c] sm:$0xf]
  %v235 = vld [vmem:[%s1 + $0x170] sm:$0xf]
  %v236 = vld [vmem:[%s1 + $0x174] sm:$0xf]
  %v237 = vld [vmem:[%s1 + $0x178] sm:$0xf]
  %v238 = vld [vmem:[%s1 + $0x17c] sm:$0xf]
  %v239 = vld [vmem:[%s1 + $0x180] sm:$0xf]
  %v240 = vld [vmem:[%s1 + $0x184] sm:$0xf]
  %v241 = vld [vmem:[%s1 + $0x188] sm:$0xf]
  %v242 = vld [vmem:[%s1 + $0x18c] sm:$0xf]
  %v243 = vld [vmem:[%s1 + $0x190] sm:$0xf]
  %v244 = vld [vmem:[%s1 + $0x194] sm:$0xf]
  %v245 = vld [vmem:[%s1 + $0x198] sm:$0xf]
  %v246 = vld [vmem:[%s1 + $0x19c] sm:$0xf]
  %v247 = vld [vmem:[%s1 + $0x1a0] sm:$0xf]
  %v248 = vld [vmem:[%s1 + $0x1a4] sm:$0xf]
  %v249 = vld [vmem:[%s1 + $0x1a8] sm:$0xf]
  %v250 = vld [vmem:[%s1 + $0x1ac] sm:$0xf]
  %v251 = vld [vmem:[%s1 + $0x1b0] sm:$0xf]
  %v252 = vld [vmem:[%s1 + $0x1b4] sm:$0xf]
  %v253 = vld [vmem:[%s1 + $0x1b8] sm:$0xf]
  %v254 = vld [vmem:[%s1 + $0x1bc] sm:$0xf]
  %v255 = vld [vmem:[%s1 + $0x1c0] sm:$0xf]
  %v256 = vld [vmem:[%s1 + $0x1c4] sm:$0xf]
  %v257 = vld [vmem:[%s1 + $0x1c8] sm:$0xf]
  %v258 = vld [vmem:[%s1 + $0x1cc] sm:$0xf]
  %v259 = vld [vmem:[%s1 + $0x1d0] sm:$0xf]
  %v260 = vld [vmem:[%s1 + $0x1d4] sm:$0xf]
  %v261 = vld [vmem:[%s1 + $0x1d8] sm:$0xf]
  %v262 = vld [vmem:[%s1 + $0x1dc] sm:$0xf]
  %v263 = vld [vmem:[%s1 + $0x1e0] sm:$0xf]
  %v264 = vld [vmem:[%s1 + $0x1e4] sm:$0xf]
  %v265 = vld [vmem:[%s1 + $0x1e8] sm:$0xf]
  %v266 = vld [vmem:[%s1 + $0x1ec] sm:$0xf]
  %v267 = vld [vmem:[%s1 + $0x1f0] sm:$0xf]
  %v268 = vld [vmem:[%s1 + $0x1f4] sm:$0xf]
  %v269 = vld [vmem:[%s1 + $0x1f8] sm:$0xf]
  %v270 = vld [vmem:[%s1 + $0x1fc] sm:$0xf]
  %v271 = vld [vmem:[%s2] sm:$0x1]
  %v273 = vlaneseq
  %v274 = vshrl.u32 %v273, 7
  %v275 = vsub.s32 0, %v274
  %v276 = vrot.slane %v271, %v275
  %v406 = vunpack.c.l.b16 %v15
  %v407 = vunpack.c.h.b16 %v15
  %v408 = vunpack.c.l.b16 %v16
  %v409 = vunpack.c.h.b16 %v16
  %v410 = vunpack.c.l.b16 %v17
  %v411 = vunpack.c.h.b16 %v17
  %v412 = vunpack.c.l.b16 %v18
  %v413 = vunpack.c.h.b16 %v18
  %v414 = vunpack.c.l.b16 %v19
  %v415 = vunpack.c.h.b16 %v19
  %v416 = vunpack.c.l.b16 %v20
  %v417 = vunpack.c.h.b16 %v20
  %v418 = vunpack.c.l.b16 %v21
  %v419 = vunpack.c.h.b16 %v21
  %v420 = vunpack.c.l.b16 %v22
  %v421 = vunpack.c.h.b16 %v22
  %v422 = vunpack.c.l.b16 %v23
  %v423 = vunpack.c.h.b16 %v23
  %v424 = vunpack.c.l.b16 %v24
  %v425 = vunpack.c.h.b16 %v24
  %v426 = vunpack.c.l.b16 %v25
  %v427 = vunpack.c.h.b16 %v25
  %v428 = vunpack.c.l.b16 %v26
  %v429 = vunpack.c.h.b16 %v26
  %v430 = vunpack.c.l.b16 %v27
  %v431 = vunpack.c.h.b16 %v27
  %v432 = vunpack.c.l.b16 %v28
  %v433 = vunpack.c.h.b16 %v28
  %v434 = vunpack.c.l.b16 %v29
  %v435 = vunpack.c.h.b16 %v29
  %v436 = vunpack.c.l.b16 %v30
  %v437 = vunpack.c.h.b16 %v30
  %v438 = vunpack.c.l.b16 %v31
  %v439 = vunpack.c.h.b16 %v31
  %v440 = vunpack.c.l.b16 %v32
  %v441 = vunpack.c.h.b16 %v32
  %v442 = vunpack.c.l.b16 %v33
  %v443 = vunpack.c.h.b16 %v33
  %v444 = vunpack.c.l.b16 %v34
  %v445 = vunpack.c.h.b16 %v34
  %v446 = vunpack.c.l.b16 %v35
  %v447 = vunpack.c.h.b16 %v35
  %v448 = vunpack.c.l.b16 %v36
  %v449 = vunpack.c.h.b16 %v36
  %v450 = vunpack.c.l.b16 %v37
  %v451 = vunpack.c.h.b16 %v37
  %v452 = vunpack.c.l.b16 %v38
  %v453 = vunpack.c.h.b16 %v38
  %v454 = vunpack.c.l.b16 %v39
  %v455 = vunpack.c.h.b16 %v39
  %v456 = vunpack.c.l.b16 %v40
  %v457 = vunpack.c.h.b16 %v40
  %v458 = vunpack.c.l.b16 %v41
  %v459 = vunpack.c.h.b16 %v41
  %v460 = vunpack.c.l.b16 %v42
  %v461 = vunpack.c.h.b16 %v42
  %v462 = vunpack.c.l.b16 %v43
  %v463 = vunpack.c.h.b16 %v43
  %v464 = vunpack.c.l.b16 %v44
  %v465 = vunpack.c.h.b16 %v44
  %v466 = vunpack.c.l.b16 %v45
  %v467 = vunpack.c.h.b16 %v45
  %v468 = vunpack.c.l.b16 %v46
  %v469 = vunpack.c.h.b16 %v46
  %v470 = vunpack.c.l.b16 %v47
  %v471 = vunpack.c.h.b16 %v47
  %v472 = vunpack.c.l.b16 %v48
  %v473 = vunpack.c.h.b16 %v48
  %v474 = vunpack.c.l.b16 %v49
  %v475 = vunpack.c.h.b16 %v49
  %v476 = vunpack.c.l.b16 %v50
  %v477 = vunpack.c.h.b16 %v50
  %v478 = vunpack.c.l.b16 %v51
  %v479 = vunpack.c.h.b16 %v51
  %v480 = vunpack.c.l.b16 %v52
  %v481 = vunpack.c.h.b16 %v52
  %v482 = vunpack.c.l.b16 %v53
  %v483 = vunpack.c.h.b16 %v53
  %v484 = vunpack.c.l.b16 %v54
  %v485 = vunpack.c.h.b16 %v54
  %v486 = vunpack.c.l.b16 %v55
  %v487 = vunpack.c.h.b16 %v55
  %v488 = vunpack.c.l.b16 %v56
  %v489 = vunpack.c.h.b16 %v56
  %v490 = vunpack.c.l.b16 %v57
  %v491 = vunpack.c.h.b16 %v57
  %v492 = vunpack.c.l.b16 %v58
  %v493 = vunpack.c.h.b16 %v58
  %v494 = vunpack.c.l.b16 %v59
  %v495 = vunpack.c.h.b16 %v59
  %v496 = vunpack.c.l.b16 %v60
  %v497 = vunpack.c.h.b16 %v60
  %v498 = vunpack.c.l.b16 %v61
  %v499 = vunpack.c.h.b16 %v61
  %v500 = vunpack.c.l.b16 %v62
  %v501 = vunpack.c.h.b16 %v62
  %v502 = vunpack.c.l.b16 %v63
  %v503 = vunpack.c.h.b16 %v63
  %v504 = vunpack.c.l.b16 %v64
  %v505 = vunpack.c.h.b16 %v64
  %v506 = vunpack.c.l.b16 %v65
  %v507 = vunpack.c.h.b16 %v65
  %v508 = vunpack.c.l.b16 %v66
  %v509 = vunpack.c.h.b16 %v66
  %v510 = vunpack.c.l.b16 %v67
  %v511 = vunpack.c.h.b16 %v67
  %v512 = vunpack.c.l.b16 %v68
  %v513 = vunpack.c.h.b16 %v68
  %v514 = vunpack.c.l.b16 %v69
  %v515 = vunpack.c.h.b16 %v69
  %v516 = vunpack.c.l.b16 %v70
  %v517 = vunpack.c.h.b16 %v70
  %v518 = vunpack.c.l.b16 %v71
  %v519 = vunpack.c.h.b16 %v71
  %v520 = vunpack.c.l.b16 %v72
  %v521 = vunpack.c.h.b16 %v72
  %v522 = vunpack.c.l.b16 %v73
  %v523 = vunpack.c.h.b16 %v73
  %v524 = vunpack.c.l.b16 %v74
  %v525 = vunpack.c.h.b16 %v74
  %v526 = vunpack.c.l.b16 %v75
  %v527 = vunpack.c.h.b16 %v75
  %v528 = vunpack.c.l.b16 %v76
  %v529 = vunpack.c.h.b16 %v76
  %v530 = vunpack.c.l.b16 %v77
  %v531 = vunpack.c.h.b16 %v77
  %v532 = vunpack.c.l.b16 %v78
  %v533 = vunpack.c.h.b16 %v78
  %v534 = vunpack.c.l.b16 %v79
  %v535 = vunpack.c.h.b16 %v79
  %v536 = vunpack.c.l.b16 %v80
  %v537 = vunpack.c.h.b16 %v80
  %v538 = vunpack.c.l.b16 %v81
  %v539 = vunpack.c.h.b16 %v81
  %v540 = vunpack.c.l.b16 %v82
  %v541 = vunpack.c.h.b16 %v82
  %v542 = vunpack.c.l.b16 %v83
  %v543 = vunpack.c.h.b16 %v83
  %v544 = vunpack.c.l.b16 %v84
  %v545 = vunpack.c.h.b16 %v84
  %v546 = vunpack.c.l.b16 %v85
  %v547 = vunpack.c.h.b16 %v85
  %v548 = vunpack.c.l.b16 %v86
  %v549 = vunpack.c.h.b16 %v86
  %v550 = vunpack.c.l.b16 %v87
  %v551 = vunpack.c.h.b16 %v87
  %v552 = vunpack.c.l.b16 %v88
  %v553 = vunpack.c.h.b16 %v88
  %v554 = vunpack.c.l.b16 %v89
  %v555 = vunpack.c.h.b16 %v89
  %v556 = vunpack.c.l.b16 %v90
  %v557 = vunpack.c.h.b16 %v90
  %v558 = vunpack.c.l.b16 %v91
  %v559 = vunpack.c.h.b16 %v91
  %v560 = vunpack.c.l.b16 %v92
  %v561 = vunpack.c.h.b16 %v92
  %v562 = vunpack.c.l.b16 %v93
  %v563 = vunpack.c.h.b16 %v93
  %v564 = vunpack.c.l.b16 %v94
  %v565 = vunpack.c.h.b16 %v94
  %v566 = vunpack.c.l.b16 %v95
  %v567 = vunpack.c.h.b16 %v95
  %v568 = vunpack.c.l.b16 %v96
  %v569 = vunpack.c.h.b16 %v96
  %v570 = vunpack.c.l.b16 %v97
  %v571 = vunpack.c.h.b16 %v97
  %v572 = vunpack.c.l.b16 %v98
  %v573 = vunpack.c.h.b16 %v98
  %v574 = vunpack.c.l.b16 %v99
  %v575 = vunpack.c.h.b16 %v99
  %v576 = vunpack.c.l.b16 %v100
  %v577 = vunpack.c.h.b16 %v100
  %v578 = vunpack.c.l.b16 %v101
  %v579 = vunpack.c.h.b16 %v101
  %v580 = vunpack.c.l.b16 %v102
  %v581 = vunpack.c.h.b16 %v102
  %v582 = vunpack.c.l.b16 %v103
  %v583 = vunpack.c.h.b16 %v103
  %v584 = vunpack.c.l.b16 %v104
  %v585 = vunpack.c.h.b16 %v104
  %v586 = vunpack.c.l.b16 %v105
  %v587 = vunpack.c.h.b16 %v105
  %v588 = vunpack.c.l.b16 %v106
  %v589 = vunpack.c.h.b16 %v106
  %v590 = vunpack.c.l.b16 %v107
  %v591 = vunpack.c.h.b16 %v107
  %v592 = vunpack.c.l.b16 %v108
  %v593 = vunpack.c.h.b16 %v108
  %v594 = vunpack.c.l.b16 %v109
  %v595 = vunpack.c.h.b16 %v109
  %v596 = vunpack.c.l.b16 %v110
  %v597 = vunpack.c.h.b16 %v110
  %v598 = vunpack.c.l.b16 %v111
  %v599 = vunpack.c.h.b16 %v111
  %v600 = vunpack.c.l.b16 %v112
  %v601 = vunpack.c.h.b16 %v112
  %v602 = vunpack.c.l.b16 %v113
  %v603 = vunpack.c.h.b16 %v113
  %v604 = vunpack.c.l.b16 %v114
  %v605 = vunpack.c.h.b16 %v114
  %v606 = vunpack.c.l.b16 %v115
  %v607 = vunpack.c.h.b16 %v115
  %v608 = vunpack.c.l.b16 %v116
  %v609 = vunpack.c.h.b16 %v116
  %v610 = vunpack.c.l.b16 %v117
  %v611 = vunpack.c.h.b16 %v117
  %v612 = vunpack.c.l.b16 %v118
  %v613 = vunpack.c.h.b16 %v118
  %v614 = vunpack.c.l.b16 %v119
  %v615 = vunpack.c.h.b16 %v119
  %v616 = vunpack.c.l.b16 %v120
  %v617 = vunpack.c.h.b16 %v120
  %v618 = vunpack.c.l.b16 %v121
  %v619 = vunpack.c.h.b16 %v121
  %v620 = vunpack.c.l.b16 %v122
  %v621 = vunpack.c.h.b16 %v122
  %v622 = vunpack.c.l.b16 %v123
  %v623 = vunpack.c.h.b16 %v123
  %v624 = vunpack.c.l.b16 %v124
  %v625 = vunpack.c.h.b16 %v124
  %v626 = vunpack.c.l.b16 %v125
  %v627 = vunpack.c.h.b16 %v125
  %v628 = vunpack.c.l.b16 %v126
  %v629 = vunpack.c.h.b16 %v126
  %v630 = vunpack.c.l.b16 %v127
  %v631 = vunpack.c.h.b16 %v127
  %v632 = vunpack.c.l.b16 %v128
  %v633 = vunpack.c.h.b16 %v128
  %v634 = vunpack.c.l.b16 %v129
  %v635 = vunpack.c.h.b16 %v129
  %v636 = vunpack.c.l.b16 %v130
  %v637 = vunpack.c.h.b16 %v130
  %v638 = vunpack.c.l.b16 %v131
  %v639 = vunpack.c.h.b16 %v131
  %v640 = vunpack.c.l.b16 %v132
  %v641 = vunpack.c.h.b16 %v132
  %v642 = vunpack.c.l.b16 %v133
  %v643 = vunpack.c.h.b16 %v133
  %v644 = vunpack.c.l.b16 %v134
  %v645 = vunpack.c.h.b16 %v134
  %v646 = vunpack.c.l.b16 %v135
  %v647 = vunpack.c.h.b16 %v135
  %v648 = vunpack.c.l.b16 %v136
  %v649 = vunpack.c.h.b16 %v136
  %v650 = vunpack.c.l.b16 %v137
  %v651 = vunpack.c.h.b16 %v137
  %v652 = vunpack.c.l.b16 %v138
  %v653 = vunpack.c.h.b16 %v138
  %v654 = vunpack.c.l.b16 %v139
  %v655 = vunpack.c.h.b16 %v139
  %v656 = vunpack.c.l.b16 %v140
  %v657 = vunpack.c.h.b16 %v140
  %v658 = vunpack.c.l.b16 %v141
  %v659 = vunpack.c.h.b16 %v141
  %v660 = vunpack.c.l.b16 %v142
  %v661 = vunpack.c.h.b16 %v142
  %v662 = vpack.c.b16 %v414, %v406
  %v663 = vpack.c.b16 %v415, %v407
  %v664 = vpack.c.b16 %v416, %v408
  %v665 = vpack.c.b16 %v417, %v409
  %v666 = vpack.c.b16 %v418, %v410
  %v667 = vpack.c.b16 %v419, %v411
  %v668 = vpack.c.b16 %v420, %v412
  %v669 = vpack.c.b16 %v421, %v413
  %v670 = vpack.c.b16 %v430, %v422
  %v671 = vpack.c.b16 %v431, %v423
  %v672 = vpack.c.b16 %v432, %v424
  %v673 = vpack.c.b16 %v433, %v425
  %v674 = vpack.c.b16 %v434, %v426
  %v675 = vpack.c.b16 %v435, %v427
  %v676 = vpack.c.b16 %v436, %v428
  %v677 = vpack.c.b16 %v437, %v429
  %v678 = vpack.c.b16 %v446, %v438
  %v679 = vpack.c.b16 %v447, %v439
  %v680 = vpack.c.b16 %v448, %v440
  %v681 = vpack.c.b16 %v449, %v441
  %v682 = vpack.c.b16 %v450, %v442
  %v683 = vpack.c.b16 %v451, %v443
  %v684 = vpack.c.b16 %v452, %v444
  %v685 = vpack.c.b16 %v453, %v445
  %v686 = vpack.c.b16 %v462, %v454
  %v687 = vpack.c.b16 %v463, %v455
  %v688 = vpack.c.b16 %v464, %v456
  %v689 = vpack.c.b16 %v465, %v457
  %v690 = vpack.c.b16 %v466, %v458
  %v691 = vpack.c.b16 %v467, %v459
  %v692 = vpack.c.b16 %v468, %v460
  %v693 = vpack.c.b16 %v469, %v461
  %v694 = vpack.c.b16 %v478, %v470
  %v695 = vpack.c.b16 %v479, %v471
  %v696 = vpack.c.b16 %v480, %v472
  %v697 = vpack.c.b16 %v481, %v473
  %v698 = vpack.c.b16 %v482, %v474
  %v699 = vpack.c.b16 %v483, %v475
  %v700 = vpack.c.b16 %v484, %v476
  %v701 = vpack.c.b16 %v485, %v477
  %v702 = vpack.c.b16 %v494, %v486
  %v703 = vpack.c.b16 %v495, %v487
  %v704 = vpack.c.b16 %v496, %v488
  %v705 = vpack.c.b16 %v497, %v489
  %v706 = vpack.c.b16 %v498, %v490
  %v707 = vpack.c.b16 %v499, %v491
  %v708 = vpack.c.b16 %v500, %v492
  %v709 = vpack.c.b16 %v501, %v493
  %v710 = vpack.c.b16 %v510, %v502
  %v711 = vpack.c.b16 %v511, %v503
  %v712 = vpack.c.b16 %v512, %v504
  %v713 = vpack.c.b16 %v513, %v505
  %v714 = vpack.c.b16 %v514, %v506
  %v715 = vpack.c.b16 %v515, %v507
  %v716 = vpack.c.b16 %v516, %v508
  %v717 = vpack.c.b16 %v517, %v509
  %v718 = vpack.c.b16 %v526, %v518
  %v719 = vpack.c.b16 %v527, %v519
  %v720 = vpack.c.b16 %v528, %v520
  %v721 = vpack.c.b16 %v529, %v521
  %v722 = vpack.c.b16 %v530, %v522
  %v723 = vpack.c.b16 %v531, %v523
  %v724 = vpack.c.b16 %v532, %v524
  %v725 = vpack.c.b16 %v533, %v525
  %v726 = vpack.c.b16 %v542, %v534
  %v727 = vpack.c.b16 %v543, %v535
  %v728 = vpack.c.b16 %v544, %v536
  %v729 = vpack.c.b16 %v545, %v537
  %v730 = vpack.c.b16 %v546, %v538
  %v731 = vpack.c.b16 %v547, %v539
  %v732 = vpack.c.b16 %v548, %v540
  %v733 = vpack.c.b16 %v549, %v541
  %v734 = vpack.c.b16 %v558, %v550
  %v735 = vpack.c.b16 %v559, %v551
  %v736 = vpack.c.b16 %v560, %v552
  %v737 = vpack.c.b16 %v561, %v553
  %v738 = vpack.c.b16 %v562, %v554
  %v739 = vpack.c.b16 %v563, %v555
  %v740 = vpack.c.b16 %v564, %v556
  %v741 = vpack.c.b16 %v565, %v557
  %v742 = vpack.c.b16 %v574, %v566
  %v743 = vpack.c.b16 %v575, %v567
  %v744 = vpack.c.b16 %v576, %v568
  %v745 = vpack.c.b16 %v577, %v569
  %v746 = vpack.c.b16 %v578, %v570
  %v747 = vpack.c.b16 %v579, %v571
  %v748 = vpack.c.b16 %v580, %v572
  %v749 = vpack.c.b16 %v581, %v573
  %v750 = vpack.c.b16 %v590, %v582
  %v751 = vpack.c.b16 %v591, %v583
  %v752 = vpack.c.b16 %v592, %v584
  %v753 = vpack.c.b16 %v593, %v585
  %v754 = vpack.c.b16 %v594, %v586
  %v755 = vpack.c.b16 %v595, %v587
  %v756 = vpack.c.b16 %v596, %v588
  %v757 = vpack.c.b16 %v597, %v589
  %v758 = vpack.c.b16 %v606, %v598
  %v759 = vpack.c.b16 %v607, %v599
  %v760 = vpack.c.b16 %v608, %v600
  %v761 = vpack.c.b16 %v609, %v601
  %v762 = vpack.c.b16 %v610, %v602
  %v763 = vpack.c.b16 %v611, %v603
  %v764 = vpack.c.b16 %v612, %v604
  %v765 = vpack.c.b16 %v613, %v605
  %v766 = vpack.c.b16 %v622, %v614
  %v767 = vpack.c.b16 %v623, %v615
  %v768 = vpack.c.b16 %v624, %v616
  %v769 = vpack.c.b16 %v625, %v617
  %v770 = vpack.c.b16 %v626, %v618
  %v771 = vpack.c.b16 %v627, %v619
  %v772 = vpack.c.b16 %v628, %v620
  %v773 = vpack.c.b16 %v629, %v621
  %v774 = vpack.c.b16 %v638, %v630
  %v775 = vpack.c.b16 %v639, %v631
  %v776 = vpack.c.b16 %v640, %v632
  %v777 = vpack.c.b16 %v641, %v633
  %v778 = vpack.c.b16 %v642, %v634
  %v779 = vpack.c.b16 %v643, %v635
  %v780 = vpack.c.b16 %v644, %v636
  %v781 = vpack.c.b16 %v645, %v637
  %v782 = vpack.c.b16 %v654, %v646
  %v783 = vpack.c.b16 %v655, %v647
  %v784 = vpack.c.b16 %v656, %v648
  %v785 = vpack.c.b16 %v657, %v649
  %v786 = vpack.c.b16 %v658, %v650
  %v787 = vpack.c.b16 %v659, %v651
  %v788 = vpack.c.b16 %v660, %v652
  %v789 = vpack.c.b16 %v661, %v653
  %v1046 = vunpack.c.l.b16 %v143
  %v1047 = vunpack.c.l.b16 %v144
  %v1048 = vunpack.c.l.b16 %v145
  %v1049 = vunpack.c.l.b16 %v146
  %v1050 = vunpack.c.l.b16 %v147
  %v1051 = vunpack.c.l.b16 %v148
  %v1052 = vunpack.c.l.b16 %v149
  %v1053 = vunpack.c.l.b16 %v150
  %v1054 = vunpack.c.l.b16 %v151
  %v1055 = vunpack.c.l.b16 %v152
  %v1056 = vunpack.c.l.b16 %v153
  %v1057 = vunpack.c.l.b16 %v154
  %v1058 = vunpack.c.l.b16 %v155
  %v1059 = vunpack.c.l.b16 %v156
  %v1060 = vunpack.c.l.b16 %v157
  %v1061 = vunpack.c.l.b16 %v158
  %v1062 = vunpack.c.l.b16 %v159
  %v1063 = vunpack.c.l.b16 %v160
  %v1064 = vunpack.c.l.b16 %v161
  %v1065 = vunpack.c.l.b16 %v162
  %v1066 = vunpack.c.l.b16 %v163
  %v1067 = vunpack.c.l.b16 %v164
  %v1068 = vunpack.c.l.b16 %v165
  %v1069 = vunpack.c.l.b16 %v166
  %v1070 = vunpack.c.l.b16 %v167
  %v1071 = vunpack.c.l.b16 %v168
  %v1072 = vunpack.c.l.b16 %v169
  %v1073 = vunpack.c.l.b16 %v170
  %v1074 = vunpack.c.l.b16 %v171
  %v1075 = vunpack.c.l.b16 %v172
  %v1076 = vunpack.c.l.b16 %v173
  %v1077 = vunpack.c.l.b16 %v174
  %v1078 = vunpack.c.l.b16 %v175
  %v1079 = vunpack.c.l.b16 %v176
  %v1080 = vunpack.c.l.b16 %v177
  %v1081 = vunpack.c.l.b16 %v178
  %v1082 = vunpack.c.l.b16 %v179
  %v1083 = vunpack.c.l.b16 %v180
  %v1084 = vunpack.c.l.b16 %v181
  %v1085 = vunpack.c.l.b16 %v182
  %v1086 = vunpack.c.l.b16 %v183
  %v1087 = vunpack.c.l.b16 %v184
  %v1088 = vunpack.c.l.b16 %v185
  %v1089 = vunpack.c.l.b16 %v186
  %v1090 = vunpack.c.l.b16 %v187
  %v1091 = vunpack.c.l.b16 %v188
  %v1092 = vunpack.c.l.b16 %v189
  %v1093 = vunpack.c.l.b16 %v190
  %v1094 = vunpack.c.l.b16 %v191
  %v1095 = vunpack.c.l.b16 %v192
  %v1096 = vunpack.c.l.b16 %v193
  %v1097 = vunpack.c.l.b16 %v194
  %v1098 = vunpack.c.l.b16 %v195
  %v1099 = vunpack.c.l.b16 %v196
  %v1100 = vunpack.c.l.b16 %v197
  %v1101 = vunpack.c.l.b16 %v198
  %v1102 = vunpack.c.l.b16 %v199
  %v1103 = vunpack.c.l.b16 %v200
  %v1104 = vunpack.c.l.b16 %v201
  %v1105 = vunpack.c.l.b16 %v202
  %v1106 = vunpack.c.l.b16 %v203
  %v1107 = vunpack.c.l.b16 %v204
  %v1108 = vunpack.c.l.b16 %v205
  %v1109 = vunpack.c.l.b16 %v206
  %v1110 = vunpack.c.l.b16 %v207
  %v1111 = vunpack.c.l.b16 %v208
  %v1112 = vunpack.c.l.b16 %v209
  %v1113 = vunpack.c.l.b16 %v210
  %v1114 = vunpack.c.l.b16 %v211
  %v1115 = vunpack.c.l.b16 %v212
  %v1116 = vunpack.c.l.b16 %v213
  %v1117 = vunpack.c.l.b16 %v214
  %v1118 = vunpack.c.l.b16 %v215
  %v1119 = vunpack.c.l.b16 %v216
  %v1120 = vunpack.c.l.b16 %v217
  %v1121 = vunpack.c.l.b16 %v218
  %v1122 = vunpack.c.l.b16 %v219
  %v1123 = vunpack.c.l.b16 %v220
  %v1124 = vunpack.c.l.b16 %v221
  %v1125 = vunpack.c.l.b16 %v222
  %v1126 = vunpack.c.l.b16 %v223
  %v1127 = vunpack.c.l.b16 %v224
  %v1128 = vunpack.c.l.b16 %v225
  %v1129 = vunpack.c.l.b16 %v226
  %v1130 = vunpack.c.l.b16 %v227
  %v1131 = vunpack.c.l.b16 %v228
  %v1132 = vunpack.c.l.b16 %v229
  %v1133 = vunpack.c.l.b16 %v230
  %v1134 = vunpack.c.l.b16 %v231
  %v1135 = vunpack.c.l.b16 %v232
  %v1136 = vunpack.c.l.b16 %v233
  %v1137 = vunpack.c.l.b16 %v234
  %v1138 = vunpack.c.l.b16 %v235
  %v1139 = vunpack.c.l.b16 %v236
  %v1140 = vunpack.c.l.b16 %v237
  %v1141 = vunpack.c.l.b16 %v238
  %v1142 = vunpack.c.l.b16 %v239
  %v1143 = vunpack.c.l.b16 %v240
  %v1144 = vunpack.c.l.b16 %v241
  %v1145 = vunpack.c.l.b16 %v242
  %v1146 = vunpack.c.l.b16 %v243
  %v1147 = vunpack.c.l.b16 %v244
  %v1148 = vunpack.c.l.b16 %v245
  %v1149 = vunpack.c.l.b16 %v246
  %v1150 = vunpack.c.l.b16 %v247
  %v1151 = vunpack.c.l.b16 %v248
  %v1152 = vunpack.c.l.b16 %v249
  %v1153 = vunpack.c.l.b16 %v250
  %v1154 = vunpack.c.l.b16 %v251
  %v1155 = vunpack.c.l.b16 %v252
  %v1156 = vunpack.c.l.b16 %v253
  %v1157 = vunpack.c.l.b16 %v254
  %v1158 = vunpack.c.l.b16 %v255
  %v1159 = vunpack.c.l.b16 %v256
  %v1160 = vunpack.c.l.b16 %v257
  %v1161 = vunpack.c.l.b16 %v258
  %v1162 = vunpack.c.l.b16 %v259
  %v1163 = vunpack.c.l.b16 %v260
  %v1164 = vunpack.c.l.b16 %v261
  %v1165 = vunpack.c.l.b16 %v262
  %v1166 = vunpack.c.l.b16 %v263
  %v1167 = vunpack.c.l.b16 %v264
  %v1168 = vunpack.c.l.b16 %v265
  %v1169 = vunpack.c.l.b16 %v266
  %v1170 = vunpack.c.l.b16 %v267
  %v1171 = vunpack.c.l.b16 %v268
  %v1172 = vunpack.c.l.b16 %v269
  %v1173 = vunpack.c.l.b16 %v270
  %v1174 = vpack.c.b16 %v1047, %v1046
  %v1175 = vpack.c.b16 %v1049, %v1048
  %v1176 = vpack.c.b16 %v1051, %v1050
  %v1177 = vpack.c.b16 %v1053, %v1052
  %v1178 = vpack.c.b16 %v1055, %v1054
  %v1179 = vpack.c.b16 %v1057, %v1056
  %v1180 = vpack.c.b16 %v1059, %v1058
  %v1181 = vpack.c.b16 %v1061, %v1060
  %v1182 = vpack.c.b16 %v1063, %v1062
  %v1183 = vpack.c.b16 %v1065, %v1064
  %v1184 = vpack.c.b16 %v1067, %v1066
  %v1185 = vpack.c.b16 %v1069, %v1068
  %v1186 = vpack.c.b16 %v1071, %v1070
  %v1187 = vpack.c.b16 %v1073, %v1072
  %v1188 = vpack.c.b16 %v1075, %v1074
  %v1189 = vpack.c.b16 %v1077, %v1076
  %v1190 = vpack.c.b16 %v1079, %v1078
  %v1191 = vpack.c.b16 %v1081, %v1080
  %v1192 = vpack.c.b16 %v1083, %v1082
  %v1193 = vpack.c.b16 %v1085, %v1084
  %v1194 = vpack.c.b16 %v1087, %v1086
  %v1195 = vpack.c.b16 %v1089, %v1088
  %v1196 = vpack.c.b16 %v1091, %v1090
  %v1197 = vpack.c.b16 %v1093, %v1092
  %v1198 = vpack.c.b16 %v1095, %v1094
  %v1199 = vpack.c.b16 %v1097, %v1096
  %v1200 = vpack.c.b16 %v1099, %v1098
  %v1201 = vpack.c.b16 %v1101, %v1100
  %v1202 = vpack.c.b16 %v1103, %v1102
  %v1203 = vpack.c.b16 %v1105, %v1104
  %v1204 = vpack.c.b16 %v1107, %v1106
  %v1205 = vpack.c.b16 %v1109, %v1108
  %v1206 = vpack.c.b16 %v1111, %v1110
  %v1207 = vpack.c.b16 %v1113, %v1112
  %v1208 = vpack.c.b16 %v1115, %v1114
  %v1209 = vpack.c.b16 %v1117, %v1116
  %v1210 = vpack.c.b16 %v1119, %v1118
  %v1211 = vpack.c.b16 %v1121, %v1120
  %v1212 = vpack.c.b16 %v1123, %v1122
  %v1213 = vpack.c.b16 %v1125, %v1124
  %v1214 = vpack.c.b16 %v1127, %v1126
  %v1215 = vpack.c.b16 %v1129, %v1128
  %v1216 = vpack.c.b16 %v1131, %v1130
  %v1217 = vpack.c.b16 %v1133, %v1132
  %v1218 = vpack.c.b16 %v1135, %v1134
  %v1219 = vpack.c.b16 %v1137, %v1136
  %v1220 = vpack.c.b16 %v1139, %v1138
  %v1221 = vpack.c.b16 %v1141, %v1140
  %v1222 = vpack.c.b16 %v1143, %v1142
  %v1223 = vpack.c.b16 %v1145, %v1144
  %v1224 = vpack.c.b16 %v1147, %v1146
  %v1225 = vpack.c.b16 %v1149, %v1148
  %v1226 = vpack.c.b16 %v1151, %v1150
  %v1227 = vpack.c.b16 %v1153, %v1152
  %v1228 = vpack.c.b16 %v1155, %v1154
  %v1229 = vpack.c.b16 %v1157, %v1156
  %v1230 = vpack.c.b16 %v1159, %v1158
  %v1231 = vpack.c.b16 %v1161, %v1160
  %v1232 = vpack.c.b16 %v1163, %v1162
  %v1233 = vpack.c.b16 %v1165, %v1164
  %v1234 = vpack.c.b16 %v1167, %v1166
  %v1235 = vpack.c.b16 %v1169, %v1168
  %v1236 = vpack.c.b16 %v1171, %v1170
  %v1237 = vpack.c.b16 %v1173, %v1172
  %1302 = vmatprep.subr.bf16.mxu0 0
  %1303 = vmatpush1.bf16.msra.mxu0 %v1174
  %1304 = vmatprep.subr.bf16.mxu0 0
  %1305 = vmatpush1.bf16.msra.mxu0 %v1175
  %1306 = vmatprep.subr.bf16.mxu0 0
  %1307 = vmatpush1.bf16.msra.mxu0 %v1176
  %1308 = vmatprep.subr.bf16.mxu0 0
  %1309 = vmatpush1.bf16.msra.mxu0 %v1177
  %1310 = vmatprep.subr.bf16.mxu0 0
  %1311 = vmatpush1.bf16.msra.mxu0 %v1178
  %1312 = vmatprep.subr.bf16.mxu0 0
  %1313 = vmatpush1.bf16.msra.mxu0 %v1179
  %1314 = vmatprep.subr.bf16.mxu0 0
  %1315 = vmatpush1.bf16.msra.mxu0 %v1180
  %1316 = vmatprep.subr.bf16.mxu0 0
  %1317 = vmatpush1.bf16.msra.mxu0 %v1181
  %1318 = vmatprep.subr.bf16.mxu0 0
  %1319 = vmatpush1.bf16.msra.mxu0 %v1182
  %1320 = vmatprep.subr.bf16.mxu0 0
  %1321 = vmatpush1.bf16.msra.mxu0 %v1183
  %1322 = vmatprep.subr.bf16.mxu0 0
  %1323 = vmatpush1.bf16.msra.mxu0 %v1184
  %1324 = vmatprep.subr.bf16.mxu0 0
  %1325 = vmatpush1.bf16.msra.mxu0 %v1185
  %1326 = vmatprep.subr.bf16.mxu0 0
  %1327 = vmatpush1.bf16.msra.mxu0 %v1186
  %1328 = vmatprep.subr.bf16.mxu0 0
  %1329 = vmatpush1.bf16.msra.mxu0 %v1187
  %1330 = vmatprep.subr.bf16.mxu0 0
  %1331 = vmatpush1.bf16.msra.mxu0 %v1188
  %1332 = vmatprep.subr.bf16.mxu0 0
  %1333 = vmatpush1.bf16.msra.mxu0 %v1189
  %1334 = vmatprep.mubr.bf16.mxu0 %v663
  %1335 = vmatmul.mubr.bf16.gmra.mrb[0].mxu0 %v662
  %v1336 = vpop.f32.mrb[0].mxu0
  %v1337 = vadd.f32 %v276, %v1336
  %v1338 = vpop.f32.mrb[0].mxu0
  %v1339 = vpop.f32.mrb[0].mxu0
  %v1340 = vadd.f32 %v276, %v1339
  %v1341 = vpop.f32.mrb[0].mxu0
  %1342 = vmatprep.mubr.bf16.mxu0 %v671
  %1343 = vmatmul.mubr.bf16.gmra.mrb[0].mxu0 %v670
  %v1344 = vpop.f32.mrb[0].mxu0
  %v1345 = vadd.f32 %v276, %v1344
  %v1346 = vpop.f32.mrb[0].mxu0
  %v1347 = vpop.f32.mrb[0].mxu0
  %v1348 = vadd.f32 %v276, %v1347
  %v1349 = vpop.f32.mrb[0].mxu0
  %1350 = vmatprep.mubr.bf16.mxu0 %v679
  %1351 = vmatmul.mubr.bf16.gmra.mrb[0].mxu0 %v678
  %v1352 = vpop.f32.mrb[0].mxu0
  %v1353 = vadd.f32 %v276, %v1352
  %v1354 = vpop.f32.mrb[0].mxu0
  %v1355 = vpop.f32.mrb[0].mxu0
  %v1356 = vadd.f32 %v276, %v1355
  %v1357 = vpop.f32.mrb[0].mxu0
  %1358 = vmatprep.mubr.bf16.mxu0 %v687
  %1359 = vmatmul.mubr.bf16.gmra.mrb[0].mxu0 %v686
  %v1360 = vpop.f32.mrb[0].mxu0
  %v1361 = vadd.f32 %v276, %v1360
  %v1362 = vpop.f32.mrb[0].mxu0
  %v1363 = vpop.f32.mrb[0].mxu0
  %v1364 = vadd.f32 %v276, %v1363
  %v1365 = vpop.f32.mrb[0].mxu0
  %1366 = vmatprep.mubr.bf16.mxu0 %v695
  %1367 = vmatmul.mubr.bf16.gmra.mrb[0].mxu0 %v694
  %v1368 = vpop.f32.mrb[0].mxu0
  %v1369 = vadd.f32 %v276, %v1368
  %v1370 = vpop.f32.mrb[0].mxu0
  %v1371 = vpop.f32.mrb[0].mxu0
  %v1372 = vadd.f32 %v276, %v1371
  %v1373 = vpop.f32.mrb[0].mxu0
  %1374 = vmatprep.mubr.bf16.mxu0 %v703
  %1375 = vmatmul.mubr.bf16.gmra.mrb[0].mxu0 %v702
  %v1376 = vpop.f32.mrb[0].mxu0
  %v1377 = vadd.f32 %v276, %v1376
  %v1378 = vpop.f32.mrb[0].mxu0
  %v1379 = vpop.f32.mrb[0].mxu0
  %v1380 = vadd.f32 %v276, %v1379
  %v1381 = vpop.f32.mrb[0].mxu0
  %1382 = vmatprep.mubr.bf16.mxu0 %v711
  %1383 = vmatmul.mubr.bf16.gmra.mrb[0].mxu0 %v710
  %v1384 = vpop.f32.mrb[0].mxu0
  %v1385 = vadd.f32 %v276, %v1384
  %v1386 = vpop.f32.mrb[0].mxu0
  %v1387 = vpop.f32.mrb[0].mxu0
  %v1388 = vadd.f32 %v276, %v1387
  %v1389 = vpop.f32.mrb[0].mxu0
  %1390 = vmatprep.mubr.bf16.mxu0 %v719
  %1391 = vmatmul.mubr.bf16.gmra.mrb[0].mxu0 %v718
  %v1392 = vpop.f32.mrb[0].mxu0
  %v1393 = vadd.f32 %v276, %v1392
  %v1394 = vpop.f32.mrb[0].mxu0
  %v1395 = vpop.f32.mrb[0].mxu0
  %v1396 = vadd.f32 %v276, %v1395
  %v1397 = vpop.f32.mrb[0].mxu0
  %1398 = vmatprep.mubr.bf16.mxu0 %v727
  %1399 = vmatmul.mubr.bf16.gmra.mrb[0].mxu0 %v726
  %v1400 = vpop.f32.mrb[0].mxu0
  %v1401 = vadd.f32 %v276, %v1400
  %v1402 = vpop.f32.mrb[0].mxu0
  %v1403 = vpop.f32.mrb[0].mxu0
  %v1404 = vadd.f32 %v276, %v1403
  %v1405 = vpop.f32.mrb[0].mxu0
  %1406 = vmatprep.mubr.bf16.mxu0 %v735
  %1407 = vmatmul.mubr.bf16.gmra.mrb[0].mxu0 %v734
  %v1408 = vpop.f32.mrb[0].mxu0
  %v1409 = vadd.f32 %v276, %v1408
  %v1410 = vpop.f32.mrb[0].mxu0
  %v1411 = vpop.f32.mrb[0].mxu0
  %v1412 = vadd.f32 %v276, %v1411
  %v1413 = vpop.f32.mrb[0].mxu0
  %1414 = vmatprep.mubr.bf16.mxu0 %v743
  %1415 = vmatmul.mubr.bf16.gmra.mrb[0].mxu0 %v742
  %v1416 = vpop.f32.mrb[0].mxu0
  %v1417 = vadd.f32 %v276, %v1416
  %v1418 = vpop.f32.mrb[0].mxu0
  %v1419 = vpop.f32.mrb[0].mxu0
  %v1420 = vadd.f32 %v276, %v1419
  %v1421 = vpop.f32.mrb[0].mxu0
  %1422 = vmatprep.mubr.bf16.mxu0 %v751
  %1423 = vmatmul.mubr.bf16.gmra.mrb[0].mxu0 %v750
  %v1424 = vpop.f32.mrb[0].mxu0
  %v1425 = vadd.f32 %v276, %v1424
  %v1426 = vpop.f32.mrb[0].mxu0
  %v1427 = vpop.f32.mrb[0].mxu0
  %v1428 = vadd.f32 %v276, %v1427
  %v1429 = vpop.f32.mrb[0].mxu0
  %1430 = vmatprep.mubr.bf16.mxu0 %v759
  %1431 = vmatmul.mubr.bf16.gmra.mrb[0].mxu0 %v758
  %v1432 = vpop.f32.mrb[0].mxu0
  %v1433 = vadd.f32 %v276, %v1432
  %v1434 = vpop.f32.mrb[0].mxu0
  %v1435 = vpop.f32.mrb[0].mxu0
  %v1436 = vadd.f32 %v276, %v1435
  %v1437 = vpop.f32.mrb[0].mxu0
  %1438 = vmatprep.mubr.bf16.mxu0 %v767
  %1439 = vmatmul.mubr.bf16.gmra.mrb[0].mxu0 %v766
  %v1440 = vpop.f32.mrb[0].mxu0
  %v1441 = vadd.f32 %v276, %v1440
  %v1442 = vpop.f32.mrb[0].mxu0
  %v1443 = vpop.f32.mrb[0].mxu0
  %v1444 = vadd.f32 %v276, %v1443
  %v1445 = vpop.f32.mrb[0].mxu0
  %1446 = vmatprep.mubr.bf16.mxu0 %v775
  %1447 = vmatmul.mubr.bf16.gmra.mrb[0].mxu0 %v774
  %v1448 = vpop.f32.mrb[0].mxu0
  %v1449 = vadd.f32 %v276, %v1448
  %v1450 = vpop.f32.mrb[0].mxu0
  %v1451 = vpop.f32.mrb[0].mxu0
  %v1452 = vadd.f32 %v276, %v1451
  %v1453 = vpop.f32.mrb[0].mxu0
  %1454 = vmatprep.mubr.bf16.mxu0 %v783
  %1455 = vmatmul.mubr.bf16.gmra.mrb[0].mxu0 %v782
  %v1456 = vpop.f32.mrb[0].mxu0
  %v1457 = vadd.f32 %v276, %v1456
  %v1458 = vpop.f32.mrb[0].mxu0
  %v1459 = vpop.f32.mrb[0].mxu0
  %v1460 = vadd.f32 %v276, %v1459
  %v1461 = vpop.f32.mrb[0].mxu0
  %1462 = vdwg.mxu0
  %1463 = vmatprep.subr.bf16.mxu0 0
  %1464 = vmatpush1.bf16.msra.mxu0 %v1190
  %1465 = vmatprep.subr.bf16.mxu0 0
  %1466 = vmatpush1.bf16.msra.mxu0 %v1191
  %1467 = vmatprep.subr.bf16.mxu0 0
  %1468 = vmatpush1.bf16.msra.mxu0 %v1192
  %1469 = vmatprep.subr.bf16.mxu0 0
  %1470 = vmatpush1.bf16.msra.mxu0 %v1193
  %1471 = vmatprep.subr.bf16.mxu0 0
  %1472 = vmatpush1.bf16.msra.mxu0 %v1194
  %1473 = vmatprep.subr.bf16.mxu0 0
  %1474 = vmatpush1.bf16.msra.mxu0 %v1195
  %1475 = vmatprep.subr.bf16.mxu0 0
  %1476 = vmatpush1.bf16.msra.mxu0 %v1196
  %1477 = vmatprep.subr.bf16.mxu0 0
  %1478 = vmatpush1.bf16.msra.mxu0 %v1197
  %1479 = vmatprep.subr.bf16.mxu0 0
  %1480 = vmatpush1.bf16.msra.mxu0 %v1198
  %1481 = vmatprep.subr.bf16.mxu0 0
  %1482 = vmatpush1.bf16.msra.mxu0 %v1199
  %1483 = vmatprep.subr.bf16.mxu0 0
  %1484 = vmatpush1.bf16.msra.mxu0 %v1200
  %1485 = vmatprep.subr.bf16.mxu0 0
  %1486 = vmatpush1.bf16.msra.mxu0 %v1201
  %1487 = vmatprep.subr.bf16.mxu0 0
  %1488 = vmatpush1.bf16.msra.mxu0 %v1202
  %1489 = vmatprep.subr.bf16.mxu0 0
  %1490 = vmatpush1.bf16.msra.mxu0 %v1203
  %1491 = vmatprep.subr.bf16.mxu0 0
  %1492 = vmatpush1.bf16.msra.mxu0 %v1204
  %1493 = vmatprep.subr.bf16.mxu0 0
  %1494 = vmatpush1.bf16.msra.mxu0 %v1205
  %1495 = vmatprep.mubr.bf16.mxu0 %v665
  %1496 = vmatmul.mubr.bf16.gmra.mrb[0].mxu0 %v664
  %v1497 = vpop.f32.mrb[0].mxu0
  %v1498 = vadd.f32 %v1337, %v1497
  %v1499 = vpop.f32.mrb[0].mxu0
  %v1500 = vpop.f32.mrb[0].mxu0
  %v1501 = vadd.f32 %v1340, %v1500
  %v1502 = vpop.f32.mrb[0].mxu0
  %1503 = vmatprep.mubr.bf16.mxu0 %v673
  %1504 = vmatmul.mubr.bf16.gmra.mrb[0].mxu0 %v672
  %v1505 = vpop.f32.mrb[0].mxu0
  %v1506 = vadd.f32 %v1345, %v1505
  %v1507 = vpop.f32.mrb[0].mxu0
  %v1508 = vpop.f32.mrb[0].mxu0
  %v1509 = vadd.f32 %v1348, %v1508
  %v1510 = vpop.f32.mrb[0].mxu0
  %1511 = vmatprep.mubr.bf16.mxu0 %v681
  %1512 = vmatmul.mubr.bf16.gmra.mrb[0].mxu0 %v680
  %v1513 = vpop.f32.mrb[0].mxu0
  %v1514 = vadd.f32 %v1353, %v1513
  %v1515 = vpop.f32.mrb[0].mxu0
  %v1516 = vpop.f32.mrb[0].mxu0
  %v1517 = vadd.f32 %v1356, %v1516
  %v1518 = vpop.f32.mrb[0].mxu0
  %1519 = vmatprep.mubr.bf16.mxu0 %v689
  %1520 = vmatmul.mubr.bf16.gmra.mrb[0].mxu0 %v688
  %v1521 = vpop.f32.mrb[0].mxu0
  %v1522 = vadd.f32 %v1361, %v1521
  %v1523 = vpop.f32.mrb[0].mxu0
  %v1524 = vpop.f32.mrb[0].mxu0
  %v1525 = vadd.f32 %v1364, %v1524
  %v1526 = vpop.f32.mrb[0].mxu0
  %1527 = vmatprep.mubr.bf16.mxu0 %v697
  %1528 = vmatmul.mubr.bf16.gmra.mrb[0].mxu0 %v696
  %v1529 = vpop.f32.mrb[0].mxu0
  %v1530 = vadd.f32 %v1369, %v1529
  %v1531 = vpop.f32.mrb[0].mxu0
  %v1532 = vpop.f32.mrb[0].mxu0
  %v1533 = vadd.f32 %v1372, %v1532
  %v1534 = vpop.f32.mrb[0].mxu0
  %1535 = vmatprep.mubr.bf16.mxu0 %v705
  %1536 = vmatmul.mubr.bf16.gmra.mrb[0].mxu0 %v704
  %v1537 = vpop.f32.mrb[0].mxu0
  %v1538 = vadd.f32 %v1377, %v1537
  %v1539 = vpop.f32.mrb[0].mxu0
  %v1540 = vpop.f32.mrb[0].mxu0
  %v1541 = vadd.f32 %v1380, %v1540
  %v1542 = vpop.f32.mrb[0].mxu0
  %1543 = vmatprep.mubr.bf16.mxu0 %v713
  %1544 = vmatmul.mubr.bf16.gmra.mrb[0].mxu0 %v712
  %v1545 = vpop.f32.mrb[0].mxu0
  %v1546 = vadd.f32 %v1385, %v1545
  %v1547 = vpop.f32.mrb[0].mxu0
  %v1548 = vpop.f32.mrb[0].mxu0
  %v1549 = vadd.f32 %v1388, %v1548
  %v1550 = vpop.f32.mrb[0].mxu0
  %1551 = vmatprep.mubr.bf16.mxu0 %v721
  %1552 = vmatmul.mubr.bf16.gmra.mrb[0].mxu0 %v720
  %v1553 = vpop.f32.mrb[0].mxu0
  %v1554 = vadd.f32 %v1393, %v1553
  %v1555 = vpop.f32.mrb[0].mxu0
  %v1556 = vpop.f32.mrb[0].mxu0
  %v1557 = vadd.f32 %v1396, %v1556
  %v1558 = vpop.f32.mrb[0].mxu0
  %1559 = vmatprep.mubr.bf16.mxu0 %v729
  %1560 = vmatmul.mubr.bf16.gmra.mrb[0].mxu0 %v728
  %v1561 = vpop.f32.mrb[0].mxu0
  %v1562 = vadd.f32 %v1401, %v1561
  %v1563 = vpop.f32.mrb[0].mxu0
  %v1564 = vpop.f32.mrb[0].mxu0
  %v1565 = vadd.f32 %v1404, %v1564
  %v1566 = vpop.f32.mrb[0].mxu0
  %1567 = vmatprep.mubr.bf16.mxu0 %v737
  %1568 = vmatmul.mubr.bf16.gmra.mrb[0].mxu0 %v736
  %v1569 = vpop.f32.mrb[0].mxu0
  %v1570 = vadd.f32 %v1409, %v1569
  %v1571 = vpop.f32.mrb[0].mxu0
  %v1572 = vpop.f32.mrb[0].mxu0
  %v1573 = vadd.f32 %v1412, %v1572
  %v1574 = vpop.f32.mrb[0].mxu0
  %1575 = vmatprep.mubr.bf16.mxu0 %v745
  %1576 = vmatmul.mubr.bf16.gmra.mrb[0].mxu0 %v744
  %v1577 = vpop.f32.mrb[0].mxu0
  %v1578 = vadd.f32 %v1417, %v1577
  %v1579 = vpop.f32.mrb[0].mxu0
  %v1580 = vpop.f32.mrb[0].mxu0
  %v1581 = vadd.f32 %v1420, %v1580
  %v1582 = vpop.f32.mrb[0].mxu0
  %1583 = vmatprep.mubr.bf16.mxu0 %v753
  %1584 = vmatmul.mubr.bf16.gmra.mrb[0].mxu0 %v752
  %v1585 = vpop.f32.mrb[0].mxu0
  %v1586 = vadd.f32 %v1425, %v1585
  %v1587 = vpop.f32.mrb[0].mxu0
  %v1588 = vpop.f32.mrb[0].mxu0
  %v1589 = vadd.f32 %v1428, %v1588
  %v1590 = vpop.f32.mrb[0].mxu0
  %1591 = vmatprep.mubr.bf16.mxu0 %v761
  %1592 = vmatmul.mubr.bf16.gmra.mrb[0].mxu0 %v760
  %v1593 = vpop.f32.mrb[0].mxu0
  %v1594 = vadd.f32 %v1433, %v1593
  %v1595 = vpop.f32.mrb[0].mxu0
  %v1596 = vpop.f32.mrb[0].mxu0
  %v1597 = vadd.f32 %v1436, %v1596
  %v1598 = vpop.f32.mrb[0].mxu0
  %1599 = vmatprep.mubr.bf16.mxu0 %v769
  %1600 = vmatmul.mubr.bf16.gmra.mrb[0].mxu0 %v768
  %v1601 = vpop.f32.mrb[0].mxu0
  %v1602 = vadd.f32 %v1441, %v1601
  %v1603 = vpop.f32.mrb[0].mxu0
  %v1604 = vpop.f32.mrb[0].mxu0
  %v1605 = vadd.f32 %v1444, %v1604
  %v1606 = vpop.f32.mrb[0].mxu0
  %1607 = vmatprep.mubr.bf16.mxu0 %v777
  %1608 = vmatmul.mubr.bf16.gmra.mrb[0].mxu0 %v776
  %v1609 = vpop.f32.mrb[0].mxu0
  %v1610 = vadd.f32 %v1449, %v1609
  %v1611 = vpop.f32.mrb[0].mxu0
  %v1612 = vpop.f32.mrb[0].mxu0
  %v1613 = vadd.f32 %v1452, %v1612
  %v1614 = vpop.f32.mrb[0].mxu0
  %1615 = vmatprep.mubr.bf16.mxu0 %v785
  %1616 = vmatmul.mubr.bf16.gmra.mrb[0].mxu0 %v784
  %v1617 = vpop.f32.mrb[0].mxu0
  %v1618 = vadd.f32 %v1457, %v1617
  %v1619 = vpop.f32.mrb[0].mxu0
  %v1620 = vpop.f32.mrb[0].mxu0
  %v1621 = vadd.f32 %v1460, %v1620
  %v1622 = vpop.f32.mrb[0].mxu0
  %1623 = vdwg.mxu0
  %1624 = vmatprep.subr.bf16.mxu0 0
  %1625 = vmatpush1.bf16.msra.mxu0 %v1206
  %1626 = vmatprep.subr.bf16.mxu0 0
  %1627 = vmatpush1.bf16.msra.mxu0 %v1207
  %1628 = vmatprep.subr.bf16.mxu0 0
  %1629 = vmatpush1.bf16.msra.mxu0 %v1208
  %1630 = vmatprep.subr.bf16.mxu0 0
  %1631 = vmatpush1.bf16.msra.mxu0 %v1209
  %1632 = vmatprep.subr.bf16.mxu0 0
  %1633 = vmatpush1.bf16.msra.mxu0 %v1210
  %1634 = vmatprep.subr.bf16.mxu0 0
  %1635 = vmatpush1.bf16.msra.mxu0 %v1211
  %1636 = vmatprep.subr.bf16.mxu0 0
  %1637 = vmatpush1.bf16.msra.mxu0 %v1212
  %1638 = vmatprep.subr.bf16.mxu0 0
  %1639 = vmatpush1.bf16.msra.mxu0 %v1213
  %1640 = vmatprep.subr.bf16.mxu0 0
  %1641 = vmatpush1.bf16.msra.mxu0 %v1214
  %1642 = vmatprep.subr.bf16.mxu0 0
  %1643 = vmatpush1.bf16.msra.mxu0 %v1215
  %1644 = vmatprep.subr.bf16.mxu0 0
  %1645 = vmatpush1.bf16.msra.mxu0 %v1216
  %1646 = vmatprep.subr.bf16.mxu0 0
  %1647 = vmatpush1.bf16.msra.mxu0 %v1217
  %1648 = vmatprep.subr.bf16.mxu0 0
  %1649 = vmatpush1.bf16.msra.mxu0 %v1218
  %1650 = vmatprep.subr.bf16.mxu0 0
  %1651 = vmatpush1.bf16.msra.mxu0 %v1219
  %1652 = vmatprep.subr.bf16.mxu0 0
  %1653 = vmatpush1.bf16.msra.mxu0 %v1220
  %1654 = vmatprep.subr.bf16.mxu0 0
  %1655 = vmatpush1.bf16.msra.mxu0 %v1221
  %1656 = vmatprep.mubr.bf16.mxu0 %v667
  %1657 = vmatmul.mubr.bf16.gmra.mrb[0].mxu0 %v666
  %v1658 = vpop.f32.mrb[0].mxu0
  %v1659 = vadd.f32 %v1498, %v1658
  %v1660 = vpop.f32.mrb[0].mxu0
  %v1661 = vpop.f32.mrb[0].mxu0
  %v1662 = vadd.f32 %v1501, %v1661
  %v1663 = vpop.f32.mrb[0].mxu0
  %1664 = vmatprep.mubr.bf16.mxu0 %v675
  %1665 = vmatmul.mubr.bf16.gmra.mrb[0].mxu0 %v674
  %v1666 = vpop.f32.mrb[0].mxu0
  %v1667 = vadd.f32 %v1506, %v1666
  %v1668 = vpop.f32.mrb[0].mxu0
  %v1669 = vpop.f32.mrb[0].mxu0
  %v1670 = vadd.f32 %v1509, %v1669
  %v1671 = vpop.f32.mrb[0].mxu0
  %1672 = vmatprep.mubr.bf16.mxu0 %v683
  %1673 = vmatmul.mubr.bf16.gmra.mrb[0].mxu0 %v682
  %v1674 = vpop.f32.mrb[0].mxu0
  %v1675 = vadd.f32 %v1514, %v1674
  %v1676 = vpop.f32.mrb[0].mxu0
  %v1677 = vpop.f32.mrb[0].mxu0
  %v1678 = vadd.f32 %v1517, %v1677
  %v1679 = vpop.f32.mrb[0].mxu0
  %1680 = vmatprep.mubr.bf16.mxu0 %v691
  %1681 = vmatmul.mubr.bf16.gmra.mrb[0].mxu0 %v690
  %v1682 = vpop.f32.mrb[0].mxu0
  %v1683 = vadd.f32 %v1522, %v1682
  %v1684 = vpop.f32.mrb[0].mxu0
  %v1685 = vpop.f32.mrb[0].mxu0
  %v1686 = vadd.f32 %v1525, %v1685
  %v1687 = vpop.f32.mrb[0].mxu0
  %1688 = vmatprep.mubr.bf16.mxu0 %v699
  %1689 = vmatmul.mubr.bf16.gmra.mrb[0].mxu0 %v698
  %v1690 = vpop.f32.mrb[0].mxu0
  %v1691 = vadd.f32 %v1530, %v1690
  %v1692 = vpop.f32.mrb[0].mxu0
  %v1693 = vpop.f32.mrb[0].mxu0
  %v1694 = vadd.f32 %v1533, %v1693
  %v1695 = vpop.f32.mrb[0].mxu0
  %1696 = vmatprep.mubr.bf16.mxu0 %v707
  %1697 = vmatmul.mubr.bf16.gmra.mrb[0].mxu0 %v706
  %v1698 = vpop.f32.mrb[0].mxu0
  %v1699 = vadd.f32 %v1538, %v1698
  %v1700 = vpop.f32.mrb[0].mxu0
  %v1701 = vpop.f32.mrb[0].mxu0
  %v1702 = vadd.f32 %v1541, %v1701
  %v1703 = vpop.f32.mrb[0].mxu0
  %1704 = vmatprep.mubr.bf16.mxu0 %v715
  %1705 = vmatmul.mubr.bf16.gmra.mrb[0].mxu0 %v714
  %v1706 = vpop.f32.mrb[0].mxu0
  %v1707 = vadd.f32 %v1546, %v1706
  %v1708 = vpop.f32.mrb[0].mxu0
  %v1709 = vpop.f32.mrb[0].mxu0
  %v1710 = vadd.f32 %v1549, %v1709
  %v1711 = vpop.f32.mrb[0].mxu0
  %1712 = vmatprep.mubr.bf16.mxu0 %v723
  %1713 = vmatmul.mubr.bf16.gmra.mrb[0].mxu0 %v722
  %v1714 = vpop.f32.mrb[0].mxu0
  %v1715 = vadd.f32 %v1554, %v1714
  %v1716 = vpop.f32.mrb[0].mxu0
  %v1717 = vpop.f32.mrb[0].mxu0
  %v1718 = vadd.f32 %v1557, %v1717
  %v1719 = vpop.f32.mrb[0].mxu0
  %1720 = vmatprep.mubr.bf16.mxu0 %v731
  %1721 = vmatmul.mubr.bf16.gmra.mrb[0].mxu0 %v730
  %v1722 = vpop.f32.mrb[0].mxu0
  %v1723 = vadd.f32 %v1562, %v1722
  %v1724 = vpop.f32.mrb[0].mxu0
  %v1725 = vpop.f32.mrb[0].mxu0
  %v1726 = vadd.f32 %v1565, %v1725
  %v1727 = vpop.f32.mrb[0].mxu0
  %1728 = vmatprep.mubr.bf16.mxu0 %v739
  %1729 = vmatmul.mubr.bf16.gmra.mrb[0].mxu0 %v738
  %v1730 = vpop.f32.mrb[0].mxu0
  %v1731 = vadd.f32 %v1570, %v1730
  %v1732 = vpop.f32.mrb[0].mxu0
  %v1733 = vpop.f32.mrb[0].mxu0
  %v1734 = vadd.f32 %v1573, %v1733
  %v1735 = vpop.f32.mrb[0].mxu0
  %1736 = vmatprep.mubr.bf16.mxu0 %v747
  %1737 = vmatmul.mubr.bf16.gmra.mrb[0].mxu0 %v746
  %v1738 = vpop.f32.mrb[0].mxu0
  %v1739 = vadd.f32 %v1578, %v1738
  %v1740 = vpop.f32.mrb[0].mxu0
  %v1741 = vpop.f32.mrb[0].mxu0
  %v1742 = vadd.f32 %v1581, %v1741
  %v1743 = vpop.f32.mrb[0].mxu0
  %1744 = vmatprep.mubr.bf16.mxu0 %v755
  %1745 = vmatmul.mubr.bf16.gmra.mrb[0].mxu0 %v754
  %v1746 = vpop.f32.mrb[0].mxu0
  %v1747 = vadd.f32 %v1586, %v1746
  %v1748 = vpop.f32.mrb[0].mxu0
  %v1749 = vpop.f32.mrb[0].mxu0
  %v1750 = vadd.f32 %v1589, %v1749
  %v1751 = vpop.f32.mrb[0].mxu0
  %1752 = vmatprep.mubr.bf16.mxu0 %v763
  %1753 = vmatmul.mubr.bf16.gmra.mrb[0].mxu0 %v762
  %v1754 = vpop.f32.mrb[0].mxu0
  %v1755 = vadd.f32 %v1594, %v1754
  %v1756 = vpop.f32.mrb[0].mxu0
  %v1757 = vpop.f32.mrb[0].mxu0
  %v1758 = vadd.f32 %v1597, %v1757
  %v1759 = vpop.f32.mrb[0].mxu0
  %1760 = vmatprep.mubr.bf16.mxu0 %v771
  %1761 = vmatmul.mubr.bf16.gmra.mrb[0].mxu0 %v770
  %v1762 = vpop.f32.mrb[0].mxu0
  %v1763 = vadd.f32 %v1602, %v1762
  %v1764 = vpop.f32.mrb[0].mxu0
  %v1765 = vpop.f32.mrb[0].mxu0
  %v1766 = vadd.f32 %v1605, %v1765
  %v1767 = vpop.f32.mrb[0].mxu0
  %1768 = vmatprep.mubr.bf16.mxu0 %v779
  %1769 = vmatmul.mubr.bf16.gmra.mrb[0].mxu0 %v778
  %v1770 = vpop.f32.mrb[0].mxu0
  %v1771 = vadd.f32 %v1610, %v1770
  %v1772 = vpop.f32.mrb[0].mxu0
  %v1773 = vpop.f32.mrb[0].mxu0
  %v1774 = vadd.f32 %v1613, %v1773
  %v1775 = vpop.f32.mrb[0].mxu0
  %1776 = vmatprep.mubr.bf16.mxu0 %v787
  %1777 = vmatmul.mubr.bf16.gmra.mrb[0].mxu0 %v786
  %v1778 = vpop.f32.mrb[0].mxu0
  %v1779 = vadd.f32 %v1618, %v1778
  %v1780 = vpop.f32.mrb[0].mxu0
  %v1781 = vpop.f32.mrb[0].mxu0
  %v1782 = vadd.f32 %v1621, %v1781
  %v1783 = vpop.f32.mrb[0].mxu0
  %1784 = vdwg.mxu0
  %1785 = vmatprep.subr.bf16.mxu0 0
  %1786 = vmatpush1.bf16.msra.mxu0 %v1222
  %1787 = vmatprep.subr.bf16.mxu0 0
  %1788 = vmatpush1.bf16.msra.mxu0 %v1223
  %1789 = vmatprep.subr.bf16.mxu0 0
  %1790 = vmatpush1.bf16.msra.mxu0 %v1224
  %1791 = vmatprep.subr.bf16.mxu0 0
  %1792 = vmatpush1.bf16.msra.mxu0 %v1225
  %1793 = vmatprep.subr.bf16.mxu0 0
  %1794 = vmatpush1.bf16.msra.mxu0 %v1226
  %1795 = vmatprep.subr.bf16.mxu0 0
  %1796 = vmatpush1.bf16.msra.mxu0 %v1227
  %1797 = vmatprep.subr.bf16.mxu0 0
  %1798 = vmatpush1.bf16.msra.mxu0 %v1228
  %1799 = vmatprep.subr.bf16.mxu0 0
  %1800 = vmatpush1.bf16.msra.mxu0 %v1229
  %1801 = vmatprep.subr.bf16.mxu0 0
  %1802 = vmatpush1.bf16.msra.mxu0 %v1230
  %1803 = vmatprep.subr.bf16.mxu0 0
  %1804 = vmatpush1.bf16.msra.mxu0 %v1231
  %1805 = vmatprep.subr.bf16.mxu0 0
  %1806 = vmatpush1.bf16.msra.mxu0 %v1232
  %1807 = vmatprep.subr.bf16.mxu0 0
  %1808 = vmatpush1.bf16.msra.mxu0 %v1233
  %1809 = vmatprep.subr.bf16.mxu0 0
  %1810 = vmatpush1.bf16.msra.mxu0 %v1234
  %1811 = vmatprep.subr.bf16.mxu0 0
  %1812 = vmatpush1.bf16.msra.mxu0 %v1235
  %1813 = vmatprep.subr.bf16.mxu0 0
  %1814 = vmatpush1.bf16.msra.mxu0 %v1236
  %1815 = vmatprep.subr.bf16.mxu0 0
  %1816 = vmatpush1.bf16.msra.mxu0 %v1237
  %1817 = vmatprep.mubr.bf16.mxu0 %v669
  %1818 = vmatmul.mubr.bf16.gmra.mrb[0].mxu0 %v668
  %v1819 = vpop.f32.mrb[0].mxu0
  %v1820 = vadd.f32 %v1659, %v1819
  %v1821 = vpop.f32.mrb[0].mxu0
  %v1822 = vpop.f32.mrb[0].mxu0
  %v1823 = vadd.f32 %v1662, %v1822
  %v1824 = vpop.f32.mrb[0].mxu0
  %1825 = vmatprep.mubr.bf16.mxu0 %v677
  %1826 = vmatmul.mubr.bf16.gmra.mrb[0].mxu0 %v676
  %v1827 = vpop.f32.mrb[0].mxu0
  %v1828 = vadd.f32 %v1667, %v1827
  %v1829 = vpop.f32.mrb[0].mxu0
  %v1830 = vpop.f32.mrb[0].mxu0
  %v1831 = vadd.f32 %v1670, %v1830
  %v1832 = vpop.f32.mrb[0].mxu0
  %1833 = vmatprep.mubr.bf16.mxu0 %v685
  %1834 = vmatmul.mubr.bf16.gmra.mrb[0].mxu0 %v684
  %v1835 = vpop.f32.mrb[0].mxu0
  %v1836 = vadd.f32 %v1675, %v1835
  %v1837 = vpop.f32.mrb[0].mxu0
  %v1838 = vpop.f32.mrb[0].mxu0
  %v1839 = vadd.f32 %v1678, %v1838
  %v1840 = vpop.f32.mrb[0].mxu0
  %1841 = vmatprep.mubr.bf16.mxu0 %v693
  %1842 = vmatmul.mubr.bf16.gmra.mrb[0].mxu0 %v692
  %v1843 = vpop.f32.mrb[0].mxu0
  %v1844 = vadd.f32 %v1683, %v1843
  %v1845 = vpop.f32.mrb[0].mxu0
  %v1846 = vpop.f32.mrb[0].mxu0
  %v1847 = vadd.f32 %v1686, %v1846
  %v1848 = vpop.f32.mrb[0].mxu0
  %1849 = vmatprep.mubr.bf16.mxu0 %v701
  %1850 = vmatmul.mubr.bf16.gmra.mrb[0].mxu0 %v700
  %v1851 = vpop.f32.mrb[0].mxu0
  %v1852 = vadd.f32 %v1691, %v1851
  %v1853 = vpop.f32.mrb[0].mxu0
  %v1854 = vpop.f32.mrb[0].mxu0
  %v1855 = vadd.f32 %v1694, %v1854
  %v1856 = vpop.f32.mrb[0].mxu0
  %1857 = vmatprep.mubr.bf16.mxu0 %v709
  %1858 = vmatmul.mubr.bf16.gmra.mrb[0].mxu0 %v708
  %v1859 = vpop.f32.mrb[0].mxu0
  %v1860 = vadd.f32 %v1699, %v1859
  %v1861 = vpop.f32.mrb[0].mxu0
  %v1862 = vpop.f32.mrb[0].mxu0
  %v1863 = vadd.f32 %v1702, %v1862
  %v1864 = vpop.f32.mrb[0].mxu0
  %1865 = vmatprep.mubr.bf16.mxu0 %v717
  %1866 = vmatmul.mubr.bf16.gmra.mrb[0].mxu0 %v716
  %v1867 = vpop.f32.mrb[0].mxu0
  %v1868 = vadd.f32 %v1707, %v1867
  %v1869 = vpop.f32.mrb[0].mxu0
  %v1870 = vpop.f32.mrb[0].mxu0
  %v1871 = vadd.f32 %v1710, %v1870
  %v1872 = vpop.f32.mrb[0].mxu0
  %1873 = vmatprep.mubr.bf16.mxu0 %v725
  %1874 = vmatmul.mubr.bf16.gmra.mrb[0].mxu0 %v724
  %v1875 = vpop.f32.mrb[0].mxu0
  %v1876 = vadd.f32 %v1715, %v1875
  %v1877 = vpop.f32.mrb[0].mxu0
  %v1878 = vpop.f32.mrb[0].mxu0
  %v1879 = vadd.f32 %v1718, %v1878
  %v1880 = vpop.f32.mrb[0].mxu0
  %1881 = vmatprep.mubr.bf16.mxu0 %v733
  %1882 = vmatmul.mubr.bf16.gmra.mrb[0].mxu0 %v732
  %v1883 = vpop.f32.mrb[0].mxu0
  %v1884 = vadd.f32 %v1723, %v1883
  %v1885 = vpop.f32.mrb[0].mxu0
  %v1886 = vpop.f32.mrb[0].mxu0
  %v1887 = vadd.f32 %v1726, %v1886
  %v1888 = vpop.f32.mrb[0].mxu0
  %1889 = vmatprep.mubr.bf16.mxu0 %v741
  %1890 = vmatmul.mubr.bf16.gmra.mrb[0].mxu0 %v740
  %v1891 = vpop.f32.mrb[0].mxu0
  %v1892 = vadd.f32 %v1731, %v1891
  %v1893 = vpop.f32.mrb[0].mxu0
  %v1894 = vpop.f32.mrb[0].mxu0
  %v1895 = vadd.f32 %v1734, %v1894
  %v1896 = vpop.f32.mrb[0].mxu0
  %1897 = vmatprep.mubr.bf16.mxu0 %v749
  %1898 = vmatmul.mubr.bf16.gmra.mrb[0].mxu0 %v748
  %v1899 = vpop.f32.mrb[0].mxu0
  %v1900 = vadd.f32 %v1739, %v1899
  %v1901 = vpop.f32.mrb[0].mxu0
  %v1902 = vpop.f32.mrb[0].mxu0
  %v1903 = vadd.f32 %v1742, %v1902
  %v1904 = vpop.f32.mrb[0].mxu0
  %1905 = vmatprep.mubr.bf16.mxu0 %v757
  %1906 = vmatmul.mubr.bf16.gmra.mrb[0].mxu0 %v756
  %v1907 = vpop.f32.mrb[0].mxu0
  %v1908 = vadd.f32 %v1747, %v1907
  %v1909 = vpop.f32.mrb[0].mxu0
  %v1910 = vpop.f32.mrb[0].mxu0
  %v1911 = vadd.f32 %v1750, %v1910
  %v1912 = vpop.f32.mrb[0].mxu0
  %1913 = vmatprep.mubr.bf16.mxu0 %v765
  %1914 = vmatmul.mubr.bf16.gmra.mrb[0].mxu0 %v764
  %v1915 = vpop.f32.mrb[0].mxu0
  %v1916 = vadd.f32 %v1755, %v1915
  %v1917 = vpop.f32.mrb[0].mxu0
  %v1918 = vpop.f32.mrb[0].mxu0
  %v1919 = vadd.f32 %v1758, %v1918
  %v1920 = vpop.f32.mrb[0].mxu0
  %1921 = vmatprep.mubr.bf16.mxu0 %v773
  %1922 = vmatmul.mubr.bf16.gmra.mrb[0].mxu0 %v772
  %v1923 = vpop.f32.mrb[0].mxu0
  %v1924 = vadd.f32 %v1763, %v1923
  %v1925 = vpop.f32.mrb[0].mxu0
  %v1926 = vpop.f32.mrb[0].mxu0
  %v1927 = vadd.f32 %v1766, %v1926
  %v1928 = vpop.f32.mrb[0].mxu0
  %1929 = vmatprep.mubr.bf16.mxu0 %v781
  %1930 = vmatmul.mubr.bf16.gmra.mrb[0].mxu0 %v780
  %v1931 = vpop.f32.mrb[0].mxu0
  %v1932 = vadd.f32 %v1771, %v1931
  %v1933 = vpop.f32.mrb[0].mxu0
  %v1934 = vpop.f32.mrb[0].mxu0
  %v1935 = vadd.f32 %v1774, %v1934
  %v1936 = vpop.f32.mrb[0].mxu0
  %1937 = vmatprep.mubr.bf16.mxu0 %v789
  %1938 = vmatmul.mubr.bf16.gmra.mrb[0].mxu0 %v788
  %v1939 = vpop.f32.mrb[0].mxu0
  %v1940 = vadd.f32 %v1779, %v1939
  %v1941 = vpop.f32.mrb[0].mxu0
  %v1942 = vpop.f32.mrb[0].mxu0
  %v1943 = vadd.f32 %v1782, %v1942
  %v1944 = vpop.f32.mrb[0].mxu0
  %1945 = vdwg.mxu0
  %v1946 = vmax.f32 %v1820, 0.0
  %v1947 = vmax.f32 %v1823, 0.0
  %v1948 = vmax.f32 %v1828, 0.0
  %v1949 = vmax.f32 %v1831, 0.0
  %v1950 = vmax.f32 %v1836, 0.0
  %v1951 = vmax.f32 %v1839, 0.0
  %v1952 = vmax.f32 %v1844, 0.0
  %v1953 = vmax.f32 %v1847, 0.0
  %v1954 = vmax.f32 %v1852, 0.0
  %v1955 = vmax.f32 %v1855, 0.0
  %v1956 = vmax.f32 %v1860, 0.0
  %v1957 = vmax.f32 %v1863, 0.0
  %v1958 = vmax.f32 %v1868, 0.0
  %v1959 = vmax.f32 %v1871, 0.0
  %v1960 = vmax.f32 %v1876, 0.0
  %v1961 = vmax.f32 %v1879, 0.0
  %v1962 = vmax.f32 %v1884, 0.0
  %v1963 = vmax.f32 %v1887, 0.0
  %v1964 = vmax.f32 %v1892, 0.0
  %v1965 = vmax.f32 %v1895, 0.0
  %v1966 = vmax.f32 %v1900, 0.0
  %v1967 = vmax.f32 %v1903, 0.0
  %v1968 = vmax.f32 %v1908, 0.0
  %v1969 = vmax.f32 %v1911, 0.0
  %v1970 = vmax.f32 %v1916, 0.0
  %v1971 = vmax.f32 %v1919, 0.0
  %v1972 = vmax.f32 %v1924, 0.0
  %v1973 = vmax.f32 %v1927, 0.0
  %v1974 = vmax.f32 %v1932, 0.0
  %v1975 = vmax.f32 %v1935, 0.0
  %v1976 = vmax.f32 %v1940, 0.0
  %v1977 = vmax.f32 %v1943, 0.0
  %v1978 = vpack.c.bf16 %v1947, %v1946
  %v1979 = vpack.c.bf16 %v1949, %v1948
  %v1980 = vpack.c.bf16 %v1951, %v1950
  %v1981 = vpack.c.bf16 %v1953, %v1952
  %v1982 = vpack.c.bf16 %v1955, %v1954
  %v1983 = vpack.c.bf16 %v1957, %v1956
  %v1984 = vpack.c.bf16 %v1959, %v1958
  %v1985 = vpack.c.bf16 %v1961, %v1960
  %v1986 = vpack.c.bf16 %v1963, %v1962
  %v1987 = vpack.c.bf16 %v1965, %v1964
  %v1988 = vpack.c.bf16 %v1967, %v1966
  %v1989 = vpack.c.bf16 %v1969, %v1968
  %v1990 = vpack.c.bf16 %v1971, %v1970
  %v1991 = vpack.c.bf16 %v1973, %v1972
  %v1992 = vpack.c.bf16 %v1975, %v1974
  %v1993 = vpack.c.bf16 %v1977, %v1976
  %v2010 = vunpack.c.l.b16 %v1978
  %v2011 = vunpack.c.h.b16 %v1978
  %v2012 = vunpack.c.l.b16 %v1979
  %v2013 = vunpack.c.h.b16 %v1979
  %v2014 = vunpack.c.l.b16 %v1980
  %v2015 = vunpack.c.h.b16 %v1980
  %v2016 = vunpack.c.l.b16 %v1981
  %v2017 = vunpack.c.h.b16 %v1981
  %v2018 = vunpack.c.l.b16 %v1982
  %v2019 = vunpack.c.h.b16 %v1982
  %v2020 = vunpack.c.l.b16 %v1983
  %v2021 = vunpack.c.h.b16 %v1983
  %v2022 = vunpack.c.l.b16 %v1984
  %v2023 = vunpack.c.h.b16 %v1984
  %v2024 = vunpack.c.l.b16 %v1985
  %v2025 = vunpack.c.h.b16 %v1985
  %v2026 = vunpack.c.l.b16 %v1986
  %v2027 = vunpack.c.h.b16 %v1986
  %v2028 = vunpack.c.l.b16 %v1987
  %v2029 = vunpack.c.h.b16 %v1987
  %v2030 = vunpack.c.l.b16 %v1988
  %v2031 = vunpack.c.h.b16 %v1988
  %v2032 = vunpack.c.l.b16 %v1989
  %v2033 = vunpack.c.h.b16 %v1989
  %v2034 = vunpack.c.l.b16 %v1990
  %v2035 = vunpack.c.h.b16 %v1990
  %v2036 = vunpack.c.l.b16 %v1991
  %v2037 = vunpack.c.h.b16 %v1991
  %v2038 = vunpack.c.l.b16 %v1992
  %v2039 = vunpack.c.h.b16 %v1992
  %v2040 = vunpack.c.l.b16 %v1993
  %v2041 = vunpack.c.h.b16 %v1993
  %v2042 = vpack.c.b16 %v2010, %v2010
  %v2043 = vpack.c.b16 %v2011, %v2011
  %v2044 = vpack.c.b16 %v2012, %v2012
  %v2045 = vpack.c.b16 %v2013, %v2013
  %v2046 = vpack.c.b16 %v2014, %v2014
  %v2047 = vpack.c.b16 %v2015, %v2015
  %v2048 = vpack.c.b16 %v2016, %v2016
  %v2049 = vpack.c.b16 %v2017, %v2017
  %v2050 = vpack.c.b16 %v2018, %v2018
  %v2051 = vpack.c.b16 %v2019, %v2019
  %v2052 = vpack.c.b16 %v2020, %v2020
  %v2053 = vpack.c.b16 %v2021, %v2021
  %v2054 = vpack.c.b16 %v2022, %v2022
  %v2055 = vpack.c.b16 %v2023, %v2023
  %v2056 = vpack.c.b16 %v2024, %v2024
  %v2057 = vpack.c.b16 %v2025, %v2025
  %v2058 = vpack.c.b16 %v2026, %v2026
  %v2059 = vpack.c.b16 %v2027, %v2027
  %v2060 = vpack.c.b16 %v2028, %v2028
  %v2061 = vpack.c.b16 %v2029, %v2029
  %v2062 = vpack.c.b16 %v2030, %v2030
  %v2063 = vpack.c.b16 %v2031, %v2031
  %v2064 = vpack.c.b16 %v2032, %v2032
  %v2065 = vpack.c.b16 %v2033, %v2033
  %v2066 = vpack.c.b16 %v2034, %v2034
  %v2067 = vpack.c.b16 %v2035, %v2035
  %v2068 = vpack.c.b16 %v2036, %v2036
  %v2069 = vpack.c.b16 %v2037, %v2037
  %v2070 = vpack.c.b16 %v2038, %v2038
  %v2071 = vpack.c.b16 %v2039, %v2039
  %v2072 = vpack.c.b16 %v2040, %v2040
  %v2073 = vpack.c.b16 %v2041, %v2041
  %2106 = vst [vmem:[%s3] sm:$0xf] %v2042
  %2107 = vst [vmem:[%s3 + $0x4] sm:$0xf] %v2043
  %2108 = vst [vmem:[%s3 + $0x8] sm:$0xf] %v2044
  %2109 = vst [vmem:[%s3 + $0xc] sm:$0xf] %v2045
  %2110 = vst [vmem:[%s3 + $0x10] sm:$0xf] %v2046
  %2111 = vst [vmem:[%s3 + $0x14] sm:$0xf] %v2047
  %2112 = vst [vmem:[%s3 + $0x18] sm:$0xf] %v2048
  %2113 = vst [vmem:[%s3 + $0x1c] sm:$0xf] %v2049
  %2114 = vst [vmem:[%s3 + $0x20] sm:$0xf] %v2050
  %2115 = vst [vmem:[%s3 + $0x24] sm:$0xf] %v2051
  %2116 = vst [vmem:[%s3 + $0x28] sm:$0xf] %v2052
  %2117 = vst [vmem:[%s3 + $0x2c] sm:$0xf] %v2053
  %2118 = vst [vmem:[%s3 + $0x30] sm:$0xf] %v2054
  %2119 = vst [vmem:[%s3 + $0x34] sm:$0xf] %v2055
  %2120 = vst [vmem:[%s3 + $0x38] sm:$0xf] %v2056
  %2121 = vst [vmem:[%s3 + $0x3c] sm:$0xf] %v2057
  %2122 = vst [vmem:[%s3 + $0x40] sm:$0xf] %v2058
  %2123 = vst [vmem:[%s3 + $0x44] sm:$0xf] %v2059
  %2124 = vst [vmem:[%s3 + $0x48] sm:$0xf] %v2060
  %2125 = vst [vmem:[%s3 + $0x4c] sm:$0xf] %v2061
  %2126 = vst [vmem:[%s3 + $0x50] sm:$0xf] %v2062
  %2127 = vst [vmem:[%s3 + $0x54] sm:$0xf] %v2063
  %2128 = vst [vmem:[%s3 + $0x58] sm:$0xf] %v2064
  %2129 = vst [vmem:[%s3 + $0x5c] sm:$0xf] %v2065
  %2130 = vst [vmem:[%s3 + $0x60] sm:$0xf] %v2066
  %2131 = vst [vmem:[%s3 + $0x64] sm:$0xf] %v2067
  %2132 = vst [vmem:[%s3 + $0x68] sm:$0xf] %v2068
  %2133 = vst [vmem:[%s3 + $0x6c] sm:$0xf] %v2069
  %2134 = vst [vmem:[%s3 + $0x70] sm:$0xf] %v2070
  %2135 = vst [vmem:[%s3 + $0x74] sm:$0xf] %v2071
  %2136 = vst [vmem:[%s3 + $0x78] sm:$0xf] %v2072
  %2137 = vst [vmem:[%s3 + $0x7c] sm:$0xf] %v2073
  // Predicated region
  $region14: #{iqn_forward.4} parent=0 // pred_check
    _
  $region15: #{iqn_forward.4} parent=0 // pred_check_branch
    %2139 = sbr.rel (0) target = $region17
  $region16: #{iqn_forward.4} parent=0 // pred_region
    _
  $region17: #{iqn_forward.4} parent=0 // pred_fallthru
    _
  // Predicated region
  $region18: #{iqn_forward.4} parent=0 // pred_check
    _
  $region19: #{iqn_forward.4} parent=0 // pred_check_branch
    %2141 = sbr.rel (0) target = $region21
  $region20: #{iqn_forward.4} parent=0 // pred_region
    _
  $region21: #{iqn_forward.4} parent=0 // pred_fallthru
    _

// kernel: iqn_forward.5
$region0: #{iqn_forward.5}
  #allocation0 [shape = 'u32[]', space=smem, size = 0x4, offset = 0x4, fixed_abs, tag = 'smem constant byte address 0x4 - core index']
  #allocation1 [shape = 'u32[144,128]{1,0:T(1,128)}', space=vmem, size = 0x12000, scoped, tag = 'internal scratch']
  %s0 = inlined_call_operand.vmem [shape: bf16[128,1024], index: 0, kind: input, shape index: {}]
  %s1 = inlined_call_operand.vmem [shape: f32[8,256], index: 1, kind: input, shape index: {}]
  %s2 = inlined_call_operand.vmem [shape: bf16[256,64], index: 2, kind: input, shape index: {}]
  %s3 = inlined_call_operand.vmem [shape: bf16[1024,128], index: 3, kind: input, shape index: {}]
  %s4 = inlined_call_operand.vmem [shape: f32[1,128], index: 4, kind: input, shape index: {}]
  %s5 = inlined_call_operand.vmem [shape: bf16[16,128,128], index: 5, kind: input, shape index: {}]
  %s6 = inlined_call_operand.vmem [shape: f32[1,128], index: 6, kind: input, shape index: {}]
  %s7 = inlined_call_operand.vmem [shape: bf16[128,256], index: 7, kind: input, shape index: {}]
  %s8 = inlined_call_operand.vmem [shape: bf16[64,256], index: 8, kind: input, shape index: {}]
  %s9 = inlined_call_operand.vmem [shape: f32[1,256], index: 9, kind: input, shape index: {}]
  %s10 = inlined_call_operand.vmem [shape: bf16[256,256], index: 10, kind: input, shape index: {}]
  %s11 = inlined_call_operand.vmem [shape: f32[1,256], index: 11, kind: input, shape index: {}]
  %s12 = inlined_call_operand.vmem [shape: bf16[256,128], index: 12, kind: input, shape index: {}]
  %s13 = inlined_call_operand.vmem [shape: f32[1,128], index: 13, kind: input, shape index: {}]
  %s14 = inlined_call_operand.vmem [shape: f32[256,128], index: 14, kind: output, shape index: {}]
  %s15 = sld [smem:[#allocation0]]
  $region66: #{iqn_forward.5} parent=0
    _
  %s17 = ssub.s32 1, %s15
  %s18 = scalar_select 0, %s17, %s15
  // Predicated region
  $region2: #{iqn_forward.5} parent=0 // pred_check
    _
  $region3: #{iqn_forward.5} parent=0 // pred_check_branch
    %20 = sbr.rel (0) target = $region5
  $region4: #{iqn_forward.5} parent=0 // pred_region
    _
  $region5: #{iqn_forward.5} parent=0 // pred_fallthru
    _
  // Predicated region
  $region6: #{iqn_forward.5} parent=0 // pred_check
    _
  $region7: #{iqn_forward.5} parent=0 // pred_check_branch
    %22 = sbr.rel (0) target = $region9
  $region8: #{iqn_forward.5} parent=0 // pred_region
    _
  $region9: #{iqn_forward.5} parent=0 // pred_fallthru
    _
  // Predicated region
  $region10: #{iqn_forward.5} parent=0 // pred_check
    _
  $region11: #{iqn_forward.5} parent=0 // pred_check_branch
    %24 = sbr.rel (0) target = $region13
  $region12: #{iqn_forward.5} parent=0 // pred_region
    _
  $region13: #{iqn_forward.5} parent=0 // pred_fallthru
    _
  // Predicated region
  $region14: #{iqn_forward.5} parent=0 // pred_check
    _
  $region15: #{iqn_forward.5} parent=0 // pred_check_branch
    %26 = sbr.rel (0) target = $region17
  $region16: #{iqn_forward.5} parent=0 // pred_region
    _
  $region17: #{iqn_forward.5} parent=0 // pred_fallthru
    _
  // Predicated region
  $region18: #{iqn_forward.5} parent=0 // pred_check
    _
  $region19: #{iqn_forward.5} parent=0 // pred_check_branch
    %28 = sbr.rel (0) target = $region21
  $region20: #{iqn_forward.5} parent=0 // pred_region
    _
  $region21: #{iqn_forward.5} parent=0 // pred_fallthru
    _
  // Predicated region
  $region22: #{iqn_forward.5} parent=0 // pred_check
    _
  $region23: #{iqn_forward.5} parent=0 // pred_check_branch
    %30 = sbr.rel (0) target = $region25
  $region24: #{iqn_forward.5} parent=0 // pred_region
    _
  $region25: #{iqn_forward.5} parent=0 // pred_fallthru
    _
  // Predicated region
  $region26: #{iqn_forward.5} parent=0 // pred_check
    _
  $region27: #{iqn_forward.5} parent=0 // pred_check_branch
    %32 = sbr.rel (0) target = $region29
  $region28: #{iqn_forward.5} parent=0 // pred_region
    _
  $region29: #{iqn_forward.5} parent=0 // pred_fallthru
    _
  // Predicated region
  $region30: #{iqn_forward.5} parent=0 // pred_check
    _
  $region31: #{iqn_forward.5} parent=0 // pred_check_branch
    %34 = sbr.rel (0) target = $region33
  $region32: #{iqn_forward.5} parent=0 // pred_region
    _
  $region33: #{iqn_forward.5} parent=0 // pred_fallthru
    _
  // Predicated region
  $region34: #{iqn_forward.5} parent=0 // pred_check
    _
  $region35: #{iqn_forward.5} parent=0 // pred_check_branch
    %36 = sbr.rel (0) target = $region37
  $region36: #{iqn_forward.5} parent=0 // pred_region
    _
  $region37: #{iqn_forward.5} parent=0 // pred_fallthru
    _
  // Predicated region
  $region38: #{iqn_forward.5} parent=0 // pred_check
    _
  $region39: #{iqn_forward.5} parent=0 // pred_check_branch
    %38 = sbr.rel (0) target = $region41
  $region40: #{iqn_forward.5} parent=0 // pred_region
    _
  $region41: #{iqn_forward.5} parent=0 // pred_fallthru
    _
  // Predicated region
  $region42: #{iqn_forward.5} parent=0 // pred_check
    _
  $region43: #{iqn_forward.5} parent=0 // pred_check_branch
    %40 = sbr.rel (0) target = $region45
  $region44: #{iqn_forward.5} parent=0 // pred_region
    _
  $region45: #{iqn_forward.5} parent=0 // pred_fallthru
    _
  // Predicated region
  $region46: #{iqn_forward.5} parent=0 // pred_check
    _
  $region47: #{iqn_forward.5} parent=0 // pred_check_branch
    %42 = sbr.rel (0) target = $region49
  $region48: #{iqn_forward.5} parent=0 // pred_region
    _
  $region49: #{iqn_forward.5} parent=0 // pred_fallthru
    _
  // Predicated region
  $region50: #{iqn_forward.5} parent=0 // pred_check
    _
  $region51: #{iqn_forward.5} parent=0 // pred_check_branch
    %44 = sbr.rel (0) target = $region53
  $region52: #{iqn_forward.5} parent=0 // pred_region
    _
  $region53: #{iqn_forward.5} parent=0 // pred_fallthru
    _
  // Predicated region
  $region54: #{iqn_forward.5} parent=0 // pred_check
    _
  $region55: #{iqn_forward.5} parent=0 // pred_check_branch
    %46 = sbr.rel (0) target = $region57
  $region56: #{iqn_forward.5} parent=0 // pred_region
    _
  $region57: #{iqn_forward.5} parent=0 // pred_fallthru
    _
  %v48 = vld [vmem:[%s0] sm:$0xff]
  %v49 = vld [vmem:[%s0 + $0x8] sm:$0xff]
  %v50 = vld [vmem:[%s0 + $0x10] sm:$0xff]
  %v51 = vld [vmem:[%s0 + $0x18] sm:$0xff]
  %v52 = vld [vmem:[%s0 + $0x20] sm:$0xff]
  %v53 = vld [vmem:[%s0 + $0x28] sm:$0xff]
  %v54 = vld [vmem:[%s0 + $0x30] sm:$0xff]
  %v55 = vld [vmem:[%s0 + $0x38] sm:$0xff]
  %v56 = vld [vmem:[%s0 + $0x40] sm:$0xff]
  %v57 = vld [vmem:[%s0 + $0x48] sm:$0xff]
  %v58 = vld [vmem:[%s0 + $0x50] sm:$0xff]
  %v59 = vld [vmem:[%s0 + $0x58] sm:$0xff]
  %v60 = vld [vmem:[%s0 + $0x60] sm:$0xff]
  %v61 = vld [vmem:[%s0 + $0x68] sm:$0xff]
  %v62 = vld [vmem:[%s0 + $0x70] sm:$0xff]
  %v63 = vld [vmem:[%s0 + $0x78] sm:$0xff]
  %v64 = vld [vmem:[%s0 + $0x80] sm:$0xff]
  %v65 = vld [vmem:[%s0 + $0x88] sm:$0xff]
  %v66 = vld [vmem:[%s0 + $0x90] sm:$0xff]
  %v67 = vld [vmem:[%s0 + $0x98] sm:$0xff]
  %v68 = vld [vmem:[%s0 + $0xa0] sm:$0xff]
  %v69 = vld [vmem:[%s0 + $0xa8] sm:$0xff]
  %v70 = vld [vmem:[%s0 + $0xb0] sm:$0xff]
  %v71 = vld [vmem:[%s0 + $0xb8] sm:$0xff]
  %v72 = vld [vmem:[%s0 + $0xc0] sm:$0xff]
  %v73 = vld [vmem:[%s0 + $0xc8] sm:$0xff]
  %v74 = vld [vmem:[%s0 + $0xd0] sm:$0xff]
  %v75 = vld [vmem:[%s0 + $0xd8] sm:$0xff]
  %v76 = vld [vmem:[%s0 + $0xe0] sm:$0xff]
  %v77 = vld [vmem:[%s0 + $0xe8] sm:$0xff]
  %v78 = vld [vmem:[%s0 + $0xf0] sm:$0xff]
  %v79 = vld [vmem:[%s0 + $0xf8] sm:$0xff]
  %v80 = vld [vmem:[%s0 + $0x100] sm:$0xff]
  %v81 = vld [vmem:[%s0 + $0x108] sm:$0xff]
  %v82 = vld [vmem:[%s0 + $0x110] sm:$0xff]
  %v83 = vld [vmem:[%s0 + $0x118] sm:$0xff]
  %v84 = vld [vmem:[%s0 + $0x120] sm:$0xff]
  %v85 = vld [vmem:[%s0 + $0x128] sm:$0xff]
  %v86 = vld [vmem:[%s0 + $0x130] sm:$0xff]
  %v87 = vld [vmem:[%s0 + $0x138] sm:$0xff]
  %v88 = vld [vmem:[%s0 + $0x140] sm:$0xff]
  %v89 = vld [vmem:[%s0 + $0x148] sm:$0xff]
  %v90 = vld [vmem:[%s0 + $0x150] sm:$0xff]
  %v91 = vld [vmem:[%s0 + $0x158] sm:$0xff]
  %v92 = vld [vmem:[%s0 + $0x160] sm:$0xff]
  %v93 = vld [vmem:[%s0 + $0x168] sm:$0xff]
  %v94 = vld [vmem:[%s0 + $0x170] sm:$0xff]
  %v95 = vld [vmem:[%s0 + $0x178] sm:$0xff]
  %v96 = vld [vmem:[%s0 + $0x180] sm:$0xff]
  %v97 = vld [vmem:[%s0 + $0x188] sm:$0xff]
  %v98 = vld [vmem:[%s0 + $0x190] sm:$0xff]
  %v99 = vld [vmem:[%s0 + $0x198] sm:$0xff]
  %v100 = vld [vmem:[%s0 + $0x1a0] sm:$0xff]
  %v101 = vld [vmem:[%s0 + $0x1a8] sm:$0xff]
  %v102 = vld [vmem:[%s0 + $0x1b0] sm:$0xff]
  %v103 = vld [vmem:[%s0 + $0x1b8] sm:$0xff]
  %v104 = vld [vmem:[%s0 + $0x1c0] sm:$0xff]
  %v105 = vld [vmem:[%s0 + $0x1c8] sm:$0xff]
  %v106 = vld [vmem:[%s0 + $0x1d0] sm:$0xff]
  %v107 = vld [vmem:[%s0 + $0x1d8] sm:$0xff]
  %v108 = vld [vmem:[%s0 + $0x1e0] sm:$0xff]
  %v109 = vld [vmem:[%s0 + $0x1e8] sm:$0xff]
  %v110 = vld [vmem:[%s0 + $0x1f0] sm:$0xff]
  %v111 = vld [vmem:[%s0 + $0x1f8] sm:$0xff]
  %v112 = vld [vmem:[%s3] sm:$0xf]
  %v113 = vld [vmem:[%s3 + $0x4] sm:$0xf]
  %v114 = vld [vmem:[%s3 + $0x8] sm:$0xf]
  %v115 = vld [vmem:[%s3 + $0xc] sm:$0xf]
  %v116 = vld [vmem:[%s3 + $0x10] sm:$0xf]
  %v117 = vld [vmem:[%s3 + $0x14] sm:$0xf]
  %v118 = vld [vmem:[%s3 + $0x18] sm:$0xf]
  %v119 = vld [vmem:[%s3 + $0x1c] sm:$0xf]
  %v120 = vld [vmem:[%s3 + $0x20] sm:$0xf]
  %v121 = vld [vmem:[%s3 + $0x24] sm:$0xf]
  %v122 = vld [vmem:[%s3 + $0x28] sm:$0xf]
  %v123 = vld [vmem:[%s3 + $0x2c] sm:$0xf]
  %v124 = vld [vmem:[%s3 + $0x30] sm:$0xf]
  %v125 = vld [vmem:[%s3 + $0x34] sm:$0xf]
  %v126 = vld [vmem:[%s3 + $0x38] sm:$0xf]
  %v127 = vld [vmem:[%s3 + $0x3c] sm:$0xf]
  %v128 = vld [vmem:[%s3 + $0x40] sm:$0xf]
  %v129 = vld [vmem:[%s3 + $0x44] sm:$0xf]
  %v130 = vld [vmem:[%s3 + $0x48] sm:$0xf]
  %v131 = vld [vmem:[%s3 + $0x4c] sm:$0xf]
  %v132 = vld [vmem:[%s3 + $0x50] sm:$0xf]
  %v133 = vld [vmem:[%s3 + $0x54] sm:$0xf]
  %v134 = vld [vmem:[%s3 + $0x58] sm:$0xf]
  %v135 = vld [vmem:[%s3 + $0x5c] sm:$0xf]
  %v136 = vld [vmem:[%s3 + $0x60] sm:$0xf]
  %v137 = vld [vmem:[%s3 + $0x64] sm:$0xf]
  %v138 = vld [vmem:[%s3 + $0x68] sm:$0xf]
  %v139 = vld [vmem:[%s3 + $0x6c] sm:$0xf]
  %v140 = vld [vmem:[%s3 + $0x70] sm:$0xf]
  %v141 = vld [vmem:[%s3 + $0x74] sm:$0xf]
  %v142 = vld [vmem:[%s3 + $0x78] sm:$0xf]
  %v143 = vld [vmem:[%s3 + $0x7c] sm:$0xf]
  %v144 = vld [vmem:[%s3 + $0x80] sm:$0xf]
  %v145 = vld [vmem:[%s3 + $0x84] sm:$0xf]
  %v146 = vld [vmem:[%s3 + $0x88] sm:$0xf]
  %v147 = vld [vmem:[%s3 + $0x8c] sm:$0xf]
  %v148 = vld [vmem:[%s3 + $0x90] sm:$0xf]
  %v149 = vld [vmem:[%s3 + $0x94] sm:$0xf]
  %v150 = vld [vmem:[%s3 + $0x98] sm:$0xf]
  %v151 = vld [vmem:[%s3 + $0x9c] sm:$0xf]
  %v152 = vld [vmem:[%s3 + $0xa0] sm:$0xf]
  %v153 = vld [vmem:[%s3 + $0xa4] sm:$0xf]
  %v154 = vld [vmem:[%s3 + $0xa8] sm:$0xf]
  %v155 = vld [vmem:[%s3 + $0xac] sm:$0xf]
  %v156 = vld [vmem:[%s3 + $0xb0] sm:$0xf]
  %v157 = vld [vmem:[%s3 + $0xb4] sm:$0xf]
  %v158 = vld [vmem:[%s3 + $0xb8] sm:$0xf]
  %v159 = vld [vmem:[%s3 + $0xbc] sm:$0xf]
  %v160 = vld [vmem:[%s3 + $0xc0] sm:$0xf]
  %v161 = vld [vmem:[%s3 + $0xc4] sm:$0xf]
  %v162 = vld [vmem:[%s3 + $0xc8] sm:$0xf]
  %v163 = vld [vmem:[%s3 + $0xcc] sm:$0xf]
  %v164 = vld [vmem:[%s3 + $0xd0] sm:$0xf]
  %v165 = vld [vmem:[%s3 + $0xd4] sm:$0xf]
  %v166 = vld [vmem:[%s3 + $0xd8] sm:$0xf]
  %v167 = vld [vmem:[%s3 + $0xdc] sm:$0xf]
  %v168 = vld [vmem:[%s3 + $0xe0] sm:$0xf]
  %v169 = vld [vmem:[%s3 + $0xe4] sm:$0xf]
  %v170 = vld [vmem:[%s3 + $0xe8] sm:$0xf]
  %v171 = vld [vmem:[%s3 + $0xec] sm:$0xf]
  %v172 = vld [vmem:[%s3 + $0xf0] sm:$0xf]
  %v173 = vld [vmem:[%s3 + $0xf4] sm:$0xf]
  %v174 = vld [vmem:[%s3 + $0xf8] sm:$0xf]
  %v175 = vld [vmem:[%s3 + $0xfc] sm:$0xf]
  %v176 = vld [vmem:[%s3 + $0x100] sm:$0xf]
  %v177 = vld [vmem:[%s3 + $0x104] sm:$0xf]
  %v178 = vld [vmem:[%s3 + $0x108] sm:$0xf]
  %v179 = vld [vmem:[%s3 + $0x10c] sm:$0xf]
  %v180 = vld [vmem:[%s3 + $0x110] sm:$0xf]
  %v181 = vld [vmem:[%s3 + $0x114] sm:$0xf]
  %v182 = vld [vmem:[%s3 + $0x118] sm:$0xf]
  %v183 = vld [vmem:[%s3 + $0x11c] sm:$0xf]
  %v184 = vld [vmem:[%s3 + $0x120] sm:$0xf]
  %v185 = vld [vmem:[%s3 + $0x124] sm:$0xf]
  %v186 = vld [vmem:[%s3 + $0x128] sm:$0xf]
  %v187 = vld [vmem:[%s3 + $0x12c] sm:$0xf]
  %v188 = vld [vmem:[%s3 + $0x130] sm:$0xf]
  %v189 = vld [vmem:[%s3 + $0x134] sm:$0xf]
  %v190 = vld [vmem:[%s3 + $0x138] sm:$0xf]
  %v191 = vld [vmem:[%s3 + $0x13c] sm:$0xf]
  %v192 = vld [vmem:[%s3 + $0x140] sm:$0xf]
  %v193 = vld [vmem:[%s3 + $0x144] sm:$0xf]
  %v194 = vld [vmem:[%s3 + $0x148] sm:$0xf]
  %v195 = vld [vmem:[%s3 + $0x14c] sm:$0xf]
  %v196 = vld [vmem:[%s3 + $0x150] sm:$0xf]
  %v197 = vld [vmem:[%s3 + $0x154] sm:$0xf]
  %v198 = vld [vmem:[%s3 + $0x158] sm:$0xf]
  %v199 = vld [vmem:[%s3 + $0x15c] sm:$0xf]
  %v200 = vld [vmem:[%s3 + $0x160] sm:$0xf]
  %v201 = vld [vmem:[%s3 + $0x164] sm:$0xf]
  %v202 = vld [vmem:[%s3 + $0x168] sm:$0xf]
  %v203 = vld [vmem:[%s3 + $0x16c] sm:$0xf]
  %v204 = vld [vmem:[%s3 + $0x170] sm:$0xf]
  %v205 = vld [vmem:[%s3 + $0x174] sm:$0xf]
  %v206 = vld [vmem:[%s3 + $0x178] sm:$0xf]
  %v207 = vld [vmem:[%s3 + $0x17c] sm:$0xf]
  %v208 = vld [vmem:[%s3 + $0x180] sm:$0xf]
  %v209 = vld [vmem:[%s3 + $0x184] sm:$0xf]
  %v210 = vld [vmem:[%s3 + $0x188] sm:$0xf]
  %v211 = vld [vmem:[%s3 + $0x18c] sm:$0xf]
  %v212 = vld [vmem:[%s3 + $0x190] sm:$0xf]
  %v213 = vld [vmem:[%s3 + $0x194] sm:$0xf]
  %v214 = vld [vmem:[%s3 + $0x198] sm:$0xf]
  %v215 = vld [vmem:[%s3 + $0x19c] sm:$0xf]
  %v216 = vld [vmem:[%s3 + $0x1a0] sm:$0xf]
  %v217 = vld [vmem:[%s3 + $0x1a4] sm:$0xf]
  %v218 = vld [vmem:[%s3 + $0x1a8] sm:$0xf]
  %v219 = vld [vmem:[%s3 + $0x1ac] sm:$0xf]
  %v220 = vld [vmem:[%s3 + $0x1b0] sm:$0xf]
  %v221 = vld [vmem:[%s3 + $0x1b4] sm:$0xf]
  %v222 = vld [vmem:[%s3 + $0x1b8] sm:$0xf]
  %v223 = vld [vmem:[%s3 + $0x1bc] sm:$0xf]
  %v224 = vld [vmem:[%s3 + $0x1c0] sm:$0xf]
  %v225 = vld [vmem:[%s3 + $0x1c4] sm:$0xf]
  %v226 = vld [vmem:[%s3 + $0x1c8] sm:$0xf]
  %v227 = vld [vmem:[%s3 + $0x1cc] sm:$0xf]
  %v228 = vld [vmem:[%s3 + $0x1d0] sm:$0xf]
  %v229 = vld [vmem:[%s3 + $0x1d4] sm:$0xf]
  %v230 = vld [vmem:[%s3 + $0x1d8] sm:$0xf]
  %v231 = vld [vmem:[%s3 + $0x1dc] sm:$0xf]
  %v232 = vld [vmem:[%s3 + $0x1e0] sm:$0xf]
  %v233 = vld [vmem:[%s3 + $0x1e4] sm:$0xf]
  %v234 = vld [vmem:[%s3 + $0x1e8] sm:$0xf]
  %v235 = vld [vmem:[%s3 + $0x1ec] sm:$0xf]
  %v236 = vld [vmem:[%s3 + $0x1f0] sm:$0xf]
  %v237 = vld [vmem:[%s3 + $0x1f4] sm:$0xf]
  %v238 = vld [vmem:[%s3 + $0x1f8] sm:$0xf]
  %v239 = vld [vmem:[%s3 + $0x1fc] sm:$0xf]
  %v240 = vld [vmem:[%s4] sm:$0x1]
  %v242 = vlaneseq
  %v243 = vshrl.u32 %v242, 7
  %v244 = vsub.s32 0, %v243
  %v245 = vrot.slane %v240, %v244
  %v311 = vunpack.c.l.b16 %v48
  %v312 = vunpack.c.h.b16 %v48
  %v313 = vunpack.c.l.b16 %v49
  %v314 = vunpack.c.h.b16 %v49
  %v315 = vunpack.c.l.b16 %v50
  %v316 = vunpack.c.h.b16 %v50
  %v317 = vunpack.c.l.b16 %v51
  %v318 = vunpack.c.h.b16 %v51
  %v319 = vunpack.c.l.b16 %v52
  %v320 = vunpack.c.h.b16 %v52
  %v321 = vunpack.c.l.b16 %v53
  %v322 = vunpack.c.h.b16 %v53
  %v323 = vunpack.c.l.b16 %v54
  %v324 = vunpack.c.h.b16 %v54
  %v325 = vunpack.c.l.b16 %v55
  %v326 = vunpack.c.h.b16 %v55
  %v327 = vunpack.c.l.b16 %v56
  %v328 = vunpack.c.h.b16 %v56
  %v329 = vunpack.c.l.b16 %v57
  %v330 = vunpack.c.h.b16 %v57
  %v331 = vunpack.c.l.b16 %v58
  %v332 = vunpack.c.h.b16 %v58
  %v333 = vunpack.c.l.b16 %v59
  %v334 = vunpack.c.h.b16 %v59
  %v335 = vunpack.c.l.b16 %v60
  %v336 = vunpack.c.h.b16 %v60
  %v337 = vunpack.c.l.b16 %v61
  %v338 = vunpack.c.h.b16 %v61
  %v339 = vunpack.c.l.b16 %v62
  %v340 = vunpack.c.h.b16 %v62
  %v341 = vunpack.c.l.b16 %v63
  %v342 = vunpack.c.h.b16 %v63
  %v343 = vunpack.c.l.b16 %v64
  %v344 = vunpack.c.h.b16 %v64
  %v345 = vunpack.c.l.b16 %v65
  %v346 = vunpack.c.h.b16 %v65
  %v347 = vunpack.c.l.b16 %v66
  %v348 = vunpack.c.h.b16 %v66
  %v349 = vunpack.c.l.b16 %v67
  %v350 = vunpack.c.h.b16 %v67
  %v351 = vunpack.c.l.b16 %v68
  %v352 = vunpack.c.h.b16 %v68
  %v353 = vunpack.c.l.b16 %v69
  %v354 = vunpack.c.h.b16 %v69
  %v355 = vunpack.c.l.b16 %v70
  %v356 = vunpack.c.h.b16 %v70
  %v357 = vunpack.c.l.b16 %v71
  %v358 = vunpack.c.h.b16 %v71
  %v359 = vunpack.c.l.b16 %v72
  %v360 = vunpack.c.h.b16 %v72
  %v361 = vunpack.c.l.b16 %v73
  %v362 = vunpack.c.h.b16 %v73
  %v363 = vunpack.c.l.b16 %v74
  %v364 = vunpack.c.h.b16 %v74
  %v365 = vunpack.c.l.b16 %v75
  %v366 = vunpack.c.h.b16 %v75
  %v367 = vunpack.c.l.b16 %v76
  %v368 = vunpack.c.h.b16 %v76
  %v369 = vunpack.c.l.b16 %v77
  %v370 = vunpack.c.h.b16 %v77
  %v371 = vunpack.c.l.b16 %v78
  %v372 = vunpack.c.h.b16 %v78
  %v373 = vunpack.c.l.b16 %v79
  %v374 = vunpack.c.h.b16 %v79
  %v375 = vunpack.c.l.b16 %v80
  %v376 = vunpack.c.h.b16 %v80
  %v377 = vunpack.c.l.b16 %v81
  %v378 = vunpack.c.h.b16 %v81
  %v379 = vunpack.c.l.b16 %v82
  %v380 = vunpack.c.h.b16 %v82
  %v381 = vunpack.c.l.b16 %v83
  %v382 = vunpack.c.h.b16 %v83
  %v383 = vunpack.c.l.b16 %v84
  %v384 = vunpack.c.h.b16 %v84
  %v385 = vunpack.c.l.b16 %v85
  %v386 = vunpack.c.h.b16 %v85
  %v387 = vunpack.c.l.b16 %v86
  %v388 = vunpack.c.h.b16 %v86
  %v389 = vunpack.c.l.b16 %v87
  %v390 = vunpack.c.h.b16 %v87
  %v391 = vunpack.c.l.b16 %v88
  %v392 = vunpack.c.h.b16 %v88
  %v393 = vunpack.c.l.b16 %v89
  %v394 = vunpack.c.h.b16 %v89
  %v395 = vunpack.c.l.b16 %v90
  %v396 = vunpack.c.h.b16 %v90
  %v397 = vunpack.c.l.b16 %v91
  %v398 = vunpack.c.h.b16 %v91
  %v399 = vunpack.c.l.b16 %v92
  %v400 = vunpack.c.h.b16 %v92
  %v401 = vunpack.c.l.b16 %v93
  %v402 = vunpack.c.h.b16 %v93
  %v403 = vunpack.c.l.b16 %v94
  %v404 = vunpack.c.h.b16 %v94
  %v405 = vunpack.c.l.b16 %v95
  %v406 = vunpack.c.h.b16 %v95
  %v407 = vunpack.c.l.b16 %v96
  %v408 = vunpack.c.h.b16 %v96
  %v409 = vunpack.c.l.b16 %v97
  %v410 = vunpack.c.h.b16 %v97
  %v411 = vunpack.c.l.b16 %v98
  %v412 = vunpack.c.h.b16 %v98
  %v413 = vunpack.c.l.b16 %v99
  %v414 = vunpack.c.h.b16 %v99
  %v415 = vunpack.c.l.b16 %v100
  %v416 = vunpack.c.h.b16 %v100
  %v417 = vunpack.c.l.b16 %v101
  %v418 = vunpack.c.h.b16 %v101
  %v419 = vunpack.c.l.b16 %v102
  %v420 = vunpack.c.h.b16 %v102
  %v421 = vunpack.c.l.b16 %v103
  %v422 = vunpack.c.h.b16 %v103
  %v423 = vunpack.c.l.b16 %v104
  %v424 = vunpack.c.h.b16 %v104
  %v425 = vunpack.c.l.b16 %v105
  %v426 = vunpack.c.h.b16 %v105
  %v427 = vunpack.c.l.b16 %v106
  %v428 = vunpack.c.h.b16 %v106
  %v429 = vunpack.c.l.b16 %v107
  %v430 = vunpack.c.h.b16 %v107
  %v431 = vunpack.c.l.b16 %v108
  %v432 = vunpack.c.h.b16 %v108
  %v433 = vunpack.c.l.b16 %v109
  %v434 = vunpack.c.h.b16 %v109
  %v435 = vunpack.c.l.b16 %v110
  %v436 = vunpack.c.h.b16 %v110
  %v437 = vunpack.c.l.b16 %v111
  %v438 = vunpack.c.h.b16 %v111
  %v439 = vpack.c.b16 %v319, %v311
  %v440 = vpack.c.b16 %v320, %v312
  %v441 = vpack.c.b16 %v321, %v313
  %v442 = vpack.c.b16 %v322, %v314
  %v443 = vpack.c.b16 %v323, %v315
  %v444 = vpack.c.b16 %v324, %v316
  %v445 = vpack.c.b16 %v325, %v317
  %v446 = vpack.c.b16 %v326, %v318
  %v447 = vpack.c.b16 %v335, %v327
  %v448 = vpack.c.b16 %v336, %v328
  %v449 = vpack.c.b16 %v337, %v329
  %v450 = vpack.c.b16 %v338, %v330
  %v451 = vpack.c.b16 %v339, %v331
  %v452 = vpack.c.b16 %v340, %v332
  %v453 = vpack.c.b16 %v341, %v333
  %v454 = vpack.c.b16 %v342, %v334
  %v455 = vpack.c.b16 %v351, %v343
  %v456 = vpack.c.b16 %v352, %v344
  %v457 = vpack.c.b16 %v353, %v345
  %v458 = vpack.c.b16 %v354, %v346
  %v459 = vpack.c.b16 %v355, %v347
  %v460 = vpack.c.b16 %v356, %v348
  %v461 = vpack.c.b16 %v357, %v349
  %v462 = vpack.c.b16 %v358, %v350
  %v463 = vpack.c.b16 %v367, %v359
  %v464 = vpack.c.b16 %v368, %v360
  %v465 = vpack.c.b16 %v369, %v361
  %v466 = vpack.c.b16 %v370, %v362
  %v467 = vpack.c.b16 %v371, %v363
  %v468 = vpack.c.b16 %v372, %v364
  %v469 = vpack.c.b16 %v373, %v365
  %v470 = vpack.c.b16 %v374, %v366
  %v471 = vpack.c.b16 %v383, %v375
  %v472 = vpack.c.b16 %v384, %v376
  %v473 = vpack.c.b16 %v385, %v377
  %v474 = vpack.c.b16 %v386, %v378
  %v475 = vpack.c.b16 %v387, %v379
  %v476 = vpack.c.b16 %v388, %v380
  %v477 = vpack.c.b16 %v389, %v381
  %v478 = vpack.c.b16 %v390, %v382
  %v479 = vpack.c.b16 %v399, %v391
  %v480 = vpack.c.b16 %v400, %v392
  %v481 = vpack.c.b16 %v401, %v393
  %v482 = vpack.c.b16 %v402, %v394
  %v483 = vpack.c.b16 %v403, %v395
  %v484 = vpack.c.b16 %v404, %v396
  %v485 = vpack.c.b16 %v405, %v397
  %v486 = vpack.c.b16 %v406, %v398
  %v487 = vpack.c.b16 %v415, %v407
  %v488 = vpack.c.b16 %v416, %v408
  %v489 = vpack.c.b16 %v417, %v409
  %v490 = vpack.c.b16 %v418, %v410
  %v491 = vpack.c.b16 %v419, %v411
  %v492 = vpack.c.b16 %v420, %v412
  %v493 = vpack.c.b16 %v421, %v413
  %v494 = vpack.c.b16 %v422, %v414
  %v495 = vpack.c.b16 %v431, %v423
  %v496 = vpack.c.b16 %v432, %v424
  %v497 = vpack.c.b16 %v433, %v425
  %v498 = vpack.c.b16 %v434, %v426
  %v499 = vpack.c.b16 %v435, %v427
  %v500 = vpack.c.b16 %v436, %v428
  %v501 = vpack.c.b16 %v437, %v429
  %v502 = vpack.c.b16 %v438, %v430
  %v695 = vunpack.c.l.b16 %v112
  %v696 = vunpack.c.l.b16 %v113
  %v697 = vunpack.c.l.b16 %v114
  %v698 = vunpack.c.l.b16 %v115
  %v699 = vunpack.c.l.b16 %v116
  %v700 = vunpack.c.l.b16 %v117
  %v701 = vunpack.c.l.b16 %v118
  %v702 = vunpack.c.l.b16 %v119
  %v703 = vunpack.c.l.b16 %v120
  %v704 = vunpack.c.l.b16 %v121
  %v705 = vunpack.c.l.b16 %v122
  %v706 = vunpack.c.l.b16 %v123
  %v707 = vunpack.c.l.b16 %v124
  %v708 = vunpack.c.l.b16 %v125
  %v709 = vunpack.c.l.b16 %v126
  %v710 = vunpack.c.l.b16 %v127
  %v711 = vunpack.c.l.b16 %v128
  %v712 = vunpack.c.l.b16 %v129
  %v713 = vunpack.c.l.b16 %v130
  %v714 = vunpack.c.l.b16 %v131
  %v715 = vunpack.c.l.b16 %v132
  %v716 = vunpack.c.l.b16 %v133
  %v717 = vunpack.c.l.b16 %v134
  %v718 = vunpack.c.l.b16 %v135
  %v719 = vunpack.c.l.b16 %v136
  %v720 = vunpack.c.l.b16 %v137
  %v721 = vunpack.c.l.b16 %v138
  %v722 = vunpack.c.l.b16 %v139
  %v723 = vunpack.c.l.b16 %v140
  %v724 = vunpack.c.l.b16 %v141
  %v725 = vunpack.c.l.b16 %v142
  %v726 = vunpack.c.l.b16 %v143
  %v727 = vunpack.c.l.b16 %v144
  %v728 = vunpack.c.l.b16 %v145
  %v729 = vunpack.c.l.b16 %v146
  %v730 = vunpack.c.l.b16 %v147
  %v731 = vunpack.c.l.b16 %v148
  %v732 = vunpack.c.l.b16 %v149
  %v733 = vunpack.c.l.b16 %v150
  %v734 = vunpack.c.l.b16 %v151
  %v735 = vunpack.c.l.b16 %v152
  %v736 = vunpack.c.l.b16 %v153
  %v737 = vunpack.c.l.b16 %v154
  %v738 = vunpack.c.l.b16 %v155
  %v739 = vunpack.c.l.b16 %v156
  %v740 = vunpack.c.l.b16 %v157
  %v741 = vunpack.c.l.b16 %v158
  %v742 = vunpack.c.l.b16 %v159
  %v743 = vunpack.c.l.b16 %v160
  %v744 = vunpack.c.l.b16 %v161
  %v745 = vunpack.c.l.b16 %v162
  %v746 = vunpack.c.l.b16 %v163
  %v747 = vunpack.c.l.b16 %v164
  %v748 = vunpack.c.l.b16 %v165
  %v749 = vunpack.c.l.b16 %v166
  %v750 = vunpack.c.l.b16 %v167
  %v751 = vunpack.c.l.b16 %v168
  %v752 = vunpack.c.l.b16 %v169
  %v753 = vunpack.c.l.b16 %v170
  %v754 = vunpack.c.l.b16 %v171
  %v755 = vunpack.c.l.b16 %v172
  %v756 = vunpack.c.l.b16 %v173
  %v757 = vunpack.c.l.b16 %v174
  %v758 = vunpack.c.l.b16 %v175
  %v759 = vunpack.c.l.b16 %v176
  %v760 = vunpack.c.l.b16 %v177
  %v761 = vunpack.c.l.b16 %v178
  %v762 = vunpack.c.l.b16 %v179
  %v763 = vunpack.c.l.b16 %v180
  %v764 = vunpack.c.l.b16 %v181
  %v765 = vunpack.c.l.b16 %v182
  %v766 = vunpack.c.l.b16 %v183
  %v767 = vunpack.c.l.b16 %v184
  %v768 = vunpack.c.l.b16 %v185
  %v769 = vunpack.c.l.b16 %v186
  %v770 = vunpack.c.l.b16 %v187
  %v771 = vunpack.c.l.b16 %v188
  %v772 = vunpack.c.l.b16 %v189
  %v773 = vunpack.c.l.b16 %v190
  %v774 = vunpack.c.l.b16 %v191
  %v775 = vunpack.c.l.b16 %v192
  %v776 = vunpack.c.l.b16 %v193
  %v777 = vunpack.c.l.b16 %v194
  %v778 = vunpack.c.l.b16 %v195
  %v779 = vunpack.c.l.b16 %v196
  %v780 = vunpack.c.l.b16 %v197
  %v781 = vunpack.c.l.b16 %v198
  %v782 = vunpack.c.l.b16 %v199
  %v783 = vunpack.c.l.b16 %v200
  %v784 = vunpack.c.l.b16 %v201
  %v785 = vunpack.c.l.b16 %v202
  %v786 = vunpack.c.l.b16 %v203
  %v787 = vunpack.c.l.b16 %v204
  %v788 = vunpack.c.l.b16 %v205
  %v789 = vunpack.c.l.b16 %v206
  %v790 = vunpack.c.l.b16 %v207
  %v791 = vunpack.c.l.b16 %v208
  %v792 = vunpack.c.l.b16 %v209
  %v793 = vunpack.c.l.b16 %v210
  %v794 = vunpack.c.l.b16 %v211
  %v795 = vunpack.c.l.b16 %v212
  %v796 = vunpack.c.l.b16 %v213
  %v797 = vunpack.c.l.b16 %v214
  %v798 = vunpack.c.l.b16 %v215
  %v799 = vunpack.c.l.b16 %v216
  %v800 = vunpack.c.l.b16 %v217
  %v801 = vunpack.c.l.b16 %v218
  %v802 = vunpack.c.l.b16 %v219
  %v803 = vunpack.c.l.b16 %v220
  %v804 = vunpack.c.l.b16 %v221
  %v805 = vunpack.c.l.b16 %v222
  %v806 = vunpack.c.l.b16 %v223
  %v807 = vunpack.c.l.b16 %v224
  %v808 = vunpack.c.l.b16 %v225
  %v809 = vunpack.c.l.b16 %v226
  %v810 = vunpack.c.l.b16 %v227
  %v811 = vunpack.c.l.b16 %v228
  %v812 = vunpack.c.l.b16 %v229
  %v813 = vunpack.c.l.b16 %v230
  %v814 = vunpack.c.l.b16 %v231
  %v815 = vunpack.c.l.b16 %v232
  %v816 = vunpack.c.l.b16 %v233
  %v817 = vunpack.c.l.b16 %v234
  %v818 = vunpack.c.l.b16 %v235
  %v819 = vunpack.c.l.b16 %v236
  %v820 = vunpack.c.l.b16 %v237
  %v821 = vunpack.c.l.b16 %v238
  %v822 = vunpack.c.l.b16 %v239
  %v823 = vpack.c.b16 %v696, %v695
  %v824 = vpack.c.b16 %v698, %v697
  %v825 = vpack.c.b16 %v700, %v699
  %v826 = vpack.c.b16 %v702, %v701
  %v827 = vpack.c.b16 %v704, %v703
  %v828 = vpack.c.b16 %v706, %v705
  %v829 = vpack.c.b16 %v708, %v707
  %v830 = vpack.c.b16 %v710, %v709
  %v831 = vpack.c.b16 %v712, %v711
  %v832 = vpack.c.b16 %v714, %v713
  %v833 = vpack.c.b16 %v716, %v715
  %v834 = vpack.c.b16 %v718, %v717
  %v835 = vpack.c.b16 %v720, %v719
  %v836 = vpack.c.b16 %v722, %v721
  %v837 = vpack.c.b16 %v724, %v723
  %v838 = vpack.c.b16 %v726, %v725
  %v839 = vpack.c.b16 %v728, %v727
  %v840 = vpack.c.b16 %v730, %v729
  %v841 = vpack.c.b16 %v732, %v731
  %v842 = vpack.c.b16 %v734, %v733
  %v843 = vpack.c.b16 %v736, %v735
  %v844 = vpack.c.b16 %v738, %v737
  %v845 = vpack.c.b16 %v740, %v739
  %v846 = vpack.c.b16 %v742, %v741
  %v847 = vpack.c.b16 %v744, %v743
  %v848 = vpack.c.b16 %v746, %v745
  %v849 = vpack.c.b16 %v748, %v747
  %v850 = vpack.c.b16 %v750, %v749
  %v851 = vpack.c.b16 %v752, %v751
  %v852 = vpack.c.b16 %v754, %v753
  %v853 = vpack.c.b16 %v756, %v755
  %v854 = vpack.c.b16 %v758, %v757
  %v855 = vpack.c.b16 %v760, %v759
  %v856 = vpack.c.b16 %v762, %v761
  %v857 = vpack.c.b16 %v764, %v763
  %v858 = vpack.c.b16 %v766, %v765
  %v859 = vpack.c.b16 %v768, %v767
  %v860 = vpack.c.b16 %v770, %v769
  %v861 = vpack.c.b16 %v772, %v771
  %v862 = vpack.c.b16 %v774, %v773
  %v863 = vpack.c.b16 %v776, %v775
  %v864 = vpack.c.b16 %v778, %v777
  %v865 = vpack.c.b16 %v780, %v779
  %v866 = vpack.c.b16 %v782, %v781
  %v867 = vpack.c.b16 %v784, %v783
  %v868 = vpack.c.b16 %v786, %v785
  %v869 = vpack.c.b16 %v788, %v787
  %v870 = vpack.c.b16 %v790, %v789
  %v871 = vpack.c.b16 %v792, %v791
  %v872 = vpack.c.b16 %v794, %v793
  %v873 = vpack.c.b16 %v796, %v795
  %v874 = vpack.c.b16 %v798, %v797
  %v875 = vpack.c.b16 %v800, %v799
  %v876 = vpack.c.b16 %v802, %v801
  %v877 = vpack.c.b16 %v804, %v803
  %v878 = vpack.c.b16 %v806, %v805
  %v879 = vpack.c.b16 %v808, %v807
  %v880 = vpack.c.b16 %v810, %v809
  %v881 = vpack.c.b16 %v812, %v811
  %v882 = vpack.c.b16 %v814, %v813
  %v883 = vpack.c.b16 %v816, %v815
  %v884 = vpack.c.b16 %v818, %v817
  %v885 = vpack.c.b16 %v820, %v819
  %v886 = vpack.c.b16 %v822, %v821
  %951 = vmatprep.subr.bf16.mxu0 0
  %952 = vmatpush1.bf16.msra.mxu0 %v823
  %953 = vmatprep.subr.bf16.mxu0 0
  %954 = vmatpush1.bf16.msra.mxu0 %v824
  %955 = vmatprep.subr.bf16.mxu0 0
  %956 = vmatpush1.bf16.msra.mxu0 %v825
  %957 = vmatprep.subr.bf16.mxu0 0
  %958 = vmatpush1.bf16.msra.mxu0 %v826
  %959 = vmatprep.subr.bf16.mxu0 0
  %960 = vmatpush1.bf16.msra.mxu0 %v827
  %961 = vmatprep.subr.bf16.mxu0 0
  %962 = vmatpush1.bf16.msra.mxu0 %v828
  %963 = vmatprep.subr.bf16.mxu0 0
  %964 = vmatpush1.bf16.msra.mxu0 %v829
  %965 = vmatprep.subr.bf16.mxu0 0
  %966 = vmatpush1.bf16.msra.mxu0 %v830
  %967 = vmatprep.subr.bf16.mxu0 0
  %968 = vmatpush1.bf16.msra.mxu0 %v831
  %969 = vmatprep.subr.bf16.mxu0 0
  %970 = vmatpush1.bf16.msra.mxu0 %v832
  %971 = vmatprep.subr.bf16.mxu0 0
  %972 = vmatpush1.bf16.msra.mxu0 %v833
  %973 = vmatprep.subr.bf16.mxu0 0
  %974 = vmatpush1.bf16.msra.mxu0 %v834
  %975 = vmatprep.subr.bf16.mxu0 0
  %976 = vmatpush1.bf16.msra.mxu0 %v835
  %977 = vmatprep.subr.bf16.mxu0 0
  %978 = vmatpush1.bf16.msra.mxu0 %v836
  %979 = vmatprep.subr.bf16.mxu0 0
  %980 = vmatpush1.bf16.msra.mxu0 %v837
  %981 = vmatprep.subr.bf16.mxu0 0
  %982 = vmatpush1.bf16.msra.mxu0 %v838
  %983 = vmatprep.mubr.bf16.mxu0 %v440
  %984 = vmatmul.mubr.bf16.gmra.mrb[0].mxu0 %v439
  %v985 = vpop.f32.mrb[0].mxu0
  %v986 = vadd.f32 %v245, %v985
  %v987 = vpop.f32.mrb[0].mxu0
  %v988 = vpop.f32.mrb[0].mxu0
  %v989 = vadd.f32 %v245, %v988
  %v990 = vpop.f32.mrb[0].mxu0
  %991 = vmatprep.mubr.bf16.mxu0 %v448
  %992 = vmatmul.mubr.bf16.gmra.mrb[0].mxu0 %v447
  %v993 = vpop.f32.mrb[0].mxu0
  %v994 = vadd.f32 %v245, %v993
  %v995 = vpop.f32.mrb[0].mxu0
  %v996 = vpop.f32.mrb[0].mxu0
  %v997 = vadd.f32 %v245, %v996
  %v998 = vpop.f32.mrb[0].mxu0
  %999 = vmatprep.mubr.bf16.mxu0 %v456
  %1000 = vmatmul.mubr.bf16.gmra.mrb[0].mxu0 %v455
  %v1001 = vpop.f32.mrb[0].mxu0
  %v1002 = vadd.f32 %v245, %v1001
  %v1003 = vpop.f32.mrb[0].mxu0
  %v1004 = vpop.f32.mrb[0].mxu0
  %v1005 = vadd.f32 %v245, %v1004
  %v1006 = vpop.f32.mrb[0].mxu0
  %1007 = vmatprep.mubr.bf16.mxu0 %v464
  %1008 = vmatmul.mubr.bf16.gmra.mrb[0].mxu0 %v463
  %v1009 = vpop.f32.mrb[0].mxu0
  %v1010 = vadd.f32 %v245, %v1009
  %v1011 = vpop.f32.mrb[0].mxu0
  %v1012 = vpop.f32.mrb[0].mxu0
  %v1013 = vadd.f32 %v245, %v1012
  %v1014 = vpop.f32.mrb[0].mxu0
  %1015 = vmatprep.mubr.bf16.mxu0 %v472
  %1016 = vmatmul.mubr.bf16.gmra.mrb[0].mxu0 %v471
  %v1017 = vpop.f32.mrb[0].mxu0
  %v1018 = vadd.f32 %v245, %v1017
  %v1019 = vpop.f32.mrb[0].mxu0
  %v1020 = vpop.f32.mrb[0].mxu0
  %v1021 = vadd.f32 %v245, %v1020
  %v1022 = vpop.f32.mrb[0].mxu0
  %1023 = vmatprep.mubr.bf16.mxu0 %v480
  %1024 = vmatmul.mubr.bf16.gmra.mrb[0].mxu0 %v479
  %v1025 = vpop.f32.mrb[0].mxu0
  %v1026 = vadd.f32 %v245, %v1025
  %v1027 = vpop.f32.mrb[0].mxu0
  %v1028 = vpop.f32.mrb[0].mxu0
  %v1029 = vadd.f32 %v245, %v1028
  %v1030 = vpop.f32.mrb[0].mxu0
  %1031 = vmatprep.mubr.bf16.mxu0 %v488
  %1032 = vmatmul.mubr.bf16.gmra.mrb[0].mxu0 %v487
  %v1033 = vpop.f32.mrb[0].mxu0
  %v1034 = vadd.f32 %v245, %v1033
  %v1035 = vpop.f32.mrb[0].mxu0
  %v1036 = vpop.f32.mrb[0].mxu0
  %v1037 = vadd.f32 %v245, %v1036
  %v1038 = vpop.f32.mrb[0].mxu0
  %1039 = vmatprep.mubr.bf16.mxu0 %v496
  %1040 = vmatmul.mubr.bf16.gmra.mrb[0].mxu0 %v495
  %v1041 = vpop.f32.mrb[0].mxu0
  %v1042 = vadd.f32 %v245, %v1041
  %v1043 = vpop.f32.mrb[0].mxu0
  %v1044 = vpop.f32.mrb[0].mxu0
  %v1045 = vadd.f32 %v245, %v1044
  %v1046 = vpop.f32.mrb[0].mxu0
  %1047 = vdwg.mxu0
  %1048 = vmatprep.subr.bf16.mxu0 0
  %1049 = vmatpush1.bf16.msra.mxu0 %v839
  %1050 = vmatprep.subr.bf16.mxu0 0
  %1051 = vmatpush1.bf16.msra.mxu0 %v840
  %1052 = vmatprep.subr.bf16.mxu0 0
  %1053 = vmatpush1.bf16.msra.mxu0 %v841
  %1054 = vmatprep.subr.bf16.mxu0 0
  %1055 = vmatpush1.bf16.msra.mxu0 %v842
  %1056 = vmatprep.subr.bf16.mxu0 0
  %1057 = vmatpush1.bf16.msra.mxu0 %v843
  %1058 = vmatprep.subr.bf16.mxu0 0
  %1059 = vmatpush1.bf16.msra.mxu0 %v844
  %1060 = vmatprep.subr.bf16.mxu0 0
  %1061 = vmatpush1.bf16.msra.mxu0 %v845
  %1062 = vmatprep.subr.bf16.mxu0 0
  %1063 = vmatpush1.bf16.msra.mxu0 %v846
  %1064 = vmatprep.subr.bf16.mxu0 0
  %1065 = vmatpush1.bf16.msra.mxu0 %v847
  %1066 = vmatprep.subr.bf16.mxu0 0
  %1067 = vmatpush1.bf16.msra.mxu0 %v848
  %1068 = vmatprep.subr.bf16.mxu0 0
  %1069 = vmatpush1.bf16.msra.mxu0 %v849
  %1070 = vmatprep.subr.bf16.mxu0 0
  %1071 = vmatpush1.bf16.msra.mxu0 %v850
  %1072 = vmatprep.subr.bf16.mxu0 0
  %1073 = vmatpush1.bf16.msra.mxu0 %v851
  %1074 = vmatprep.subr.bf16.mxu0 0
  %1075 = vmatpush1.bf16.msra.mxu0 %v852
  %1076 = vmatprep.subr.bf16.mxu0 0
  %1077 = vmatpush1.bf16.msra.mxu0 %v853
  %1078 = vmatprep.subr.bf16.mxu0 0
  %1079 = vmatpush1.bf16.msra.mxu0 %v854
  %1080 = vmatprep.mubr.bf16.mxu0 %v442
  %1081 = vmatmul.mubr.bf16.gmra.mrb[0].mxu0 %v441
  %v1082 = vpop.f32.mrb[0].mxu0
  %v1083 = vadd.f32 %v986, %v1082
  %v1084 = vpop.f32.mrb[0].mxu0
  %v1085 = vpop.f32.mrb[0].mxu0
  %v1086 = vadd.f32 %v989, %v1085
  %v1087 = vpop.f32.mrb[0].mxu0
  %1088 = vmatprep.mubr.bf16.mxu0 %v450
  %1089 = vmatmul.mubr.bf16.gmra.mrb[0].mxu0 %v449
  %v1090 = vpop.f32.mrb[0].mxu0
  %v1091 = vadd.f32 %v994, %v1090
  %v1092 = vpop.f32.mrb[0].mxu0
  %v1093 = vpop.f32.mrb[0].mxu0
  %v1094 = vadd.f32 %v997, %v1093
  %v1095 = vpop.f32.mrb[0].mxu0
  %1096 = vmatprep.mubr.bf16.mxu0 %v458
  %1097 = vmatmul.mubr.bf16.gmra.mrb[0].mxu0 %v457
  %v1098 = vpop.f32.mrb[0].mxu0
  %v1099 = vadd.f32 %v1002, %v1098
  %v1100 = vpop.f32.mrb[0].mxu0
  %v1101 = vpop.f32.mrb[0].mxu0
  %v1102 = vadd.f32 %v1005, %v1101
  %v1103 = vpop.f32.mrb[0].mxu0
  %1104 = vmatprep.mubr.bf16.mxu0 %v466
  %1105 = vmatmul.mubr.bf16.gmra.mrb[0].mxu0 %v465
  %v1106 = vpop.f32.mrb[0].mxu0
  %v1107 = vadd.f32 %v1010, %v1106
  %v1108 = vpop.f32.mrb[0].mxu0
  %v1109 = vpop.f32.mrb[0].mxu0
  %v1110 = vadd.f32 %v1013, %v1109
  %v1111 = vpop.f32.mrb[0].mxu0
  %1112 = vmatprep.mubr.bf16.mxu0 %v474
  %1113 = vmatmul.mubr.bf16.gmra.mrb[0].mxu0 %v473
  %v1114 = vpop.f32.mrb[0].mxu0
  %v1115 = vadd.f32 %v1018, %v1114
  %v1116 = vpop.f32.mrb[0].mxu0
  %v1117 = vpop.f32.mrb[0].mxu0
  %v1118 = vadd.f32 %v1021, %v1117
  %v1119 = vpop.f32.mrb[0].mxu0
  %1120 = vmatprep.mubr.bf16.mxu0 %v482
  %1121 = vmatmul.mubr.bf16.gmra.mrb[0].mxu0 %v481
  %v1122 = vpop.f32.mrb[0].mxu0
  %v1123 = vadd.f32 %v1026, %v1122
  %v1124 = vpop.f32.mrb[0].mxu0
  %v1125 = vpop.f32.mrb[0].mxu0
  %v1126 = vadd.f32 %v1029, %v1125
  %v1127 = vpop.f32.mrb[0].mxu0
  %1128 = vmatprep.mubr.bf16.mxu0 %v490
  %1129 = vmatmul.mubr.bf16.gmra.mrb[0].mxu0 %v489
  %v1130 = vpop.f32.mrb[0].mxu0
  %v1131 = vadd.f32 %v1034, %v1130
  %v1132 = vpop.f32.mrb[0].mxu0
  %v1133 = vpop.f32.mrb[0].mxu0
  %v1134 = vadd.f32 %v1037, %v1133
  %v1135 = vpop.f32.mrb[0].mxu0
  %1136 = vmatprep.mubr.bf16.mxu0 %v498
  %1137 = vmatmul.mubr.bf16.gmra.mrb[0].mxu0 %v497
  %v1138 = vpop.f32.mrb[0].mxu0
  %v1139 = vadd.f32 %v1042, %v1138
  %v1140 = vpop.f32.mrb[0].mxu0
  %v1141 = vpop.f32.mrb[0].mxu0
  %v1142 = vadd.f32 %v1045, %v1141
  %v1143 = vpop.f32.mrb[0].mxu0
  %1144 = vdwg.mxu0
  %1145 = vmatprep.subr.bf16.mxu0 0
  %1146 = vmatpush1.bf16.msra.mxu0 %v855
  %1147 = vmatprep.subr.bf16.mxu0 0
  %1148 = vmatpush1.bf16.msra.mxu0 %v856
  %1149 = vmatprep.subr.bf16.mxu0 0
  %1150 = vmatpush1.bf16.msra.mxu0 %v857
  %1151 = vmatprep.subr.bf16.mxu0 0
  %1152 = vmatpush1.bf16.msra.mxu0 %v858
  %1153 = vmatprep.subr.bf16.mxu0 0
  %1154 = vmatpush1.bf16.msra.mxu0 %v859
  %1155 = vmatprep.subr.bf16.mxu0 0
  %1156 = vmatpush1.bf16.msra.mxu0 %v860
  %1157 = vmatprep.subr.bf16.mxu0 0
  %1158 = vmatpush1.bf16.msra.mxu0 %v861
  %1159 = vmatprep.subr.bf16.mxu0 0
  %1160 = vmatpush1.bf16.msra.mxu0 %v862
  %1161 = vmatprep.subr.bf16.mxu0 0
  %1162 = vmatpush1.bf16.msra.mxu0 %v863
  %1163 = vmatprep.subr.bf16.mxu0 0
  %1164 = vmatpush1.bf16.msra.mxu0 %v864
  %1165 = vmatprep.subr.bf16.mxu0 0
  %1166 = vmatpush1.bf16.msra.mxu0 %v865
  %1167 = vmatprep.subr.bf16.mxu0 0
  %1168 = vmatpush1.bf16.msra.mxu0 %v866
  %1169 = vmatprep.subr.bf16.mxu0 0
  %1170 = vmatpush1.bf16.msra.mxu0 %v867
  %1171 = vmatprep.subr.bf16.mxu0 0
  %1172 = vmatpush1.bf16.msra.mxu0 %v868
  %1173 = vmatprep.subr.bf16.mxu0 0
  %1174 = vmatpush1.bf16.msra.mxu0 %v869
  %1175 = vmatprep.subr.bf16.mxu0 0
  %1176 = vmatpush1.bf16.msra.mxu0 %v870
  %1177 = vmatprep.mubr.bf16.mxu0 %v444
  %1178 = vmatmul.mubr.bf16.gmra.mrb[0].mxu0 %v443
  %v1179 = vpop.f32.mrb[0].mxu0
  %v1180 = vadd.f32 %v1083, %v1179
  %v1181 = vpop.f32.mrb[0].mxu0
  %v1182 = vpop.f32.mrb[0].mxu0
  %v1183 = vadd.f32 %v1086, %v1182
  %v1184 = vpop.f32.mrb[0].mxu0
  %1185 = vmatprep.mubr.bf16.mxu0 %v452
  %1186 = vmatmul.mubr.bf16.gmra.mrb[0].mxu0 %v451
  %v1187 = vpop.f32.mrb[0].mxu0
  %v1188 = vadd.f32 %v1091, %v1187
  %v1189 = vpop.f32.mrb[0].mxu0
  %v1190 = vpop.f32.mrb[0].mxu0
  %v1191 = vadd.f32 %v1094, %v1190
  %v1192 = vpop.f32.mrb[0].mxu0
  %1193 = vmatprep.mubr.bf16.mxu0 %v460
  %1194 = vmatmul.mubr.bf16.gmra.mrb[0].mxu0 %v459
  %v1195 = vpop.f32.mrb[0].mxu0
  %v1196 = vadd.f32 %v1099, %v1195
  %v1197 = vpop.f32.mrb[0].mxu0
  %v1198 = vpop.f32.mrb[0].mxu0
  %v1199 = vadd.f32 %v1102, %v1198
  %v1200 = vpop.f32.mrb[0].mxu0
  %1201 = vmatprep.mubr.bf16.mxu0 %v468
  %1202 = vmatmul.mubr.bf16.gmra.mrb[0].mxu0 %v467
  %v1203 = vpop.f32.mrb[0].mxu0
  %v1204 = vadd.f32 %v1107, %v1203
  %v1205 = vpop.f32.mrb[0].mxu0
  %v1206 = vpop.f32.mrb[0].mxu0
  %v1207 = vadd.f32 %v1110, %v1206
  %v1208 = vpop.f32.mrb[0].mxu0
  %1209 = vmatprep.mubr.bf16.mxu0 %v476
  %1210 = vmatmul.mubr.bf16.gmra.mrb[0].mxu0 %v475
  %v1211 = vpop.f32.mrb[0].mxu0
  %v1212 = vadd.f32 %v1115, %v1211
  %v1213 = vpop.f32.mrb[0].mxu0
  %v1214 = vpop.f32.mrb[0].mxu0
  %v1215 = vadd.f32 %v1118, %v1214
  %v1216 = vpop.f32.mrb[0].mxu0
  %1217 = vmatprep.mubr.bf16.mxu0 %v484
  %1218 = vmatmul.mubr.bf16.gmra.mrb[0].mxu0 %v483
  %v1219 = vpop.f32.mrb[0].mxu0
  %v1220 = vadd.f32 %v1123, %v1219
  %v1221 = vpop.f32.mrb[0].mxu0
  %v1222 = vpop.f32.mrb[0].mxu0
  %v1223 = vadd.f32 %v1126, %v1222
  %v1224 = vpop.f32.mrb[0].mxu0
  %1225 = vmatprep.mubr.bf16.mxu0 %v492
  %1226 = vmatmul.mubr.bf16.gmra.mrb[0].mxu0 %v491
  %v1227 = vpop.f32.mrb[0].mxu0
  %v1228 = vadd.f32 %v1131, %v1227
  %v1229 = vpop.f32.mrb[0].mxu0
  %v1230 = vpop.f32.mrb[0].mxu0
  %v1231 = vadd.f32 %v1134, %v1230
  %v1232 = vpop.f32.mrb[0].mxu0
  %1233 = vmatprep.mubr.bf16.mxu0 %v500
  %1234 = vmatmul.mubr.bf16.gmra.mrb[0].mxu0 %v499
  %v1235 = vpop.f32.mrb[0].mxu0
  %v1236 = vadd.f32 %v1139, %v1235
  %v1237 = vpop.f32.mrb[0].mxu0
  %v1238 = vpop.f32.mrb[0].mxu0
  %v1239 = vadd.f32 %v1142, %v1238
  %v1240 = vpop.f32.mrb[0].mxu0
  %1241 = vdwg.mxu0
  %1242 = vmatprep.subr.bf16.mxu0 0
  %1243 = vmatpush1.bf16.msra.mxu0 %v871
  %1244 = vmatprep.subr.bf16.mxu0 0
  %1245 = vmatpush1.bf16.msra.mxu0 %v872
  %1246 = vmatprep.subr.bf16.mxu0 0
  %1247 = vmatpush1.bf16.msra.mxu0 %v873
  %1248 = vmatprep.subr.bf16.mxu0 0
  %1249 = vmatpush1.bf16.msra.mxu0 %v874
  %1250 = vmatprep.subr.bf16.mxu0 0
  %1251 = vmatpush1.bf16.msra.mxu0 %v875
  %1252 = vmatprep.subr.bf16.mxu0 0
  %1253 = vmatpush1.bf16.msra.mxu0 %v876
  %1254 = vmatprep.subr.bf16.mxu0 0
  %1255 = vmatpush1.bf16.msra.mxu0 %v877
  %1256 = vmatprep.subr.bf16.mxu0 0
  %1257 = vmatpush1.bf16.msra.mxu0 %v878
  %1258 = vmatprep.subr.bf16.mxu0 0
  %1259 = vmatpush1.bf16.msra.mxu0 %v879
  %1260 = vmatprep.subr.bf16.mxu0 0
  %1261 = vmatpush1.bf16.msra.mxu0 %v880
  %1262 = vmatprep.subr.bf16.mxu0 0
  %1263 = vmatpush1.bf16.msra.mxu0 %v881
  %1264 = vmatprep.subr.bf16.mxu0 0
  %1265 = vmatpush1.bf16.msra.mxu0 %v882
  %1266 = vmatprep.subr.bf16.mxu0 0
  %1267 = vmatpush1.bf16.msra.mxu0 %v883
  %1268 = vmatprep.subr.bf16.mxu0 0
  %1269 = vmatpush1.bf16.msra.mxu0 %v884
  %1270 = vmatprep.subr.bf16.mxu0 0
  %1271 = vmatpush1.bf16.msra.mxu0 %v885
  %1272 = vmatprep.subr.bf16.mxu0 0
  %1273 = vmatpush1.bf16.msra.mxu0 %v886
  %1274 = vmatprep.mubr.bf16.mxu0 %v446
  %1275 = vmatmul.mubr.bf16.gmra.mrb[0].mxu0 %v445
  %v1276 = vpop.f32.mrb[0].mxu0
  %v1277 = vadd.f32 %v1180, %v1276
  %v1278 = vpop.f32.mrb[0].mxu0
  %v1279 = vpop.f32.mrb[0].mxu0
  %v1280 = vadd.f32 %v1183, %v1279
  %v1281 = vpop.f32.mrb[0].mxu0
  %1282 = vmatprep.mubr.bf16.mxu0 %v454
  %1283 = vmatmul.mubr.bf16.gmra.mrb[0].mxu0 %v453
  %v1284 = vpop.f32.mrb[0].mxu0
  %v1285 = vadd.f32 %v1188, %v1284
  %v1286 = vpop.f32.mrb[0].mxu0
  %v1287 = vpop.f32.mrb[0].mxu0
  %v1288 = vadd.f32 %v1191, %v1287
  %v1289 = vpop.f32.mrb[0].mxu0
  %1290 = vmatprep.mubr.bf16.mxu0 %v462
  %1291 = vmatmul.mubr.bf16.gmra.mrb[0].mxu0 %v461
  %v1292 = vpop.f32.mrb[0].mxu0
  %v1293 = vadd.f32 %v1196, %v1292
  %v1294 = vpop.f32.mrb[0].mxu0
  %v1295 = vpop.f32.mrb[0].mxu0
  %v1296 = vadd.f32 %v1199, %v1295
  %v1297 = vpop.f32.mrb[0].mxu0
  %1298 = vmatprep.mubr.bf16.mxu0 %v470
  %1299 = vmatmul.mubr.bf16.gmra.mrb[0].mxu0 %v469
  %v1300 = vpop.f32.mrb[0].mxu0
  %v1301 = vadd.f32 %v1204, %v1300
  %v1302 = vpop.f32.mrb[0].mxu0
  %v1303 = vpop.f32.mrb[0].mxu0
  %v1304 = vadd.f32 %v1207, %v1303
  %v1305 = vpop.f32.mrb[0].mxu0
  %1306 = vmatprep.mubr.bf16.mxu0 %v478
  %1307 = vmatmul.mubr.bf16.gmra.mrb[0].mxu0 %v477
  %v1308 = vpop.f32.mrb[0].mxu0
  %v1309 = vadd.f32 %v1212, %v1308
  %v1310 = vpop.f32.mrb[0].mxu0
  %v1311 = vpop.f32.mrb[0].mxu0
  %v1312 = vadd.f32 %v1215, %v1311
  %v1313 = vpop.f32.mrb[0].mxu0
  %1314 = vmatprep.mubr.bf16.mxu0 %v486
  %1315 = vmatmul.mubr.bf16.gmra.mrb[0].mxu0 %v485
  %v1316 = vpop.f32.mrb[0].mxu0
  %v1317 = vadd.f32 %v1220, %v1316
  %v1318 = vpop.f32.mrb[0].mxu0
  %v1319 = vpop.f32.mrb[0].mxu0
  %v1320 = vadd.f32 %v1223, %v1319
  %v1321 = vpop.f32.mrb[0].mxu0
  %1322 = vmatprep.mubr.bf16.mxu0 %v494
  %1323 = vmatmul.mubr.bf16.gmra.mrb[0].mxu0 %v493
  %v1324 = vpop.f32.mrb[0].mxu0
  %v1325 = vadd.f32 %v1228, %v1324
  %v1326 = vpop.f32.mrb[0].mxu0
  %v1327 = vpop.f32.mrb[0].mxu0
  %v1328 = vadd.f32 %v1231, %v1327
  %v1329 = vpop.f32.mrb[0].mxu0
  %1330 = vmatprep.mubr.bf16.mxu0 %v502
  %1331 = vmatmul.mubr.bf16.gmra.mrb[0].mxu0 %v501
  %v1332 = vpop.f32.mrb[0].mxu0
  %v1333 = vadd.f32 %v1236, %v1332
  %v1334 = vpop.f32.mrb[0].mxu0
  %v1335 = vpop.f32.mrb[0].mxu0
  %v1336 = vadd.f32 %v1239, %v1335
  %v1337 = vpop.f32.mrb[0].mxu0
  %1338 = vdwg.mxu0
  %v1339 = vmax.f32 %v1277, 0.0
  %v1340 = vmax.f32 %v1280, 0.0
  %v1341 = vmax.f32 %v1285, 0.0
  %v1342 = vmax.f32 %v1288, 0.0
  %v1343 = vmax.f32 %v1293, 0.0
  %v1344 = vmax.f32 %v1296, 0.0
  %v1345 = vmax.f32 %v1301, 0.0
  %v1346 = vmax.f32 %v1304, 0.0
  %v1347 = vmax.f32 %v1309, 0.0
  %v1348 = vmax.f32 %v1312, 0.0
  %v1349 = vmax.f32 %v1317, 0.0
  %v1350 = vmax.f32 %v1320, 0.0
  %v1351 = vmax.f32 %v1325, 0.0
  %v1352 = vmax.f32 %v1328, 0.0
  %v1353 = vmax.f32 %v1333, 0.0
  %v1354 = vmax.f32 %v1336, 0.0
  %v1355 = vpack.c.bf16 %v1340, %v1339
  %v1356 = vpack.c.bf16 %v1342, %v1341
  %v1357 = vpack.c.bf16 %v1344, %v1343
  %v1358 = vpack.c.bf16 %v1346, %v1345
  %v1359 = vpack.c.bf16 %v1348, %v1347
  %v1360 = vpack.c.bf16 %v1350, %v1349
  %v1361 = vpack.c.bf16 %v1352, %v1351
  %v1362 = vpack.c.bf16 %v1354, %v1353
  %v1363 = vld [vmem:[%s5] sm:$0xf]
  %v1364 = vld [vmem:[%s5 + $0x4] sm:$0xf]
  %v1365 = vld [vmem:[%s5 + $0x8] sm:$0xf]
  %v1366 = vld [vmem:[%s5 + $0xc] sm:$0xf]
  %v1367 = vld [vmem:[%s5 + $0x10] sm:$0xf]
  %v1368 = vld [vmem:[%s5 + $0x14] sm:$0xf]
  %v1369 = vld [vmem:[%s5 + $0x18] sm:$0xf]
  %v1370 = vld [vmem:[%s5 + $0x1c] sm:$0xf]
  %v1371 = vld [vmem:[%s5 + $0x20] sm:$0xf]
  %v1372 = vld [vmem:[%s5 + $0x24] sm:$0xf]
  %v1373 = vld [vmem:[%s5 + $0x28] sm:$0xf]
  %v1374 = vld [vmem:[%s5 + $0x2c] sm:$0xf]
  %v1375 = vld [vmem:[%s5 + $0x30] sm:$0xf]
  %v1376 = vld [vmem:[%s5 + $0x34] sm:$0xf]
  %v1377 = vld [vmem:[%s5 + $0x38] sm:$0xf]
  %v1378 = vld [vmem:[%s5 + $0x3c] sm:$0xf]
  %s1379 = scalar_lea.vmem %s5, 64
  %v1380 = vld [vmem:[%s1379] sm:$0xf]
  %v1381 = vld [vmem:[%s1379 + $0x4] sm:$0xf]
  %v1382 = vld [vmem:[%s1379 + $0x8] sm:$0xf]
  %v1383 = vld [vmem:[%s1379 + $0xc] sm:$0xf]
  %v1384 = vld [vmem:[%s1379 + $0x10] sm:$0xf]
  %v1385 = vld [vmem:[%s1379 + $0x14] sm:$0xf]
  %v1386 = vld [vmem:[%s1379 + $0x18] sm:$0xf]
  %v1387 = vld [vmem:[%s1379 + $0x1c] sm:$0xf]
  %v1388 = vld [vmem:[%s1379 + $0x20] sm:$0xf]
  %v1389 = vld [vmem:[%s1379 + $0x24] sm:$0xf]
  %v1390 = vld [vmem:[%s1379 + $0x28] sm:$0xf]
  %v1391 = vld [vmem:[%s1379 + $0x2c] sm:$0xf]
  %v1392 = vld [vmem:[%s1379 + $0x30] sm:$0xf]
  %v1393 = vld [vmem:[%s1379 + $0x34] sm:$0xf]
  %v1394 = vld [vmem:[%s1379 + $0x38] sm:$0xf]
  %v1395 = vld [vmem:[%s1379 + $0x3c] sm:$0xf]
  %v1404 = vunpack.c.l.b16 %v1355
  %v1405 = vunpack.c.l.b16 %v1356
  %v1406 = vunpack.c.l.b16 %v1357
  %v1407 = vunpack.c.l.b16 %v1358
  %v1408 = vunpack.c.l.b16 %v1359
  %v1409 = vunpack.c.l.b16 %v1360
  %v1410 = vunpack.c.l.b16 %v1361
  %v1411 = vunpack.c.l.b16 %v1362
  %v1412 = vrot.slane %v1404, 1
  %vm1413 = vcmask 1041409
  %v1414 = vsel %vm1413, %v1405, %v1412
  %v1415 = vrot.slane %v1406, 7
  %vm1416 = vcmask 1042434
  %v1417 = vsel %vm1416, %v1415, %v1414
  %v1418 = vrot.slane %v1407, 6
  %vm1419 = vcmask 1043459
  %v1420 = vsel %vm1419, %v1418, %v1417
  %v1421 = vrot.slane %v1408, 5
  %vm1422 = vcmask 1044484
  %v1423 = vsel %vm1422, %v1421, %v1420
  %v1424 = vrot.slane %v1409, 4
  %vm1425 = vcmask 1045509
  %v1426 = vsel %vm1425, %v1424, %v1423
  %v1427 = vrot.slane %v1410, 3
  %vm1428 = vcmask 1046534
  %v1429 = vsel %vm1428, %v1427, %v1426
  %v1430 = vrot.slane %v1411, 2
  %vm1431 = vcmask 1047559
  %v1432 = vsel %vm1431, %v1430, %v1429
  %v1433 = vpack.c.b16 %v1432, %v1432
  %v1451 = vunpack.c.l.b16 %v1380
  %v1452 = vunpack.c.l.b16 %v1381
  %v1453 = vunpack.c.l.b16 %v1382
  %v1454 = vunpack.c.l.b16 %v1383
  %v1455 = vunpack.c.l.b16 %v1384
  %v1456 = vunpack.c.l.b16 %v1385
  %v1457 = vunpack.c.l.b16 %v1386
  %v1458 = vunpack.c.l.b16 %v1387
  %v1459 = vunpack.c.l.b16 %v1388
  %v1460 = vunpack.c.l.b16 %v1389
  %v1461 = vunpack.c.l.b16 %v1390
  %v1462 = vunpack.c.l.b16 %v1391
  %v1463 = vunpack.c.l.b16 %v1392
  %v1464 = vunpack.c.l.b16 %v1393
  %v1465 = vunpack.c.l.b16 %v1394
  %v1466 = vunpack.c.l.b16 %v1395
  %v1467 = vpack.c.b16 %v1452, %v1451
  %v1468 = vpack.c.b16 %v1454, %v1453
  %v1469 = vpack.c.b16 %v1456, %v1455
  %v1470 = vpack.c.b16 %v1458, %v1457
  %v1471 = vpack.c.b16 %v1460, %v1459
  %v1472 = vpack.c.b16 %v1462, %v1461
  %v1473 = vpack.c.b16 %v1464, %v1463
  %v1474 = vpack.c.b16 %v1466, %v1465
  %1483 = vmatprep.subr.bf16.mxu0 0
  %1484 = vmatpush1.bf16.msra.mxu0 %v1467
  %1485 = vmatprep.subr.bf16.mxu0 0
  %1486 = vmatpush1.bf16.msra.mxu0 %v1468
  %1487 = vmatprep.subr.bf16.mxu0 0
  %1488 = vmatpush1.bf16.msra.mxu0 %v1469
  %1489 = vmatprep.subr.bf16.mxu0 0
  %1490 = vmatpush1.bf16.msra.mxu0 %v1470
  %1491 = vmatprep.subr.bf16.mxu0 0
  %1492 = vmatpush1.bf16.msra.mxu0 %v1471
  %1493 = vmatprep.subr.bf16.mxu0 0
  %1494 = vmatpush1.bf16.msra.mxu0 %v1472
  %1495 = vmatprep.subr.bf16.mxu0 0
  %1496 = vmatpush1.bf16.msra.mxu0 %v1473
  %1497 = vmatprep.subr.bf16.mxu0 0
  %1498 = vmatpush1.bf16.msra.mxu0 %v1474
  %1499 = vmatprep.subr.bf16.mxu0 0
  %1500 = vmatpush1.bf16.msra.mxu0 0
  %1501 = vmatprep.subr.bf16.mxu0 0
  %1502 = vmatpush1.bf16.msra.mxu0 0
  %1503 = vmatprep.subr.bf16.mxu0 0
  %1504 = vmatpush1.bf16.msra.mxu0 0
  %1505 = vmatprep.subr.bf16.mxu0 0
  %1506 = vmatpush1.bf16.msra.mxu0 0
  %1507 = vmatprep.subr.bf16.mxu0 0
  %1508 = vmatpush1.bf16.msra.mxu0 0
  %1509 = vmatprep.subr.bf16.mxu0 0
  %1510 = vmatpush1.bf16.msra.mxu0 0
  %1511 = vmatprep.subr.bf16.mxu0 0
  %1512 = vmatpush1.bf16.msra.mxu0 0
  %1513 = vmatprep.subr.bf16.mxu0 0
  %1514 = vmatpush1.bf16.msra.mxu0 0
  %1515 = vmatprep.mubr.bf16.mxu0 0
  %1516 = vmatmul.mubr.bf16.gmra.mrb[0].mxu0 %v1433
  %v1517 = vpop.f32.mrb[0].mxu0
  %v1518 = vadd.f32 0.0, %v1517
  %v1519 = vpop.f32.mrb[0].mxu0
  %v1520 = vpop.f32.mrb[0].mxu0
  %v1521 = vpop.f32.mrb[0].mxu0
  %1522 = vdwg.mxu0
  %v1523 = vrot.slane %v1405, 7
  %v1524 = vsel %vm1413, %v1523, %v1404
  %v1525 = vrot.slane %v1406, 6
  %v1526 = vsel %vm1416, %v1525, %v1524
  %v1527 = vrot.slane %v1407, 5
  %v1528 = vsel %vm1419, %v1527, %v1526
  %v1529 = vrot.slane %v1408, 4
  %v1530 = vsel %vm1422, %v1529, %v1528
  %v1531 = vrot.slane %v1409, 3
  %v1532 = vsel %vm1425, %v1531, %v1530
  %v1533 = vrot.slane %v1410, 2
  %v1534 = vsel %vm1428, %v1533, %v1532
  %v1535 = vrot.slane %v1411, 1
  %v1536 = vsel %vm1431, %v1535, %v1534
  %v1537 = vpack.c.b16 %v1536, %v1536
  %v1555 = vunpack.c.l.b16 %v1363
  %v1556 = vunpack.c.l.b16 %v1364
  %v1557 = vunpack.c.l.b16 %v1365
  %v1558 = vunpack.c.l.b16 %v1366
  %v1559 = vunpack.c.l.b16 %v1367
  %v1560 = vunpack.c.l.b16 %v1368
  %v1561 = vunpack.c.l.b16 %v1369
  %v1562 = vunpack.c.l.b16 %v1370
  %v1563 = vunpack.c.l.b16 %v1371
  %v1564 = vunpack.c.l.b16 %v1372
  %v1565 = vunpack.c.l.b16 %v1373
  %v1566 = vunpack.c.l.b16 %v1374
  %v1567 = vunpack.c.l.b16 %v1375
  %v1568 = vunpack.c.l.b16 %v1376
  %v1569 = vunpack.c.l.b16 %v1377
  %v1570 = vunpack.c.l.b16 %v1378
  %v1571 = vpack.c.b16 %v1556, %v1555
  %v1572 = vpack.c.b16 %v1558, %v1557
  %v1573 = vpack.c.b16 %v1560, %v1559
  %v1574 = vpack.c.b16 %v1562, %v1561
  %v1575 = vpack.c.b16 %v1564, %v1563
  %v1576 = vpack.c.b16 %v1566, %v1565
  %v1577 = vpack.c.b16 %v1568, %v1567
  %v1578 = vpack.c.b16 %v1570, %v1569
  %1587 = vmatprep.subr.bf16.mxu0 0
  %1588 = vmatpush1.bf16.msra.mxu0 %v1571
  %1589 = vmatprep.subr.bf16.mxu0 0
  %1590 = vmatpush1.bf16.msra.mxu0 %v1572
  %1591 = vmatprep.subr.bf16.mxu0 0
  %1592 = vmatpush1.bf16.msra.mxu0 %v1573
  %1593 = vmatprep.subr.bf16.mxu0 0
  %1594 = vmatpush1.bf16.msra.mxu0 %v1574
  %1595 = vmatprep.subr.bf16.mxu0 0
  %1596 = vmatpush1.bf16.msra.mxu0 %v1575
  %1597 = vmatprep.subr.bf16.mxu0 0
  %1598 = vmatpush1.bf16.msra.mxu0 %v1576
  %1599 = vmatprep.subr.bf16.mxu0 0
  %1600 = vmatpush1.bf16.msra.mxu0 %v1577
  %1601 = vmatprep.subr.bf16.mxu0 0
  %1602 = vmatpush1.bf16.msra.mxu0 %v1578
  %1603 = vmatprep.subr.bf16.mxu0 0
  %1604 = vmatpush1.bf16.msra.mxu0 0
  %1605 = vmatprep.subr.bf16.mxu0 0
  %1606 = vmatpush1.bf16.msra.mxu0 0
  %1607 = vmatprep.subr.bf16.mxu0 0
  %1608 = vmatpush1.bf16.msra.mxu0 0
  %1609 = vmatprep.subr.bf16.mxu0 0
  %1610 = vmatpush1.bf16.msra.mxu0 0
  %1611 = vmatprep.subr.bf16.mxu0 0
  %1612 = vmatpush1.bf16.msra.mxu0 0
  %1613 = vmatprep.subr.bf16.mxu0 0
  %1614 = vmatpush1.bf16.msra.mxu0 0
  %1615 = vmatprep.subr.bf16.mxu0 0
  %1616 = vmatpush1.bf16.msra.mxu0 0
  %1617 = vmatprep.subr.bf16.mxu0 0
  %1618 = vmatpush1.bf16.msra.mxu0 0
  %1619 = vmatprep.mubr.bf16.mxu0 0
  %1620 = vmatmul.mubr.bf16.gmra.mrb[0].mxu0 %v1537
  %v1621 = vpop.f32.mrb[0].mxu0
  %v1622 = vadd.f32 %v1518, %v1621
  %v1623 = vpop.f32.mrb[0].mxu0
  %v1624 = vpop.f32.mrb[0].mxu0
  %v1625 = vpop.f32.mrb[0].mxu0
  %1626 = vdwg.mxu0
  %s1627 = scalar_lea.vmem %s5, 128
  %v1628 = vld [vmem:[%s1627] sm:$0xf]
  %v1629 = vld [vmem:[%s1627 + $0x4] sm:$0xf]
  %v1630 = vld [vmem:[%s1627 + $0x8] sm:$0xf]
  %v1631 = vld [vmem:[%s1627 + $0xc] sm:$0xf]
  %v1632 = vld [vmem:[%s1627 + $0x10] sm:$0xf]
  %v1633 = vld [vmem:[%s1627 + $0x14] sm:$0xf]
  %v1634 = vld [vmem:[%s1627 + $0x18] sm:$0xf]
  %v1635 = vld [vmem:[%s1627 + $0x1c] sm:$0xf]
  %v1636 = vld [vmem:[%s1627 + $0x20] sm:$0xf]
  %v1637 = vld [vmem:[%s1627 + $0x24] sm:$0xf]
  %v1638 = vld [vmem:[%s1627 + $0x28] sm:$0xf]
  %v1639 = vld [vmem:[%s1627 + $0x2c] sm:$0xf]
  %v1640 = vld [vmem:[%s1627 + $0x30] sm:$0xf]
  %v1641 = vld [vmem:[%s1627 + $0x34] sm:$0xf]
  %v1642 = vld [vmem:[%s1627 + $0x38] sm:$0xf]
  %v1643 = vld [vmem:[%s1627 + $0x3c] sm:$0xf]
  %v1644 = vrot.slane %v1404, 2
  %v1645 = vrot.slane %v1405, 1
  %v1646 = vsel %vm1413, %v1645, %v1644
  %v1647 = vsel %vm1416, %v1406, %v1646
  %v1648 = vrot.slane %v1407, 7
  %v1649 = vsel %vm1419, %v1648, %v1647
  %v1650 = vrot.slane %v1408, 6
  %v1651 = vsel %vm1422, %v1650, %v1649
  %v1652 = vrot.slane %v1409, 5
  %v1653 = vsel %vm1425, %v1652, %v1651
  %v1654 = vrot.slane %v1410, 4
  %v1655 = vsel %vm1428, %v1654, %v1653
  %v1656 = vrot.slane %v1411, 3
  %v1657 = vsel %vm1431, %v1656, %v1655
  %v1658 = vpack.c.b16 %v1657, %v1657
  %v1676 = vunpack.c.l.b16 %v1628
  %v1677 = vunpack.c.l.b16 %v1629
  %v1678 = vunpack.c.l.b16 %v1630
  %v1679 = vunpack.c.l.b16 %v1631
  %v1680 = vunpack.c.l.b16 %v1632
  %v1681 = vunpack.c.l.b16 %v1633
  %v1682 = vunpack.c.l.b16 %v1634
  %v1683 = vunpack.c.l.b16 %v1635
  %v1684 = vunpack.c.l.b16 %v1636
  %v1685 = vunpack.c.l.b16 %v1637
  %v1686 = vunpack.c.l.b16 %v1638
  %v1687 = vunpack.c.l.b16 %v1639
  %v1688 = vunpack.c.l.b16 %v1640
  %v1689 = vunpack.c.l.b16 %v1641
  %v1690 = vunpack.c.l.b16 %v1642
  %v1691 = vunpack.c.l.b16 %v1643
  %v1692 = vpack.c.b16 %v1677, %v1676
  %v1693 = vpack.c.b16 %v1679, %v1678
  %v1694 = vpack.c.b16 %v1681, %v1680
  %v1695 = vpack.c.b16 %v1683, %v1682
  %v1696 = vpack.c.b16 %v1685, %v1684
  %v1697 = vpack.c.b16 %v1687, %v1686
  %v1698 = vpack.c.b16 %v1689, %v1688
  %v1699 = vpack.c.b16 %v1691, %v1690
  %1708 = vmatprep.subr.bf16.mxu0 0
  %1709 = vmatpush1.bf16.msra.mxu0 %v1692
  %1710 = vmatprep.subr.bf16.mxu0 0
  %1711 = vmatpush1.bf16.msra.mxu0 %v1693
  %1712 = vmatprep.subr.bf16.mxu0 0
  %1713 = vmatpush1.bf16.msra.mxu0 %v1694
  %1714 = vmatprep.subr.bf16.mxu0 0
  %1715 = vmatpush1.bf16.msra.mxu0 %v1695
  %1716 = vmatprep.subr.bf16.mxu0 0
  %1717 = vmatpush1.bf16.msra.mxu0 %v1696
  %1718 = vmatprep.subr.bf16.mxu0 0
  %1719 = vmatpush1.bf16.msra.mxu0 %v1697
  %1720 = vmatprep.subr.bf16.mxu0 0
  %1721 = vmatpush1.bf16.msra.mxu0 %v1698
  %1722 = vmatprep.subr.bf16.mxu0 0
  %1723 = vmatpush1.bf16.msra.mxu0 %v1699
  %1724 = vmatprep.subr.bf16.mxu0 0
  %1725 = vmatpush1.bf16.msra.mxu0 0
  %1726 = vmatprep.subr.bf16.mxu0 0
  %1727 = vmatpush1.bf16.msra.mxu0 0
  %1728 = vmatprep.subr.bf16.mxu0 0
  %1729 = vmatpush1.bf16.msra.mxu0 0
  %1730 = vmatprep.subr.bf16.mxu0 0
  %1731 = vmatpush1.bf16.msra.mxu0 0
  %1732 = vmatprep.subr.bf16.mxu0 0
  %1733 = vmatpush1.bf16.msra.mxu0 0
  %1734 = vmatprep.subr.bf16.mxu0 0
  %1735 = vmatpush1.bf16.msra.mxu0 0
  %1736 = vmatprep.subr.bf16.mxu0 0
  %1737 = vmatpush1.bf16.msra.mxu0 0
  %1738 = vmatprep.subr.bf16.mxu0 0
  %1739 = vmatpush1.bf16.msra.mxu0 0
  %1740 = vmatprep.mubr.bf16.mxu0 0
  %1741 = vmatmul.mubr.bf16.gmra.mrb[0].mxu0 %v1658
  %v1742 = vpop.f32.mrb[0].mxu0
  %v1743 = vadd.f32 0.0, %v1742
  %v1744 = vpop.f32.mrb[0].mxu0
  %v1745 = vpop.f32.mrb[0].mxu0
  %v1746 = vpop.f32.mrb[0].mxu0
  %1747 = vdwg.mxu0
  %v1748 = vadd.f32 %v1622, %v1743
  %s1749 = scalar_lea.vmem %s5, 192
  %v1750 = vld [vmem:[%s1749] sm:$0xf]
  %v1751 = vld [vmem:[%s1749 + $0x4] sm:$0xf]
  %v1752 = vld [vmem:[%s1749 + $0x8] sm:$0xf]
  %v1753 = vld [vmem:[%s1749 + $0xc] sm:$0xf]
  %v1754 = vld [vmem:[%s1749 + $0x10] sm:$0xf]
  %v1755 = vld [vmem:[%s1749 + $0x14] sm:$0xf]
  %v1756 = vld [vmem:[%s1749 + $0x18] sm:$0xf]
  %v1757 = vld [vmem:[%s1749 + $0x1c] sm:$0xf]
  %v1758 = vld [vmem:[%s1749 + $0x20] sm:$0xf]
  %v1759 = vld [vmem:[%s1749 + $0x24] sm:$0xf]
  %v1760 = vld [vmem:[%s1749 + $0x28] sm:$0xf]
  %v1761 = vld [vmem:[%s1749 + $0x2c] sm:$0xf]
  %v1762 = vld [vmem:[%s1749 + $0x30] sm:$0xf]
  %v1763 = vld [vmem:[%s1749 + $0x34] sm:$0xf]
  %v1764 = vld [vmem:[%s1749 + $0x38] sm:$0xf]
  %v1765 = vld [vmem:[%s1749 + $0x3c] sm:$0xf]
  %v1766 = vrot.slane %v1404, 3
  %v1767 = vrot.slane %v1405, 2
  %v1768 = vsel %vm1413, %v1767, %v1766
  %v1769 = vrot.slane %v1406, 1
  %v1770 = vsel %vm1416, %v1769, %v1768
  %v1771 = vsel %vm1419, %v1407, %v1770
  %v1772 = vrot.slane %v1408, 7
  %v1773 = vsel %vm1422, %v1772, %v1771
  %v1774 = vrot.slane %v1409, 6
  %v1775 = vsel %vm1425, %v1774, %v1773
  %v1776 = vrot.slane %v1410, 5
  %v1777 = vsel %vm1428, %v1776, %v1775
  %v1778 = vrot.slane %v1411, 4
  %v1779 = vsel %vm1431, %v1778, %v1777
  %v1780 = vpack.c.b16 %v1779, %v1779
  %v1798 = vunpack.c.l.b16 %v1750
  %v1799 = vunpack.c.l.b16 %v1751
  %v1800 = vunpack.c.l.b16 %v1752
  %v1801 = vunpack.c.l.b16 %v1753
  %v1802 = vunpack.c.l.b16 %v1754
  %v1803 = vunpack.c.l.b16 %v1755
  %v1804 = vunpack.c.l.b16 %v1756
  %v1805 = vunpack.c.l.b16 %v1757
  %v1806 = vunpack.c.l.b16 %v1758
  %v1807 = vunpack.c.l.b16 %v1759
  %v1808 = vunpack.c.l.b16 %v1760
  %v1809 = vunpack.c.l.b16 %v1761
  %v1810 = vunpack.c.l.b16 %v1762
  %v1811 = vunpack.c.l.b16 %v1763
  %v1812 = vunpack.c.l.b16 %v1764
  %v1813 = vunpack.c.l.b16 %v1765
  %v1814 = vpack.c.b16 %v1799, %v1798
  %v1815 = vpack.c.b16 %v1801, %v1800
  %v1816 = vpack.c.b16 %v1803, %v1802
  %v1817 = vpack.c.b16 %v1805, %v1804
  %v1818 = vpack.c.b16 %v1807, %v1806
  %v1819 = vpack.c.b16 %v1809, %v1808
  %v1820 = vpack.c.b16 %v1811, %v1810
  %v1821 = vpack.c.b16 %v1813, %v1812
  %1830 = vmatprep.subr.bf16.mxu0 0
  %1831 = vmatpush1.bf16.msra.mxu0 %v1814
  %1832 = vmatprep.subr.bf16.mxu0 0
  %1833 = vmatpush1.bf16.msra.mxu0 %v1815
  %1834 = vmatprep.subr.bf16.mxu0 0
  %1835 = vmatpush1.bf16.msra.mxu0 %v1816
  %1836 = vmatprep.subr.bf16.mxu0 0
  %1837 = vmatpush1.bf16.msra.mxu0 %v1817
  %1838 = vmatprep.subr.bf16.mxu0 0
  %1839 = vmatpush1.bf16.msra.mxu0 %v1818
  %1840 = vmatprep.subr.bf16.mxu0 0
  %1841 = vmatpush1.bf16.msra.mxu0 %v1819
  %1842 = vmatprep.subr.bf16.mxu0 0
  %1843 = vmatpush1.bf16.msra.mxu0 %v1820
  %1844 = vmatprep.subr.bf16.mxu0 0
  %1845 = vmatpush1.bf16.msra.mxu0 %v1821
  %1846 = vmatprep.subr.bf16.mxu0 0
  %1847 = vmatpush1.bf16.msra.mxu0 0
  %1848 = vmatprep.subr.bf16.mxu0 0
  %1849 = vmatpush1.bf16.msra.mxu0 0
  %1850 = vmatprep.subr.bf16.mxu0 0
  %1851 = vmatpush1.bf16.msra.mxu0 0
  %1852 = vmatprep.subr.bf16.mxu0 0
  %1853 = vmatpush1.bf16.msra.mxu0 0
  %1854 = vmatprep.subr.bf16.mxu0 0
  %1855 = vmatpush1.bf16.msra.mxu0 0
  %1856 = vmatprep.subr.bf16.mxu0 0
  %1857 = vmatpush1.bf16.msra.mxu0 0
  %1858 = vmatprep.subr.bf16.mxu0 0
  %1859 = vmatpush1.bf16.msra.mxu0 0
  %1860 = vmatprep.subr.bf16.mxu0 0
  %1861 = vmatpush1.bf16.msra.mxu0 0
  %1862 = vmatprep.mubr.bf16.mxu0 0
  %1863 = vmatmul.mubr.bf16.gmra.mrb[0].mxu0 %v1780
  %v1864 = vpop.f32.mrb[0].mxu0
  %v1865 = vadd.f32 0.0, %v1864
  %v1866 = vpop.f32.mrb[0].mxu0
  %v1867 = vpop.f32.mrb[0].mxu0
  %v1868 = vpop.f32.mrb[0].mxu0
  %1869 = vdwg.mxu0
  %v1870 = vadd.f32 %v1748, %v1865
  %s1871 = scalar_lea.vmem %s5, 256
  %v1872 = vld [vmem:[%s1871] sm:$0xf]
  %v1873 = vld [vmem:[%s1871 + $0x4] sm:$0xf]
  %v1874 = vld [vmem:[%s1871 + $0x8] sm:$0xf]
  %v1875 = vld [vmem:[%s1871 + $0xc] sm:$0xf]
  %v1876 = vld [vmem:[%s1871 + $0x10] sm:$0xf]
  %v1877 = vld [vmem:[%s1871 + $0x14] sm:$0xf]
  %v1878 = vld [vmem:[%s1871 + $0x18] sm:$0xf]
  %v1879 = vld [vmem:[%s1871 + $0x1c] sm:$0xf]
  %v1880 = vld [vmem:[%s1871 + $0x20] sm:$0xf]
  %v1881 = vld [vmem:[%s1871 + $0x24] sm:$0xf]
  %v1882 = vld [vmem:[%s1871 + $0x28] sm:$0xf]
  %v1883 = vld [vmem:[%s1871 + $0x2c] sm:$0xf]
  %v1884 = vld [vmem:[%s1871 + $0x30] sm:$0xf]
  %v1885 = vld [vmem:[%s1871 + $0x34] sm:$0xf]
  %v1886 = vld [vmem:[%s1871 + $0x38] sm:$0xf]
  %v1887 = vld [vmem:[%s1871 + $0x3c] sm:$0xf]
  %v1888 = vrot.slane %v1404, 4
  %v1889 = vrot.slane %v1405, 3
  %v1890 = vsel %vm1413, %v1889, %v1888
  %v1891 = vrot.slane %v1406, 2
  %v1892 = vsel %vm1416, %v1891, %v1890
  %v1893 = vrot.slane %v1407, 1
  %v1894 = vsel %vm1419, %v1893, %v1892
  %v1895 = vsel %vm1422, %v1408, %v1894
  %v1896 = vrot.slane %v1409, 7
  %v1897 = vsel %vm1425, %v1896, %v1895
  %v1898 = vrot.slane %v1410, 6
  %v1899 = vsel %vm1428, %v1898, %v1897
  %v1900 = vrot.slane %v1411, 5
  %v1901 = vsel %vm1431, %v1900, %v1899
  %v1902 = vpack.c.b16 %v1901, %v1901
  %v1920 = vunpack.c.l.b16 %v1872
  %v1921 = vunpack.c.l.b16 %v1873
  %v1922 = vunpack.c.l.b16 %v1874
  %v1923 = vunpack.c.l.b16 %v1875
  %v1924 = vunpack.c.l.b16 %v1876
  %v1925 = vunpack.c.l.b16 %v1877
  %v1926 = vunpack.c.l.b16 %v1878
  %v1927 = vunpack.c.l.b16 %v1879
  %v1928 = vunpack.c.l.b16 %v1880
  %v1929 = vunpack.c.l.b16 %v1881
  %v1930 = vunpack.c.l.b16 %v1882
  %v1931 = vunpack.c.l.b16 %v1883
  %v1932 = vunpack.c.l.b16 %v1884
  %v1933 = vunpack.c.l.b16 %v1885
  %v1934 = vunpack.c.l.b16 %v1886
  %v1935 = vunpack.c.l.b16 %v1887
  %v1936 = vpack.c.b16 %v1921, %v1920
  %v1937 = vpack.c.b16 %v1923, %v1922
  %v1938 = vpack.c.b16 %v1925, %v1924
  %v1939 = vpack.c.b16 %v1927, %v1926
  %v1940 = vpack.c.b16 %v1929, %v1928
  %v1941 = vpack.c.b16 %v1931, %v1930
  %v1942 = vpack.c.b16 %v1933, %v1932
  %v1943 = vpack.c.b16 %v1935, %v1934
  %1952 = vmatprep.subr.bf16.mxu0 0
  %1953 = vmatpush1.bf16.msra.mxu0 %v1936
  %1954 = vmatprep.subr.bf16.mxu0 0
  %1955 = vmatpush1.bf16.msra.mxu0 %v1937
  %1956 = vmatprep.subr.bf16.mxu0 0
  %1957 = vmatpush1.bf16.msra.mxu0 %v1938
  %1958 = vmatprep.subr.bf16.mxu0 0
  %1959 = vmatpush1.bf16.msra.mxu0 %v1939
  %1960 = vmatprep.subr.bf16.mxu0 0
  %1961 = vmatpush1.bf16.msra.mxu0 %v1940
  %1962 = vmatprep.subr.bf16.mxu0 0
  %1963 = vmatpush1.bf16.msra.mxu0 %v1941
  %1964 = vmatprep.subr.bf16.mxu0 0
  %1965 = vmatpush1.bf16.msra.mxu0 %v1942
  %1966 = vmatprep.subr.bf16.mxu0 0
  %1967 = vmatpush1.bf16.msra.mxu0 %v1943
  %1968 = vmatprep.subr.bf16.mxu0 0
  %1969 = vmatpush1.bf16.msra.mxu0 0
  %1970 = vmatprep.subr.bf16.mxu0 0
  %1971 = vmatpush1.bf16.msra.mxu0 0
  %1972 = vmatprep.subr.bf16.mxu0 0
  %1973 = vmatpush1.bf16.msra.mxu0 0
  %1974 = vmatprep.subr.bf16.mxu0 0
  %1975 = vmatpush1.bf16.msra.mxu0 0
  %1976 = vmatprep.subr.bf16.mxu0 0
  %1977 = vmatpush1.bf16.msra.mxu0 0
  %1978 = vmatprep.subr.bf16.mxu0 0
  %1979 = vmatpush1.bf16.msra.mxu0 0
  %1980 = vmatprep.subr.bf16.mxu0 0
  %1981 = vmatpush1.bf16.msra.mxu0 0
  %1982 = vmatprep.subr.bf16.mxu0 0
  %1983 = vmatpush1.bf16.msra.mxu0 0
  %1984 = vmatprep.mubr.bf16.mxu0 0
  %1985 = vmatmul.mubr.bf16.gmra.mrb[0].mxu0 %v1902
  %v1986 = vpop.f32.mrb[0].mxu0
  %v1987 = vadd.f32 0.0, %v1986
  %v1988 = vpop.f32.mrb[0].mxu0
  %v1989 = vpop.f32.mrb[0].mxu0
  %v1990 = vpop.f32.mrb[0].mxu0
  %1991 = vdwg.mxu0
  %v1992 = vadd.f32 %v1870, %v1987
  %s1993 = scalar_lea.vmem %s5, 320
  %v1994 = vld [vmem:[%s1993] sm:$0xf]
  %v1995 = vld [vmem:[%s1993 + $0x4] sm:$0xf]
  %v1996 = vld [vmem:[%s1993 + $0x8] sm:$0xf]
  %v1997 = vld [vmem:[%s1993 + $0xc] sm:$0xf]
  %v1998 = vld [vmem:[%s1993 + $0x10] sm:$0xf]
  %v1999 = vld [vmem:[%s1993 + $0x14] sm:$0xf]
  %v2000 = vld [vmem:[%s1993 + $0x18] sm:$0xf]
  %v2001 = vld [vmem:[%s1993 + $0x1c] sm:$0xf]
  %v2002 = vld [vmem:[%s1993 + $0x20] sm:$0xf]
  %v2003 = vld [vmem:[%s1993 + $0x24] sm:$0xf]
  %v2004 = vld [vmem:[%s1993 + $0x28] sm:$0xf]
  %v2005 = vld [vmem:[%s1993 + $0x2c] sm:$0xf]
  %v2006 = vld [vmem:[%s1993 + $0x30] sm:$0xf]
  %v2007 = vld [vmem:[%s1993 + $0x34] sm:$0xf]
  %v2008 = vld [vmem:[%s1993 + $0x38] sm:$0xf]
  %v2009 = vld [vmem:[%s1993 + $0x3c] sm:$0xf]
  %v2010 = vrot.slane %v1404, 5
  %v2011 = vrot.slane %v1405, 4
  %v2012 = vsel %vm1413, %v2011, %v2010
  %v2013 = vrot.slane %v1406, 3
  %v2014 = vsel %vm1416, %v2013, %v2012
  %v2015 = vrot.slane %v1407, 2
  %v2016 = vsel %vm1419, %v2015, %v2014
  %v2017 = vrot.slane %v1408, 1
  %v2018 = vsel %vm1422, %v2017, %v2016
  %v2019 = vsel %vm1425, %v1409, %v2018
  %v2020 = vrot.slane %v1410, 7
  %v2021 = vsel %vm1428, %v2020, %v2019
  %v2022 = vrot.slane %v1411, 6
  %v2023 = vsel %vm1431, %v2022, %v2021
  %v2024 = vpack.c.b16 %v2023, %v2023
  %v2042 = vunpack.c.l.b16 %v1994
  %v2043 = vunpack.c.l.b16 %v1995
  %v2044 = vunpack.c.l.b16 %v1996
  %v2045 = vunpack.c.l.b16 %v1997
  %v2046 = vunpack.c.l.b16 %v1998
  %v2047 = vunpack.c.l.b16 %v1999
  %v2048 = vunpack.c.l.b16 %v2000
  %v2049 = vunpack.c.l.b16 %v2001
  %v2050 = vunpack.c.l.b16 %v2002
  %v2051 = vunpack.c.l.b16 %v2003
  %v2052 = vunpack.c.l.b16 %v2004
  %v2053 = vunpack.c.l.b16 %v2005
  %v2054 = vunpack.c.l.b16 %v2006
  %v2055 = vunpack.c.l.b16 %v2007
  %v2056 = vunpack.c.l.b16 %v2008
  %v2057 = vunpack.c.l.b16 %v2009
  %v2058 = vpack.c.b16 %v2043, %v2042
  %v2059 = vpack.c.b16 %v2045, %v2044
  %v2060 = vpack.c.b16 %v2047, %v2046
  %v2061 = vpack.c.b16 %v2049, %v2048
  %v2062 = vpack.c.b16 %v2051, %v2050
  %v2063 = vpack.c.b16 %v2053, %v2052
  %v2064 = vpack.c.b16 %v2055, %v2054
  %v2065 = vpack.c.b16 %v2057, %v2056
  %2074 = vmatprep.subr.bf16.mxu0 0
  %2075 = vmatpush1.bf16.msra.mxu0 %v2058
  %2076 = vmatprep.subr.bf16.mxu0 0
  %2077 = vmatpush1.bf16.msra.mxu0 %v2059
  %2078 = vmatprep.subr.bf16.mxu0 0
  %2079 = vmatpush1.bf16.msra.mxu0 %v2060
  %2080 = vmatprep.subr.bf16.mxu0 0
  %2081 = vmatpush1.bf16.msra.mxu0 %v2061
  %2082 = vmatprep.subr.bf16.mxu0 0
  %2083 = vmatpush1.bf16.msra.mxu0 %v2062
  %2084 = vmatprep.subr.bf16.mxu0 0
  %2085 = vmatpush1.bf16.msra.mxu0 %v2063
  %2086 = vmatprep.subr.bf16.mxu0 0
  %2087 = vmatpush1.bf16.msra.mxu0 %v2064
  %2088 = vmatprep.subr.bf16.mxu0 0
  %2089 = vmatpush1.bf16.msra.mxu0 %v2065
  %2090 = vmatprep.subr.bf16.mxu0 0
  %2091 = vmatpush1.bf16.msra.mxu0 0
  %2092 = vmatprep.subr.bf16.mxu0 0
  %2093 = vmatpush1.bf16.msra.mxu0 0
  %2094 = vmatprep.subr.bf16.mxu0 0
  %2095 = vmatpush1.bf16.msra.mxu0 0
  %2096 = vmatprep.subr.bf16.mxu0 0
  %2097 = vmatpush1.bf16.msra.mxu0 0
  %2098 = vmatprep.subr.bf16.mxu0 0
  %2099 = vmatpush1.bf16.msra.mxu0 0
  %2100 = vmatprep.subr.bf16.mxu0 0
  %2101 = vmatpush1.bf16.msra.mxu0 0
  %2102 = vmatprep.subr.bf16.mxu0 0
  %2103 = vmatpush1.bf16.msra.mxu0 0
  %2104 = vmatprep.subr.bf16.mxu0 0
  %2105 = vmatpush1.bf16.msra.mxu0 0
  %2106 = vmatprep.mubr.bf16.mxu0 0
  %2107 = vmatmul.mubr.bf16.gmra.mrb[0].mxu0 %v2024
  %v2108 = vpop.f32.mrb[0].mxu0
  %v2109 = vadd.f32 0.0, %v2108
  %v2110 = vpop.f32.mrb[0].mxu0
  %v2111 = vpop.f32.mrb[0].mxu0
  %v2112 = vpop.f32.mrb[0].mxu0
  %2113 = vdwg.mxu0
  %v2114 = vadd.f32 %v1992, %v2109
  %s2115 = scalar_lea.vmem %s5, 384
  %v2116 = vld [vmem:[%s2115] sm:$0xf]
  %v2117 = vld [vmem:[%s2115 + $0x4] sm:$0xf]
  %v2118 = vld [vmem:[%s2115 + $0x8] sm:$0xf]
  %v2119 = vld [vmem:[%s2115 + $0xc] sm:$0xf]
  %v2120 = vld [vmem:[%s2115 + $0x10] sm:$0xf]
  %v2121 = vld [vmem:[%s2115 + $0x14] sm:$0xf]
  %v2122 = vld [vmem:[%s2115 + $0x18] sm:$0xf]
  %v2123 = vld [vmem:[%s2115 + $0x1c] sm:$0xf]
  %v2124 = vld [vmem:[%s2115 + $0x20] sm:$0xf]
  %v2125 = vld [vmem:[%s2115 + $0x24] sm:$0xf]
  %v2126 = vld [vmem:[%s2115 + $0x28] sm:$0xf]
  %v2127 = vld [vmem:[%s2115 + $0x2c] sm:$0xf]
  %v2128 = vld [vmem:[%s2115 + $0x30] sm:$0xf]
  %v2129 = vld [vmem:[%s2115 + $0x34] sm:$0xf]
  %v2130 = vld [vmem:[%s2115 + $0x38] sm:$0xf]
  %v2131 = vld [vmem:[%s2115 + $0x3c] sm:$0xf]
  %v2132 = vrot.slane %v1404, 6
  %v2133 = vrot.slane %v1405, 5
  %v2134 = vsel %vm1413, %v2133, %v2132
  %v2135 = vrot.slane %v1406, 4
  %v2136 = vsel %vm1416, %v2135, %v2134
  %v2137 = vrot.slane %v1407, 3
  %v2138 = vsel %vm1419, %v2137, %v2136
  %v2139 = vrot.slane %v1408, 2
  %v2140 = vsel %vm1422, %v2139, %v2138
  %v2141 = vrot.slane %v1409, 1
  %v2142 = vsel %vm1425, %v2141, %v2140
  %v2143 = vsel %vm1428, %v1410, %v2142
  %v2144 = vrot.slane %v1411, 7
  %v2145 = vsel %vm1431, %v2144, %v2143
  %v2146 = vpack.c.b16 %v2145, %v2145
  %v2164 = vunpack.c.l.b16 %v2116
  %v2165 = vunpack.c.l.b16 %v2117
  %v2166 = vunpack.c.l.b16 %v2118
  %v2167 = vunpack.c.l.b16 %v2119
  %v2168 = vunpack.c.l.b16 %v2120
  %v2169 = vunpack.c.l.b16 %v2121
  %v2170 = vunpack.c.l.b16 %v2122
  %v2171 = vunpack.c.l.b16 %v2123
  %v2172 = vunpack.c.l.b16 %v2124
  %v2173 = vunpack.c.l.b16 %v2125
  %v2174 = vunpack.c.l.b16 %v2126
  %v2175 = vunpack.c.l.b16 %v2127
  %v2176 = vunpack.c.l.b16 %v2128
  %v2177 = vunpack.c.l.b16 %v2129
  %v2178 = vunpack.c.l.b16 %v2130
  %v2179 = vunpack.c.l.b16 %v2131
  %v2180 = vpack.c.b16 %v2165, %v2164
  %v2181 = vpack.c.b16 %v2167, %v2166
  %v2182 = vpack.c.b16 %v2169, %v2168
  %v2183 = vpack.c.b16 %v2171, %v2170
  %v2184 = vpack.c.b16 %v2173, %v2172
  %v2185 = vpack.c.b16 %v2175, %v2174
  %v2186 = vpack.c.b16 %v2177, %v2176
  %v2187 = vpack.c.b16 %v2179, %v2178
  %2196 = vmatprep.subr.bf16.mxu0 0
  %2197 = vmatpush1.bf16.msra.mxu0 %v2180
  %2198 = vmatprep.subr.bf16.mxu0 0
  %2199 = vmatpush1.bf16.msra.mxu0 %v2181
  %2200 = vmatprep.subr.bf16.mxu0 0
  %2201 = vmatpush1.bf16.msra.mxu0 %v2182
  %2202 = vmatprep.subr.bf16.mxu0 0
  %2203 = vmatpush1.bf16.msra.mxu0 %v2183
  %2204 = vmatprep.subr.bf16.mxu0 0
  %2205 = vmatpush1.bf16.msra.mxu0 %v2184
  %2206 = vmatprep.subr.bf16.mxu0 0
  %2207 = vmatpush1.bf16.msra.mxu0 %v2185
  %2208 = vmatprep.subr.bf16.mxu0 0
  %2209 = vmatpush1.bf16.msra.mxu0 %v2186
  %2210 = vmatprep.subr.bf16.mxu0 0
  %2211 = vmatpush1.bf16.msra.mxu0 %v2187
  %2212 = vmatprep.subr.bf16.mxu0 0
  %2213 = vmatpush1.bf16.msra.mxu0 0
  %2214 = vmatprep.subr.bf16.mxu0 0
  %2215 = vmatpush1.bf16.msra.mxu0 0
  %2216 = vmatprep.subr.bf16.mxu0 0
  %2217 = vmatpush1.bf16.msra.mxu0 0
  %2218 = vmatprep.subr.bf16.mxu0 0
  %2219 = vmatpush1.bf16.msra.mxu0 0
  %2220 = vmatprep.subr.bf16.mxu0 0
  %2221 = vmatpush1.bf16.msra.mxu0 0
  %2222 = vmatprep.subr.bf16.mxu0 0
  %2223 = vmatpush1.bf16.msra.mxu0 0
  %2224 = vmatprep.subr.bf16.mxu0 0
  %2225 = vmatpush1.bf16.msra.mxu0 0
  %2226 = vmatprep.subr.bf16.mxu0 0
  %2227 = vmatpush1.bf16.msra.mxu0 0
  %2228 = vmatprep.mubr.bf16.mxu0 0
  %2229 = vmatmul.mubr.bf16.gmra.mrb[0].mxu0 %v2146
  %v2230 = vpop.f32.mrb[0].mxu0
  %v2231 = vadd.f32 0.0, %v2230
  %v2232 = vpop.f32.mrb[0].mxu0
  %v2233 = vpop.f32.mrb[0].mxu0
  %v2234 = vpop.f32.mrb[0].mxu0
  %2235 = vdwg.mxu0
  %v2236 = vadd.f32 %v2114, %v2231
  %s2237 = scalar_lea.vmem %s5, 448
  %v2238 = vld [vmem:[%s2237] sm:$0xf]
  %v2239 = vld [vmem:[%s2237 + $0x4] sm:$0xf]
  %v2240 = vld [vmem:[%s2237 + $0x8] sm:$0xf]
  %v2241 = vld [vmem:[%s2237 + $0xc] sm:$0xf]
  %v2242 = vld [vmem:[%s2237 + $0x10] sm:$0xf]
  %v2243 = vld [vmem:[%s2237 + $0x14] sm:$0xf]
  %v2244 = vld [vmem:[%s2237 + $0x18] sm:$0xf]
  %v2245 = vld [vmem:[%s2237 + $0x1c] sm:$0xf]
  %v2246 = vld [vmem:[%s2237 + $0x20] sm:$0xf]
  %v2247 = vld [vmem:[%s2237 + $0x24] sm:$0xf]
  %v2248 = vld [vmem:[%s2237 + $0x28] sm:$0xf]
  %v2249 = vld [vmem:[%s2237 + $0x2c] sm:$0xf]
  %v2250 = vld [vmem:[%s2237 + $0x30] sm:$0xf]
  %v2251 = vld [vmem:[%s2237 + $0x34] sm:$0xf]
  %v2252 = vld [vmem:[%s2237 + $0x38] sm:$0xf]
  %v2253 = vld [vmem:[%s2237 + $0x3c] sm:$0xf]
  %v2254 = vrot.slane %v1404, 7
  %v2255 = vrot.slane %v1405, 6
  %v2256 = vsel %vm1413, %v2255, %v2254
  %v2257 = vrot.slane %v1406, 5
  %v2258 = vsel %vm1416, %v2257, %v2256
  %v2259 = vrot.slane %v1407, 4
  %v2260 = vsel %vm1419, %v2259, %v2258
  %v2261 = vrot.slane %v1408, 3
  %v2262 = vsel %vm1422, %v2261, %v2260
  %v2263 = vrot.slane %v1409, 2
  %v2264 = vsel %vm1425, %v2263, %v2262
  %v2265 = vrot.slane %v1410, 1
  %v2266 = vsel %vm1428, %v2265, %v2264
  %v2267 = vsel %vm1431, %v1411, %v2266
  %v2268 = vpack.c.b16 %v2267, %v2267
  %v2286 = vunpack.c.l.b16 %v2238
  %v2287 = vunpack.c.l.b16 %v2239
  %v2288 = vunpack.c.l.b16 %v2240
  %v2289 = vunpack.c.l.b16 %v2241
  %v2290 = vunpack.c.l.b16 %v2242
  %v2291 = vunpack.c.l.b16 %v2243
  %v2292 = vunpack.c.l.b16 %v2244
  %v2293 = vunpack.c.l.b16 %v2245
  %v2294 = vunpack.c.l.b16 %v2246
  %v2295 = vunpack.c.l.b16 %v2247
  %v2296 = vunpack.c.l.b16 %v2248
  %v2297 = vunpack.c.l.b16 %v2249
  %v2298 = vunpack.c.l.b16 %v2250
  %v2299 = vunpack.c.l.b16 %v2251
  %v2300 = vunpack.c.l.b16 %v2252
  %v2301 = vunpack.c.l.b16 %v2253
  %v2302 = vpack.c.b16 %v2287, %v2286
  %v2303 = vpack.c.b16 %v2289, %v2288
  %v2304 = vpack.c.b16 %v2291, %v2290
  %v2305 = vpack.c.b16 %v2293, %v2292
  %v2306 = vpack.c.b16 %v2295, %v2294
  %v2307 = vpack.c.b16 %v2297, %v2296
  %v2308 = vpack.c.b16 %v2299, %v2298
  %v2309 = vpack.c.b16 %v2301, %v2300
  %2318 = vmatprep.subr.bf16.mxu0 0
  %2319 = vmatpush1.bf16.msra.mxu0 %v2302
  %2320 = vmatprep.subr.bf16.mxu0 0
  %2321 = vmatpush1.bf16.msra.mxu0 %v2303
  %2322 = vmatprep.subr.bf16.mxu0 0
  %2323 = vmatpush1.bf16.msra.mxu0 %v2304
  %2324 = vmatprep.subr.bf16.mxu0 0
  %2325 = vmatpush1.bf16.msra.mxu0 %v2305
  %2326 = vmatprep.subr.bf16.mxu0 0
  %2327 = vmatpush1.bf16.msra.mxu0 %v2306
  %2328 = vmatprep.subr.bf16.mxu0 0
  %2329 = vmatpush1.bf16.msra.mxu0 %v2307
  %2330 = vmatprep.subr.bf16.mxu0 0
  %2331 = vmatpush1.bf16.msra.mxu0 %v2308
  %2332 = vmatprep.subr.bf16.mxu0 0
  %2333 = vmatpush1.bf16.msra.mxu0 %v2309
  %2334 = vmatprep.subr.bf16.mxu0 0
  %2335 = vmatpush1.bf16.msra.mxu0 0
  %2336 = vmatprep.subr.bf16.mxu0 0
  %2337 = vmatpush1.bf16.msra.mxu0 0
  %2338 = vmatprep.subr.bf16.mxu0 0
  %2339 = vmatpush1.bf16.msra.mxu0 0
  %2340 = vmatprep.subr.bf16.mxu0 0
  %2341 = vmatpush1.bf16.msra.mxu0 0
  %2342 = vmatprep.subr.bf16.mxu0 0
  %2343 = vmatpush1.bf16.msra.mxu0 0
  %2344 = vmatprep.subr.bf16.mxu0 0
  %2345 = vmatpush1.bf16.msra.mxu0 0
  %2346 = vmatprep.subr.bf16.mxu0 0
  %2347 = vmatpush1.bf16.msra.mxu0 0
  %2348 = vmatprep.subr.bf16.mxu0 0
  %2349 = vmatpush1.bf16.msra.mxu0 0
  %2350 = vmatprep.mubr.bf16.mxu0 0
  %2351 = vmatmul.mubr.bf16.gmra.mrb[0].mxu0 %v2268
  %v2352 = vpop.f32.mrb[0].mxu0
  %v2353 = vadd.f32 0.0, %v2352
  %v2354 = vpop.f32.mrb[0].mxu0
  %v2355 = vpop.f32.mrb[0].mxu0
  %v2356 = vpop.f32.mrb[0].mxu0
  %2357 = vdwg.mxu0
  %v2358 = vadd.f32 %v2236, %v2353
  %s2359 = scalar_lea.vmem %s5, 512
  %v2360 = vld [vmem:[%s2359] sm:$0xf]
  %v2361 = vld [vmem:[%s2359 + $0x4] sm:$0xf]
  %v2362 = vld [vmem:[%s2359 + $0x8] sm:$0xf]
  %v2363 = vld [vmem:[%s2359 + $0xc] sm:$0xf]
  %v2364 = vld [vmem:[%s2359 + $0x10] sm:$0xf]
  %v2365 = vld [vmem:[%s2359 + $0x14] sm:$0xf]
  %v2366 = vld [vmem:[%s2359 + $0x18] sm:$0xf]
  %v2367 = vld [vmem:[%s2359 + $0x1c] sm:$0xf]
  %v2368 = vld [vmem:[%s2359 + $0x20] sm:$0xf]
  %v2369 = vld [vmem:[%s2359 + $0x24] sm:$0xf]
  %v2370 = vld [vmem:[%s2359 + $0x28] sm:$0xf]
  %v2371 = vld [vmem:[%s2359 + $0x2c] sm:$0xf]
  %v2372 = vld [vmem:[%s2359 + $0x30] sm:$0xf]
  %v2373 = vld [vmem:[%s2359 + $0x34] sm:$0xf]
  %v2374 = vld [vmem:[%s2359 + $0x38] sm:$0xf]
  %v2375 = vld [vmem:[%s2359 + $0x3c] sm:$0xf]
  %v2376 = vunpack.c.h.b16 %v1355
  %v2377 = vunpack.c.h.b16 %v1356
  %v2378 = vunpack.c.h.b16 %v1357
  %v2379 = vunpack.c.h.b16 %v1358
  %v2380 = vunpack.c.h.b16 %v1359
  %v2381 = vunpack.c.h.b16 %v1360
  %v2382 = vunpack.c.h.b16 %v1361
  %v2383 = vunpack.c.h.b16 %v1362
  %v2384 = vrot.slane %v2377, 7
  %v2385 = vsel %vm1413, %v2384, %v2376
  %v2386 = vrot.slane %v2378, 6
  %v2387 = vsel %vm1416, %v2386, %v2385
  %v2388 = vrot.slane %v2379, 5
  %v2389 = vsel %vm1419, %v2388, %v2387
  %v2390 = vrot.slane %v2380, 4
  %v2391 = vsel %vm1422, %v2390, %v2389
  %v2392 = vrot.slane %v2381, 3
  %v2393 = vsel %vm1425, %v2392, %v2391
  %v2394 = vrot.slane %v2382, 2
  %v2395 = vsel %vm1428, %v2394, %v2393
  %v2396 = vrot.slane %v2383, 1
  %v2397 = vsel %vm1431, %v2396, %v2395
  %v2398 = vpack.c.b16 %v2397, %v2397
  %v2416 = vunpack.c.l.b16 %v2360
  %v2417 = vunpack.c.l.b16 %v2361
  %v2418 = vunpack.c.l.b16 %v2362
  %v2419 = vunpack.c.l.b16 %v2363
  %v2420 = vunpack.c.l.b16 %v2364
  %v2421 = vunpack.c.l.b16 %v2365
  %v2422 = vunpack.c.l.b16 %v2366
  %v2423 = vunpack.c.l.b16 %v2367
  %v2424 = vunpack.c.l.b16 %v2368
  %v2425 = vunpack.c.l.b16 %v2369
  %v2426 = vunpack.c.l.b16 %v2370
  %v2427 = vunpack.c.l.b16 %v2371
  %v2428 = vunpack.c.l.b16 %v2372
  %v2429 = vunpack.c.l.b16 %v2373
  %v2430 = vunpack.c.l.b16 %v2374
  %v2431 = vunpack.c.l.b16 %v2375
  %v2432 = vpack.c.b16 %v2417, %v2416
  %v2433 = vpack.c.b16 %v2419, %v2418
  %v2434 = vpack.c.b16 %v2421, %v2420
  %v2435 = vpack.c.b16 %v2423, %v2422
  %v2436 = vpack.c.b16 %v2425, %v2424
  %v2437 = vpack.c.b16 %v2427, %v2426
  %v2438 = vpack.c.b16 %v2429, %v2428
  %v2439 = vpack.c.b16 %v2431, %v2430
  %2448 = vmatprep.subr.bf16.mxu0 0
  %2449 = vmatpush1.bf16.msra.mxu0 %v2432
  %2450 = vmatprep.subr.bf16.mxu0 0
  %2451 = vmatpush1.bf16.msra.mxu0 %v2433
  %2452 = vmatprep.subr.bf16.mxu0 0
  %2453 = vmatpush1.bf16.msra.mxu0 %v2434
  %2454 = vmatprep.subr.bf16.mxu0 0
  %2455 = vmatpush1.bf16.msra.mxu0 %v2435
  %2456 = vmatprep.subr.bf16.mxu0 0
  %2457 = vmatpush1.bf16.msra.mxu0 %v2436
  %2458 = vmatprep.subr.bf16.mxu0 0
  %2459 = vmatpush1.bf16.msra.mxu0 %v2437
  %2460 = vmatprep.subr.bf16.mxu0 0
  %2461 = vmatpush1.bf16.msra.mxu0 %v2438
  %2462 = vmatprep.subr.bf16.mxu0 0
  %2463 = vmatpush1.bf16.msra.mxu0 %v2439
  %2464 = vmatprep.subr.bf16.mxu0 0
  %2465 = vmatpush1.bf16.msra.mxu0 0
  %2466 = vmatprep.subr.bf16.mxu0 0
  %2467 = vmatpush1.bf16.msra.mxu0 0
  %2468 = vmatprep.subr.bf16.mxu0 0
  %2469 = vmatpush1.bf16.msra.mxu0 0
  %2470 = vmatprep.subr.bf16.mxu0 0
  %2471 = vmatpush1.bf16.msra.mxu0 0
  %2472 = vmatprep.subr.bf16.mxu0 0
  %2473 = vmatpush1.bf16.msra.mxu0 0
  %2474 = vmatprep.subr.bf16.mxu0 0
  %2475 = vmatpush1.bf16.msra.mxu0 0
  %2476 = vmatprep.subr.bf16.mxu0 0
  %2477 = vmatpush1.bf16.msra.mxu0 0
  %2478 = vmatprep.subr.bf16.mxu0 0
  %2479 = vmatpush1.bf16.msra.mxu0 0
  %2480 = vmatprep.mubr.bf16.mxu0 0
  %2481 = vmatmul.mubr.bf16.gmra.mrb[0].mxu0 %v2398
  %v2482 = vpop.f32.mrb[0].mxu0
  %v2483 = vadd.f32 0.0, %v2482
  %v2484 = vpop.f32.mrb[0].mxu0
  %v2485 = vpop.f32.mrb[0].mxu0
  %v2486 = vpop.f32.mrb[0].mxu0
  %2487 = vdwg.mxu0
  %v2488 = vadd.f32 %v2358, %v2483
  %s2489 = scalar_lea.vmem %s5, 576
  %v2490 = vld [vmem:[%s2489] sm:$0xf]
  %v2491 = vld [vmem:[%s2489 + $0x4] sm:$0xf]
  %v2492 = vld [vmem:[%s2489 + $0x8] sm:$0xf]
  %v2493 = vld [vmem:[%s2489 + $0xc] sm:$0xf]
  %v2494 = vld [vmem:[%s2489 + $0x10] sm:$0xf]
  %v2495 = vld [vmem:[%s2489 + $0x14] sm:$0xf]
  %v2496 = vld [vmem:[%s2489 + $0x18] sm:$0xf]
  %v2497 = vld [vmem:[%s2489 + $0x1c] sm:$0xf]
  %v2498 = vld [vmem:[%s2489 + $0x20] sm:$0xf]
  %v2499 = vld [vmem:[%s2489 + $0x24] sm:$0xf]
  %v2500 = vld [vmem:[%s2489 + $0x28] sm:$0xf]
  %v2501 = vld [vmem:[%s2489 + $0x2c] sm:$0xf]
  %v2502 = vld [vmem:[%s2489 + $0x30] sm:$0xf]
  %v2503 = vld [vmem:[%s2489 + $0x34] sm:$0xf]
  %v2504 = vld [vmem:[%s2489 + $0x38] sm:$0xf]
  %v2505 = vld [vmem:[%s2489 + $0x3c] sm:$0xf]
  %v2506 = vrot.slane %v2376, 1
  %v2507 = vsel %vm1413, %v2377, %v2506
  %v2508 = vrot.slane %v2378, 7
  %v2509 = vsel %vm1416, %v2508, %v2507
  %v2510 = vrot.slane %v2379, 6
  %v2511 = vsel %vm1419, %v2510, %v2509
  %v2512 = vrot.slane %v2380, 5
  %v2513 = vsel %vm1422, %v2512, %v2511
  %v2514 = vrot.slane %v2381, 4
  %v2515 = vsel %vm1425, %v2514, %v2513
  %v2516 = vrot.slane %v2382, 3
  %v2517 = vsel %vm1428, %v2516, %v2515
  %v2518 = vrot.slane %v2383, 2
  %v2519 = vsel %vm1431, %v2518, %v2517
  %v2520 = vpack.c.b16 %v2519, %v2519
  %v2538 = vunpack.c.l.b16 %v2490
  %v2539 = vunpack.c.l.b16 %v2491
  %v2540 = vunpack.c.l.b16 %v2492
  %v2541 = vunpack.c.l.b16 %v2493
  %v2542 = vunpack.c.l.b16 %v2494
  %v2543 = vunpack.c.l.b16 %v2495
  %v2544 = vunpack.c.l.b16 %v2496
  %v2545 = vunpack.c.l.b16 %v2497
  %v2546 = vunpack.c.l.b16 %v2498
  %v2547 = vunpack.c.l.b16 %v2499
  %v2548 = vunpack.c.l.b16 %v2500
  %v2549 = vunpack.c.l.b16 %v2501
  %v2550 = vunpack.c.l.b16 %v2502
  %v2551 = vunpack.c.l.b16 %v2503
  %v2552 = vunpack.c.l.b16 %v2504
  %v2553 = vunpack.c.l.b16 %v2505
  %v2554 = vpack.c.b16 %v2539, %v2538
  %v2555 = vpack.c.b16 %v2541, %v2540
  %v2556 = vpack.c.b16 %v2543, %v2542
  %v2557 = vpack.c.b16 %v2545, %v2544
  %v2558 = vpack.c.b16 %v2547, %v2546
  %v2559 = vpack.c.b16 %v2549, %v2548
  %v2560 = vpack.c.b16 %v2551, %v2550
  %v2561 = vpack.c.b16 %v2553, %v2552
  %2570 = vmatprep.subr.bf16.mxu0 0
  %2571 = vmatpush1.bf16.msra.mxu0 %v2554
  %2572 = vmatprep.subr.bf16.mxu0 0
  %2573 = vmatpush1.bf16.msra.mxu0 %v2555
  %2574 = vmatprep.subr.bf16.mxu0 0
  %2575 = vmatpush1.bf16.msra.mxu0 %v2556
  %2576 = vmatprep.subr.bf16.mxu0 0
  %2577 = vmatpush1.bf16.msra.mxu0 %v2557
  %2578 = vmatprep.subr.bf16.mxu0 0
  %2579 = vmatpush1.bf16.msra.mxu0 %v2558
  %2580 = vmatprep.subr.bf16.mxu0 0
  %2581 = vmatpush1.bf16.msra.mxu0 %v2559
  %2582 = vmatprep.subr.bf16.mxu0 0
  %2583 = vmatpush1.bf16.msra.mxu0 %v2560
  %2584 = vmatprep.subr.bf16.mxu0 0
  %2585 = vmatpush1.bf16.msra.mxu0 %v2561
  %2586 = vmatprep.subr.bf16.mxu0 0
  %2587 = vmatpush1.bf16.msra.mxu0 0
  %2588 = vmatprep.subr.bf16.mxu0 0
  %2589 = vmatpush1.bf16.msra.mxu0 0
  %2590 = vmatprep.subr.bf16.mxu0 0
  %2591 = vmatpush1.bf16.msra.mxu0 0
  %2592 = vmatprep.subr.bf16.mxu0 0
  %2593 = vmatpush1.bf16.msra.mxu0 0
  %2594 = vmatprep.subr.bf16.mxu0 0
  %2595 = vmatpush1.bf16.msra.mxu0 0
  %2596 = vmatprep.subr.bf16.mxu0 0
  %2597 = vmatpush1.bf16.msra.mxu0 0
  %2598 = vmatprep.subr.bf16.mxu0 0
  %2599 = vmatpush1.bf16.msra.mxu0 0
  %2600 = vmatprep.subr.bf16.mxu0 0
  %2601 = vmatpush1.bf16.msra.mxu0 0
  %2602 = vmatprep.mubr.bf16.mxu0 0
  %2603 = vmatmul.mubr.bf16.gmra.mrb[0].mxu0 %v2520
  %v2604 = vpop.f32.mrb[0].mxu0
  %v2605 = vadd.f32 0.0, %v2604
  %v2606 = vpop.f32.mrb[0].mxu0
  %v2607 = vpop.f32.mrb[0].mxu0
  %v2608 = vpop.f32.mrb[0].mxu0
  %2609 = vdwg.mxu0
  %v2610 = vadd.f32 %v2488, %v2605
  %s2611 = scalar_lea.vmem %s5, 640
  %v2612 = vld [vmem:[%s2611] sm:$0xf]
  %v2613 = vld [vmem:[%s2611 + $0x4] sm:$0xf]
  %v2614 = vld [vmem:[%s2611 + $0x8] sm:$0xf]
  %v2615 = vld [vmem:[%s2611 + $0xc] sm:$0xf]
  %v2616 = vld [vmem:[%s2611 + $0x10] sm:$0xf]
  %v2617 = vld [vmem:[%s2611 + $0x14] sm:$0xf]
  %v2618 = vld [vmem:[%s2611 + $0x18] sm:$0xf]
  %v2619 = vld [vmem:[%s2611 + $0x1c] sm:$0xf]
  %v2620 = vld [vmem:[%s2611 + $0x20] sm:$0xf]
  %v2621 = vld [vmem:[%s2611 + $0x24] sm:$0xf]
  %v2622 = vld [vmem:[%s2611 + $0x28] sm:$0xf]
  %v2623 = vld [vmem:[%s2611 + $0x2c] sm:$0xf]
  %v2624 = vld [vmem:[%s2611 + $0x30] sm:$0xf]
  %v2625 = vld [vmem:[%s2611 + $0x34] sm:$0xf]
  %v2626 = vld [vmem:[%s2611 + $0x38] sm:$0xf]
  %v2627 = vld [vmem:[%s2611 + $0x3c] sm:$0xf]
  %v2628 = vrot.slane %v2376, 2
  %v2629 = vrot.slane %v2377, 1
  %v2630 = vsel %vm1413, %v2629, %v2628
  %v2631 = vsel %vm1416, %v2378, %v2630
  %v2632 = vrot.slane %v2379, 7
  %v2633 = vsel %vm1419, %v2632, %v2631
  %v2634 = vrot.slane %v2380, 6
  %v2635 = vsel %vm1422, %v2634, %v2633
  %v2636 = vrot.slane %v2381, 5
  %v2637 = vsel %vm1425, %v2636, %v2635
  %v2638 = vrot.slane %v2382, 4
  %v2639 = vsel %vm1428, %v2638, %v2637
  %v2640 = vrot.slane %v2383, 3
  %v2641 = vsel %vm1431, %v2640, %v2639
  %v2642 = vpack.c.b16 %v2641, %v2641
  %v2660 = vunpack.c.l.b16 %v2612
  %v2661 = vunpack.c.l.b16 %v2613
  %v2662 = vunpack.c.l.b16 %v2614
  %v2663 = vunpack.c.l.b16 %v2615
  %v2664 = vunpack.c.l.b16 %v2616
  %v2665 = vunpack.c.l.b16 %v2617
  %v2666 = vunpack.c.l.b16 %v2618
  %v2667 = vunpack.c.l.b16 %v2619
  %v2668 = vunpack.c.l.b16 %v2620
  %v2669 = vunpack.c.l.b16 %v2621
  %v2670 = vunpack.c.l.b16 %v2622
  %v2671 = vunpack.c.l.b16 %v2623
  %v2672 = vunpack.c.l.b16 %v2624
  %v2673 = vunpack.c.l.b16 %v2625
  %v2674 = vunpack.c.l.b16 %v2626
  %v2675 = vunpack.c.l.b16 %v2627
  %v2676 = vpack.c.b16 %v2661, %v2660
  %v2677 = vpack.c.b16 %v2663, %v2662
  %v2678 = vpack.c.b16 %v2665, %v2664
  %v2679 = vpack.c.b16 %v2667, %v2666
  %v2680 = vpack.c.b16 %v2669, %v2668
  %v2681 = vpack.c.b16 %v2671, %v2670
  %v2682 = vpack.c.b16 %v2673, %v2672
  %v2683 = vpack.c.b16 %v2675, %v2674
  %2692 = vmatprep.subr.bf16.mxu0 0
  %2693 = vmatpush1.bf16.msra.mxu0 %v2676
  %2694 = vmatprep.subr.bf16.mxu0 0
  %2695 = vmatpush1.bf16.msra.mxu0 %v2677
  %2696 = vmatprep.subr.bf16.mxu0 0
  %2697 = vmatpush1.bf16.msra.mxu0 %v2678
  %2698 = vmatprep.subr.bf16.mxu0 0
  %2699 = vmatpush1.bf16.msra.mxu0 %v2679
  %2700 = vmatprep.subr.bf16.mxu0 0
  %2701 = vmatpush1.bf16.msra.mxu0 %v2680
  %2702 = vmatprep.subr.bf16.mxu0 0
  %2703 = vmatpush1.bf16.msra.mxu0 %v2681
  %2704 = vmatprep.subr.bf16.mxu0 0
  %2705 = vmatpush1.bf16.msra.mxu0 %v2682
  %2706 = vmatprep.subr.bf16.mxu0 0
  %2707 = vmatpush1.bf16.msra.mxu0 %v2683
  %2708 = vmatprep.subr.bf16.mxu0 0
  %2709 = vmatpush1.bf16.msra.mxu0 0
  %2710 = vmatprep.subr.bf16.mxu0 0
  %2711 = vmatpush1.bf16.msra.mxu0 0
  %2712 = vmatprep.subr.bf16.mxu0 0
  %2713 = vmatpush1.bf16.msra.mxu0 0
  %2714 = vmatprep.subr.bf16.mxu0 0
  %2715 = vmatpush1.bf16.msra.mxu0 0
  %2716 = vmatprep.subr.bf16.mxu0 0
  %2717 = vmatpush1.bf16.msra.mxu0 0
  %2718 = vmatprep.subr.bf16.mxu0 0
  %2719 = vmatpush1.bf16.msra.mxu0 0
  %2720 = vmatprep.subr.bf16.mxu0 0
  %2721 = vmatpush1.bf16.msra.mxu0 0
  %2722 = vmatprep.subr.bf16.mxu0 0
  %2723 = vmatpush1.bf16.msra.mxu0 0
  %2724 = vmatprep.mubr.bf16.mxu0 0
  %2725 = vmatmul.mubr.bf16.gmra.mrb[0].mxu0 %v2642
  %v2726 = vpop.f32.mrb[0].mxu0
  %v2727 = vadd.f32 0.0, %v2726
  %v2728 = vpop.f32.mrb[0].mxu0
  %v2729 = vpop.f32.mrb[0].mxu0
  %v2730 = vpop.f32.mrb[0].mxu0
  %2731 = vdwg.mxu0
  %v2732 = vadd.f32 %v2610, %v2727
  %s2733 = scalar_lea.vmem %s5, 704
  %v2734 = vld [vmem:[%s2733] sm:$0xf]
  %v2735 = vld [vmem:[%s2733 + $0x4] sm:$0xf]
  %v2736 = vld [vmem:[%s2733 + $0x8] sm:$0xf]
  %v2737 = vld [vmem:[%s2733 + $0xc] sm:$0xf]
  %v2738 = vld [vmem:[%s2733 + $0x10] sm:$0xf]
  %v2739 = vld [vmem:[%s2733 + $0x14] sm:$0xf]
  %v2740 = vld [vmem:[%s2733 + $0x18] sm:$0xf]
  %v2741 = vld [vmem:[%s2733 + $0x1c] sm:$0xf]
  %v2742 = vld [vmem:[%s2733 + $0x20] sm:$0xf]
  %v2743 = vld [vmem:[%s2733 + $0x24] sm:$0xf]
  %v2744 = vld [vmem:[%s2733 + $0x28] sm:$0xf]
  %v2745 = vld [vmem:[%s2733 + $0x2c] sm:$0xf]
  %v2746 = vld [vmem:[%s2733 + $0x30] sm:$0xf]
  %v2747 = vld [vmem:[%s2733 + $0x34] sm:$0xf]
  %v2748 = vld [vmem:[%s2733 + $0x38] sm:$0xf]
  %v2749 = vld [vmem:[%s2733 + $0x3c] sm:$0xf]
  %v2750 = vrot.slane %v2376, 3
  %v2751 = vrot.slane %v2377, 2
  %v2752 = vsel %vm1413, %v2751, %v2750
  %v2753 = vrot.slane %v2378, 1
  %v2754 = vsel %vm1416, %v2753, %v2752
  %v2755 = vsel %vm1419, %v2379, %v2754
  %v2756 = vrot.slane %v2380, 7
  %v2757 = vsel %vm1422, %v2756, %v2755
  %v2758 = vrot.slane %v2381, 6
  %v2759 = vsel %vm1425, %v2758, %v2757
  %v2760 = vrot.slane %v2382, 5
  %v2761 = vsel %vm1428, %v2760, %v2759
  %v2762 = vrot.slane %v2383, 4
  %v2763 = vsel %vm1431, %v2762, %v2761
  %v2764 = vpack.c.b16 %v2763, %v2763
  %v2782 = vunpack.c.l.b16 %v2734
  %v2783 = vunpack.c.l.b16 %v2735
  %v2784 = vunpack.c.l.b16 %v2736
  %v2785 = vunpack.c.l.b16 %v2737
  %v2786 = vunpack.c.l.b16 %v2738
  %v2787 = vunpack.c.l.b16 %v2739
  %v2788 = vunpack.c.l.b16 %v2740
  %v2789 = vunpack.c.l.b16 %v2741
  %v2790 = vunpack.c.l.b16 %v2742
  %v2791 = vunpack.c.l.b16 %v2743
  %v2792 = vunpack.c.l.b16 %v2744
  %v2793 = vunpack.c.l.b16 %v2745
  %v2794 = vunpack.c.l.b16 %v2746
  %v2795 = vunpack.c.l.b16 %v2747
  %v2796 = vunpack.c.l.b16 %v2748
  %v2797 = vunpack.c.l.b16 %v2749
  %v2798 = vpack.c.b16 %v2783, %v2782
  %v2799 = vpack.c.b16 %v2785, %v2784
  %v2800 = vpack.c.b16 %v2787, %v2786
  %v2801 = vpack.c.b16 %v2789, %v2788
  %v2802 = vpack.c.b16 %v2791, %v2790
  %v2803 = vpack.c.b16 %v2793, %v2792
  %v2804 = vpack.c.b16 %v2795, %v2794
  %v2805 = vpack.c.b16 %v2797, %v2796
  %2814 = vmatprep.subr.bf16.mxu0 0
  %2815 = vmatpush1.bf16.msra.mxu0 %v2798
  %2816 = vmatprep.subr.bf16.mxu0 0
  %2817 = vmatpush1.bf16.msra.mxu0 %v2799
  %2818 = vmatprep.subr.bf16.mxu0 0
  %2819 = vmatpush1.bf16.msra.mxu0 %v2800
  %2820 = vmatprep.subr.bf16.mxu0 0
  %2821 = vmatpush1.bf16.msra.mxu0 %v2801
  %2822 = vmatprep.subr.bf16.mxu0 0
  %2823 = vmatpush1.bf16.msra.mxu0 %v2802
  %2824 = vmatprep.subr.bf16.mxu0 0
  %2825 = vmatpush1.bf16.msra.mxu0 %v2803
  %2826 = vmatprep.subr.bf16.mxu0 0
  %2827 = vmatpush1.bf16.msra.mxu0 %v2804
  %2828 = vmatprep.subr.bf16.mxu0 0
  %2829 = vmatpush1.bf16.msra.mxu0 %v2805
  %2830 = vmatprep.subr.bf16.mxu0 0
  %2831 = vmatpush1.bf16.msra.mxu0 0
  %2832 = vmatprep.subr.bf16.mxu0 0
  %2833 = vmatpush1.bf16.msra.mxu0 0
  %2834 = vmatprep.subr.bf16.mxu0 0
  %2835 = vmatpush1.bf16.msra.mxu0 0
  %2836 = vmatprep.subr.bf16.mxu0 0
  %2837 = vmatpush1.bf16.msra.mxu0 0
  %2838 = vmatprep.subr.bf16.mxu0 0
  %2839 = vmatpush1.bf16.msra.mxu0 0
  %2840 = vmatprep.subr.bf16.mxu0 0
  %2841 = vmatpush1.bf16.msra.mxu0 0
  %2842 = vmatprep.subr.bf16.mxu0 0
  %2843 = vmatpush1.bf16.msra.mxu0 0
  %2844 = vmatprep.subr.bf16.mxu0 0
  %2845 = vmatpush1.bf16.msra.mxu0 0
  %2846 = vmatprep.mubr.bf16.mxu0 0
  %2847 = vmatmul.mubr.bf16.gmra.mrb[0].mxu0 %v2764
  %v2848 = vpop.f32.mrb[0].mxu0
  %v2849 = vadd.f32 0.0, %v2848
  %v2850 = vpop.f32.mrb[0].mxu0
  %v2851 = vpop.f32.mrb[0].mxu0
  %v2852 = vpop.f32.mrb[0].mxu0
  %2853 = vdwg.mxu0
  %v2854 = vadd.f32 %v2732, %v2849
  %s2855 = scalar_lea.vmem %s5, 768
  %v2856 = vld [vmem:[%s2855] sm:$0xf]
  %v2857 = vld [vmem:[%s2855 + $0x4] sm:$0xf]
  %v2858 = vld [vmem:[%s2855 + $0x8] sm:$0xf]
  %v2859 = vld [vmem:[%s2855 + $0xc] sm:$0xf]
  %v2860 = vld [vmem:[%s2855 + $0x10] sm:$0xf]
  %v2861 = vld [vmem:[%s2855 + $0x14] sm:$0xf]
  %v2862 = vld [vmem:[%s2855 + $0x18] sm:$0xf]
  %v2863 = vld [vmem:[%s2855 + $0x1c] sm:$0xf]
  %v2864 = vld [vmem:[%s2855 + $0x20] sm:$0xf]
  %v2865 = vld [vmem:[%s2855 + $0x24] sm:$0xf]
  %v2866 = vld [vmem:[%s2855 + $0x28] sm:$0xf]
  %v2867 = vld [vmem:[%s2855 + $0x2c] sm:$0xf]
  %v2868 = vld [vmem:[%s2855 + $0x30] sm:$0xf]
  %v2869 = vld [vmem:[%s2855 + $0x34] sm:$0xf]
  %v2870 = vld [vmem:[%s2855 + $0x38] sm:$0xf]
  %v2871 = vld [vmem:[%s2855 + $0x3c] sm:$0xf]
  %v2872 = vrot.slane %v2376, 4
  %v2873 = vrot.slane %v2377, 3
  %v2874 = vsel %vm1413, %v2873, %v2872
  %v2875 = vrot.slane %v2378, 2
  %v2876 = vsel %vm1416, %v2875, %v2874
  %v2877 = vrot.slane %v2379, 1
  %v2878 = vsel %vm1419, %v2877, %v2876
  %v2879 = vsel %vm1422, %v2380, %v2878
  %v2880 = vrot.slane %v2381, 7
  %v2881 = vsel %vm1425, %v2880, %v2879
  %v2882 = vrot.slane %v2382, 6
  %v2883 = vsel %vm1428, %v2882, %v2881
  %v2884 = vrot.slane %v2383, 5
  %v2885 = vsel %vm1431, %v2884, %v2883
  %v2886 = vpack.c.b16 %v2885, %v2885
  %v2904 = vunpack.c.l.b16 %v2856
  %v2905 = vunpack.c.l.b16 %v2857
  %v2906 = vunpack.c.l.b16 %v2858
  %v2907 = vunpack.c.l.b16 %v2859
  %v2908 = vunpack.c.l.b16 %v2860
  %v2909 = vunpack.c.l.b16 %v2861
  %v2910 = vunpack.c.l.b16 %v2862
  %v2911 = vunpack.c.l.b16 %v2863
  %v2912 = vunpack.c.l.b16 %v2864
  %v2913 = vunpack.c.l.b16 %v2865
  %v2914 = vunpack.c.l.b16 %v2866
  %v2915 = vunpack.c.l.b16 %v2867
  %v2916 = vunpack.c.l.b16 %v2868
  %v2917 = vunpack.c.l.b16 %v2869
  %v2918 = vunpack.c.l.b16 %v2870
  %v2919 = vunpack.c.l.b16 %v2871
  %v2920 = vpack.c.b16 %v2905, %v2904
  %v2921 = vpack.c.b16 %v2907, %v2906
  %v2922 = vpack.c.b16 %v2909, %v2908
  %v2923 = vpack.c.b16 %v2911, %v2910
  %v2924 = vpack.c.b16 %v2913, %v2912
  %v2925 = vpack.c.b16 %v2915, %v2914
  %v2926 = vpack.c.b16 %v2917, %v2916
  %v2927 = vpack.c.b16 %v2919, %v2918
  %2936 = vmatprep.subr.bf16.mxu0 0
  %2937 = vmatpush1.bf16.msra.mxu0 %v2920
  %2938 = vmatprep.subr.bf16.mxu0 0
  %2939 = vmatpush1.bf16.msra.mxu0 %v2921
  %2940 = vmatprep.subr.bf16.mxu0 0
  %2941 = vmatpush1.bf16.msra.mxu0 %v2922
  %2942 = vmatprep.subr.bf16.mxu0 0
  %2943 = vmatpush1.bf16.msra.mxu0 %v2923
  %2944 = vmatprep.subr.bf16.mxu0 0
  %2945 = vmatpush1.bf16.msra.mxu0 %v2924
  %2946 = vmatprep.subr.bf16.mxu0 0
  %2947 = vmatpush1.bf16.msra.mxu0 %v2925
  %2948 = vmatprep.subr.bf16.mxu0 0
  %2949 = vmatpush1.bf16.msra.mxu0 %v2926
  %2950 = vmatprep.subr.bf16.mxu0 0
  %2951 = vmatpush1.bf16.msra.mxu0 %v2927
  %2952 = vmatprep.subr.bf16.mxu0 0
  %2953 = vmatpush1.bf16.msra.mxu0 0
  %2954 = vmatprep.subr.bf16.mxu0 0
  %2955 = vmatpush1.bf16.msra.mxu0 0
  %2956 = vmatprep.subr.bf16.mxu0 0
  %2957 = vmatpush1.bf16.msra.mxu0 0
  %2958 = vmatprep.subr.bf16.mxu0 0
  %2959 = vmatpush1.bf16.msra.mxu0 0
  %2960 = vmatprep.subr.bf16.mxu0 0
  %2961 = vmatpush1.bf16.msra.mxu0 0
  %2962 = vmatprep.subr.bf16.mxu0 0
  %2963 = vmatpush1.bf16.msra.mxu0 0
  %2964 = vmatprep.subr.bf16.mxu0 0
  %2965 = vmatpush1.bf16.msra.mxu0 0
  %2966 = vmatprep.subr.bf16.mxu0 0
  %2967 = vmatpush1.bf16.msra.mxu0 0
  %2968 = vmatprep.mubr.bf16.mxu0 0
  %2969 = vmatmul.mubr.bf16.gmra.mrb[0].mxu0 %v2886
  %v2970 = vpop.f32.mrb[0].mxu0
  %v2971 = vadd.f32 0.0, %v2970
  %v2972 = vpop.f32.mrb[0].mxu0
  %v2973 = vpop.f32.mrb[0].mxu0
  %v2974 = vpop.f32.mrb[0].mxu0
  %2975 = vdwg.mxu0
  %v2976 = vadd.f32 %v2854, %v2971
  %s2977 = scalar_lea.vmem %s5, 832
  %v2978 = vld [vmem:[%s2977] sm:$0xf]
  %v2979 = vld [vmem:[%s2977 + $0x4] sm:$0xf]
  %v2980 = vld [vmem:[%s2977 + $0x8] sm:$0xf]
  %v2981 = vld [vmem:[%s2977 + $0xc] sm:$0xf]
  %v2982 = vld [vmem:[%s2977 + $0x10] sm:$0xf]
  %v2983 = vld [vmem:[%s2977 + $0x14] sm:$0xf]
  %v2984 = vld [vmem:[%s2977 + $0x18] sm:$0xf]
  %v2985 = vld [vmem:[%s2977 + $0x1c] sm:$0xf]
  %v2986 = vld [vmem:[%s2977 + $0x20] sm:$0xf]
  %v2987 = vld [vmem:[%s2977 + $0x24] sm:$0xf]
  %v2988 = vld [vmem:[%s2977 + $0x28] sm:$0xf]
  %v2989 = vld [vmem:[%s2977 + $0x2c] sm:$0xf]
  %v2990 = vld [vmem:[%s2977 + $0x30] sm:$0xf]
  %v2991 = vld [vmem:[%s2977 + $0x34] sm:$0xf]
  %v2992 = vld [vmem:[%s2977 + $0x38] sm:$0xf]
  %v2993 = vld [vmem:[%s2977 + $0x3c] sm:$0xf]
  %v2994 = vrot.slane %v2376, 5
  %v2995 = vrot.slane %v2377, 4
  %v2996 = vsel %vm1413, %v2995, %v2994
  %v2997 = vrot.slane %v2378, 3
  %v2998 = vsel %vm1416, %v2997, %v2996
  %v2999 = vrot.slane %v2379, 2
  %v3000 = vsel %vm1419, %v2999, %v2998
  %v3001 = vrot.slane %v2380, 1
  %v3002 = vsel %vm1422, %v3001, %v3000
  %v3003 = vsel %vm1425, %v2381, %v3002
  %v3004 = vrot.slane %v2382, 7
  %v3005 = vsel %vm1428, %v3004, %v3003
  %v3006 = vrot.slane %v2383, 6
  %v3007 = vsel %vm1431, %v3006, %v3005
  %v3008 = vpack.c.b16 %v3007, %v3007
  %v3026 = vunpack.c.l.b16 %v2978
  %v3027 = vunpack.c.l.b16 %v2979
  %v3028 = vunpack.c.l.b16 %v2980
  %v3029 = vunpack.c.l.b16 %v2981
  %v3030 = vunpack.c.l.b16 %v2982
  %v3031 = vunpack.c.l.b16 %v2983
  %v3032 = vunpack.c.l.b16 %v2984
  %v3033 = vunpack.c.l.b16 %v2985
  %v3034 = vunpack.c.l.b16 %v2986
  %v3035 = vunpack.c.l.b16 %v2987
  %v3036 = vunpack.c.l.b16 %v2988
  %v3037 = vunpack.c.l.b16 %v2989
  %v3038 = vunpack.c.l.b16 %v2990
  %v3039 = vunpack.c.l.b16 %v2991
  %v3040 = vunpack.c.l.b16 %v2992
  %v3041 = vunpack.c.l.b16 %v2993
  %v3042 = vpack.c.b16 %v3027, %v3026
  %v3043 = vpack.c.b16 %v3029, %v3028
  %v3044 = vpack.c.b16 %v3031, %v3030
  %v3045 = vpack.c.b16 %v3033, %v3032
  %v3046 = vpack.c.b16 %v3035, %v3034
  %v3047 = vpack.c.b16 %v3037, %v3036
  %v3048 = vpack.c.b16 %v3039, %v3038
  %v3049 = vpack.c.b16 %v3041, %v3040
  %3058 = vmatprep.subr.bf16.mxu0 0
  %3059 = vmatpush1.bf16.msra.mxu0 %v3042
  %3060 = vmatprep.subr.bf16.mxu0 0
  %3061 = vmatpush1.bf16.msra.mxu0 %v3043
  %3062 = vmatprep.subr.bf16.mxu0 0
  %3063 = vmatpush1.bf16.msra.mxu0 %v3044
  %3064 = vmatprep.subr.bf16.mxu0 0
  %3065 = vmatpush1.bf16.msra.mxu0 %v3045
  %3066 = vmatprep.subr.bf16.mxu0 0
  %3067 = vmatpush1.bf16.msra.mxu0 %v3046
  %3068 = vmatprep.subr.bf16.mxu0 0
  %3069 = vmatpush1.bf16.msra.mxu0 %v3047
  %3070 = vmatprep.subr.bf16.mxu0 0
  %3071 = vmatpush1.bf16.msra.mxu0 %v3048
  %3072 = vmatprep.subr.bf16.mxu0 0
  %3073 = vmatpush1.bf16.msra.mxu0 %v3049
  %3074 = vmatprep.subr.bf16.mxu0 0
  %3075 = vmatpush1.bf16.msra.mxu0 0
  %3076 = vmatprep.subr.bf16.mxu0 0
  %3077 = vmatpush1.bf16.msra.mxu0 0
  %3078 = vmatprep.subr.bf16.mxu0 0
  %3079 = vmatpush1.bf16.msra.mxu0 0
  %3080 = vmatprep.subr.bf16.mxu0 0
  %3081 = vmatpush1.bf16.msra.mxu0 0
  %3082 = vmatprep.subr.bf16.mxu0 0
  %3083 = vmatpush1.bf16.msra.mxu0 0
  %3084 = vmatprep.subr.bf16.mxu0 0
  %3085 = vmatpush1.bf16.msra.mxu0 0
  %3086 = vmatprep.subr.bf16.mxu0 0
  %3087 = vmatpush1.bf16.msra.mxu0 0
  %3088 = vmatprep.subr.bf16.mxu0 0
  %3089 = vmatpush1.bf16.msra.mxu0 0
  %3090 = vmatprep.mubr.bf16.mxu0 0
  %3091 = vmatmul.mubr.bf16.gmra.mrb[0].mxu0 %v3008
  %v3092 = vpop.f32.mrb[0].mxu0
  %v3093 = vadd.f32 0.0, %v3092
  %v3094 = vpop.f32.mrb[0].mxu0
  %v3095 = vpop.f32.mrb[0].mxu0
  %v3096 = vpop.f32.mrb[0].mxu0
  %3097 = vdwg.mxu0
  %v3098 = vadd.f32 %v2976, %v3093
  %s3099 = scalar_lea.vmem %s5, 896
  %v3100 = vld [vmem:[%s3099] sm:$0xf]
  %v3101 = vld [vmem:[%s3099 + $0x4] sm:$0xf]
  %v3102 = vld [vmem:[%s3099 + $0x8] sm:$0xf]
  %v3103 = vld [vmem:[%s3099 + $0xc] sm:$0xf]
  %v3104 = vld [vmem:[%s3099 + $0x10] sm:$0xf]
  %v3105 = vld [vmem:[%s3099 + $0x14] sm:$0xf]
  %v3106 = vld [vmem:[%s3099 + $0x18] sm:$0xf]
  %v3107 = vld [vmem:[%s3099 + $0x1c] sm:$0xf]
  %v3108 = vld [vmem:[%s3099 + $0x20] sm:$0xf]
  %v3109 = vld [vmem:[%s3099 + $0x24] sm:$0xf]
  %v3110 = vld [vmem:[%s3099 + $0x28] sm:$0xf]
  %v3111 = vld [vmem:[%s3099 + $0x2c] sm:$0xf]
  %v3112 = vld [vmem:[%s3099 + $0x30] sm:$0xf]
  %v3113 = vld [vmem:[%s3099 + $0x34] sm:$0xf]
  %v3114 = vld [vmem:[%s3099 + $0x38] sm:$0xf]
  %v3115 = vld [vmem:[%s3099 + $0x3c] sm:$0xf]
  %v3116 = vrot.slane %v2376, 6
  %v3117 = vrot.slane %v2377, 5
  %v3118 = vsel %vm1413, %v3117, %v3116
  %v3119 = vrot.slane %v2378, 4
  %v3120 = vsel %vm1416, %v3119, %v3118
  %v3121 = vrot.slane %v2379, 3
  %v3122 = vsel %vm1419, %v3121, %v3120
  %v3123 = vrot.slane %v2380, 2
  %v3124 = vsel %vm1422, %v3123, %v3122
  %v3125 = vrot.slane %v2381, 1
  %v3126 = vsel %vm1425, %v3125, %v3124
  %v3127 = vsel %vm1428, %v2382, %v3126
  %v3128 = vrot.slane %v2383, 7
  %v3129 = vsel %vm1431, %v3128, %v3127
  %v3130 = vpack.c.b16 %v3129, %v3129
  %v3148 = vunpack.c.l.b16 %v3100
  %v3149 = vunpack.c.l.b16 %v3101
  %v3150 = vunpack.c.l.b16 %v3102
  %v3151 = vunpack.c.l.b16 %v3103
  %v3152 = vunpack.c.l.b16 %v3104
  %v3153 = vunpack.c.l.b16 %v3105
  %v3154 = vunpack.c.l.b16 %v3106
  %v3155 = vunpack.c.l.b16 %v3107
  %v3156 = vunpack.c.l.b16 %v3108
  %v3157 = vunpack.c.l.b16 %v3109
  %v3158 = vunpack.c.l.b16 %v3110
  %v3159 = vunpack.c.l.b16 %v3111
  %v3160 = vunpack.c.l.b16 %v3112
  %v3161 = vunpack.c.l.b16 %v3113
  %v3162 = vunpack.c.l.b16 %v3114
  %v3163 = vunpack.c.l.b16 %v3115
  %v3164 = vpack.c.b16 %v3149, %v3148
  %v3165 = vpack.c.b16 %v3151, %v3150
  %v3166 = vpack.c.b16 %v3153, %v3152
  %v3167 = vpack.c.b16 %v3155, %v3154
  %v3168 = vpack.c.b16 %v3157, %v3156
  %v3169 = vpack.c.b16 %v3159, %v3158
  %v3170 = vpack.c.b16 %v3161, %v3160
  %v3171 = vpack.c.b16 %v3163, %v3162
  %3180 = vmatprep.subr.bf16.mxu0 0
  %3181 = vmatpush1.bf16.msra.mxu0 %v3164
  %3182 = vmatprep.subr.bf16.mxu0 0
  %3183 = vmatpush1.bf16.msra.mxu0 %v3165
  %3184 = vmatprep.subr.bf16.mxu0 0
  %3185 = vmatpush1.bf16.msra.mxu0 %v3166
  %3186 = vmatprep.subr.bf16.mxu0 0
  %3187 = vmatpush1.bf16.msra.mxu0 %v3167
  %3188 = vmatprep.subr.bf16.mxu0 0
  %3189 = vmatpush1.bf16.msra.mxu0 %v3168
  %3190 = vmatprep.subr.bf16.mxu0 0
  %3191 = vmatpush1.bf16.msra.mxu0 %v3169
  %3192 = vmatprep.subr.bf16.mxu0 0
  %3193 = vmatpush1.bf16.msra.mxu0 %v3170
  %3194 = vmatprep.subr.bf16.mxu0 0
  %3195 = vmatpush1.bf16.msra.mxu0 %v3171
  %3196 = vmatprep.subr.bf16.mxu0 0
  %3197 = vmatpush1.bf16.msra.mxu0 0
  %3198 = vmatprep.subr.bf16.mxu0 0
  %3199 = vmatpush1.bf16.msra.mxu0 0
  %3200 = vmatprep.subr.bf16.mxu0 0
  %3201 = vmatpush1.bf16.msra.mxu0 0
  %3202 = vmatprep.subr.bf16.mxu0 0
  %3203 = vmatpush1.bf16.msra.mxu0 0
  %3204 = vmatprep.subr.bf16.mxu0 0
  %3205 = vmatpush1.bf16.msra.mxu0 0
  %3206 = vmatprep.subr.bf16.mxu0 0
  %3207 = vmatpush1.bf16.msra.mxu0 0
  %3208 = vmatprep.subr.bf16.mxu0 0
  %3209 = vmatpush1.bf16.msra.mxu0 0
  %3210 = vmatprep.subr.bf16.mxu0 0
  %3211 = vmatpush1.bf16.msra.mxu0 0
  %3212 = vmatprep.mubr.bf16.mxu0 0
  %3213 = vmatmul.mubr.bf16.gmra.mrb[0].mxu0 %v3130
  %v3214 = vpop.f32.mrb[0].mxu0
  %v3215 = vadd.f32 0.0, %v3214
  %v3216 = vpop.f32.mrb[0].mxu0
  %v3217 = vpop.f32.mrb[0].mxu0
  %v3218 = vpop.f32.mrb[0].mxu0
  %3219 = vdwg.mxu0
  %v3220 = vadd.f32 %v3098, %v3215
  %s3221 = scalar_lea.vmem %s5, 960
  %v3222 = vld [vmem:[%s3221] sm:$0xf]
  %v3223 = vld [vmem:[%s3221 + $0x4] sm:$0xf]
  %v3224 = vld [vmem:[%s3221 + $0x8] sm:$0xf]
  %v3225 = vld [vmem:[%s3221 + $0xc] sm:$0xf]
  %v3226 = vld [vmem:[%s3221 + $0x10] sm:$0xf]
  %v3227 = vld [vmem:[%s3221 + $0x14] sm:$0xf]
  %v3228 = vld [vmem:[%s3221 + $0x18] sm:$0xf]
  %v3229 = vld [vmem:[%s3221 + $0x1c] sm:$0xf]
  %v3230 = vld [vmem:[%s3221 + $0x20] sm:$0xf]
  %v3231 = vld [vmem:[%s3221 + $0x24] sm:$0xf]
  %v3232 = vld [vmem:[%s3221 + $0x28] sm:$0xf]
  %v3233 = vld [vmem:[%s3221 + $0x2c] sm:$0xf]
  %v3234 = vld [vmem:[%s3221 + $0x30] sm:$0xf]
  %v3235 = vld [vmem:[%s3221 + $0x34] sm:$0xf]
  %v3236 = vld [vmem:[%s3221 + $0x38] sm:$0xf]
  %v3237 = vld [vmem:[%s3221 + $0x3c] sm:$0xf]
  %v3238 = vrot.slane %v2376, 7
  %v3239 = vrot.slane %v2377, 6
  %v3240 = vsel %vm1413, %v3239, %v3238
  %v3241 = vrot.slane %v2378, 5
  %v3242 = vsel %vm1416, %v3241, %v3240
  %v3243 = vrot.slane %v2379, 4
  %v3244 = vsel %vm1419, %v3243, %v3242
  %v3245 = vrot.slane %v2380, 3
  %v3246 = vsel %vm1422, %v3245, %v3244
  %v3247 = vrot.slane %v2381, 2
  %v3248 = vsel %vm1425, %v3247, %v3246
  %v3249 = vrot.slane %v2382, 1
  %v3250 = vsel %vm1428, %v3249, %v3248
  %v3251 = vsel %vm1431, %v2383, %v3250
  %v3252 = vpack.c.b16 %v3251, %v3251
  %v3270 = vunpack.c.l.b16 %v3222
  %v3271 = vunpack.c.l.b16 %v3223
  %v3272 = vunpack.c.l.b16 %v3224
  %v3273 = vunpack.c.l.b16 %v3225
  %v3274 = vunpack.c.l.b16 %v3226
  %v3275 = vunpack.c.l.b16 %v3227
  %v3276 = vunpack.c.l.b16 %v3228
  %v3277 = vunpack.c.l.b16 %v3229
  %v3278 = vunpack.c.l.b16 %v3230
  %v3279 = vunpack.c.l.b16 %v3231
  %v3280 = vunpack.c.l.b16 %v3232
  %v3281 = vunpack.c.l.b16 %v3233
  %v3282 = vunpack.c.l.b16 %v3234
  %v3283 = vunpack.c.l.b16 %v3235
  %v3284 = vunpack.c.l.b16 %v3236
  %v3285 = vunpack.c.l.b16 %v3237
  %v3286 = vpack.c.b16 %v3271, %v3270
  %v3287 = vpack.c.b16 %v3273, %v3272
  %v3288 = vpack.c.b16 %v3275, %v3274
  %v3289 = vpack.c.b16 %v3277, %v3276
  %v3290 = vpack.c.b16 %v3279, %v3278
  %v3291 = vpack.c.b16 %v3281, %v3280
  %v3292 = vpack.c.b16 %v3283, %v3282
  %v3293 = vpack.c.b16 %v3285, %v3284
  %3302 = vmatprep.subr.bf16.mxu0 0
  %3303 = vmatpush1.bf16.msra.mxu0 %v3286
  %3304 = vmatprep.subr.bf16.mxu0 0
  %3305 = vmatpush1.bf16.msra.mxu0 %v3287
  %3306 = vmatprep.subr.bf16.mxu0 0
  %3307 = vmatpush1.bf16.msra.mxu0 %v3288
  %3308 = vmatprep.subr.bf16.mxu0 0
  %3309 = vmatpush1.bf16.msra.mxu0 %v3289
  %3310 = vmatprep.subr.bf16.mxu0 0
  %3311 = vmatpush1.bf16.msra.mxu0 %v3290
  %3312 = vmatprep.subr.bf16.mxu0 0
  %3313 = vmatpush1.bf16.msra.mxu0 %v3291
  %3314 = vmatprep.subr.bf16.mxu0 0
  %3315 = vmatpush1.bf16.msra.mxu0 %v3292
  %3316 = vmatprep.subr.bf16.mxu0 0
  %3317 = vmatpush1.bf16.msra.mxu0 %v3293
  %3318 = vmatprep.subr.bf16.mxu0 0
  %3319 = vmatpush1.bf16.msra.mxu0 0
  %3320 = vmatprep.subr.bf16.mxu0 0
  %3321 = vmatpush1.bf16.msra.mxu0 0
  %3322 = vmatprep.subr.bf16.mxu0 0
  %3323 = vmatpush1.bf16.msra.mxu0 0
  %3324 = vmatprep.subr.bf16.mxu0 0
  %3325 = vmatpush1.bf16.msra.mxu0 0
  %3326 = vmatprep.subr.bf16.mxu0 0
  %3327 = vmatpush1.bf16.msra.mxu0 0
  %3328 = vmatprep.subr.bf16.mxu0 0
  %3329 = vmatpush1.bf16.msra.mxu0 0
  %3330 = vmatprep.subr.bf16.mxu0 0
  %3331 = vmatpush1.bf16.msra.mxu0 0
  %3332 = vmatprep.subr.bf16.mxu0 0
  %3333 = vmatpush1.bf16.msra.mxu0 0
  %3334 = vmatprep.mubr.bf16.mxu0 0
  %3335 = vmatmul.mubr.bf16.gmra.mrb[0].mxu0 %v3252
  %v3336 = vpop.f32.mrb[0].mxu0
  %v3337 = vadd.f32 0.0, %v3336
  %v3338 = vpop.f32.mrb[0].mxu0
  %v3339 = vpop.f32.mrb[0].mxu0
  %v3340 = vpop.f32.mrb[0].mxu0
  %3341 = vdwg.mxu0
  %v3342 = vadd.f32 %v3220, %v3337
  %v3343 = vld [vmem:[%s6] sm:$0x1]
  %v3345 = vlaneseq
  %v3346 = vshrl.u32 %v3345, 7
  %v3347 = vsub.s32 0, %v3346
  %v3348 = vrot.slane %v3343, %v3347
  %v3350 = vadd.f32 %v3342, %v3348
  %v3351 = vmax.f32 %v3350, 0.0
  %v3352 = vpack.c.bf16 %v3351, %v3351
  %v3353 = vld [vmem:[%s7] sm:$0xff]
  %v3354 = vld [vmem:[%s7 + $0x8] sm:$0xff]
  %v3355 = vld [vmem:[%s7 + $0x10] sm:$0xff]
  %v3356 = vld [vmem:[%s7 + $0x18] sm:$0xff]
  %v3357 = vld [vmem:[%s7 + $0x20] sm:$0xff]
  %v3358 = vld [vmem:[%s7 + $0x28] sm:$0xff]
  %v3359 = vld [vmem:[%s7 + $0x30] sm:$0xff]
  %v3360 = vld [vmem:[%s7 + $0x38] sm:$0xff]
  %v3361 = vld [vmem:[%s7 + $0x40] sm:$0xff]
  %v3362 = vld [vmem:[%s7 + $0x48] sm:$0xff]
  %v3363 = vld [vmem:[%s7 + $0x50] sm:$0xff]
  %v3364 = vld [vmem:[%s7 + $0x58] sm:$0xff]
  %v3365 = vld [vmem:[%s7 + $0x60] sm:$0xff]
  %v3366 = vld [vmem:[%s7 + $0x68] sm:$0xff]
  %v3367 = vld [vmem:[%s7 + $0x70] sm:$0xff]
  %v3368 = vld [vmem:[%s7 + $0x78] sm:$0xff]
  %v3369 = vld [vmem:[%s1] sm:$0xff]
  %v3370 = vld [vmem:[%s1 + $0x8] sm:$0xff]
  %v3387 = vunpack.c.l.b16 %v3353
  %v3388 = vunpack.c.h.b16 %v3353
  %v3389 = vunpack.c.l.b16 %v3354
  %v3390 = vunpack.c.h.b16 %v3354
  %v3391 = vunpack.c.l.b16 %v3355
  %v3392 = vunpack.c.h.b16 %v3355
  %v3393 = vunpack.c.l.b16 %v3356
  %v3394 = vunpack.c.h.b16 %v3356
  %v3395 = vunpack.c.l.b16 %v3357
  %v3396 = vunpack.c.h.b16 %v3357
  %v3397 = vunpack.c.l.b16 %v3358
  %v3398 = vunpack.c.h.b16 %v3358
  %v3399 = vunpack.c.l.b16 %v3359
  %v3400 = vunpack.c.h.b16 %v3359
  %v3401 = vunpack.c.l.b16 %v3360
  %v3402 = vunpack.c.h.b16 %v3360
  %v3403 = vunpack.c.l.b16 %v3361
  %v3404 = vunpack.c.h.b16 %v3361
  %v3405 = vunpack.c.l.b16 %v3362
  %v3406 = vunpack.c.h.b16 %v3362
  %v3407 = vunpack.c.l.b16 %v3363
  %v3408 = vunpack.c.h.b16 %v3363
  %v3409 = vunpack.c.l.b16 %v3364
  %v3410 = vunpack.c.h.b16 %v3364
  %v3411 = vunpack.c.l.b16 %v3365
  %v3412 = vunpack.c.h.b16 %v3365
  %v3413 = vunpack.c.l.b16 %v3366
  %v3414 = vunpack.c.h.b16 %v3366
  %v3415 = vunpack.c.l.b16 %v3367
  %v3416 = vunpack.c.h.b16 %v3367
  %v3417 = vunpack.c.l.b16 %v3368
  %v3418 = vunpack.c.h.b16 %v3368
  %v3419 = vpack.c.b16 %v3389, %v3387
  %v3420 = vpack.c.b16 %v3390, %v3388
  %v3421 = vpack.c.b16 %v3393, %v3391
  %v3422 = vpack.c.b16 %v3394, %v3392
  %v3423 = vpack.c.b16 %v3397, %v3395
  %v3424 = vpack.c.b16 %v3398, %v3396
  %v3425 = vpack.c.b16 %v3401, %v3399
  %v3426 = vpack.c.b16 %v3402, %v3400
  %v3427 = vpack.c.b16 %v3405, %v3403
  %v3428 = vpack.c.b16 %v3406, %v3404
  %v3429 = vpack.c.b16 %v3409, %v3407
  %v3430 = vpack.c.b16 %v3410, %v3408
  %v3431 = vpack.c.b16 %v3413, %v3411
  %v3432 = vpack.c.b16 %v3414, %v3412
  %v3433 = vpack.c.b16 %v3417, %v3415
  %v3434 = vpack.c.b16 %v3418, %v3416
  %3451 = vmatprep.subr.bf16.mxu0 %v3420
  %3452 = vmatpush1.bf16.msra.mxu0 %v3419
  %3453 = vmatprep.subr.bf16.mxu0 %v3422
  %3454 = vmatpush1.bf16.msra.mxu0 %v3421
  %3455 = vmatprep.subr.bf16.mxu0 %v3424
  %3456 = vmatpush1.bf16.msra.mxu0 %v3423
  %3457 = vmatprep.subr.bf16.mxu0 %v3426
  %3458 = vmatpush1.bf16.msra.mxu0 %v3425
  %3459 = vmatprep.subr.bf16.mxu0 %v3428
  %3460 = vmatpush1.bf16.msra.mxu0 %v3427
  %3461 = vmatprep.subr.bf16.mxu0 %v3430
  %3462 = vmatpush1.bf16.msra.mxu0 %v3429
  %3463 = vmatprep.subr.bf16.mxu0 %v3432
  %3464 = vmatpush1.bf16.msra.mxu0 %v3431
  %3465 = vmatprep.subr.bf16.mxu0 %v3434
  %3466 = vmatpush1.bf16.msra.mxu0 %v3433
  %3467 = vmatprep.subr.bf16.mxu0 0
  %3468 = vmatpush1.bf16.msra.mxu0 0
  %3469 = vmatprep.subr.bf16.mxu0 0
  %3470 = vmatpush1.bf16.msra.mxu0 0
  %3471 = vmatprep.subr.bf16.mxu0 0
  %3472 = vmatpush1.bf16.msra.mxu0 0
  %3473 = vmatprep.subr.bf16.mxu0 0
  %3474 = vmatpush1.bf16.msra.mxu0 0
  %3475 = vmatprep.subr.bf16.mxu0 0
  %3476 = vmatpush1.bf16.msra.mxu0 0
  %3477 = vmatprep.subr.bf16.mxu0 0
  %3478 = vmatpush1.bf16.msra.mxu0 0
  %3479 = vmatprep.subr.bf16.mxu0 0
  %3480 = vmatpush1.bf16.msra.mxu0 0
  %3481 = vmatprep.subr.bf16.mxu0 0
  %3482 = vmatpush1.bf16.msra.mxu0 0
  %3483 = vmatprep.mubr.bf16.mxu0 0
  %3484 = vmatmul.mubr.bf16.gmra.mrb[0].mxu0 %v3352
  %v3485 = vpop.f32.mrb[0].mxu0
  %v3486 = vadd.f32 %v3369, %v3485
  %v3487 = vpop.f32.mrb[0].mxu0
  %v3488 = vadd.f32 %v3370, %v3487
  %v3489 = vpop.f32.mrb[0].mxu0
  %v3490 = vpop.f32.mrb[0].mxu0
  %3491 = vdwg.mxu0
  %v3492 = vmax.f32 %v3486, 0.0
  %v3493 = vmax.f32 %v3488, 0.0
  %v3494 = vld [vmem:[%s2] sm:$0xf]
  %v3495 = vld [vmem:[%s2 + $0x4] sm:$0xf]
  %v3496 = vld [vmem:[%s2 + $0x8] sm:$0xf]
  %v3497 = vld [vmem:[%s2 + $0xc] sm:$0xf]
  %v3498 = vld [vmem:[%s2 + $0x10] sm:$0xf]
  %v3499 = vld [vmem:[%s2 + $0x14] sm:$0xf]
  %v3500 = vld [vmem:[%s2 + $0x18] sm:$0xf]
  %v3501 = vld [vmem:[%s2 + $0x1c] sm:$0xf]
  %v3502 = vld [vmem:[%s2 + $0x20] sm:$0xf]
  %v3503 = vld [vmem:[%s2 + $0x24] sm:$0xf]
  %v3504 = vld [vmem:[%s2 + $0x28] sm:$0xf]
  %v3505 = vld [vmem:[%s2 + $0x2c] sm:$0xf]
  %v3506 = vld [vmem:[%s2 + $0x30] sm:$0xf]
  %v3507 = vld [vmem:[%s2 + $0x34] sm:$0xf]
  %v3508 = vld [vmem:[%s2 + $0x38] sm:$0xf]
  %v3509 = vld [vmem:[%s2 + $0x3c] sm:$0xf]
  %v3510 = vld [vmem:[%s2 + $0x40] sm:$0xf]
  %v3511 = vld [vmem:[%s2 + $0x44] sm:$0xf]
  %v3512 = vld [vmem:[%s2 + $0x48] sm:$0xf]
  %v3513 = vld [vmem:[%s2 + $0x4c] sm:$0xf]
  %v3514 = vld [vmem:[%s2 + $0x50] sm:$0xf]
  %v3515 = vld [vmem:[%s2 + $0x54] sm:$0xf]
  %v3516 = vld [vmem:[%s2 + $0x58] sm:$0xf]
  %v3517 = vld [vmem:[%s2 + $0x5c] sm:$0xf]
  %v3518 = vld [vmem:[%s2 + $0x60] sm:$0xf]
  %v3519 = vld [vmem:[%s2 + $0x64] sm:$0xf]
  %v3520 = vld [vmem:[%s2 + $0x68] sm:$0xf]
  %v3521 = vld [vmem:[%s2 + $0x6c] sm:$0xf]
  %v3522 = vld [vmem:[%s2 + $0x70] sm:$0xf]
  %v3523 = vld [vmem:[%s2 + $0x74] sm:$0xf]
  %v3524 = vld [vmem:[%s2 + $0x78] sm:$0xf]
  %v3525 = vld [vmem:[%s2 + $0x7c] sm:$0xf]
  %v3526 = vld [vmem:[%s8] sm:$0xff]
  %v3527 = vld [vmem:[%s8 + $0x8] sm:$0xff]
  %v3528 = vld [vmem:[%s8 + $0x10] sm:$0xff]
  %v3529 = vld [vmem:[%s8 + $0x18] sm:$0xff]
  %v3530 = vld [vmem:[%s8 + $0x20] sm:$0xff]
  %v3531 = vld [vmem:[%s8 + $0x28] sm:$0xff]
  %v3532 = vld [vmem:[%s8 + $0x30] sm:$0xff]
  %v3533 = vld [vmem:[%s8 + $0x38] sm:$0xff]
  %v3534 = vld [vmem:[%s9] sm:$0x3]
  %v3536 = vlaneseq
  %v3537 = vshrl.u32 %v3536, 7
  %v3538 = vsub.s32 0, %v3537
  %v3539 = vrot.slane %v3534, %v3538
  %v3540 = vlaneseq
  %v3541 = vshrl.u32 %v3540, 7
  %v3542 = vsub.s32 1, %v3541
  %v3543 = vrot.slane %v3534, %v3542
  %v3578 = vunpack.c.l.b16 %v3494
  %v3579 = vunpack.c.l.b16 %v3495
  %v3580 = vunpack.c.l.b16 %v3496
  %v3581 = vunpack.c.l.b16 %v3497
  %v3582 = vunpack.c.l.b16 %v3498
  %v3583 = vunpack.c.l.b16 %v3499
  %v3584 = vunpack.c.l.b16 %v3500
  %v3585 = vunpack.c.l.b16 %v3501
  %v3586 = vunpack.c.l.b16 %v3502
  %v3587 = vunpack.c.l.b16 %v3503
  %v3588 = vunpack.c.l.b16 %v3504
  %v3589 = vunpack.c.l.b16 %v3505
  %v3590 = vunpack.c.l.b16 %v3506
  %v3591 = vunpack.c.l.b16 %v3507
  %v3592 = vunpack.c.l.b16 %v3508
  %v3593 = vunpack.c.l.b16 %v3509
  %v3594 = vunpack.c.l.b16 %v3510
  %v3595 = vunpack.c.l.b16 %v3511
  %v3596 = vunpack.c.l.b16 %v3512
  %v3597 = vunpack.c.l.b16 %v3513
  %v3598 = vunpack.c.l.b16 %v3514
  %v3599 = vunpack.c.l.b16 %v3515
  %v3600 = vunpack.c.l.b16 %v3516
  %v3601 = vunpack.c.l.b16 %v3517
  %v3602 = vunpack.c.l.b16 %v3518
  %v3603 = vunpack.c.l.b16 %v3519
  %v3604 = vunpack.c.l.b16 %v3520
  %v3605 = vunpack.c.l.b16 %v3521
  %v3606 = vunpack.c.l.b16 %v3522
  %v3607 = vunpack.c.l.b16 %v3523
  %v3608 = vunpack.c.l.b16 %v3524
  %v3609 = vunpack.c.l.b16 %v3525
  %v3610 = vpack.c.b16 %v3579, %v3578
  %v3611 = vpack.c.b16 %v3581, %v3580
  %v3612 = vpack.c.b16 %v3583, %v3582
  %v3613 = vpack.c.b16 %v3585, %v3584
  %v3614 = vpack.c.b16 %v3587, %v3586
  %v3615 = vpack.c.b16 %v3589, %v3588
  %v3616 = vpack.c.b16 %v3591, %v3590
  %v3617 = vpack.c.b16 %v3593, %v3592
  %v3618 = vpack.c.b16 %v3595, %v3594
  %v3619 = vpack.c.b16 %v3597, %v3596
  %v3620 = vpack.c.b16 %v3599, %v3598
  %v3621 = vpack.c.b16 %v3601, %v3600
  %v3622 = vpack.c.b16 %v3603, %v3602
  %v3623 = vpack.c.b16 %v3605, %v3604
  %v3624 = vpack.c.b16 %v3607, %v3606
  %v3625 = vpack.c.b16 %v3609, %v3608
  %v3634 = vunpack.c.l.b16 %v3526
  %v3635 = vunpack.c.h.b16 %v3526
  %v3636 = vunpack.c.l.b16 %v3527
  %v3637 = vunpack.c.h.b16 %v3527
  %v3638 = vunpack.c.l.b16 %v3528
  %v3639 = vunpack.c.h.b16 %v3528
  %v3640 = vunpack.c.l.b16 %v3529
  %v3641 = vunpack.c.h.b16 %v3529
  %v3642 = vunpack.c.l.b16 %v3530
  %v3643 = vunpack.c.h.b16 %v3530
  %v3644 = vunpack.c.l.b16 %v3531
  %v3645 = vunpack.c.h.b16 %v3531
  %v3646 = vunpack.c.l.b16 %v3532
  %v3647 = vunpack.c.h.b16 %v3532
  %v3648 = vunpack.c.l.b16 %v3533
  %v3649 = vunpack.c.h.b16 %v3533
  %v3650 = vpack.c.b16 %v3636, %v3634
  %v3651 = vpack.c.b16 %v3637, %v3635
  %v3652 = vpack.c.b16 %v3640, %v3638
  %v3653 = vpack.c.b16 %v3641, %v3639
  %v3654 = vpack.c.b16 %v3644, %v3642
  %v3655 = vpack.c.b16 %v3645, %v3643
  %v3656 = vpack.c.b16 %v3648, %v3646
  %v3657 = vpack.c.b16 %v3649, %v3647
  %vm3666 = vcmask 523264
  %v3668 = vsel %vm3666, %v3610, 0
  %v3671 = vsel %vm3666, %v3611, 0
  %v3674 = vsel %vm3666, %v3612, 0
  %v3677 = vsel %vm3666, %v3613, 0
  %v3680 = vsel %vm3666, %v3614, 0
  %v3683 = vsel %vm3666, %v3615, 0
  %v3686 = vsel %vm3666, %v3616, 0
  %v3689 = vsel %vm3666, %v3617, 0
  %v3692 = vsel %vm3666, %v3618, 0
  %v3695 = vsel %vm3666, %v3619, 0
  %v3698 = vsel %vm3666, %v3620, 0
  %v3701 = vsel %vm3666, %v3621, 0
  %v3704 = vsel %vm3666, %v3622, 0
  %v3707 = vsel %vm3666, %v3623, 0
  %v3710 = vsel %vm3666, %v3624, 0
  %v3713 = vsel %vm3666, %v3625, 0
  %3715 = vmatprep.subr.bf16.mxu0 %v3651
  %3716 = vmatpush1.bf16.msra.mxu0 %v3650
  %3717 = vmatprep.subr.bf16.mxu0 %v3653
  %3718 = vmatpush1.bf16.msra.mxu0 %v3652
  %3719 = vmatprep.subr.bf16.mxu0 %v3655
  %3720 = vmatpush1.bf16.msra.mxu0 %v3654
  %3721 = vmatprep.subr.bf16.mxu0 %v3657
  %3722 = vmatpush1.bf16.msra.mxu0 %v3656
  %3723 = vmatprep.subr.bf16.mxu0 0
  %3724 = vmatpush1.bf16.msra.mxu0 0
  %3725 = vmatprep.subr.bf16.mxu0 0
  %3726 = vmatpush1.bf16.msra.mxu0 0
  %3727 = vmatprep.subr.bf16.mxu0 0
  %3728 = vmatpush1.bf16.msra.mxu0 0
  %3729 = vmatprep.subr.bf16.mxu0 0
  %3730 = vmatpush1.bf16.msra.mxu0 0
  %3731 = vmatprep.subr.bf16.mxu0 0
  %3732 = vmatpush1.bf16.msra.mxu0 0
  %3733 = vmatprep.subr.bf16.mxu0 0
  %3734 = vmatpush1.bf16.msra.mxu0 0
  %3735 = vmatprep.subr.bf16.mxu0 0
  %3736 = vmatpush1.bf16.msra.mxu0 0
  %3737 = vmatprep.subr.bf16.mxu0 0
  %3738 = vmatpush1.bf16.msra.mxu0 0
  %3739 = vmatprep.subr.bf16.mxu0 0
  %3740 = vmatpush1.bf16.msra.mxu0 0
  %3741 = vmatprep.subr.bf16.mxu0 0
  %3742 = vmatpush1.bf16.msra.mxu0 0
  %3743 = vmatprep.subr.bf16.mxu0 0
  %3744 = vmatpush1.bf16.msra.mxu0 0
  %3745 = vmatprep.subr.bf16.mxu0 0
  %3746 = vmatpush1.bf16.msra.mxu0 0
  %3747 = vmatprep.mubr.bf16.mxu0 0
  %3748 = vmatmul.mubr.bf16.gmra.mrb[0].mxu0 %v3668
  %v3749 = vpop.f32.mrb[0].mxu0
  %v3750 = vadd.f32 %v3539, %v3749
  %v3751 = vpop.f32.mrb[0].mxu0
  %v3752 = vadd.f32 %v3543, %v3751
  %v3753 = vpop.f32.mrb[0].mxu0
  %v3754 = vadd.f32 %v3539, %v3753
  %v3755 = vpop.f32.mrb[0].mxu0
  %v3756 = vadd.f32 %v3543, %v3755
  %3757 = vmatprep.mubr.bf16.mxu0 0
  %3758 = vmatmul.mubr.bf16.gmra.mrb[0].mxu0 %v3671
  %v3759 = vpop.f32.mrb[0].mxu0
  %v3760 = vadd.f32 %v3539, %v3759
  %v3761 = vpop.f32.mrb[0].mxu0
  %v3762 = vadd.f32 %v3543, %v3761
  %v3763 = vpop.f32.mrb[0].mxu0
  %v3764 = vadd.f32 %v3539, %v3763
  %v3765 = vpop.f32.mrb[0].mxu0
  %v3766 = vadd.f32 %v3543, %v3765
  %3767 = vmatprep.mubr.bf16.mxu0 0
  %3768 = vmatmul.mubr.bf16.gmra.mrb[0].mxu0 %v3674
  %v3769 = vpop.f32.mrb[0].mxu0
  %v3770 = vadd.f32 %v3539, %v3769
  %v3771 = vpop.f32.mrb[0].mxu0
  %v3772 = vadd.f32 %v3543, %v3771
  %v3773 = vpop.f32.mrb[0].mxu0
  %v3774 = vadd.f32 %v3539, %v3773
  %v3775 = vpop.f32.mrb[0].mxu0
  %v3776 = vadd.f32 %v3543, %v3775
  %3777 = vmatprep.mubr.bf16.mxu0 0
  %3778 = vmatmul.mubr.bf16.gmra.mrb[0].mxu0 %v3677
  %v3779 = vpop.f32.mrb[0].mxu0
  %v3780 = vadd.f32 %v3539, %v3779
  %v3781 = vpop.f32.mrb[0].mxu0
  %v3782 = vadd.f32 %v3543, %v3781
  %v3783 = vpop.f32.mrb[0].mxu0
  %v3784 = vadd.f32 %v3539, %v3783
  %v3785 = vpop.f32.mrb[0].mxu0
  %v3786 = vadd.f32 %v3543, %v3785
  %3787 = vmatprep.mubr.bf16.mxu0 0
  %3788 = vmatmul.mubr.bf16.gmra.mrb[0].mxu0 %v3680
  %v3789 = vpop.f32.mrb[0].mxu0
  %v3790 = vadd.f32 %v3539, %v3789
  %v3791 = vpop.f32.mrb[0].mxu0
  %v3792 = vadd.f32 %v3543, %v3791
  %v3793 = vpop.f32.mrb[0].mxu0
  %v3794 = vadd.f32 %v3539, %v3793
  %v3795 = vpop.f32.mrb[0].mxu0
  %v3796 = vadd.f32 %v3543, %v3795
  %3797 = vmatprep.mubr.bf16.mxu0 0
  %3798 = vmatmul.mubr.bf16.gmra.mrb[0].mxu0 %v3683
  %v3799 = vpop.f32.mrb[0].mxu0
  %v3800 = vadd.f32 %v3539, %v3799
  %v3801 = vpop.f32.mrb[0].mxu0
  %v3802 = vadd.f32 %v3543, %v3801
  %v3803 = vpop.f32.mrb[0].mxu0
  %v3804 = vadd.f32 %v3539, %v3803
  %v3805 = vpop.f32.mrb[0].mxu0
  %v3806 = vadd.f32 %v3543, %v3805
  %3807 = vmatprep.mubr.bf16.mxu0 0
  %3808 = vmatmul.mubr.bf16.gmra.mrb[0].mxu0 %v3686
  %v3809 = vpop.f32.mrb[0].mxu0
  %v3810 = vadd.f32 %v3539, %v3809
  %v3811 = vpop.f32.mrb[0].mxu0
  %v3812 = vadd.f32 %v3543, %v3811
  %v3813 = vpop.f32.mrb[0].mxu0
  %v3814 = vadd.f32 %v3539, %v3813
  %v3815 = vpop.f32.mrb[0].mxu0
  %v3816 = vadd.f32 %v3543, %v3815
  %3817 = vmatprep.mubr.bf16.mxu0 0
  %3818 = vmatmul.mubr.bf16.gmra.mrb[0].mxu0 %v3689
  %v3819 = vpop.f32.mrb[0].mxu0
  %v3820 = vadd.f32 %v3539, %v3819
  %v3821 = vpop.f32.mrb[0].mxu0
  %v3822 = vadd.f32 %v3543, %v3821
  %v3823 = vpop.f32.mrb[0].mxu0
  %v3824 = vadd.f32 %v3539, %v3823
  %v3825 = vpop.f32.mrb[0].mxu0
  %v3826 = vadd.f32 %v3543, %v3825
  %3827 = vmatprep.mubr.bf16.mxu0 0
  %3828 = vmatmul.mubr.bf16.gmra.mrb[0].mxu0 %v3692
  %v3829 = vpop.f32.mrb[0].mxu0
  %v3830 = vadd.f32 %v3539, %v3829
  %v3831 = vpop.f32.mrb[0].mxu0
  %v3832 = vadd.f32 %v3543, %v3831
  %v3833 = vpop.f32.mrb[0].mxu0
  %v3834 = vadd.f32 %v3539, %v3833
  %v3835 = vpop.f32.mrb[0].mxu0
  %v3836 = vadd.f32 %v3543, %v3835
  %3837 = vmatprep.mubr.bf16.mxu0 0
  %3838 = vmatmul.mubr.bf16.gmra.mrb[0].mxu0 %v3695
  %v3839 = vpop.f32.mrb[0].mxu0
  %v3840 = vadd.f32 %v3539, %v3839
  %v3841 = vpop.f32.mrb[0].mxu0
  %v3842 = vadd.f32 %v3543, %v3841
  %v3843 = vpop.f32.mrb[0].mxu0
  %v3844 = vadd.f32 %v3539, %v3843
  %v3845 = vpop.f32.mrb[0].mxu0
  %v3846 = vadd.f32 %v3543, %v3845
  %3847 = vmatprep.mubr.bf16.mxu0 0
  %3848 = vmatmul.mubr.bf16.gmra.mrb[0].mxu0 %v3698
  %v3849 = vpop.f32.mrb[0].mxu0
  %v3850 = vadd.f32 %v3539, %v3849
  %v3851 = vpop.f32.mrb[0].mxu0
  %v3852 = vadd.f32 %v3543, %v3851
  %v3853 = vpop.f32.mrb[0].mxu0
  %v3854 = vadd.f32 %v3539, %v3853
  %v3855 = vpop.f32.mrb[0].mxu0
  %v3856 = vadd.f32 %v3543, %v3855
  %3857 = vmatprep.mubr.bf16.mxu0 0
  %3858 = vmatmul.mubr.bf16.gmra.mrb[0].mxu0 %v3701
  %v3859 = vpop.f32.mrb[0].mxu0
  %v3860 = vadd.f32 %v3539, %v3859
  %v3861 = vpop.f32.mrb[0].mxu0
  %v3862 = vadd.f32 %v3543, %v3861
  %v3863 = vpop.f32.mrb[0].mxu0
  %v3864 = vadd.f32 %v3539, %v3863
  %v3865 = vpop.f32.mrb[0].mxu0
  %v3866 = vadd.f32 %v3543, %v3865
  %3867 = vmatprep.mubr.bf16.mxu0 0
  %3868 = vmatmul.mubr.bf16.gmra.mrb[0].mxu0 %v3704
  %v3869 = vpop.f32.mrb[0].mxu0
  %v3870 = vadd.f32 %v3539, %v3869
  %v3871 = vpop.f32.mrb[0].mxu0
  %v3872 = vadd.f32 %v3543, %v3871
  %v3873 = vpop.f32.mrb[0].mxu0
  %v3874 = vadd.f32 %v3539, %v3873
  %v3875 = vpop.f32.mrb[0].mxu0
  %v3876 = vadd.f32 %v3543, %v3875
  %3877 = vmatprep.mubr.bf16.mxu0 0
  %3878 = vmatmul.mubr.bf16.gmra.mrb[0].mxu0 %v3707
  %v3879 = vpop.f32.mrb[0].mxu0
  %v3880 = vadd.f32 %v3539, %v3879
  %v3881 = vpop.f32.mrb[0].mxu0
  %v3882 = vadd.f32 %v3543, %v3881
  %v3883 = vpop.f32.mrb[0].mxu0
  %v3884 = vadd.f32 %v3539, %v3883
  %v3885 = vpop.f32.mrb[0].mxu0
  %v3886 = vadd.f32 %v3543, %v3885
  %3887 = vmatprep.mubr.bf16.mxu0 0
  %3888 = vmatmul.mubr.bf16.gmra.mrb[0].mxu0 %v3710
  %v3889 = vpop.f32.mrb[0].mxu0
  %v3890 = vadd.f32 %v3539, %v3889
  %v3891 = vpop.f32.mrb[0].mxu0
  %v3892 = vadd.f32 %v3543, %v3891
  %v3893 = vpop.f32.mrb[0].mxu0
  %v3894 = vadd.f32 %v3539, %v3893
  %v3895 = vpop.f32.mrb[0].mxu0
  %v3896 = vadd.f32 %v3543, %v3895
  %3897 = vmatprep.mubr.bf16.mxu0 0
  %3898 = vmatmul.mubr.bf16.gmra.mrb[0].mxu0 %v3713
  %v3899 = vpop.f32.mrb[0].mxu0
  %v3900 = vadd.f32 %v3539, %v3899
  %v3901 = vpop.f32.mrb[0].mxu0
  %v3902 = vadd.f32 %v3543, %v3901
  %v3903 = vpop.f32.mrb[0].mxu0
  %v3904 = vadd.f32 %v3539, %v3903
  %v3905 = vpop.f32.mrb[0].mxu0
  %v3906 = vadd.f32 %v3543, %v3905
  %3907 = vdwg.mxu0
  %v3908 = vmax.f32 %v3750, 0.0
  %v3909 = vmax.f32 %v3752, 0.0
  %v3910 = vmax.f32 %v3754, 0.0
  %v3911 = vmax.f32 %v3756, 0.0
  %v3912 = vmax.f32 %v3760, 0.0
  %v3913 = vmax.f32 %v3762, 0.0
  %v3914 = vmax.f32 %v3764, 0.0
  %v3915 = vmax.f32 %v3766, 0.0
  %v3916 = vmax.f32 %v3770, 0.0
  %v3917 = vmax.f32 %v3772, 0.0
  %v3918 = vmax.f32 %v3774, 0.0
  %v3919 = vmax.f32 %v3776, 0.0
  %v3920 = vmax.f32 %v3780, 0.0
  %v3921 = vmax.f32 %v3782, 0.0
  %v3922 = vmax.f32 %v3784, 0.0
  %v3923 = vmax.f32 %v3786, 0.0
  %v3924 = vmax.f32 %v3790, 0.0
  %v3925 = vmax.f32 %v3792, 0.0
  %v3926 = vmax.f32 %v3794, 0.0
  %v3927 = vmax.f32 %v3796, 0.0
  %v3928 = vmax.f32 %v3800, 0.0
  %v3929 = vmax.f32 %v3802, 0.0
  %v3930 = vmax.f32 %v3804, 0.0
  %v3931 = vmax.f32 %v3806, 0.0
  %v3932 = vmax.f32 %v3810, 0.0
  %v3933 = vmax.f32 %v3812, 0.0
  %v3934 = vmax.f32 %v3814, 0.0
  %v3935 = vmax.f32 %v3816, 0.0
  %v3936 = vmax.f32 %v3820, 0.0
  %v3937 = vmax.f32 %v3822, 0.0
  %v3938 = vmax.f32 %v3824, 0.0
  %v3939 = vmax.f32 %v3826, 0.0
  %v3940 = vmax.f32 %v3830, 0.0
  %v3941 = vmax.f32 %v3832, 0.0
  %v3942 = vmax.f32 %v3834, 0.0
  %v3943 = vmax.f32 %v3836, 0.0
  %v3944 = vmax.f32 %v3840, 0.0
  %v3945 = vmax.f32 %v3842, 0.0
  %v3946 = vmax.f32 %v3844, 0.0
  %v3947 = vmax.f32 %v3846, 0.0
  %v3948 = vmax.f32 %v3850, 0.0
  %v3949 = vmax.f32 %v3852, 0.0
  %v3950 = vmax.f32 %v3854, 0.0
  %v3951 = vmax.f32 %v3856, 0.0
  %v3952 = vmax.f32 %v3860, 0.0
  %v3953 = vmax.f32 %v3862, 0.0
  %v3954 = vmax.f32 %v3864, 0.0
  %v3955 = vmax.f32 %v3866, 0.0
  %v3956 = vmax.f32 %v3870, 0.0
  %v3957 = vmax.f32 %v3872, 0.0
  %v3958 = vmax.f32 %v3874, 0.0
  %v3959 = vmax.f32 %v3876, 0.0
  %v3960 = vmax.f32 %v3880, 0.0
  %v3961 = vmax.f32 %v3882, 0.0
  %v3962 = vmax.f32 %v3884, 0.0
  %v3963 = vmax.f32 %v3886, 0.0
  %v3964 = vmax.f32 %v3890, 0.0
  %v3965 = vmax.f32 %v3892, 0.0
  %v3966 = vmax.f32 %v3894, 0.0
  %v3967 = vmax.f32 %v3896, 0.0
  %v3968 = vmax.f32 %v3900, 0.0
  %v3969 = vmax.f32 %v3902, 0.0
  %v3970 = vmax.f32 %v3904, 0.0
  %v3971 = vmax.f32 %v3906, 0.0
  %v3974 = vcombine.low %v3492, %v3493
  %v3975 = vcombine.high %v3492, %v3493
  %v3977 = vunpack.c.l.s4 1966171168
  %v3978 = vunpack.c.0.s8 %v3977
  %v3979 = vlaneseq
  %v3980 = vshrl.u32 %v3979, 7
  %v3981 = vsub.s32 %v3978, %v3980
  %v3982 = vrot.slane %v3974, %v3981
  %v3984 = vunpack.c.l.s4 1966171168
  %v3985 = vunpack.c.0.s8 %v3984
  %v3986 = vlaneseq
  %v3987 = vshrl.u32 %v3986, 7
  %v3988 = vsub.s32 %v3985, %v3987
  %v3989 = vrot.slane %v3975, %v3988
  %v3990 = vcombine.high %v3982, %v3982
  %v3991 = vcombine.high %v3989, %v3989
  %v3993 = vunpack.c.l.s4 1966171168
  %v3994 = vunpack.c.0.s8 %v3993
  %v3995 = vlaneseq
  %v3996 = vshrl.u32 %v3995, 7
  %v3997 = vsub.s32 %v3994, %v3996
  %v3998 = vrot.slane %v3982, %v3997
  %v4000 = vunpack.c.l.s4 1966171168
  %v4001 = vunpack.c.0.s8 %v4000
  %v4002 = vlaneseq
  %v4003 = vshrl.u32 %v4002, 7
  %v4004 = vsub.s32 %v4001, %v4003
  %v4005 = vrot.slane %v3989, %v4004
  %v4007 = vunpack.c.l.s4 1966171168
  %v4008 = vunpack.c.0.s8 %v4007
  %v4009 = vlaneseq
  %v4010 = vshrl.u32 %v4009, 7
  %v4011 = vsub.s32 %v4008, %v4010
  %v4012 = vrot.slane %v3990, %v4011
  %v4014 = vunpack.c.l.s4 1966171168
  %v4015 = vunpack.c.0.s8 %v4014
  %v4016 = vlaneseq
  %v4017 = vshrl.u32 %v4016, 7
  %v4018 = vsub.s32 %v4015, %v4017
  %v4019 = vrot.slane %v3991, %v4018
  %v4020 = vcombine.high %v3998, %v3998
  %v4021 = vcombine.high %v4005, %v4005
  %v4022 = vcombine.high %v4012, %v4012
  %v4023 = vcombine.high %v4019, %v4019
  %v4024 = vlaneseq
  %v4025 = vshrl.u32 %v4024, 7
  %v4026 = vsub.s32 0, %v4025
  %v4027 = vrot.slane %v3998, %v4026
  %v4028 = vlaneseq
  %v4029 = vshrl.u32 %v4028, 7
  %v4030 = vsub.s32 1, %v4029
  %v4031 = vrot.slane %v3998, %v4030
  %v4032 = vlaneseq
  %v4033 = vshrl.u32 %v4032, 7
  %v4034 = vsub.s32 0, %v4033
  %v4035 = vrot.slane %v4012, %v4034
  %v4036 = vlaneseq
  %v4037 = vshrl.u32 %v4036, 7
  %v4038 = vsub.s32 1, %v4037
  %v4039 = vrot.slane %v4012, %v4038
  %v4040 = vlaneseq
  %v4041 = vshrl.u32 %v4040, 7
  %v4042 = vsub.s32 0, %v4041
  %v4043 = vrot.slane %v4020, %v4042
  %v4044 = vlaneseq
  %v4045 = vshrl.u32 %v4044, 7
  %v4046 = vsub.s32 1, %v4045
  %v4047 = vrot.slane %v4020, %v4046
  %v4048 = vlaneseq
  %v4049 = vshrl.u32 %v4048, 7
  %v4050 = vsub.s32 0, %v4049
  %v4051 = vrot.slane %v4022, %v4050
  %v4052 = vlaneseq
  %v4053 = vshrl.u32 %v4052, 7
  %v4054 = vsub.s32 1, %v4053
  %v4055 = vrot.slane %v4022, %v4054
  %v4056 = vlaneseq
  %v4057 = vshrl.u32 %v4056, 7
  %v4058 = vsub.s32 0, %v4057
  %v4059 = vrot.slane %v4005, %v4058
  %v4060 = vlaneseq
  %v4061 = vshrl.u32 %v4060, 7
  %v4062 = vsub.s32 1, %v4061
  %v4063 = vrot.slane %v4005, %v4062
  %v4064 = vlaneseq
  %v4065 = vshrl.u32 %v4064, 7
  %v4066 = vsub.s32 0, %v4065
  %v4067 = vrot.slane %v4019, %v4066
  %v4068 = vlaneseq
  %v4069 = vshrl.u32 %v4068, 7
  %v4070 = vsub.s32 1, %v4069
  %v4071 = vrot.slane %v4019, %v4070
  %v4072 = vlaneseq
  %v4073 = vshrl.u32 %v4072, 7
  %v4074 = vsub.s32 0, %v4073
  %v4075 = vrot.slane %v4021, %v4074
  %v4076 = vlaneseq
  %v4077 = vshrl.u32 %v4076, 7
  %v4078 = vsub.s32 1, %v4077
  %v4079 = vrot.slane %v4021, %v4078
  %v4080 = vlaneseq
  %v4081 = vshrl.u32 %v4080, 7
  %v4082 = vsub.s32 0, %v4081
  %v4083 = vrot.slane %v4023, %v4082
  %v4084 = vlaneseq
  %v4085 = vshrl.u32 %v4084, 7
  %v4086 = vsub.s32 1, %v4085
  %v4087 = vrot.slane %v4023, %v4086
  %v4104 = vmul.f32 %v3908, %v4027
  %v4105 = vmul.f32 %v3909, %v4031
  %v4106 = vmul.f32 %v3910, %v4027
  %v4107 = vmul.f32 %v3911, %v4031
  %v4108 = vmul.f32 %v3912, %v4027
  %v4109 = vmul.f32 %v3913, %v4031
  %v4110 = vmul.f32 %v3914, %v4027
  %v4111 = vmul.f32 %v3915, %v4031
  %v4112 = vmul.f32 %v3916, %v4035
  %v4113 = vmul.f32 %v3917, %v4039
  %v4114 = vmul.f32 %v3918, %v4035
  %v4115 = vmul.f32 %v3919, %v4039
  %v4116 = vmul.f32 %v3920, %v4035
  %v4117 = vmul.f32 %v3921, %v4039
  %v4118 = vmul.f32 %v3922, %v4035
  %v4119 = vmul.f32 %v3923, %v4039
  %v4120 = vmul.f32 %v3924, %v4043
  %v4121 = vmul.f32 %v3925, %v4047
  %v4122 = vmul.f32 %v3926, %v4043
  %v4123 = vmul.f32 %v3927, %v4047
  %v4124 = vmul.f32 %v3928, %v4043
  %v4125 = vmul.f32 %v3929, %v4047
  %v4126 = vmul.f32 %v3930, %v4043
  %v4127 = vmul.f32 %v3931, %v4047
  %v4128 = vmul.f32 %v3932, %v4051
  %v4129 = vmul.f32 %v3933, %v4055
  %v4130 = vmul.f32 %v3934, %v4051
  %v4131 = vmul.f32 %v3935, %v4055
  %v4132 = vmul.f32 %v3936, %v4051
  %v4133 = vmul.f32 %v3937, %v4055
  %v4134 = vmul.f32 %v3938, %v4051
  %v4135 = vmul.f32 %v3939, %v4055
  %v4136 = vmul.f32 %v3940, %v4059
  %v4137 = vmul.f32 %v3941, %v4063
  %v4138 = vmul.f32 %v3942, %v4059
  %v4139 = vmul.f32 %v3943, %v4063
  %v4140 = vmul.f32 %v3944, %v4059
  %v4141 = vmul.f32 %v3945, %v4063
  %v4142 = vmul.f32 %v3946, %v4059
  %v4143 = vmul.f32 %v3947, %v4063
  %v4144 = vmul.f32 %v3948, %v4067
  %v4145 = vmul.f32 %v3949, %v4071
  %v4146 = vmul.f32 %v3950, %v4067
  %v4147 = vmul.f32 %v3951, %v4071
  %v4148 = vmul.f32 %v3952, %v4067
  %v4149 = vmul.f32 %v3953, %v4071
  %v4150 = vmul.f32 %v3954, %v4067
  %v4151 = vmul.f32 %v3955, %v4071
  %v4152 = vmul.f32 %v3956, %v4075
  %v4153 = vmul.f32 %v3957, %v4079
  %v4154 = vmul.f32 %v3958, %v4075
  %v4155 = vmul.f32 %v3959, %v4079
  %v4156 = vmul.f32 %v3960, %v4075
  %v4157 = vmul.f32 %v3961, %v4079
  %v4158 = vmul.f32 %v3962, %v4075
  %v4159 = vmul.f32 %v3963, %v4079
  %v4160 = vmul.f32 %v3964, %v4083
  %v4161 = vmul.f32 %v3965, %v4087
  %v4162 = vmul.f32 %v3966, %v4083
  %v4163 = vmul.f32 %v3967, %v4087
  %v4164 = vmul.f32 %v3968, %v4083
  %v4165 = vmul.f32 %v3969, %v4087
  %v4166 = vmul.f32 %v3970, %v4083
  %v4167 = vmul.f32 %v3971, %v4087
  %v4168 = vpack.c.bf16 %v4106, %v4104
  %v4169 = vpack.c.bf16 %v4107, %v4105
  %v4170 = vpack.c.bf16 %v4110, %v4108
  %v4171 = vpack.c.bf16 %v4111, %v4109
  %v4172 = vpack.c.bf16 %v4114, %v4112
  %v4173 = vpack.c.bf16 %v4115, %v4113
  %v4174 = vpack.c.bf16 %v4118, %v4116
  %v4175 = vpack.c.bf16 %v4119, %v4117
  %v4176 = vpack.c.bf16 %v4122, %v4120
  %v4177 = vpack.c.bf16 %v4123, %v4121
  %v4178 = vpack.c.bf16 %v4126, %v4124
  %v4179 = vpack.c.bf16 %v4127, %v4125
  %v4180 = vpack.c.bf16 %v4130, %v4128
  %v4181 = vpack.c.bf16 %v4131, %v4129
  %v4182 = vpack.c.bf16 %v4134, %v4132
  %v4183 = vpack.c.bf16 %v4135, %v4133
  %v4184 = vpack.c.bf16 %v4138, %v4136
  %v4185 = vpack.c.bf16 %v4139, %v4137
  %v4186 = vpack.c.bf16 %v4142, %v4140
  %v4187 = vpack.c.bf16 %v4143, %v4141
  %v4188 = vpack.c.bf16 %v4146, %v4144
  %v4189 = vpack.c.bf16 %v4147, %v4145
  %v4190 = vpack.c.bf16 %v4150, %v4148
  %v4191 = vpack.c.bf16 %v4151, %v4149
  %v4192 = vpack.c.bf16 %v4154, %v4152
  %v4193 = vpack.c.bf16 %v4155, %v4153
  %v4194 = vpack.c.bf16 %v4158, %v4156
  %v4195 = vpack.c.bf16 %v4159, %v4157
  %v4196 = vpack.c.bf16 %v4162, %v4160
  %v4197 = vpack.c.bf16 %v4163, %v4161
  %v4198 = vpack.c.bf16 %v4166, %v4164
  %v4199 = vpack.c.bf16 %v4167, %v4165
  %v4200 = vld [vmem:[%s10] sm:$0xff]
  %v4201 = vld [vmem:[%s10 + $0x8] sm:$0xff]
  %v4202 = vld [vmem:[%s10 + $0x10] sm:$0xff]
  %v4203 = vld [vmem:[%s10 + $0x18] sm:$0xff]
  %v4204 = vld [vmem:[%s10 + $0x20] sm:$0xff]
  %v4205 = vld [vmem:[%s10 + $0x28] sm:$0xff]
  %v4206 = vld [vmem:[%s10 + $0x30] sm:$0xff]
  %v4207 = vld [vmem:[%s10 + $0x38] sm:$0xff]
  %v4208 = vld [vmem:[%s10 + $0x40] sm:$0xff]
  %v4209 = vld [vmem:[%s10 + $0x48] sm:$0xff]
  %v4210 = vld [vmem:[%s10 + $0x50] sm:$0xff]
  %v4211 = vld [vmem:[%s10 + $0x58] sm:$0xff]
  %v4212 = vld [vmem:[%s10 + $0x60] sm:$0xff]
  %v4213 = vld [vmem:[%s10 + $0x68] sm:$0xff]
  %v4214 = vld [vmem:[%s10 + $0x70] sm:$0xff]
  %v4215 = vld [vmem:[%s10 + $0x78] sm:$0xff]
  %v4216 = vld [vmem:[%s10 + $0x80] sm:$0xff]
  %v4217 = vld [vmem:[%s10 + $0x88] sm:$0xff]
  %v4218 = vld [vmem:[%s10 + $0x90] sm:$0xff]
  %v4219 = vld [vmem:[%s10 + $0x98] sm:$0xff]
  %v4220 = vld [vmem:[%s10 + $0xa0] sm:$0xff]
  %v4221 = vld [vmem:[%s10 + $0xa8] sm:$0xff]
  %v4222 = vld [vmem:[%s10 + $0xb0] sm:$0xff]
  %v4223 = vld [vmem:[%s10 + $0xb8] sm:$0xff]
  %v4224 = vld [vmem:[%s10 + $0xc0] sm:$0xff]
  %v4225 = vld [vmem:[%s10 + $0xc8] sm:$0xff]
  %v4226 = vld [vmem:[%s10 + $0xd0] sm:$0xff]
  %v4227 = vld [vmem:[%s10 + $0xd8] sm:$0xff]
  %v4228 = vld [vmem:[%s10 + $0xe0] sm:$0xff]
  %v4229 = vld [vmem:[%s10 + $0xe8] sm:$0xff]
  %v4230 = vld [vmem:[%s10 + $0xf0] sm:$0xff]
  %v4231 = vld [vmem:[%s10 + $0xf8] sm:$0xff]
  %v4232 = vld [vmem:[%s11] sm:$0x3]
  %v4234 = vlaneseq
  %v4235 = vshrl.u32 %v4234, 7
  %v4236 = vsub.s32 0, %v4235
  %v4237 = vrot.slane %v4232, %v4236
  %v4238 = vlaneseq
  %v4239 = vshrl.u32 %v4238, 7
  %v4240 = vsub.s32 1, %v4239
  %v4241 = vrot.slane %v4232, %v4240
  %v4276 = vunpack.c.l.b16 %v4200
  %v4277 = vunpack.c.h.b16 %v4200
  %v4278 = vunpack.c.l.b16 %v4201
  %v4279 = vunpack.c.h.b16 %v4201
  %v4280 = vunpack.c.l.b16 %v4202
  %v4281 = vunpack.c.h.b16 %v4202
  %v4282 = vunpack.c.l.b16 %v4203
  %v4283 = vunpack.c.h.b16 %v4203
  %v4284 = vunpack.c.l.b16 %v4204
  %v4285 = vunpack.c.h.b16 %v4204
  %v4286 = vunpack.c.l.b16 %v4205
  %v4287 = vunpack.c.h.b16 %v4205
  %v4288 = vunpack.c.l.b16 %v4206
  %v4289 = vunpack.c.h.b16 %v4206
  %v4290 = vunpack.c.l.b16 %v4207
  %v4291 = vunpack.c.h.b16 %v4207
  %v4292 = vunpack.c.l.b16 %v4208
  %v4293 = vunpack.c.h.b16 %v4208
  %v4294 = vunpack.c.l.b16 %v4209
  %v4295 = vunpack.c.h.b16 %v4209
  %v4296 = vunpack.c.l.b16 %v4210
  %v4297 = vunpack.c.h.b16 %v4210
  %v4298 = vunpack.c.l.b16 %v4211
  %v4299 = vunpack.c.h.b16 %v4211
  %v4300 = vunpack.c.l.b16 %v4212
  %v4301 = vunpack.c.h.b16 %v4212
  %v4302 = vunpack.c.l.b16 %v4213
  %v4303 = vunpack.c.h.b16 %v4213
  %v4304 = vunpack.c.l.b16 %v4214
  %v4305 = vunpack.c.h.b16 %v4214
  %v4306 = vunpack.c.l.b16 %v4215
  %v4307 = vunpack.c.h.b16 %v4215
  %v4308 = vunpack.c.l.b16 %v4216
  %v4309 = vunpack.c.h.b16 %v4216
  %v4310 = vunpack.c.l.b16 %v4217
  %v4311 = vunpack.c.h.b16 %v4217
  %v4312 = vunpack.c.l.b16 %v4218
  %v4313 = vunpack.c.h.b16 %v4218
  %v4314 = vunpack.c.l.b16 %v4219
  %v4315 = vunpack.c.h.b16 %v4219
  %v4316 = vunpack.c.l.b16 %v4220
  %v4317 = vunpack.c.h.b16 %v4220
  %v4318 = vunpack.c.l.b16 %v4221
  %v4319 = vunpack.c.h.b16 %v4221
  %v4320 = vunpack.c.l.b16 %v4222
  %v4321 = vunpack.c.h.b16 %v4222
  %v4322 = vunpack.c.l.b16 %v4223
  %v4323 = vunpack.c.h.b16 %v4223
  %v4324 = vunpack.c.l.b16 %v4224
  %v4325 = vunpack.c.h.b16 %v4224
  %v4326 = vunpack.c.l.b16 %v4225
  %v4327 = vunpack.c.h.b16 %v4225
  %v4328 = vunpack.c.l.b16 %v4226
  %v4329 = vunpack.c.h.b16 %v4226
  %v4330 = vunpack.c.l.b16 %v4227
  %v4331 = vunpack.c.h.b16 %v4227
  %v4332 = vunpack.c.l.b16 %v4228
  %v4333 = vunpack.c.h.b16 %v4228
  %v4334 = vunpack.c.l.b16 %v4229
  %v4335 = vunpack.c.h.b16 %v4229
  %v4336 = vunpack.c.l.b16 %v4230
  %v4337 = vunpack.c.h.b16 %v4230
  %v4338 = vunpack.c.l.b16 %v4231
  %v4339 = vunpack.c.h.b16 %v4231
  %v4340 = vpack.c.b16 %v4278, %v4276
  %v4341 = vpack.c.b16 %v4279, %v4277
  %v4342 = vpack.c.b16 %v4282, %v4280
  %v4343 = vpack.c.b16 %v4283, %v4281
  %v4344 = vpack.c.b16 %v4286, %v4284
  %v4345 = vpack.c.b16 %v4287, %v4285
  %v4346 = vpack.c.b16 %v4290, %v4288
  %v4347 = vpack.c.b16 %v4291, %v4289
  %v4348 = vpack.c.b16 %v4294, %v4292
  %v4349 = vpack.c.b16 %v4295, %v4293
  %v4350 = vpack.c.b16 %v4298, %v4296
  %v4351 = vpack.c.b16 %v4299, %v4297
  %v4352 = vpack.c.b16 %v4302, %v4300
  %v4353 = vpack.c.b16 %v4303, %v4301
  %v4354 = vpack.c.b16 %v4306, %v4304
  %v4355 = vpack.c.b16 %v4307, %v4305
  %v4356 = vpack.c.b16 %v4310, %v4308
  %v4357 = vpack.c.b16 %v4311, %v4309
  %v4358 = vpack.c.b16 %v4314, %v4312
  %v4359 = vpack.c.b16 %v4315, %v4313
  %v4360 = vpack.c.b16 %v4318, %v4316
  %v4361 = vpack.c.b16 %v4319, %v4317
  %v4362 = vpack.c.b16 %v4322, %v4320
  %v4363 = vpack.c.b16 %v4323, %v4321
  %v4364 = vpack.c.b16 %v4326, %v4324
  %v4365 = vpack.c.b16 %v4327, %v4325
  %v4366 = vpack.c.b16 %v4330, %v4328
  %v4367 = vpack.c.b16 %v4331, %v4329
  %v4368 = vpack.c.b16 %v4334, %v4332
  %v4369 = vpack.c.b16 %v4335, %v4333
  %v4370 = vpack.c.b16 %v4338, %v4336
  %v4371 = vpack.c.b16 %v4339, %v4337
  %4404 = vmatprep.subr.bf16.mxu0 %v4341
  %4405 = vmatpush1.bf16.msra.mxu0 %v4340
  %4406 = vmatprep.subr.bf16.mxu0 %v4343
  %4407 = vmatpush1.bf16.msra.mxu0 %v4342
  %4408 = vmatprep.subr.bf16.mxu0 %v4345
  %4409 = vmatpush1.bf16.msra.mxu0 %v4344
  %4410 = vmatprep.subr.bf16.mxu0 %v4347
  %4411 = vmatpush1.bf16.msra.mxu0 %v4346
  %4412 = vmatprep.subr.bf16.mxu0 %v4349
  %4413 = vmatpush1.bf16.msra.mxu0 %v4348
  %4414 = vmatprep.subr.bf16.mxu0 %v4351
  %4415 = vmatpush1.bf16.msra.mxu0 %v4350
  %4416 = vmatprep.subr.bf16.mxu0 %v4353
  %4417 = vmatpush1.bf16.msra.mxu0 %v4352
  %4418 = vmatprep.subr.bf16.mxu0 %v4355
  %4419 = vmatpush1.bf16.msra.mxu0 %v4354
  %4420 = vmatprep.subr.bf16.mxu0 %v4357
  %4421 = vmatpush1.bf16.msra.mxu0 %v4356
  %4422 = vmatprep.subr.bf16.mxu0 %v4359
  %4423 = vmatpush1.bf16.msra.mxu0 %v4358
  %4424 = vmatprep.subr.bf16.mxu0 %v4361
  %4425 = vmatpush1.bf16.msra.mxu0 %v4360
  %4426 = vmatprep.subr.bf16.mxu0 %v4363
  %4427 = vmatpush1.bf16.msra.mxu0 %v4362
  %4428 = vmatprep.subr.bf16.mxu0 %v4365
  %4429 = vmatpush1.bf16.msra.mxu0 %v4364
  %4430 = vmatprep.subr.bf16.mxu0 %v4367
  %4431 = vmatpush1.bf16.msra.mxu0 %v4366
  %4432 = vmatprep.subr.bf16.mxu0 %v4369
  %4433 = vmatpush1.bf16.msra.mxu0 %v4368
  %4434 = vmatprep.subr.bf16.mxu0 %v4371
  %4435 = vmatpush1.bf16.msra.mxu0 %v4370
  %4436 = vmatprep.mubr.bf16.mxu0 %v4169
  %4437 = vmatmul.mubr.bf16.gmra.mrb[0].mxu0 %v4168
  %v4438 = vpop.f32.mrb[0].mxu0
  %v4439 = vadd.f32 %v4237, %v4438
  %v4440 = vpop.f32.mrb[0].mxu0
  %v4441 = vadd.f32 %v4241, %v4440
  %v4442 = vpop.f32.mrb[0].mxu0
  %v4443 = vadd.f32 %v4237, %v4442
  %v4444 = vpop.f32.mrb[0].mxu0
  %v4445 = vadd.f32 %v4241, %v4444
  %4446 = vmatprep.mubr.bf16.mxu0 %v4171
  %4447 = vmatmul.mubr.bf16.gmra.mrb[0].mxu0 %v4170
  %v4448 = vpop.f32.mrb[0].mxu0
  %v4449 = vadd.f32 %v4237, %v4448
  %v4450 = vpop.f32.mrb[0].mxu0
  %v4451 = vadd.f32 %v4241, %v4450
  %v4452 = vpop.f32.mrb[0].mxu0
  %v4453 = vadd.f32 %v4237, %v4452
  %v4454 = vpop.f32.mrb[0].mxu0
  %v4455 = vadd.f32 %v4241, %v4454
  %4456 = vmatprep.mubr.bf16.mxu0 %v4173
  %4457 = vmatmul.mubr.bf16.gmra.mrb[0].mxu0 %v4172
  %v4458 = vpop.f32.mrb[0].mxu0
  %v4459 = vadd.f32 %v4237, %v4458
  %v4460 = vpop.f32.mrb[0].mxu0
  %v4461 = vadd.f32 %v4241, %v4460
  %v4462 = vpop.f32.mrb[0].mxu0
  %v4463 = vadd.f32 %v4237, %v4462
  %v4464 = vpop.f32.mrb[0].mxu0
  %v4465 = vadd.f32 %v4241, %v4464
  %4466 = vmatprep.mubr.bf16.mxu0 %v4175
  %4467 = vmatmul.mubr.bf16.gmra.mrb[0].mxu0 %v4174
  %v4468 = vpop.f32.mrb[0].mxu0
  %v4469 = vadd.f32 %v4237, %v4468
  %v4470 = vpop.f32.mrb[0].mxu0
  %v4471 = vadd.f32 %v4241, %v4470
  %v4472 = vpop.f32.mrb[0].mxu0
  %v4473 = vadd.f32 %v4237, %v4472
  %v4474 = vpop.f32.mrb[0].mxu0
  %v4475 = vadd.f32 %v4241, %v4474
  %4476 = vmatprep.mubr.bf16.mxu0 %v4177
  %4477 = vmatmul.mubr.bf16.gmra.mrb[0].mxu0 %v4176
  %v4478 = vpop.f32.mrb[0].mxu0
  %v4479 = vadd.f32 %v4237, %v4478
  %v4480 = vpop.f32.mrb[0].mxu0
  %v4481 = vadd.f32 %v4241, %v4480
  %v4482 = vpop.f32.mrb[0].mxu0
  %v4483 = vadd.f32 %v4237, %v4482
  %v4484 = vpop.f32.mrb[0].mxu0
  %v4485 = vadd.f32 %v4241, %v4484
  %4486 = vmatprep.mubr.bf16.mxu0 %v4179
  %4487 = vmatmul.mubr.bf16.gmra.mrb[0].mxu0 %v4178
  %v4488 = vpop.f32.mrb[0].mxu0
  %v4489 = vadd.f32 %v4237, %v4488
  %v4490 = vpop.f32.mrb[0].mxu0
  %v4491 = vadd.f32 %v4241, %v4490
  %v4492 = vpop.f32.mrb[0].mxu0
  %v4493 = vadd.f32 %v4237, %v4492
  %v4494 = vpop.f32.mrb[0].mxu0
  %v4495 = vadd.f32 %v4241, %v4494
  %4496 = vmatprep.mubr.bf16.mxu0 %v4181
  %4497 = vmatmul.mubr.bf16.gmra.mrb[0].mxu0 %v4180
  %v4498 = vpop.f32.mrb[0].mxu0
  %v4499 = vadd.f32 %v4237, %v4498
  %v4500 = vpop.f32.mrb[0].mxu0
  %v4501 = vadd.f32 %v4241, %v4500
  %v4502 = vpop.f32.mrb[0].mxu0
  %v4503 = vadd.f32 %v4237, %v4502
  %v4504 = vpop.f32.mrb[0].mxu0
  %v4505 = vadd.f32 %v4241, %v4504
  %4506 = vmatprep.mubr.bf16.mxu0 %v4183
  %4507 = vmatmul.mubr.bf16.gmra.mrb[0].mxu0 %v4182
  %v4508 = vpop.f32.mrb[0].mxu0
  %v4509 = vadd.f32 %v4237, %v4508
  %v4510 = vpop.f32.mrb[0].mxu0
  %v4511 = vadd.f32 %v4241, %v4510
  %v4512 = vpop.f32.mrb[0].mxu0
  %v4513 = vadd.f32 %v4237, %v4512
  %v4514 = vpop.f32.mrb[0].mxu0
  %v4515 = vadd.f32 %v4241, %v4514
  %4516 = vmatprep.mubr.bf16.mxu0 %v4185
  %4517 = vmatmul.mubr.bf16.gmra.mrb[0].mxu0 %v4184
  %v4518 = vpop.f32.mrb[0].mxu0
  %v4519 = vadd.f32 %v4237, %v4518
  %v4520 = vpop.f32.mrb[0].mxu0
  %v4521 = vadd.f32 %v4241, %v4520
  %v4522 = vpop.f32.mrb[0].mxu0
  %v4523 = vadd.f32 %v4237, %v4522
  %v4524 = vpop.f32.mrb[0].mxu0
  %v4525 = vadd.f32 %v4241, %v4524
  %4526 = vmatprep.mubr.bf16.mxu0 %v4187
  %4527 = vmatmul.mubr.bf16.gmra.mrb[0].mxu0 %v4186
  %v4528 = vpop.f32.mrb[0].mxu0
  %v4529 = vadd.f32 %v4237, %v4528
  %v4530 = vpop.f32.mrb[0].mxu0
  %v4531 = vadd.f32 %v4241, %v4530
  %v4532 = vpop.f32.mrb[0].mxu0
  %v4533 = vadd.f32 %v4237, %v4532
  %v4534 = vpop.f32.mrb[0].mxu0
  %v4535 = vadd.f32 %v4241, %v4534
  %4536 = vmatprep.mubr.bf16.mxu0 %v4189
  %4537 = vmatmul.mubr.bf16.gmra.mrb[0].mxu0 %v4188
  %v4538 = vpop.f32.mrb[0].mxu0
  %v4539 = vadd.f32 %v4237, %v4538
  %v4540 = vpop.f32.mrb[0].mxu0
  %v4541 = vadd.f32 %v4241, %v4540
  %v4542 = vpop.f32.mrb[0].mxu0
  %v4543 = vadd.f32 %v4237, %v4542
  %v4544 = vpop.f32.mrb[0].mxu0
  %v4545 = vadd.f32 %v4241, %v4544
  %4546 = vmatprep.mubr.bf16.mxu0 %v4191
  %4547 = vmatmul.mubr.bf16.gmra.mrb[0].mxu0 %v4190
  %v4548 = vpop.f32.mrb[0].mxu0
  %v4549 = vadd.f32 %v4237, %v4548
  %v4550 = vpop.f32.mrb[0].mxu0
  %v4551 = vadd.f32 %v4241, %v4550
  %v4552 = vpop.f32.mrb[0].mxu0
  %v4553 = vadd.f32 %v4237, %v4552
  %v4554 = vpop.f32.mrb[0].mxu0
  %v4555 = vadd.f32 %v4241, %v4554
  %4556 = vmatprep.mubr.bf16.mxu0 %v4193
  %4557 = vmatmul.mubr.bf16.gmra.mrb[0].mxu0 %v4192
  %v4558 = vpop.f32.mrb[0].mxu0
  %v4559 = vadd.f32 %v4237, %v4558
  %v4560 = vpop.f32.mrb[0].mxu0
  %v4561 = vadd.f32 %v4241, %v4560
  %v4562 = vpop.f32.mrb[0].mxu0
  %v4563 = vadd.f32 %v4237, %v4562
  %v4564 = vpop.f32.mrb[0].mxu0
  %v4565 = vadd.f32 %v4241, %v4564
  %4566 = vmatprep.mubr.bf16.mxu0 %v4195
  %4567 = vmatmul.mubr.bf16.gmra.mrb[0].mxu0 %v4194
  %v4568 = vpop.f32.mrb[0].mxu0
  %v4569 = vadd.f32 %v4237, %v4568
  %v4570 = vpop.f32.mrb[0].mxu0
  %v4571 = vadd.f32 %v4241, %v4570
  %v4572 = vpop.f32.mrb[0].mxu0
  %v4573 = vadd.f32 %v4237, %v4572
  %v4574 = vpop.f32.mrb[0].mxu0
  %v4575 = vadd.f32 %v4241, %v4574
  %4576 = vmatprep.mubr.bf16.mxu0 %v4197
  %4577 = vmatmul.mubr.bf16.gmra.mrb[0].mxu0 %v4196
  %v4578 = vpop.f32.mrb[0].mxu0
  %v4579 = vadd.f32 %v4237, %v4578
  %v4580 = vpop.f32.mrb[0].mxu0
  %v4581 = vadd.f32 %v4241, %v4580
  %v4582 = vpop.f32.mrb[0].mxu0
  %v4583 = vadd.f32 %v4237, %v4582
  %v4584 = vpop.f32.mrb[0].mxu0
  %v4585 = vadd.f32 %v4241, %v4584
  %4586 = vmatprep.mubr.bf16.mxu0 %v4199
  %4587 = vmatmul.mubr.bf16.gmra.mrb[0].mxu0 %v4198
  %v4588 = vpop.f32.mrb[0].mxu0
  %v4589 = vadd.f32 %v4237, %v4588
  %v4590 = vpop.f32.mrb[0].mxu0
  %v4591 = vadd.f32 %v4241, %v4590
  %v4592 = vpop.f32.mrb[0].mxu0
  %v4593 = vadd.f32 %v4237, %v4592
  %v4594 = vpop.f32.mrb[0].mxu0
  %v4595 = vadd.f32 %v4241, %v4594
  %4596 = vdwg.mxu0
  %v4597 = vmax.f32 %v4439, 0.0
  %v4598 = vmax.f32 %v4441, 0.0
  %v4599 = vmax.f32 %v4443, 0.0
  %v4600 = vmax.f32 %v4445, 0.0
  %v4601 = vmax.f32 %v4449, 0.0
  %v4602 = vmax.f32 %v4451, 0.0
  %v4603 = vmax.f32 %v4453, 0.0
  %v4604 = vmax.f32 %v4455, 0.0
  %v4605 = vmax.f32 %v4459, 0.0
  %v4606 = vmax.f32 %v4461, 0.0
  %v4607 = vmax.f32 %v4463, 0.0
  %v4608 = vmax.f32 %v4465, 0.0
  %v4609 = vmax.f32 %v4469, 0.0
  %v4610 = vmax.f32 %v4471, 0.0
  %v4611 = vmax.f32 %v4473, 0.0
  %v4612 = vmax.f32 %v4475, 0.0
  %v4613 = vmax.f32 %v4479, 0.0
  %v4614 = vmax.f32 %v4481, 0.0
  %v4615 = vmax.f32 %v4483, 0.0
  %v4616 = vmax.f32 %v4485, 0.0
  %v4617 = vmax.f32 %v4489, 0.0
  %v4618 = vmax.f32 %v4491, 0.0
  %v4619 = vmax.f32 %v4493, 0.0
  %v4620 = vmax.f32 %v4495, 0.0
  %v4621 = vmax.f32 %v4499, 0.0
  %v4622 = vmax.f32 %v4501, 0.0
  %v4623 = vmax.f32 %v4503, 0.0
  %v4624 = vmax.f32 %v4505, 0.0
  %v4625 = vmax.f32 %v4509, 0.0
  %v4626 = vmax.f32 %v4511, 0.0
  %v4627 = vmax.f32 %v4513, 0.0
  %v4628 = vmax.f32 %v4515, 0.0
  %v4629 = vmax.f32 %v4519, 0.0
  %v4630 = vmax.f32 %v4521, 0.0
  %v4631 = vmax.f32 %v4523, 0.0
  %v4632 = vmax.f32 %v4525, 0.0
  %v4633 = vmax.f32 %v4529, 0.0
  %v4634 = vmax.f32 %v4531, 0.0
  %v4635 = vmax.f32 %v4533, 0.0
  %v4636 = vmax.f32 %v4535, 0.0
  %v4637 = vmax.f32 %v4539, 0.0
  %v4638 = vmax.f32 %v4541, 0.0
  %v4639 = vmax.f32 %v4543, 0.0
  %v4640 = vmax.f32 %v4545, 0.0
  %v4641 = vmax.f32 %v4549, 0.0
  %v4642 = vmax.f32 %v4551, 0.0
  %v4643 = vmax.f32 %v4553, 0.0
  %v4644 = vmax.f32 %v4555, 0.0
  %v4645 = vmax.f32 %v4559, 0.0
  %v4646 = vmax.f32 %v4561, 0.0
  %v4647 = vmax.f32 %v4563, 0.0
  %v4648 = vmax.f32 %v4565, 0.0
  %v4649 = vmax.f32 %v4569, 0.0
  %v4650 = vmax.f32 %v4571, 0.0
  %v4651 = vmax.f32 %v4573, 0.0
  %v4652 = vmax.f32 %v4575, 0.0
  %v4653 = vmax.f32 %v4579, 0.0
  %v4654 = vmax.f32 %v4581, 0.0
  %v4655 = vmax.f32 %v4583, 0.0
  %v4656 = vmax.f32 %v4585, 0.0
  %v4657 = vmax.f32 %v4589, 0.0
  %v4658 = vmax.f32 %v4591, 0.0
  %v4659 = vmax.f32 %v4593, 0.0
  %v4660 = vmax.f32 %v4595, 0.0
  %v4661 = vpack.c.bf16 %v4599, %v4597
  %v4662 = vpack.c.bf16 %v4600, %v4598
  %v4663 = vpack.c.bf16 %v4603, %v4601
  %v4664 = vpack.c.bf16 %v4604, %v4602
  %v4665 = vpack.c.bf16 %v4607, %v4605
  %v4666 = vpack.c.bf16 %v4608, %v4606
  %v4667 = vpack.c.bf16 %v4611, %v4609
  %v4668 = vpack.c.bf16 %v4612, %v4610
  %v4669 = vpack.c.bf16 %v4615, %v4613
  %v4670 = vpack.c.bf16 %v4616, %v4614
  %v4671 = vpack.c.bf16 %v4619, %v4617
  %v4672 = vpack.c.bf16 %v4620, %v4618
  %v4673 = vpack.c.bf16 %v4623, %v4621
  %v4674 = vpack.c.bf16 %v4624, %v4622
  %v4675 = vpack.c.bf16 %v4627, %v4625
  %v4676 = vpack.c.bf16 %v4628, %v4626
  %v4677 = vpack.c.bf16 %v4631, %v4629
  %v4678 = vpack.c.bf16 %v4632, %v4630
  %v4679 = vpack.c.bf16 %v4635, %v4633
  %v4680 = vpack.c.bf16 %v4636, %v4634
  %v4681 = vpack.c.bf16 %v4639, %v4637
  %v4682 = vpack.c.bf16 %v4640, %v4638
  %v4683 = vpack.c.bf16 %v4643, %v4641
  %v4684 = vpack.c.bf16 %v4644, %v4642
  %v4685 = vpack.c.bf16 %v4647, %v4645
  %v4686 = vpack.c.bf16 %v4648, %v4646
  %v4687 = vpack.c.bf16 %v4651, %v4649
  %v4688 = vpack.c.bf16 %v4652, %v4650
  %v4689 = vpack.c.bf16 %v4655, %v4653
  %v4690 = vpack.c.bf16 %v4656, %v4654
  %v4691 = vpack.c.bf16 %v4659, %v4657
  %v4692 = vpack.c.bf16 %v4660, %v4658
  %v4693 = vld [vmem:[%s12] sm:$0xf]
  %v4694 = vld [vmem:[%s12 + $0x4] sm:$0xf]
  %v4695 = vld [vmem:[%s12 + $0x8] sm:$0xf]
  %v4696 = vld [vmem:[%s12 + $0xc] sm:$0xf]
  %v4697 = vld [vmem:[%s12 + $0x10] sm:$0xf]
  %v4698 = vld [vmem:[%s12 + $0x14] sm:$0xf]
  %v4699 = vld [vmem:[%s12 + $0x18] sm:$0xf]
  %v4700 = vld [vmem:[%s12 + $0x1c] sm:$0xf]
  %v4701 = vld [vmem:[%s12 + $0x20] sm:$0xf]
  %v4702 = vld [vmem:[%s12 + $0x24] sm:$0xf]
  %v4703 = vld [vmem:[%s12 + $0x28] sm:$0xf]
  %v4704 = vld [vmem:[%s12 + $0x2c] sm:$0xf]
  %v4705 = vld [vmem:[%s12 + $0x30] sm:$0xf]
  %v4706 = vld [vmem:[%s12 + $0x34] sm:$0xf]
  %v4707 = vld [vmem:[%s12 + $0x38] sm:$0xf]
  %v4708 = vld [vmem:[%s12 + $0x3c] sm:$0xf]
  %v4709 = vld [vmem:[%s12 + $0x40] sm:$0xf]
  %v4710 = vld [vmem:[%s12 + $0x44] sm:$0xf]
  %v4711 = vld [vmem:[%s12 + $0x48] sm:$0xf]
  %v4712 = vld [vmem:[%s12 + $0x4c] sm:$0xf]
  %v4713 = vld [vmem:[%s12 + $0x50] sm:$0xf]
  %v4714 = vld [vmem:[%s12 + $0x54] sm:$0xf]
  %v4715 = vld [vmem:[%s12 + $0x58] sm:$0xf]
  %v4716 = vld [vmem:[%s12 + $0x5c] sm:$0xf]
  %v4717 = vld [vmem:[%s12 + $0x60] sm:$0xf]
  %v4718 = vld [vmem:[%s12 + $0x64] sm:$0xf]
  %v4719 = vld [vmem:[%s12 + $0x68] sm:$0xf]
  %v4720 = vld [vmem:[%s12 + $0x6c] sm:$0xf]
  %v4721 = vld [vmem:[%s12 + $0x70] sm:$0xf]
  %v4722 = vld [vmem:[%s12 + $0x74] sm:$0xf]
  %v4723 = vld [vmem:[%s12 + $0x78] sm:$0xf]
  %v4724 = vld [vmem:[%s12 + $0x7c] sm:$0xf]
  %v4725 = vld [vmem:[%s13] sm:$0x1]
  %v4727 = vlaneseq
  %v4728 = vshrl.u32 %v4727, 7
  %v4729 = vsub.s32 0, %v4728
  %v4730 = vrot.slane %v4725, %v4729
  %v4764 = vunpack.c.l.b16 %v4693
  %v4765 = vunpack.c.l.b16 %v4694
  %v4766 = vunpack.c.l.b16 %v4695
  %v4767 = vunpack.c.l.b16 %v4696
  %v4768 = vunpack.c.l.b16 %v4697
  %v4769 = vunpack.c.l.b16 %v4698
  %v4770 = vunpack.c.l.b16 %v4699
  %v4771 = vunpack.c.l.b16 %v4700
  %v4772 = vunpack.c.l.b16 %v4701
  %v4773 = vunpack.c.l.b16 %v4702
  %v4774 = vunpack.c.l.b16 %v4703
  %v4775 = vunpack.c.l.b16 %v4704
  %v4776 = vunpack.c.l.b16 %v4705
  %v4777 = vunpack.c.l.b16 %v4706
  %v4778 = vunpack.c.l.b16 %v4707
  %v4779 = vunpack.c.l.b16 %v4708
  %v4780 = vunpack.c.l.b16 %v4709
  %v4781 = vunpack.c.l.b16 %v4710
  %v4782 = vunpack.c.l.b16 %v4711
  %v4783 = vunpack.c.l.b16 %v4712
  %v4784 = vunpack.c.l.b16 %v4713
  %v4785 = vunpack.c.l.b16 %v4714
  %v4786 = vunpack.c.l.b16 %v4715
  %v4787 = vunpack.c.l.b16 %v4716
  %v4788 = vunpack.c.l.b16 %v4717
  %v4789 = vunpack.c.l.b16 %v4718
  %v4790 = vunpack.c.l.b16 %v4719
  %v4791 = vunpack.c.l.b16 %v4720
  %v4792 = vunpack.c.l.b16 %v4721
  %v4793 = vunpack.c.l.b16 %v4722
  %v4794 = vunpack.c.l.b16 %v4723
  %v4795 = vunpack.c.l.b16 %v4724
  %v4796 = vpack.c.b16 %v4765, %v4764
  %v4797 = vpack.c.b16 %v4767, %v4766
  %v4798 = vpack.c.b16 %v4769, %v4768
  %v4799 = vpack.c.b16 %v4771, %v4770
  %v4800 = vpack.c.b16 %v4773, %v4772
  %v4801 = vpack.c.b16 %v4775, %v4774
  %v4802 = vpack.c.b16 %v4777, %v4776
  %v4803 = vpack.c.b16 %v4779, %v4778
  %v4804 = vpack.c.b16 %v4781, %v4780
  %v4805 = vpack.c.b16 %v4783, %v4782
  %v4806 = vpack.c.b16 %v4785, %v4784
  %v4807 = vpack.c.b16 %v4787, %v4786
  %v4808 = vpack.c.b16 %v4789, %v4788
  %v4809 = vpack.c.b16 %v4791, %v4790
  %v4810 = vpack.c.b16 %v4793, %v4792
  %v4811 = vpack.c.b16 %v4795, %v4794
  %4828 = vmatprep.subr.bf16.mxu0 0
  %4829 = vmatpush1.bf16.msra.mxu0 %v4796
  %4830 = vmatprep.subr.bf16.mxu0 0
  %4831 = vmatpush1.bf16.msra.mxu0 %v4797
  %4832 = vmatprep.subr.bf16.mxu0 0
  %4833 = vmatpush1.bf16.msra.mxu0 %v4798
  %4834 = vmatprep.subr.bf16.mxu0 0
  %4835 = vmatpush1.bf16.msra.mxu0 %v4799
  %4836 = vmatprep.subr.bf16.mxu0 0
  %4837 = vmatpush1.bf16.msra.mxu0 %v4800
  %4838 = vmatprep.subr.bf16.mxu0 0
  %4839 = vmatpush1.bf16.msra.mxu0 %v4801
  %4840 = vmatprep.subr.bf16.mxu0 0
  %4841 = vmatpush1.bf16.msra.mxu0 %v4802
  %4842 = vmatprep.subr.bf16.mxu0 0
  %4843 = vmatpush1.bf16.msra.mxu0 %v4803
  %4844 = vmatprep.subr.bf16.mxu0 0
  %4845 = vmatpush1.bf16.msra.mxu0 %v4804
  %4846 = vmatprep.subr.bf16.mxu0 0
  %4847 = vmatpush1.bf16.msra.mxu0 %v4805
  %4848 = vmatprep.subr.bf16.mxu0 0
  %4849 = vmatpush1.bf16.msra.mxu0 %v4806
  %4850 = vmatprep.subr.bf16.mxu0 0
  %4851 = vmatpush1.bf16.msra.mxu0 %v4807
  %4852 = vmatprep.subr.bf16.mxu0 0
  %4853 = vmatpush1.bf16.msra.mxu0 %v4808
  %4854 = vmatprep.subr.bf16.mxu0 0
  %4855 = vmatpush1.bf16.msra.mxu0 %v4809
  %4856 = vmatprep.subr.bf16.mxu0 0
  %4857 = vmatpush1.bf16.msra.mxu0 %v4810
  %4858 = vmatprep.subr.bf16.mxu0 0
  %4859 = vmatpush1.bf16.msra.mxu0 %v4811
  %4860 = vmatprep.mubr.bf16.mxu0 %v4662
  %4861 = vmatmul.mubr.bf16.gmra.mrb[0].mxu0 %v4661
  %v4862 = vpop.f32.mrb[0].mxu0
  %v4863 = vadd.f32 %v4730, %v4862
  %v4864 = vpop.f32.mrb[0].mxu0
  %v4865 = vpop.f32.mrb[0].mxu0
  %v4866 = vadd.f32 %v4730, %v4865
  %v4867 = vpop.f32.mrb[0].mxu0
  %4868 = vmatprep.mubr.bf16.mxu0 %v4664
  %4869 = vmatmul.mubr.bf16.gmra.mrb[0].mxu0 %v4663
  %v4870 = vpop.f32.mrb[0].mxu0
  %v4871 = vadd.f32 %v4730, %v4870
  %v4872 = vpop.f32.mrb[0].mxu0
  %v4873 = vpop.f32.mrb[0].mxu0
  %v4874 = vadd.f32 %v4730, %v4873
  %v4875 = vpop.f32.mrb[0].mxu0
  %4876 = vmatprep.mubr.bf16.mxu0 %v4666
  %4877 = vmatmul.mubr.bf16.gmra.mrb[0].mxu0 %v4665
  %v4878 = vpop.f32.mrb[0].mxu0
  %v4879 = vadd.f32 %v4730, %v4878
  %v4880 = vpop.f32.mrb[0].mxu0
  %v4881 = vpop.f32.mrb[0].mxu0
  %v4882 = vadd.f32 %v4730, %v4881
  %v4883 = vpop.f32.mrb[0].mxu0
  %4884 = vmatprep.mubr.bf16.mxu0 %v4668
  %4885 = vmatmul.mubr.bf16.gmra.mrb[0].mxu0 %v4667
  %v4886 = vpop.f32.mrb[0].mxu0
  %v4887 = vadd.f32 %v4730, %v4886
  %v4888 = vpop.f32.mrb[0].mxu0
  %v4889 = vpop.f32.mrb[0].mxu0
  %v4890 = vadd.f32 %v4730, %v4889
  %v4891 = vpop.f32.mrb[0].mxu0
  %4892 = vmatprep.mubr.bf16.mxu0 %v4670
  %4893 = vmatmul.mubr.bf16.gmra.mrb[0].mxu0 %v4669
  %v4894 = vpop.f32.mrb[0].mxu0
  %v4895 = vadd.f32 %v4730, %v4894
  %v4896 = vpop.f32.mrb[0].mxu0
  %v4897 = vpop.f32.mrb[0].mxu0
  %v4898 = vadd.f32 %v4730, %v4897
  %v4899 = vpop.f32.mrb[0].mxu0
  %4900 = vmatprep.mubr.bf16.mxu0 %v4672
  %4901 = vmatmul.mubr.bf16.gmra.mrb[0].mxu0 %v4671
  %v4902 = vpop.f32.mrb[0].mxu0
  %v4903 = vadd.f32 %v4730, %v4902
  %v4904 = vpop.f32.mrb[0].mxu0
  %v4905 = vpop.f32.mrb[0].mxu0
  %v4906 = vadd.f32 %v4730, %v4905
  %v4907 = vpop.f32.mrb[0].mxu0
  %4908 = vmatprep.mubr.bf16.mxu0 %v4674
  %4909 = vmatmul.mubr.bf16.gmra.mrb[0].mxu0 %v4673
  %v4910 = vpop.f32.mrb[0].mxu0
  %v4911 = vadd.f32 %v4730, %v4910
  %v4912 = vpop.f32.mrb[0].mxu0
  %v4913 = vpop.f32.mrb[0].mxu0
  %v4914 = vadd.f32 %v4730, %v4913
  %v4915 = vpop.f32.mrb[0].mxu0
  %4916 = vmatprep.mubr.bf16.mxu0 %v4676
  %4917 = vmatmul.mubr.bf16.gmra.mrb[0].mxu0 %v4675
  %v4918 = vpop.f32.mrb[0].mxu0
  %v4919 = vadd.f32 %v4730, %v4918
  %v4920 = vpop.f32.mrb[0].mxu0
  %v4921 = vpop.f32.mrb[0].mxu0
  %v4922 = vadd.f32 %v4730, %v4921
  %v4923 = vpop.f32.mrb[0].mxu0
  %4924 = vmatprep.mubr.bf16.mxu0 %v4678
  %4925 = vmatmul.mubr.bf16.gmra.mrb[0].mxu0 %v4677
  %v4926 = vpop.f32.mrb[0].mxu0
  %v4927 = vadd.f32 %v4730, %v4926
  %v4928 = vpop.f32.mrb[0].mxu0
  %v4929 = vpop.f32.mrb[0].mxu0
  %v4930 = vadd.f32 %v4730, %v4929
  %v4931 = vpop.f32.mrb[0].mxu0
  %4932 = vmatprep.mubr.bf16.mxu0 %v4680
  %4933 = vmatmul.mubr.bf16.gmra.mrb[0].mxu0 %v4679
  %v4934 = vpop.f32.mrb[0].mxu0
  %v4935 = vadd.f32 %v4730, %v4934
  %v4936 = vpop.f32.mrb[0].mxu0
  %v4937 = vpop.f32.mrb[0].mxu0
  %v4938 = vadd.f32 %v4730, %v4937
  %v4939 = vpop.f32.mrb[0].mxu0
  %4940 = vmatprep.mubr.bf16.mxu0 %v4682
  %4941 = vmatmul.mubr.bf16.gmra.mrb[0].mxu0 %v4681
  %v4942 = vpop.f32.mrb[0].mxu0
  %v4943 = vadd.f32 %v4730, %v4942
  %v4944 = vpop.f32.mrb[0].mxu0
  %v4945 = vpop.f32.mrb[0].mxu0
  %v4946 = vadd.f32 %v4730, %v4945
  %v4947 = vpop.f32.mrb[0].mxu0
  %4948 = vmatprep.mubr.bf16.mxu0 %v4684
  %4949 = vmatmul.mubr.bf16.gmra.mrb[0].mxu0 %v4683
  %v4950 = vpop.f32.mrb[0].mxu0
  %v4951 = vadd.f32 %v4730, %v4950
  %v4952 = vpop.f32.mrb[0].mxu0
  %v4953 = vpop.f32.mrb[0].mxu0
  %v4954 = vadd.f32 %v4730, %v4953
  %v4955 = vpop.f32.mrb[0].mxu0
  %4956 = vmatprep.mubr.bf16.mxu0 %v4686
  %4957 = vmatmul.mubr.bf16.gmra.mrb[0].mxu0 %v4685
  %v4958 = vpop.f32.mrb[0].mxu0
  %v4959 = vadd.f32 %v4730, %v4958
  %v4960 = vpop.f32.mrb[0].mxu0
  %v4961 = vpop.f32.mrb[0].mxu0
  %v4962 = vadd.f32 %v4730, %v4961
  %v4963 = vpop.f32.mrb[0].mxu0
  %4964 = vmatprep.mubr.bf16.mxu0 %v4688
  %4965 = vmatmul.mubr.bf16.gmra.mrb[0].mxu0 %v4687
  %v4966 = vpop.f32.mrb[0].mxu0
  %v4967 = vadd.f32 %v4730, %v4966
  %v4968 = vpop.f32.mrb[0].mxu0
  %v4969 = vpop.f32.mrb[0].mxu0
  %v4970 = vadd.f32 %v4730, %v4969
  %v4971 = vpop.f32.mrb[0].mxu0
  %4972 = vmatprep.mubr.bf16.mxu0 %v4690
  %4973 = vmatmul.mubr.bf16.gmra.mrb[0].mxu0 %v4689
  %v4974 = vpop.f32.mrb[0].mxu0
  %v4975 = vadd.f32 %v4730, %v4974
  %v4976 = vpop.f32.mrb[0].mxu0
  %v4977 = vpop.f32.mrb[0].mxu0
  %v4978 = vadd.f32 %v4730, %v4977
  %v4979 = vpop.f32.mrb[0].mxu0
  %4980 = vmatprep.mubr.bf16.mxu0 %v4692
  %4981 = vmatmul.mubr.bf16.gmra.mrb[0].mxu0 %v4691
  %v4982 = vpop.f32.mrb[0].mxu0
  %v4983 = vadd.f32 %v4730, %v4982
  %v4984 = vpop.f32.mrb[0].mxu0
  %v4985 = vpop.f32.mrb[0].mxu0
  %v4986 = vadd.f32 %v4730, %v4985
  %v4987 = vpop.f32.mrb[0].mxu0
  %4988 = vdwg.mxu0
  %4989 = vst [vmem:[%s14] sm:$0xff] %v4863
  %4990 = vst [vmem:[%s14 + $0x8] sm:$0xff] %v4866
  %4991 = vst [vmem:[%s14 + $0x10] sm:$0xff] %v4871
  %4992 = vst [vmem:[%s14 + $0x18] sm:$0xff] %v4874
  %4993 = vst [vmem:[%s14 + $0x20] sm:$0xff] %v4879
  %4994 = vst [vmem:[%s14 + $0x28] sm:$0xff] %v4882
  %4995 = vst [vmem:[%s14 + $0x30] sm:$0xff] %v4887
  %4996 = vst [vmem:[%s14 + $0x38] sm:$0xff] %v4890
  %4997 = vst [vmem:[%s14 + $0x40] sm:$0xff] %v4895
  %4998 = vst [vmem:[%s14 + $0x48] sm:$0xff] %v4898
  %4999 = vst [vmem:[%s14 + $0x50] sm:$0xff] %v4903
  %5000 = vst [vmem:[%s14 + $0x58] sm:$0xff] %v4906
  %5001 = vst [vmem:[%s14 + $0x60] sm:$0xff] %v4911
  %5002 = vst [vmem:[%s14 + $0x68] sm:$0xff] %v4914
  %5003 = vst [vmem:[%s14 + $0x70] sm:$0xff] %v4919
  %5004 = vst [vmem:[%s14 + $0x78] sm:$0xff] %v4922
  %5005 = vst [vmem:[%s14 + $0x80] sm:$0xff] %v4927
  %5006 = vst [vmem:[%s14 + $0x88] sm:$0xff] %v4930
  %5007 = vst [vmem:[%s14 + $0x90] sm:$0xff] %v4935
  %5008 = vst [vmem:[%s14 + $0x98] sm:$0xff] %v4938
  %5009 = vst [vmem:[%s14 + $0xa0] sm:$0xff] %v4943
  %5010 = vst [vmem:[%s14 + $0xa8] sm:$0xff] %v4946
  %5011 = vst [vmem:[%s14 + $0xb0] sm:$0xff] %v4951
  %5012 = vst [vmem:[%s14 + $0xb8] sm:$0xff] %v4954
  %5013 = vst [vmem:[%s14 + $0xc0] sm:$0xff] %v4959
  %5014 = vst [vmem:[%s14 + $0xc8] sm:$0xff] %v4962
  %5015 = vst [vmem:[%s14 + $0xd0] sm:$0xff] %v4967
  %5016 = vst [vmem:[%s14 + $0xd8] sm:$0xff] %v4970
  %5017 = vst [vmem:[%s14 + $0xe0] sm:$0xff] %v4975
  %5018 = vst [vmem:[%s14 + $0xe8] sm:$0xff] %v4978
  %5019 = vst [vmem:[%s14 + $0xf0] sm:$0xff] %v4983
  %5020 = vst [vmem:[%s14 + $0xf8] sm:$0xff] %v4986
  // Predicated region
  $region58: #{iqn_forward.5} parent=0 // pred_check
    _
  $region59: #{iqn_forward.5} parent=0 // pred_check_branch
    %5022 = sbr.rel (0) target = $region61
  $region60: #{iqn_forward.5} parent=0 // pred_region
    _
  $region61: #{iqn_forward.5} parent=0 // pred_fallthru
    _
  // Predicated region
  $region62: #{iqn_forward.5} parent=0 // pred_check
    _
  $region63: #{iqn_forward.5} parent=0 // pred_check_branch
    %5024 = sbr.rel (0) target = $region65
  $region64: #{iqn_forward.5} parent=0 // pred_region
    _
  $region65: #{iqn_forward.5} parent=0 // pred_fallthru
    _

</llo_original>
